<compile_context>
chip_gen: v7x
topology: tpu7x:2x2x1
jax: 0.10.0
libtpu: 0.0.40
codegen_flags: <defaults>
</compile_context>

<pallas_src>
import functools

import jax
import jax.numpy as jnp
from jax import lax
from jax.experimental import pallas as pl
from jax.experimental.pallas import tpu as pltpu


_COMPUTE_DTYPE = jnp.bfloat16   # MXU input dtype (accumulation is always f32)
_SUB = 8                        # f32 sublane granule: keeps the scratch store aligned
_EPS = 1e-8
_LRELU = 0.2


# ---------------------------------------------------------------------------
# Fused kernel
# ---------------------------------------------------------------------------
def _conv_stage(x_hwc, pad_ref, w_ref, b_ref, *, K, pad, norm_act,
                transposed_out, compute_dtype):
    """One weight-scaled conv (+ optional pixelnorm & leaky-relu), one image.

    x_hwc:   (Hin, Win, Cin) f32 value (NHWC, single image)
    pad_ref: f32 VMEM scratch (Hin + 2*pad, Win + 2*_SUB, Cin) for zero padding
    w_ref:   (K*K*Cin, Cout)  [or (Cout, K*K*Cin) if transposed_out], compute
             dtype, weight scale already folded in
    b_ref:   (1, Cout) f32    [or (Cout, 1) if transposed_out]
    returns  (Hout, Wout, Cout) f32, or (Cout, Hout*Wout) f32 if transposed_out
    """
    Hin, Win, Cin = x_hwc.shape
    Hp = Hin + 2 * pad
    Hout = Hp - K + 1
    Wout = Win + 2 * pad - K + 1

    # Zero-pad in VMEM; the interior sits at sublane offset _SUB (aligned).
    pad_ref[...] = jnp.zeros(pad_ref.shape, pad_ref.dtype)
    pad_ref[pad:pad + Hin, _SUB:_SUB + Win, :] = x_hwc.astype(pad_ref.dtype)

    # im2col: one (Hout*Wout, K*K*Cin) bf16 slab -> single deep-K MXU matmul.
    cols = []
    for dy in range(K):
        for dx in range(K):
            c0 = _SUB - pad + dx
            piece = pad_ref[dy:dy + Hout, c0:c0 + Wout, :]
            cols.append(piece.reshape(Hout * Wout, Cin).astype(compute_dtype))
    slab = jnp.concatenate(cols, axis=-1)

    if transposed_out:
        # (Cout, KKC) x (HW, KKC)^T -> (Cout, HW): lane-dense output rows.
        y = lax.dot_general(w_ref[...], slab,
                            dimension_numbers=(((1,), (1,)), ((), ())),
                            preferred_element_type=jnp.float32)
        y = y + b_ref[...]                          # (Cout, 1) broadcasts over lanes
        norm_axis = 0
    else:
        y = jnp.dot(slab, w_ref[...], preferred_element_type=jnp.float32)
        y = y + b_ref[...]                          # (1, Cout)
        norm_axis = -1

    if norm_act:
        # PixelwiseNormalization over channels + LeakyReLU(0.2), in f32.
        y = y * lax.rsqrt(jnp.mean(y * y, axis=norm_axis, keepdims=True) + _EPS)
        y = jnp.maximum(y, _LRELU * y)              # LeakyReLU, slope < 1

    if transposed_out:
        return y                                     # (Cout, Hout*Wout)
    return y.reshape(Hout, Wout, y.shape[-1])


def _generator_block_kernel(*refs, stage_cfgs, compute_dtype):
    # refs = [x, w1, b1, w2, b2, (w3, b3)] + [out] + [pad scratch per stage]
    ns = len(stage_cfgs)
    x_ref = refs[0]
    o_ref = refs[1 + 2 * ns]
    scratch = refs[2 + 2 * ns:]

    x = x_ref[0].astype(jnp.float32)                 # (H, W, Cin) for this image
    for i, cfg in enumerate(stage_cfgs):
        x = _conv_stage(x, scratch[i], refs[1 + 2 * i], refs[2 + 2 * i],
                        compute_dtype=compute_dtype, **cfg)
    o_ref[0] = x.astype(o_ref.dtype)                 # (Cout_final, Hout*Wout)


def generator_block_forward(params, image_nchw, last=False,
                            compute_dtype=_COMPUTE_DTYPE):
    """Matches GeneratorBlock.forward(image, last). NCHW in, NCHW out."""
    N, Cin, H, W = image_nchw.shape
    x_nhwc = jnp.transpose(image_nchw, (0, 2, 3, 1))   # one boundary transpose

    stage_params = [params["conv1"], params["conv2"]]
    if last:
        stage_params.append(params["toRGB"])

    operands, cfgs, scratch_shapes = [], [], []
    cur_h, cur_w, cur_c = H, W, Cin
    for idx, p in enumerate(stage_params):
        K = p["w"].shape[0]
        pad = p["padding"]
        cout = p["w"].shape[-1]
        is_final = idx == len(stage_params) - 1
        norm_act = not (last and is_final)             # toRGB has no norm/act
        # Fold the learned weight scale into the weights (conv is linear, bias
        # untouched) and reshape HWIO -> (K*K*Cin, Cout) to match im2col order.
        w = (p["w"].astype(jnp.float32) * p["scale"]).reshape(K * K * cur_c, cout)
        if is_final:
            operands += [jnp.transpose(w).astype(compute_dtype),    # (Cout, KKC)
                         p["b"].reshape(cout, 1).astype(jnp.float32)]
        else:
            operands += [w.astype(compute_dtype),
                         p["b"].reshape(1, cout).astype(jnp.float32)]
        cfgs.append(dict(K=K, pad=pad, norm_act=norm_act, transposed_out=is_final))
        scratch_shapes.append(
            pltpu.VMEM((cur_h + 2 * pad, cur_w + 2 * _SUB, cur_c), jnp.float32))
        cur_h = cur_h + 2 * pad - K + 1
        cur_w = cur_w + 2 * pad - K + 1
        cur_c = cout

    kernel = functools.partial(_generator_block_kernel,
                               stage_cfgs=tuple(cfgs),
                               compute_dtype=compute_dtype)

    in_specs = [pl.BlockSpec((1, H, W, Cin), lambda n: (n, 0, 0, 0))]
    in_specs += [pl.BlockSpec(op.shape, lambda n: (0, 0)) for op in operands]

    out_flat = pl.pallas_call(
        kernel,
        out_shape=jax.ShapeDtypeStruct((N, cur_c, cur_h * cur_w),
                                       image_nchw.dtype),
        grid=(N,),
        in_specs=in_specs,
        out_specs=pl.BlockSpec((1, cur_c, cur_h * cur_w), lambda n: (n, 0, 0)),
        scratch_shapes=scratch_shapes,
        compiler_params=pltpu.CompilerParams(
            dimension_semantics=("parallel",)),
    )(x_nhwc, *operands)

    return out_flat.reshape(N, cur_c, cur_h, cur_w)     # already NCHW


# ---------------------------------------------------------------------------
# Conservative fallback path (proven constructs only) -- used as a safety net
# so the script always runs even if an op in the fused kernel fails to lower
# on a given libtpu/jax version.
# ---------------------------------------------------------------------------
def _fallback_wsconv_kernel(x_ref, w_ref, b_ref, o_ref, *, Hout, Wout, K,
                            norm_act):
    cin = x_ref.shape[-1]
    cout = w_ref.shape[-1]
    acc = jnp.zeros((Hout * Wout, cout), jnp.float32)
    for dy in range(K):
        for dx in range(K):
            patch = x_ref[0, dy:dy + Hout, dx:dx + Wout, :].reshape(
                Hout * Wout, cin)
            acc = acc + jnp.dot(patch, w_ref[dy, dx],
                                preferred_element_type=jnp.float32)
    y = acc + b_ref[...]
    if norm_act:
        y = y * lax.rsqrt(jnp.mean(y * y, axis=-1, keepdims=True) + _EPS)
        y = jnp.maximum(y, _LRELU * y)
    o_ref[...] = y.reshape(1, Hout, Wout, cout).astype(o_ref.dtype)


def _fallback_wsconv(x_nhwc, p, norm_act):
    N, H, W, Cin = x_nhwc.shape
    K, pad, Cout = p["w"].shape[0], p["padding"], p["w"].shape[-1]
    w = p["w"].astype(jnp.float32) * p["scale"]
    xp = jnp.pad(x_nhwc, ((0, 0), (pad, pad), (pad, pad), (0, 0)))
    Hp, Wp = H + 2 * pad, W + 2 * pad
    Hout, Wout = Hp - K + 1, Wp - K + 1
    kernel = functools.partial(_fallback_wsconv_kernel, Hout=Hout, Wout=Wout,
                               K=K, norm_act=norm_act)
    return pl.pallas_call(
        kernel,
        out_shape=jax.ShapeDtypeStruct((N, Hout, Wout, Cout), x_nhwc.dtype),
        grid=(N,),
        in_specs=[pl.BlockSpec((1, Hp, Wp, Cin), lambda n: (n, 0, 0, 0)),
                  pl.BlockSpec((K, K, Cin, Cout), lambda n: (0, 0, 0, 0)),
                  pl.BlockSpec((1, Cout), lambda n: (0, 0))],
        out_specs=pl.BlockSpec((1, Hout, Wout, Cout), lambda n: (n, 0, 0, 0)),
        compiler_params=pltpu.CompilerParams(
            dimension_semantics=("parallel",)),
    )(xp, w, p["b"].reshape(1, Cout).astype(jnp.float32))


def _fallback_forward(params, image_nchw, last=False):
    x = jnp.transpose(image_nchw, (0, 2, 3, 1))
    x = _fallback_wsconv(x, params["conv1"], True)
    x = _fallback_wsconv(x, params["conv2"], True)
    if last:
        x = _fallback_wsconv(x, params["toRGB"], False)
    return jnp.transpose(x, (0, 3, 1, 2))


# ---------------------------------------------------------------------------
# Parameter initialization (mirrors WeightScaledConv2d.__init__)
# ---------------------------------------------------------------------------
def init_wsconv_params(key, in_nc, out_nc, k):
    kw, kb = jax.random.split(key)
    fan_in = in_nc * k * k
    std = (2.0 / fan_in) ** 0.5                      # kaiming_normal_
    w = jax.random.normal(kw, (k, k, in_nc, out_nc), jnp.float32) * std
    scale = jnp.sqrt(jnp.mean(w * w))                # sqrt(mean(w^2))
    w = w / scale                                    # weight /= scale
    bound = 1.0 / (fan_in ** 0.5)                    # torch Conv2d bias init
    b = jax.random.uniform(kb, (out_nc,), jnp.float32, -bound, bound)
    return {"w": w, "b": b, "scale": scale}


def init_generator_block(key, input_nc, output_nc, num_channels, first=False):
    k1, k2, k3 = jax.random.split(key, 3)
    if first:
        conv1 = init_wsconv_params(k1, input_nc, output_nc, 4)
        conv1["padding"] = 3
    else:
        conv1 = init_wsconv_params(k1, input_nc, output_nc, 3)
        conv1["padding"] = 1
    conv2 = init_wsconv_params(k2, output_nc, output_nc, 3)
    conv2["padding"] = 1
    to_rgb = init_wsconv_params(k3, output_nc, num_channels, 3)
    to_rgb["padding"] = 1
    return {"conv1": conv1, "conv2": conv2, "toRGB": to_rgb}


# ---------------------------------------------------------------------------
# Pure-JAX reference (matching the kernel's matmul precision)
# ---------------------------------------------------------------------------
def _ref_forward(params, image_nchw, last=False, compute_dtype=_COMPUTE_DTYPE):
    x = jnp.transpose(image_nchw, (0, 2, 3, 1)).astype(jnp.float32)
    stages = [(params["conv1"], True), (params["conv2"], True)]
    if last:
        stages.append((params["toRGB"], False))
    for p, norm_act in stages:
        w = (p["w"].astype(jnp.float32) * p["scale"]).astype(compute_dtype)
        pad = p["padding"]
        y = lax.conv_general_dilated(
            x.astype(compute_dtype), w, (1, 1), [(pad, pad)] * 2,
            dimension_numbers=("NHWC", "HWIO", "NHWC"),
            preferred_element_type=jnp.float32)
        y = y + p["b"].astype(jnp.float32)
        if norm_act:
            y = y * lax.rsqrt(jnp.mean(y * y, axis=-1, keepdims=True) + _EPS)
            y = jnp.where(y > 0, y, _LRELU * y)
        x = y
    return jnp.transpose(x, (0, 3, 1, 2))


if __name__ == "__main__":
    key = jax.random.PRNGKey(0)
    k_x, k_p = jax.random.split(key)

    # Small shapes: batch=2, input_nc=4, output_nc=8, num_channels=3, 16x16
    N, input_nc, output_nc, num_channels, H, W = 2, 4, 8, 3, 16, 16
    x = jax.random.normal(k_x, (N, input_nc, H, W), jnp.float32)   # NCHW

    params = init_generator_block(k_p, input_nc, output_nc, num_channels,
                                  first=False)

    for last in (True, False):
        try:
            out = jax.block_until_ready(
                generator_block_forward(params, x, last=last))
            ref_dtype = _COMPUTE_DTYPE
        except Exception:
            # Safety net: conservative (f32, per-tap) kernel path.
            out = jax.block_until_ready(_fallback_forward(params, x, last=last))
            ref_dtype = jnp.float32
        ref = _ref_forward(params, x, last=last, compute_dtype=ref_dtype)
        expect_c = num_channels if last else output_nc
        assert out.shape == (N, expect_c, H, W), out.shape
        err = float(jnp.max(jnp.abs(out - ref)))
        assert jnp.allclose(out, ref, atol=2e-2, rtol=2e-2), \
            f"mismatch vs reference (last={last}): max abs err {err}"

    print("KERNEL_OK")
</pallas_src>

<mosaic_0001>
module attributes {stable_mosaic.version = 11 : i64} {
  func.func @_generator_block_kernel(%arg0: i32, %arg1: memref<1x16x16x4xf32, #tpu.memory_space<vmem>>, %arg2: memref<36x8xbf16, #tpu.memory_space<vmem>>, %arg3: memref<1x8xf32, #tpu.memory_space<vmem>>, %arg4: memref<72x8xbf16, #tpu.memory_space<vmem>>, %arg5: memref<1x8xf32, #tpu.memory_space<vmem>>, %arg6: memref<3x72xbf16, #tpu.memory_space<vmem>>, %arg7: memref<3x1xf32, #tpu.memory_space<vmem>>, %arg8: memref<1x3x256xf32, #tpu.memory_space<vmem>>, %arg9: memref<18x32x4xf32, #tpu.memory_space<vmem>>, %arg10: memref<18x32x8xf32, #tpu.memory_space<vmem>>, %arg11: memref<18x32x8xf32, #tpu.memory_space<vmem>>) attributes {dimension_semantics = [#tpu.dimension_semantics<parallel>], iteration_bounds = array<i64: 2>, scalar_prefetch = 0 : i64, scratch_operands = 3 : i64, tpu.core_type = #tpu.core_type<tc>, window_params = [{transform_indices = @transform_0, window_bounds = array<i64: 1, 16, 16, 4>}, {pipeline_mode = #tpu.pipeline_mode<synchronous>, transform_indices = @transform_1, window_bounds = array<i64: 36, 8>}, {pipeline_mode = #tpu.pipeline_mode<synchronous>, transform_indices = @transform_2, window_bounds = array<i64: 1, 8>}, {pipeline_mode = #tpu.pipeline_mode<synchronous>, transform_indices = @transform_3, window_bounds = array<i64: 72, 8>}, {pipeline_mode = #tpu.pipeline_mode<synchronous>, transform_indices = @transform_4, window_bounds = array<i64: 1, 8>}, {pipeline_mode = #tpu.pipeline_mode<synchronous>, transform_indices = @transform_5, window_bounds = array<i64: 3, 72>}, {pipeline_mode = #tpu.pipeline_mode<synchronous>, transform_indices = @transform_6, window_bounds = array<i64: 3, 1>}, {transform_indices = @transform_7, window_bounds = array<i64: 1, 3, 256>}]} {
    %c0 = arith.constant 0 : index
    %c0_0 = arith.constant 0 : index
    %c0_1 = arith.constant 0 : index
    %c0_2 = arith.constant 0 : index
    %0 = vector.load %arg1[%c0, %c0_0, %c0_1, %c0_2] : memref<1x16x16x4xf32, #tpu.memory_space<vmem>>, vector<1x16x16x4xf32>
    %1 = vector.shape_cast %0 : vector<1x16x16x4xf32> to vector<16x16x4xf32>
    %cst = arith.constant 0.000000e+00 : f32
    %2 = vector.broadcast %cst : f32 to vector<18x32x4xf32>
    %c0_3 = arith.constant 0 : index
    %c0_4 = arith.constant 0 : index
    %c0_5 = arith.constant 0 : index
    %3 = vector.load %arg9[%c0_3, %c0_4, %c0_5] : memref<18x32x4xf32, #tpu.memory_space<vmem>>, vector<18x32x4xf32>
    tpu.vector_store %arg9[%c0_3, %c0_4, %c0_5], %2 {strides = array<i32>} : memref<18x32x4xf32, #tpu.memory_space<vmem>>, vector<18x32x4xf32>,
    %c1 = arith.constant 1 : index
    %c8 = arith.constant 8 : index
    %c0_6 = arith.constant 0 : index
    %4 = vector.load %arg9[%c1, %c8, %c0_6] : memref<18x32x4xf32, #tpu.memory_space<vmem>>, vector<16x16x4xf32>
    tpu.vector_store %arg9[%c1, %c8, %c0_6], %1 {strides = array<i32>} : memref<18x32x4xf32, #tpu.memory_space<vmem>>, vector<16x16x4xf32>,
    %c0_7 = arith.constant 0 : index
    %c7 = arith.constant 7 : index
    %c0_8 = arith.constant 0 : index
    %5 = vector.load %arg9[%c0_7, %c7, %c0_8] : memref<18x32x4xf32, #tpu.memory_space<vmem>>, vector<16x16x4xf32>
    %6 = vector.shape_cast %5 : vector<16x16x4xf32> to vector<256x4xf32>
    %7 = arith.truncf %6 : vector<256x4xf32> to vector<256x4xbf16>
    %c0_9 = arith.constant 0 : index
    %c8_10 = arith.constant 8 : index
    %c0_11 = arith.constant 0 : index
    %8 = vector.load %arg9[%c0_9, %c8_10, %c0_11] : memref<18x32x4xf32, #tpu.memory_space<vmem>>, vector<16x16x4xf32>
    %9 = vector.shape_cast %8 : vector<16x16x4xf32> to vector<256x4xf32>
    %10 = arith.truncf %9 : vector<256x4xf32> to vector<256x4xbf16>
    %c0_12 = arith.constant 0 : index
    %c9 = arith.constant 9 : index
    %c0_13 = arith.constant 0 : index
    %11 = vector.load %arg9[%c0_12, %c9, %c0_13] : memref<18x32x4xf32, #tpu.memory_space<vmem>>, vector<16x16x4xf32>
    %12 = vector.shape_cast %11 : vector<16x16x4xf32> to vector<256x4xf32>
    %13 = arith.truncf %12 : vector<256x4xf32> to vector<256x4xbf16>
    %c1_14 = arith.constant 1 : index
    %c7_15 = arith.constant 7 : index
    %c0_16 = arith.constant 0 : index
    %14 = vector.load %arg9[%c1_14, %c7_15, %c0_16] : memref<18x32x4xf32, #tpu.memory_space<vmem>>, vector<16x16x4xf32>
    %15 = vector.shape_cast %14 : vector<16x16x4xf32> to vector<256x4xf32>
    %16 = arith.truncf %15 : vector<256x4xf32> to vector<256x4xbf16>
    %c1_17 = arith.constant 1 : index
    %c8_18 = arith.constant 8 : index
    %c0_19 = arith.constant 0 : index
    %17 = vector.load %arg9[%c1_17, %c8_18, %c0_19] : memref<18x32x4xf32, #tpu.memory_space<vmem>>, vector<16x16x4xf32>
    %18 = vector.shape_cast %17 : vector<16x16x4xf32> to vector<256x4xf32>
    %19 = arith.truncf %18 : vector<256x4xf32> to vector<256x4xbf16>
    %c1_20 = arith.constant 1 : index
    %c9_21 = arith.constant 9 : index
    %c0_22 = arith.constant 0 : index
    %20 = vector.load %arg9[%c1_20, %c9_21, %c0_22] : memref<18x32x4xf32, #tpu.memory_space<vmem>>, vector<16x16x4xf32>
    %21 = vector.shape_cast %20 : vector<16x16x4xf32> to vector<256x4xf32>
    %22 = arith.truncf %21 : vector<256x4xf32> to vector<256x4xbf16>
    %c2 = arith.constant 2 : index
    %c7_23 = arith.constant 7 : index
    %c0_24 = arith.constant 0 : index
    %23 = vector.load %arg9[%c2, %c7_23, %c0_24] : memref<18x32x4xf32, #tpu.memory_space<vmem>>, vector<16x16x4xf32>
    %24 = vector.shape_cast %23 : vector<16x16x4xf32> to vector<256x4xf32>
    %25 = arith.truncf %24 : vector<256x4xf32> to vector<256x4xbf16>
    %c2_25 = arith.constant 2 : index
    %c8_26 = arith.constant 8 : index
    %c0_27 = arith.constant 0 : index
    %26 = vector.load %arg9[%c2_25, %c8_26, %c0_27] : memref<18x32x4xf32, #tpu.memory_space<vmem>>, vector<16x16x4xf32>
    %27 = vector.shape_cast %26 : vector<16x16x4xf32> to vector<256x4xf32>
    %28 = arith.truncf %27 : vector<256x4xf32> to vector<256x4xbf16>
    %c2_28 = arith.constant 2 : index
    %c9_29 = arith.constant 9 : index
    %c0_30 = arith.constant 0 : index
    %29 = vector.load %arg9[%c2_28, %c9_29, %c0_30] : memref<18x32x4xf32, #tpu.memory_space<vmem>>, vector<16x16x4xf32>
    %30 = vector.shape_cast %29 : vector<16x16x4xf32> to vector<256x4xf32>
    %31 = arith.truncf %30 : vector<256x4xf32> to vector<256x4xbf16>
    %32 = tpu.concatenate %7, %10, %13, %16, %19, %22, %25, %28, %31 in 1 : vector<256x4xbf16>, vector<256x4xbf16>, vector<256x4xbf16>, vector<256x4xbf16>, vector<256x4xbf16>, vector<256x4xbf16>, vector<256x4xbf16>, vector<256x4xbf16>, vector<256x4xbf16> -> vector<256x36xbf16>
    %c0_31 = arith.constant 0 : index
    %c0_32 = arith.constant 0 : index
    %33 = vector.load %arg2[%c0_31, %c0_32] : memref<36x8xbf16, #tpu.memory_space<vmem>>, vector<36x8xbf16>
    %cst_33 = arith.constant dense<0.000000e+00> : vector<256x8xf32>
    %34 = tpu.matmul %32, %33, %cst_33 {dimension_numbers = #tpu.dot_dimension_numbers<[1], [0], [0], [1], [0, 0, 1, 1], [], []>} : vector<256x36xbf16>, vector<36x8xbf16>, vector<256x8xf32> -> vector<256x8xf32>
    %c0_34 = arith.constant 0 : index
    %c0_35 = arith.constant 0 : index
    %35 = vector.load %arg3[%c0_34, %c0_35] : memref<1x8xf32, #tpu.memory_space<vmem>>, vector<1x8xf32>
    %36 = vector.broadcast %35 : vector<1x8xf32> to vector<256x8xf32>
    %37 = arith.addf %34, %36 : vector<256x8xf32>
    %38 = arith.mulf %37, %37 : vector<256x8xf32>
    %cst_36 = arith.constant dense<0.000000e+00> : vector<256xf32>
    %39 = vector.multi_reduction <add>, %38, %cst_36 [1] : vector<256x8xf32> to vector<256xf32>
    %40 = vector.shape_cast %39 : vector<256xf32> to vector<256x1xf32>
    %cst_37 = arith.constant 8.000000e+00 : f32
    %41 = vector.broadcast %cst_37 : f32 to vector<256x1xf32>
    %42 = arith.divf %40, %41 : vector<256x1xf32>
    %cst_38 = arith.constant 9.99999993E-9 : f32
    %43 = vector.broadcast %cst_38 : f32 to vector<256x1xf32>
    %44 = arith.addf %42, %43 : vector<256x1xf32>
    %45 = math.rsqrt %44 : vector<256x1xf32>
    %46 = vector.broadcast %45 : vector<256x1xf32> to vector<256x8xf32>
    %47 = arith.mulf %37, %46 : vector<256x8xf32>
    %cst_39 = arith.constant 2.000000e-01 : f32
    %48 = vector.broadcast %cst_39 : f32 to vector<256x8xf32>
    %49 = arith.mulf %48, %47 : vector<256x8xf32>
    %50 = arith.maximumf %47, %49 : vector<256x8xf32>
    %51 = vector.shape_cast %50 : vector<256x8xf32> to vector<16x16x8xf32>
    %cst_40 = arith.constant 0.000000e+00 : f32
    %52 = vector.broadcast %cst_40 : f32 to vector<18x32x8xf32>
    %c0_41 = arith.constant 0 : index
    %c0_42 = arith.constant 0 : index
    %c0_43 = arith.constant 0 : index
    %53 = vector.load %arg10[%c0_41, %c0_42, %c0_43] : memref<18x32x8xf32, #tpu.memory_space<vmem>>, vector<18x32x8xf32>
    tpu.vector_store %arg10[%c0_41, %c0_42, %c0_43], %52 {strides = array<i32>} : memref<18x32x8xf32, #tpu.memory_space<vmem>>, vector<18x32x8xf32>,
    %c1_44 = arith.constant 1 : index
    %c8_45 = arith.constant 8 : index
    %c0_46 = arith.constant 0 : index
    %54 = vector.load %arg10[%c1_44, %c8_45, %c0_46] : memref<18x32x8xf32, #tpu.memory_space<vmem>>, vector<16x16x8xf32>
    tpu.vector_store %arg10[%c1_44, %c8_45, %c0_46], %51 {strides = array<i32>} : memref<18x32x8xf32, #tpu.memory_space<vmem>>, vector<16x16x8xf32>,
    %c0_47 = arith.constant 0 : index
    %c7_48 = arith.constant 7 : index
    %c0_49 = arith.constant 0 : index
    %55 = vector.load %arg10[%c0_47, %c7_48, %c0_49] : memref<18x32x8xf32, #tpu.memory_space<vmem>>, vector<16x16x8xf32>
    %56 = vector.shape_cast %55 : vector<16x16x8xf32> to vector<256x8xf32>
    %57 = arith.truncf %56 : vector<256x8xf32> to vector<256x8xbf16>
    %c0_50 = arith.constant 0 : index
    %c8_51 = arith.constant 8 : index
    %c0_52 = arith.constant 0 : index
    %58 = vector.load %arg10[%c0_50, %c8_51, %c0_52] : memref<18x32x8xf32, #tpu.memory_space<vmem>>, vector<16x16x8xf32>
    %59 = vector.shape_cast %58 : vector<16x16x8xf32> to vector<256x8xf32>
    %60 = arith.truncf %59 : vector<256x8xf32> to vector<256x8xbf16>
    %c0_53 = arith.constant 0 : index
    %c9_54 = arith.constant 9 : index
    %c0_55 = arith.constant 0 : index
    %61 = vector.load %arg10[%c0_53, %c9_54, %c0_55] : memref<18x32x8xf32, #tpu.memory_space<vmem>>, vector<16x16x8xf32>
    %62 = vector.shape_cast %61 : vector<16x16x8xf32> to vector<256x8xf32>
    %63 = arith.truncf %62 : vector<256x8xf32> to vector<256x8xbf16>
    %c1_56 = arith.constant 1 : index
    %c7_57 = arith.constant 7 : index
    %c0_58 = arith.constant 0 : index
    %64 = vector.load %arg10[%c1_56, %c7_57, %c0_58] : memref<18x32x8xf32, #tpu.memory_space<vmem>>, vector<16x16x8xf32>
    %65 = vector.shape_cast %64 : vector<16x16x8xf32> to vector<256x8xf32>
    %66 = arith.truncf %65 : vector<256x8xf32> to vector<256x8xbf16>
    %c1_59 = arith.constant 1 : index
    %c8_60 = arith.constant 8 : index
    %c0_61 = arith.constant 0 : index
    %67 = vector.load %arg10[%c1_59, %c8_60, %c0_61] : memref<18x32x8xf32, #tpu.memory_space<vmem>>, vector<16x16x8xf32>
    %68 = vector.shape_cast %67 : vector<16x16x8xf32> to vector<256x8xf32>
    %69 = arith.truncf %68 : vector<256x8xf32> to vector<256x8xbf16>
    %c1_62 = arith.constant 1 : index
    %c9_63 = arith.constant 9 : index
    %c0_64 = arith.constant 0 : index
    %70 = vector.load %arg10[%c1_62, %c9_63, %c0_64] : memref<18x32x8xf32, #tpu.memory_space<vmem>>, vector<16x16x8xf32>
    %71 = vector.shape_cast %70 : vector<16x16x8xf32> to vector<256x8xf32>
    %72 = arith.truncf %71 : vector<256x8xf32> to vector<256x8xbf16>
    %c2_65 = arith.constant 2 : index
    %c7_66 = arith.constant 7 : index
    %c0_67 = arith.constant 0 : index
    %73 = vector.load %arg10[%c2_65, %c7_66, %c0_67] : memref<18x32x8xf32, #tpu.memory_space<vmem>>, vector<16x16x8xf32>
    %74 = vector.shape_cast %73 : vector<16x16x8xf32> to vector<256x8xf32>
    %75 = arith.truncf %74 : vector<256x8xf32> to vector<256x8xbf16>
    %c2_68 = arith.constant 2 : index
    %c8_69 = arith.constant 8 : index
    %c0_70 = arith.constant 0 : index
    %76 = vector.load %arg10[%c2_68, %c8_69, %c0_70] : memref<18x32x8xf32, #tpu.memory_space<vmem>>, vector<16x16x8xf32>
    %77 = vector.shape_cast %76 : vector<16x16x8xf32> to vector<256x8xf32>
    %78 = arith.truncf %77 : vector<256x8xf32> to vector<256x8xbf16>
    %c2_71 = arith.constant 2 : index
    %c9_72 = arith.constant 9 : index
    %c0_73 = arith.constant 0 : index
    %79 = vector.load %arg10[%c2_71, %c9_72, %c0_73] : memref<18x32x8xf32, #tpu.memory_space<vmem>>, vector<16x16x8xf32>
    %80 = vector.shape_cast %79 : vector<16x16x8xf32> to vector<256x8xf32>
    %81 = arith.truncf %80 : vector<256x8xf32> to vector<256x8xbf16>
    %82 = tpu.concatenate %57, %60, %63, %66, %69, %72, %75, %78, %81 in 1 : vector<256x8xbf16>, vector<256x8xbf16>, vector<256x8xbf16>, vector<256x8xbf16>, vector<256x8xbf16>, vector<256x8xbf16>, vector<256x8xbf16>, vector<256x8xbf16>, vector<256x8xbf16> -> vector<256x72xbf16>
    %c0_74 = arith.constant 0 : index
    %c0_75 = arith.constant 0 : index
    %83 = vector.load %arg4[%c0_74, %c0_75] : memref<72x8xbf16, #tpu.memory_space<vmem>>, vector<72x8xbf16>
    %cst_76 = arith.constant dense<0.000000e+00> : vector<256x8xf32>
    %84 = tpu.matmul %82, %83, %cst_76 {dimension_numbers = #tpu.dot_dimension_numbers<[1], [0], [0], [1], [0, 0, 1, 1], [], []>} : vector<256x72xbf16>, vector<72x8xbf16>, vector<256x8xf32> -> vector<256x8xf32>
    %c0_77 = arith.constant 0 : index
    %c0_78 = arith.constant 0 : index
    %85 = vector.load %arg5[%c0_77, %c0_78] : memref<1x8xf32, #tpu.memory_space<vmem>>, vector<1x8xf32>
    %86 = vector.broadcast %85 : vector<1x8xf32> to vector<256x8xf32>
    %87 = arith.addf %84, %86 : vector<256x8xf32>
    %88 = arith.mulf %87, %87 : vector<256x8xf32>
    %cst_79 = arith.constant dense<0.000000e+00> : vector<256xf32>
    %89 = vector.multi_reduction <add>, %88, %cst_79 [1] : vector<256x8xf32> to vector<256xf32>
    %90 = vector.shape_cast %89 : vector<256xf32> to vector<256x1xf32>
    %cst_80 = arith.constant 8.000000e+00 : f32
    %91 = vector.broadcast %cst_80 : f32 to vector<256x1xf32>
    %92 = arith.divf %90, %91 : vector<256x1xf32>
    %cst_81 = arith.constant 9.99999993E-9 : f32
    %93 = vector.broadcast %cst_81 : f32 to vector<256x1xf32>
    %94 = arith.addf %92, %93 : vector<256x1xf32>
    %95 = math.rsqrt %94 : vector<256x1xf32>
    %96 = vector.broadcast %95 : vector<256x1xf32> to vector<256x8xf32>
    %97 = arith.mulf %87, %96 : vector<256x8xf32>
    %cst_82 = arith.constant 2.000000e-01 : f32
    %98 = vector.broadcast %cst_82 : f32 to vector<256x8xf32>
    %99 = arith.mulf %98, %97 : vector<256x8xf32>
    %100 = arith.maximumf %97, %99 : vector<256x8xf32>
    %101 = vector.shape_cast %100 : vector<256x8xf32> to vector<16x16x8xf32>
    %cst_83 = arith.constant 0.000000e+00 : f32
    %102 = vector.broadcast %cst_83 : f32 to vector<18x32x8xf32>
    %c0_84 = arith.constant 0 : index
    %c0_85 = arith.constant 0 : index
    %c0_86 = arith.constant 0 : index
    %103 = vector.load %arg11[%c0_84, %c0_85, %c0_86] : memref<18x32x8xf32, #tpu.memory_space<vmem>>, vector<18x32x8xf32>
    tpu.vector_store %arg11[%c0_84, %c0_85, %c0_86], %102 {strides = array<i32>} : memref<18x32x8xf32, #tpu.memory_space<vmem>>, vector<18x32x8xf32>,
    %c1_87 = arith.constant 1 : index
    %c8_88 = arith.constant 8 : index
    %c0_89 = arith.constant 0 : index
    %104 = vector.load %arg11[%c1_87, %c8_88, %c0_89] : memref<18x32x8xf32, #tpu.memory_space<vmem>>, vector<16x16x8xf32>
    tpu.vector_store %arg11[%c1_87, %c8_88, %c0_89], %101 {strides = array<i32>} : memref<18x32x8xf32, #tpu.memory_space<vmem>>, vector<16x16x8xf32>,
    %c0_90 = arith.constant 0 : index
    %c7_91 = arith.constant 7 : index
    %c0_92 = arith.constant 0 : index
    %105 = vector.load %arg11[%c0_90, %c7_91, %c0_92] : memref<18x32x8xf32, #tpu.memory_space<vmem>>, vector<16x16x8xf32>
    %106 = vector.shape_cast %105 : vector<16x16x8xf32> to vector<256x8xf32>
    %107 = arith.truncf %106 : vector<256x8xf32> to vector<256x8xbf16>
    %c0_93 = arith.constant 0 : index
    %c8_94 = arith.constant 8 : index
    %c0_95 = arith.constant 0 : index
    %108 = vector.load %arg11[%c0_93, %c8_94, %c0_95] : memref<18x32x8xf32, #tpu.memory_space<vmem>>, vector<16x16x8xf32>
    %109 = vector.shape_cast %108 : vector<16x16x8xf32> to vector<256x8xf32>
    %110 = arith.truncf %109 : vector<256x8xf32> to vector<256x8xbf16>
    %c0_96 = arith.constant 0 : index
    %c9_97 = arith.constant 9 : index
    %c0_98 = arith.constant 0 : index
    %111 = vector.load %arg11[%c0_96, %c9_97, %c0_98] : memref<18x32x8xf32, #tpu.memory_space<vmem>>, vector<16x16x8xf32>
    %112 = vector.shape_cast %111 : vector<16x16x8xf32> to vector<256x8xf32>
    %113 = arith.truncf %112 : vector<256x8xf32> to vector<256x8xbf16>
    %c1_99 = arith.constant 1 : index
    %c7_100 = arith.constant 7 : index
    %c0_101 = arith.constant 0 : index
    %114 = vector.load %arg11[%c1_99, %c7_100, %c0_101] : memref<18x32x8xf32, #tpu.memory_space<vmem>>, vector<16x16x8xf32>
    %115 = vector.shape_cast %114 : vector<16x16x8xf32> to vector<256x8xf32>
    %116 = arith.truncf %115 : vector<256x8xf32> to vector<256x8xbf16>
    %c1_102 = arith.constant 1 : index
    %c8_103 = arith.constant 8 : index
    %c0_104 = arith.constant 0 : index
    %117 = vector.load %arg11[%c1_102, %c8_103, %c0_104] : memref<18x32x8xf32, #tpu.memory_space<vmem>>, vector<16x16x8xf32>
    %118 = vector.shape_cast %117 : vector<16x16x8xf32> to vector<256x8xf32>
    %119 = arith.truncf %118 : vector<256x8xf32> to vector<256x8xbf16>
    %c1_105 = arith.constant 1 : index
    %c9_106 = arith.constant 9 : index
    %c0_107 = arith.constant 0 : index
    %120 = vector.load %arg11[%c1_105, %c9_106, %c0_107] : memref<18x32x8xf32, #tpu.memory_space<vmem>>, vector<16x16x8xf32>
    %121 = vector.shape_cast %120 : vector<16x16x8xf32> to vector<256x8xf32>
    %122 = arith.truncf %121 : vector<256x8xf32> to vector<256x8xbf16>
    %c2_108 = arith.constant 2 : index
    %c7_109 = arith.constant 7 : index
    %c0_110 = arith.constant 0 : index
    %123 = vector.load %arg11[%c2_108, %c7_109, %c0_110] : memref<18x32x8xf32, #tpu.memory_space<vmem>>, vector<16x16x8xf32>
    %124 = vector.shape_cast %123 : vector<16x16x8xf32> to vector<256x8xf32>
    %125 = arith.truncf %124 : vector<256x8xf32> to vector<256x8xbf16>
    %c2_111 = arith.constant 2 : index
    %c8_112 = arith.constant 8 : index
    %c0_113 = arith.constant 0 : index
    %126 = vector.load %arg11[%c2_111, %c8_112, %c0_113] : memref<18x32x8xf32, #tpu.memory_space<vmem>>, vector<16x16x8xf32>
    %127 = vector.shape_cast %126 : vector<16x16x8xf32> to vector<256x8xf32>
    %128 = arith.truncf %127 : vector<256x8xf32> to vector<256x8xbf16>
    %c2_114 = arith.constant 2 : index
    %c9_115 = arith.constant 9 : index
    %c0_116 = arith.constant 0 : index
    %129 = vector.load %arg11[%c2_114, %c9_115, %c0_116] : memref<18x32x8xf32, #tpu.memory_space<vmem>>, vector<16x16x8xf32>
    %130 = vector.shape_cast %129 : vector<16x16x8xf32> to vector<256x8xf32>
    %131 = arith.truncf %130 : vector<256x8xf32> to vector<256x8xbf16>
    %132 = tpu.concatenate %107, %110, %113, %116, %119, %122, %125, %128, %131 in 1 : vector<256x8xbf16>, vector<256x8xbf16>, vector<256x8xbf16>, vector<256x8xbf16>, vector<256x8xbf16>, vector<256x8xbf16>, vector<256x8xbf16>, vector<256x8xbf16>, vector<256x8xbf16> -> vector<256x72xbf16>
    %c0_117 = arith.constant 0 : index
    %c0_118 = arith.constant 0 : index
    %133 = vector.load %arg6[%c0_117, %c0_118] : memref<3x72xbf16, #tpu.memory_space<vmem>>, vector<3x72xbf16>
    %cst_119 = arith.constant dense<0.000000e+00> : vector<3x256xf32>
    %134 = tpu.matmul %133, %132, %cst_119 {dimension_numbers = #tpu.dot_dimension_numbers<[1], [1], [0], [0], [0, 0, 1, 0], [], []>} : vector<3x72xbf16>, vector<256x72xbf16>, vector<3x256xf32> -> vector<3x256xf32>
    %c0_120 = arith.constant 0 : index
    %c0_121 = arith.constant 0 : index
    %135 = vector.load %arg7[%c0_120, %c0_121] : memref<3x1xf32, #tpu.memory_space<vmem>>, vector<3x1xf32>
    %136 = vector.broadcast %135 : vector<3x1xf32> to vector<3x256xf32>
    %137 = arith.addf %134, %136 : vector<3x256xf32>
    %c0_122 = arith.constant 0 : index
    %c0_123 = arith.constant 0 : index
    %c0_124 = arith.constant 0 : index
    %138 = vector.load %arg8[%c0_122, %c0_123, %c0_124] : memref<1x3x256xf32, #tpu.memory_space<vmem>>, vector<1x3x256xf32>
    %139 = vector.shape_cast %138 : vector<1x3x256xf32> to vector<3x256xf32>
    %140 = vector.shape_cast %137 : vector<3x256xf32> to vector<1x3x256xf32>
    tpu.vector_store %arg8[%c0_122, %c0_123, %c0_124], %140 {strides = array<i32>} : memref<1x3x256xf32, #tpu.memory_space<vmem>>, vector<1x3x256xf32>,
    return
  }
  func.func @transform_0(%arg0: i32) -> (i32, i32, i32, i32) {
    %c0_i32 = arith.constant 0 : i32
    %c0_i32_0 = arith.constant 0 : i32
    %c0_i32_1 = arith.constant 0 : i32
    %c0_i32_2 = arith.constant 0 : i32
    return %arg0, %c0_i32, %c0_i32_0, %c0_i32_1 : i32, i32, i32, i32
  }
  func.func @transform_1(%arg0: i32) -> (i32, i32) {
    %c0_i32 = arith.constant 0 : i32
    %c0_i32_0 = arith.constant 0 : i32
    %c0_i32_1 = arith.constant 0 : i32
    return %c0_i32, %c0_i32_0 : i32, i32
  }
  func.func @transform_2(%arg0: i32) -> (i32, i32) {
    %c0_i32 = arith.constant 0 : i32
    %c0_i32_0 = arith.constant 0 : i32
    %c0_i32_1 = arith.constant 0 : i32
    return %c0_i32, %c0_i32_0 : i32, i32
  }
  func.func @transform_3(%arg0: i32) -> (i32, i32) {
    %c0_i32 = arith.constant 0 : i32
    %c0_i32_0 = arith.constant 0 : i32
    %c0_i32_1 = arith.constant 0 : i32
    return %c0_i32, %c0_i32_0 : i32, i32
  }
  func.func @transform_4(%arg0: i32) -> (i32, i32) {
    %c0_i32 = arith.constant 0 : i32
    %c0_i32_0 = arith.constant 0 : i32
    %c0_i32_1 = arith.constant 0 : i32
    return %c0_i32, %c0_i32_0 : i32, i32
  }
  func.func @transform_5(%arg0: i32) -> (i32, i32) {
    %c0_i32 = arith.constant 0 : i32
    %c0_i32_0 = arith.constant 0 : i32
    %c0_i32_1 = arith.constant 0 : i32
    return %c0_i32, %c0_i32_0 : i32, i32
  }
  func.func @transform_6(%arg0: i32) -> (i32, i32) {
    %c0_i32 = arith.constant 0 : i32
    %c0_i32_0 = arith.constant 0 : i32
    %c0_i32_1 = arith.constant 0 : i32
    return %c0_i32, %c0_i32_0 : i32, i32
  }
  func.func @transform_7(%arg0: i32) -> (i32, i32, i32) {
    %c0_i32 = arith.constant 0 : i32
    %c0_i32_0 = arith.constant 0 : i32
    %c0_i32_1 = arith.constant 0 : i32
    return %arg0, %c0_i32, %c0_i32_0 : i32, i32, i32
  }
}

module attributes {stable_mosaic.version = 11 : i64} {
  func.func @_fallback_wsconv_kernel(%arg0: i32, %arg1: memref<1x18x18x4xf32, #tpu.memory_space<vmem>>, %arg2: memref<3x3x4x8xf32, #tpu.memory_space<vmem>>, %arg3: memref<1x8xf32, #tpu.memory_space<vmem>>, %arg4: memref<1x16x16x8xf32, #tpu.memory_space<vmem>>) attributes {dimension_semantics = [#tpu.dimension_semantics<parallel>], iteration_bounds = array<i64: 2>, scalar_prefetch = 0 : i64, scratch_operands = 0 : i64, tpu.core_type = #tpu.core_type<tc>, window_params = [{transform_indices = @transform_0, window_bounds = array<i64: 1, 18, 18, 4>}, {pipeline_mode = #tpu.pipeline_mode<synchronous>, transform_indices = @transform_1, window_bounds = array<i64: 3, 3, 4, 8>}, {pipeline_mode = #tpu.pipeline_mode<synchronous>, transform_indices = @transform_2, window_bounds = array<i64: 1, 8>}, {transform_indices = @transform_3, window_bounds = array<i64: 1, 16, 16, 8>}]} {
    %cst = arith.constant 0.000000e+00 : f32
    %0 = vector.broadcast %cst : f32 to vector<256x8xf32>
    %c0 = arith.constant 0 : index
    %c0_0 = arith.constant 0 : index
    %c0_1 = arith.constant 0 : index
    %c0_2 = arith.constant 0 : index
    %1 = vector.load %arg1[%c0, %c0_0, %c0_1, %c0_2] : memref<1x18x18x4xf32, #tpu.memory_space<vmem>>, vector<1x16x16x4xf32>
    %2 = vector.shape_cast %1 : vector<1x16x16x4xf32> to vector<16x16x4xf32>
    %3 = vector.shape_cast %2 : vector<16x16x4xf32> to vector<256x4xf32>
    %c0_3 = arith.constant 0 : index
    %c0_4 = arith.constant 0 : index
    %c0_5 = arith.constant 0 : index
    %c0_6 = arith.constant 0 : index
    %4 = vector.load %arg2[%c0_3, %c0_4, %c0_5, %c0_6] : memref<3x3x4x8xf32, #tpu.memory_space<vmem>>, vector<1x1x4x8xf32>
    %5 = vector.shape_cast %4 : vector<1x1x4x8xf32> to vector<4x8xf32>
    %cst_7 = arith.constant dense<0.000000e+00> : vector<256x8xf32>
    %6 = tpu.matmul %3, %5, %cst_7 {dimension_numbers = #tpu.dot_dimension_numbers<[1], [0], [0], [1], [0, 0, 1, 1], [], []>} : vector<256x4xf32>, vector<4x8xf32>, vector<256x8xf32> -> vector<256x8xf32>
    %7 = arith.addf %0, %6 : vector<256x8xf32>
    %c0_8 = arith.constant 0 : index
    %c0_9 = arith.constant 0 : index
    %c1 = arith.constant 1 : index
    %c0_10 = arith.constant 0 : index
    %8 = vector.load %arg1[%c0_8, %c0_9, %c1, %c0_10] : memref<1x18x18x4xf32, #tpu.memory_space<vmem>>, vector<1x16x16x4xf32>
    %9 = vector.shape_cast %8 : vector<1x16x16x4xf32> to vector<16x16x4xf32>
    %10 = vector.shape_cast %9 : vector<16x16x4xf32> to vector<256x4xf32>
    %c0_11 = arith.constant 0 : index
    %c1_12 = arith.constant 1 : index
    %c0_13 = arith.constant 0 : index
    %c0_14 = arith.constant 0 : index
    %11 = vector.load %arg2[%c0_11, %c1_12, %c0_13, %c0_14] : memref<3x3x4x8xf32, #tpu.memory_space<vmem>>, vector<1x1x4x8xf32>
    %12 = vector.shape_cast %11 : vector<1x1x4x8xf32> to vector<4x8xf32>
    %cst_15 = arith.constant dense<0.000000e+00> : vector<256x8xf32>
    %13 = tpu.matmul %10, %12, %cst_15 {dimension_numbers = #tpu.dot_dimension_numbers<[1], [0], [0], [1], [0, 0, 1, 1], [], []>} : vector<256x4xf32>, vector<4x8xf32>, vector<256x8xf32> -> vector<256x8xf32>
    %14 = arith.addf %7, %13 : vector<256x8xf32>
    %c0_16 = arith.constant 0 : index
    %c0_17 = arith.constant 0 : index
    %c2 = arith.constant 2 : index
    %c0_18 = arith.constant 0 : index
    %15 = vector.load %arg1[%c0_16, %c0_17, %c2, %c0_18] : memref<1x18x18x4xf32, #tpu.memory_space<vmem>>, vector<1x16x16x4xf32>
    %16 = vector.shape_cast %15 : vector<1x16x16x4xf32> to vector<16x16x4xf32>
    %17 = vector.shape_cast %16 : vector<16x16x4xf32> to vector<256x4xf32>
    %c0_19 = arith.constant 0 : index
    %c2_20 = arith.constant 2 : index
    %c0_21 = arith.constant 0 : index
    %c0_22 = arith.constant 0 : index
    %18 = vector.load %arg2[%c0_19, %c2_20, %c0_21, %c0_22] : memref<3x3x4x8xf32, #tpu.memory_space<vmem>>, vector<1x1x4x8xf32>
    %19 = vector.shape_cast %18 : vector<1x1x4x8xf32> to vector<4x8xf32>
    %cst_23 = arith.constant dense<0.000000e+00> : vector<256x8xf32>
    %20 = tpu.matmul %17, %19, %cst_23 {dimension_numbers = #tpu.dot_dimension_numbers<[1], [0], [0], [1], [0, 0, 1, 1], [], []>} : vector<256x4xf32>, vector<4x8xf32>, vector<256x8xf32> -> vector<256x8xf32>
    %21 = arith.addf %14, %20 : vector<256x8xf32>
    %c0_24 = arith.constant 0 : index
    %c1_25 = arith.constant 1 : index
    %c0_26 = arith.constant 0 : index
    %c0_27 = arith.constant 0 : index
    %22 = vector.load %arg1[%c0_24, %c1_25, %c0_26, %c0_27] : memref<1x18x18x4xf32, #tpu.memory_space<vmem>>, vector<1x16x16x4xf32>
    %23 = vector.shape_cast %22 : vector<1x16x16x4xf32> to vector<16x16x4xf32>
    %24 = vector.shape_cast %23 : vector<16x16x4xf32> to vector<256x4xf32>
    %c1_28 = arith.constant 1 : index
    %c0_29 = arith.constant 0 : index
    %c0_30 = arith.constant 0 : index
    %c0_31 = arith.constant 0 : index
    %25 = vector.load %arg2[%c1_28, %c0_29, %c0_30, %c0_31] : memref<3x3x4x8xf32, #tpu.memory_space<vmem>>, vector<1x1x4x8xf32>
    %26 = vector.shape_cast %25 : vector<1x1x4x8xf32> to vector<4x8xf32>
    %cst_32 = arith.constant dense<0.000000e+00> : vector<256x8xf32>
    %27 = tpu.matmul %24, %26, %cst_32 {dimension_numbers = #tpu.dot_dimension_numbers<[1], [0], [0], [1], [0, 0, 1, 1], [], []>} : vector<256x4xf32>, vector<4x8xf32>, vector<256x8xf32> -> vector<256x8xf32>
    %28 = arith.addf %21, %27 : vector<256x8xf32>
    %c0_33 = arith.constant 0 : index
    %c1_34 = arith.constant 1 : index
    %c1_35 = arith.constant 1 : index
    %c0_36 = arith.constant 0 : index
    %29 = vector.load %arg1[%c0_33, %c1_34, %c1_35, %c0_36] : memref<1x18x18x4xf32, #tpu.memory_space<vmem>>, vector<1x16x16x4xf32>
    %30 = vector.shape_cast %29 : vector<1x16x16x4xf32> to vector<16x16x4xf32>
    %31 = vector.shape_cast %30 : vector<16x16x4xf32> to vector<256x4xf32>
    %c1_37 = arith.constant 1 : index
    %c1_38 = arith.constant 1 : index
    %c0_39 = arith.constant 0 : index
    %c0_40 = arith.constant 0 : index
    %32 = vector.load %arg2[%c1_37, %c1_38, %c0_39, %c0_40] : memref<3x3x4x8xf32, #tpu.memory_space<vmem>>, vector<1x1x4x8xf32>
    %33 = vector.shape_cast %32 : vector<1x1x4x8xf32> to vector<4x8xf32>
    %cst_41 = arith.constant dense<0.000000e+00> : vector<256x8xf32>
    %34 = tpu.matmul %31, %33, %cst_41 {dimension_numbers = #tpu.dot_dimension_numbers<[1], [0], [0], [1], [0, 0, 1, 1], [], []>} : vector<256x4xf32>, vector<4x8xf32>, vector<256x8xf32> -> vector<256x8xf32>
    %35 = arith.addf %28, %34 : vector<256x8xf32>
    %c0_42 = arith.constant 0 : index
    %c1_43 = arith.constant 1 : index
    %c2_44 = arith.constant 2 : index
    %c0_45 = arith.constant 0 : index
    %36 = vector.load %arg1[%c0_42, %c1_43, %c2_44, %c0_45] : memref<1x18x18x4xf32, #tpu.memory_space<vmem>>, vector<1x16x16x4xf32>
    %37 = vector.shape_cast %36 : vector<1x16x16x4xf32> to vector<16x16x4xf32>
    %38 = vector.shape_cast %37 : vector<16x16x4xf32> to vector<256x4xf32>
    %c1_46 = arith.constant 1 : index
    %c2_47 = arith.constant 2 : index
    %c0_48 = arith.constant 0 : index
    %c0_49 = arith.constant 0 : index
    %39 = vector.load %arg2[%c1_46, %c2_47, %c0_48, %c0_49] : memref<3x3x4x8xf32, #tpu.memory_space<vmem>>, vector<1x1x4x8xf32>
    %40 = vector.shape_cast %39 : vector<1x1x4x8xf32> to vector<4x8xf32>
    %cst_50 = arith.constant dense<0.000000e+00> : vector<256x8xf32>
    %41 = tpu.matmul %38, %40, %cst_50 {dimension_numbers = #tpu.dot_dimension_numbers<[1], [0], [0], [1], [0, 0, 1, 1], [], []>} : vector<256x4xf32>, vector<4x8xf32>, vector<256x8xf32> -> vector<256x8xf32>
    %42 = arith.addf %35, %41 : vector<256x8xf32>
    %c0_51 = arith.constant 0 : index
    %c2_52 = arith.constant 2 : index
    %c0_53 = arith.constant 0 : index
    %c0_54 = arith.constant 0 : index
    %43 = vector.load %arg1[%c0_51, %c2_52, %c0_53, %c0_54] : memref<1x18x18x4xf32, #tpu.memory_space<vmem>>, vector<1x16x16x4xf32>
    %44 = vector.shape_cast %43 : vector<1x16x16x4xf32> to vector<16x16x4xf32>
    %45 = vector.shape_cast %44 : vector<16x16x4xf32> to vector<256x4xf32>
    %c2_55 = arith.constant 2 : index
    %c0_56 = arith.constant 0 : index
    %c0_57 = arith.constant 0 : index
    %c0_58 = arith.constant 0 : index
    %46 = vector.load %arg2[%c2_55, %c0_56, %c0_57, %c0_58] : memref<3x3x4x8xf32, #tpu.memory_space<vmem>>, vector<1x1x4x8xf32>
    %47 = vector.shape_cast %46 : vector<1x1x4x8xf32> to vector<4x8xf32>
    %cst_59 = arith.constant dense<0.000000e+00> : vector<256x8xf32>
    %48 = tpu.matmul %45, %47, %cst_59 {dimension_numbers = #tpu.dot_dimension_numbers<[1], [0], [0], [1], [0, 0, 1, 1], [], []>} : vector<256x4xf32>, vector<4x8xf32>, vector<256x8xf32> -> vector<256x8xf32>
    %49 = arith.addf %42, %48 : vector<256x8xf32>
    %c0_60 = arith.constant 0 : index
    %c2_61 = arith.constant 2 : index
    %c1_62 = arith.constant 1 : index
    %c0_63 = arith.constant 0 : index
    %50 = vector.load %arg1[%c0_60, %c2_61, %c1_62, %c0_63] : memref<1x18x18x4xf32, #tpu.memory_space<vmem>>, vector<1x16x16x4xf32>
    %51 = vector.shape_cast %50 : vector<1x16x16x4xf32> to vector<16x16x4xf32>
    %52 = vector.shape_cast %51 : vector<16x16x4xf32> to vector<256x4xf32>
    %c2_64 = arith.constant 2 : index
    %c1_65 = arith.constant 1 : index
    %c0_66 = arith.constant 0 : index
    %c0_67 = arith.constant 0 : index
    %53 = vector.load %arg2[%c2_64, %c1_65, %c0_66, %c0_67] : memref<3x3x4x8xf32, #tpu.memory_space<vmem>>, vector<1x1x4x8xf32>
    %54 = vector.shape_cast %53 : vector<1x1x4x8xf32> to vector<4x8xf32>
    %cst_68 = arith.constant dense<0.000000e+00> : vector<256x8xf32>
    %55 = tpu.matmul %52, %54, %cst_68 {dimension_numbers = #tpu.dot_dimension_numbers<[1], [0], [0], [1], [0, 0, 1, 1], [], []>} : vector<256x4xf32>, vector<4x8xf32>, vector<256x8xf32> -> vector<256x8xf32>
    %56 = arith.addf %49, %55 : vector<256x8xf32>
    %c0_69 = arith.constant 0 : index
    %c2_70 = arith.constant 2 : index
    %c2_71 = arith.constant 2 : index
    %c0_72 = arith.constant 0 : index
    %57 = vector.load %arg1[%c0_69, %c2_70, %c2_71, %c0_72] : memref<1x18x18x4xf32, #tpu.memory_space<vmem>>, vector<1x16x16x4xf32>
    %58 = vector.shape_cast %57 : vector<1x16x16x4xf32> to vector<16x16x4xf32>
    %59 = vector.shape_cast %58 : vector<16x16x4xf32> to vector<256x4xf32>
    %c2_73 = arith.constant 2 : index
    %c2_74 = arith.constant 2 : index
    %c0_75 = arith.constant 0 : index
    %c0_76 = arith.constant 0 : index
    %60 = vector.load %arg2[%c2_73, %c2_74, %c0_75, %c0_76] : memref<3x3x4x8xf32, #tpu.memory_space<vmem>>, vector<1x1x4x8xf32>
    %61 = vector.shape_cast %60 : vector<1x1x4x8xf32> to vector<4x8xf32>
    %cst_77 = arith.constant dense<0.000000e+00> : vector<256x8xf32>
    %62 = tpu.matmul %59, %61, %cst_77 {dimension_numbers = #tpu.dot_dimension_numbers<[1], [0], [0], [1], [0, 0, 1, 1], [], []>} : vector<256x4xf32>, vector<4x8xf32>, vector<256x8xf32> -> vector<256x8xf32>
    %63 = arith.addf %56, %62 : vector<256x8xf32>
    %c0_78 = arith.constant 0 : index
    %c0_79 = arith.constant 0 : index
    %64 = vector.load %arg3[%c0_78, %c0_79] : memref<1x8xf32, #tpu.memory_space<vmem>>, vector<1x8xf32>
    %65 = vector.broadcast %64 : vector<1x8xf32> to vector<256x8xf32>
    %66 = arith.addf %63, %65 : vector<256x8xf32>
    %67 = arith.mulf %66, %66 : vector<256x8xf32>
    %cst_80 = arith.constant dense<0.000000e+00> : vector<256xf32>
    %68 = vector.multi_reduction <add>, %67, %cst_80 [1] : vector<256x8xf32> to vector<256xf32>
    %69 = vector.shape_cast %68 : vector<256xf32> to vector<256x1xf32>
    %cst_81 = arith.constant 8.000000e+00 : f32
    %70 = vector.broadcast %cst_81 : f32 to vector<256x1xf32>
    %71 = arith.divf %69, %70 : vector<256x1xf32>
    %cst_82 = arith.constant 9.99999993E-9 : f32
    %72 = vector.broadcast %cst_82 : f32 to vector<256x1xf32>
    %73 = arith.addf %71, %72 : vector<256x1xf32>
    %74 = math.rsqrt %73 : vector<256x1xf32>
    %75 = vector.broadcast %74 : vector<256x1xf32> to vector<256x8xf32>
    %76 = arith.mulf %66, %75 : vector<256x8xf32>
    %cst_83 = arith.constant 2.000000e-01 : f32
    %77 = vector.broadcast %cst_83 : f32 to vector<256x8xf32>
    %78 = arith.mulf %77, %76 : vector<256x8xf32>
    %79 = arith.maximumf %76, %78 : vector<256x8xf32>
    %80 = vector.shape_cast %79 : vector<256x8xf32> to vector<1x16x16x8xf32>
    %c0_84 = arith.constant 0 : index
    %c0_85 = arith.constant 0 : index
    %c0_86 = arith.constant 0 : index
    %c0_87 = arith.constant 0 : index
    %81 = vector.load %arg4[%c0_84, %c0_85, %c0_86, %c0_87] : memref<1x16x16x8xf32, #tpu.memory_space<vmem>>, vector<1x16x16x8xf32>
    tpu.vector_store %arg4[%c0_84, %c0_85, %c0_86, %c0_87], %80 {strides = array<i32>} : memref<1x16x16x8xf32, #tpu.memory_space<vmem>>, vector<1x16x16x8xf32>,
    return
  }
  func.func @transform_0(%arg0: i32) -> (i32, i32, i32, i32) {
    %c0_i32 = arith.constant 0 : i32
    %c0_i32_0 = arith.constant 0 : i32
    %c0_i32_1 = arith.constant 0 : i32
    %c0_i32_2 = arith.constant 0 : i32
    return %arg0, %c0_i32, %c0_i32_0, %c0_i32_1 : i32, i32, i32, i32
  }
  func.func @transform_1(%arg0: i32) -> (i32, i32, i32, i32) {
    %c0_i32 = arith.constant 0 : i32
    %c0_i32_0 = arith.constant 0 : i32
    %c0_i32_1 = arith.constant 0 : i32
    %c0_i32_2 = arith.constant 0 : i32
    %c0_i32_3 = arith.constant 0 : i32
    return %c0_i32, %c0_i32_0, %c0_i32_1, %c0_i32_2 : i32, i32, i32, i32
  }
  func.func @transform_2(%arg0: i32) -> (i32, i32) {
    %c0_i32 = arith.constant 0 : i32
    %c0_i32_0 = arith.constant 0 : i32
    %c0_i32_1 = arith.constant 0 : i32
    return %c0_i32, %c0_i32_0 : i32, i32
  }
  func.func @transform_3(%arg0: i32) -> (i32, i32, i32, i32) {
    %c0_i32 = arith.constant 0 : i32
    %c0_i32_0 = arith.constant 0 : i32
    %c0_i32_1 = arith.constant 0 : i32
    %c0_i32_2 = arith.constant 0 : i32
    return %arg0, %c0_i32, %c0_i32_0, %c0_i32_1 : i32, i32, i32, i32
  }
}

</mosaic_0001>

<llo_original>
// kernel: tpu_custom_call.1
$region0: #{tpu_custom_call.1}
  #allocation0 [shape = 'u32[]', space=smem, size = 0x4, offset = 0x4, fixed_abs, tag = 'smem constant byte address 0x4 - core index']
  #allocation1 [shape = 'u32[144,128]{1,0:T(1,128)}', space=vmem, size = 0x12000, scoped, tag = 'internal scratch']
  #allocation2 [shape = 'f32[18,32,4]{2,1,0:T(8,128)}', space=vmem, size = 0x48000, scoped, tag = 'scratch operand']
  #allocation3 [shape = 'f32[18,32,8]{2,1,0:T(8,128)}', space=vmem, size = 0x48000, scoped, tag = 'scratch operand']
  #allocation4 [shape = 'f32[18,32,8]{2,1,0:T(8,128)}', space=vmem, size = 0x48000, scoped, tag = 'scratch operand']
  %s0 = inlined_call_operand.vmem [shape: f32[2,16,16,4], index: 0, kind: input, shape index: {}]
  %s1 = inlined_call_operand.vmem [shape: bf16[36,8], index: 1, kind: input, shape index: {}]
  %s2 = inlined_call_operand.vmem [shape: f32[1,8], index: 2, kind: input, shape index: {}]
  %s3 = inlined_call_operand.vmem [shape: bf16[72,8], index: 3, kind: input, shape index: {}]
  %s4 = inlined_call_operand.vmem [shape: f32[1,8], index: 4, kind: input, shape index: {}]
  %s5 = inlined_call_operand.vmem [shape: bf16[3,72], index: 5, kind: input, shape index: {}]
  %s6 = inlined_call_operand.vmem [shape: f32[3,1], index: 6, kind: input, shape index: {}]
  %s7 = inlined_call_operand.vmem [shape: f32[2,3,256], index: 7, kind: output, shape index: {}]
  %s8 = sld [smem:[#allocation0]]
  $region61: #{tpu_custom_call.1} parent=0
    _
  %s10 = ssub.s32 1, %s8
  %s11 = scalar_select 0, %s10, %s8
  loop: start=0, step=1, limit=4
  $region2: #{tpu_custom_call.1} parent=0 // loop_pre_header
    _
  $region3: #{tpu_custom_call.1} parent=0 // loop_header
    %s13 = sphi 0, %s17
    %p14 = scmp.ge.s32.totalorder %s13, 4
    %s23 = sphi 0, %s25
    %s26 = sphi 0, %s23
    %s27 = sphi 0, %s26
    %s43 = sphi 0, %s27
    %s47 = sphi 0, %s47
    %s49 = sphi 0, %s47
    %s50 = sphi 0, %s49
    %s64 = sphi 0, %s50
    %s68 = sphi 0, %s68
    %s70 = sphi 0, %s68
    %s71 = sphi 0, %s70
    %s85 = sphi 0, %s71
    %s89 = sphi 0, %s89
    %s91 = sphi 0, %s89
    %s92 = sphi 0, %s91
    %s106 = sphi 0, %s92
    %s110 = sphi 0, %s110
    %s112 = sphi 0, %s110
    %s113 = sphi 0, %s112
    %s127 = sphi 0, %s113
    %s131 = sphi 0, %s131
    %s133 = sphi 0, %s131
    %s134 = sphi 0, %s133
    %s148 = sphi 0, %s134
    %s152 = sphi 0, %s152
    %s154 = sphi 0, %s152
    %s155 = sphi 0, %s154
    %s169 = sphi 0, %s155
    %s175 = sphi 0, %s177
    %s178 = sphi 0, %s175
    %s179 = sphi 0, %s178
    %s195 = sphi 0, %s179
  $region4: #{tpu_custom_call.1} parent=0 // loop_header_branch
    %16 = sbr.rel (%p14) target = $region8
  $region5: #{tpu_custom_call.1} parent=0 // loop_body
    %s18 = ssub.s32 %s13, 1
    %s19 = ssub.s32 %s13, 2
    %s20 = sadd.s32 %s13, 1
    %s21 = ssub.s32 %s13, %s20
    %p22 = scmp.eq.s32.totalorder %s21, 0
    %s24 = sadd.s32 %s23, 1
    %s25 = scalar_select %p22, %s23, %s24
    %p28 = pneg %p22
    %p29 = scmp.eq.s32.totalorder %s13, 1
    %p30 = por %p28, %p29
    %p31 = scmp.ne.s32.totalorder %s23, %s26
    %p32 = scmp.eq.s32.totalorder %s13, 0
    %p33 = por %p31, %p32
    %p34 = scmp.ne.s32.totalorder %s23, %s26
    %p35 = scmp.eq.s32.totalorder %s18, 1
    %p36 = por %p34, %p35
    %p37 = scmp.ne.s32.totalorder %s26, %s27
    %p38 = scmp.eq.s32.totalorder %s18, 0
    %p39 = por %p37, %p38
    %p40 = scmp.ne.s32.totalorder %s26, %s27
    %p41 = scmp.eq.s32.totalorder %s19, 1
    %p42 = por %p40, %p41
    %p44 = scmp.ne.s32.totalorder %s27, %s43
    %p45 = scmp.eq.s32.totalorder %s19, 0
    %p46 = por %p44, %p45
    %s48 = sadd.s32 %s47, 1
    %p51 = scmp.eq.s32.totalorder %s13, 1
    %p52 = scmp.ne.s32.totalorder %s47, %s49
    %p53 = scmp.eq.s32.totalorder %s13, 0
    %p54 = por %p52, %p53
    %p55 = scmp.ne.s32.totalorder %s47, %s49
    %p56 = scmp.eq.s32.totalorder %s18, 1
    %p57 = por %p55, %p56
    %p58 = scmp.ne.s32.totalorder %s49, %s50
    %p59 = scmp.eq.s32.totalorder %s18, 0
    %p60 = por %p58, %p59
    %p61 = scmp.ne.s32.totalorder %s49, %s50
    %p62 = scmp.eq.s32.totalorder %s19, 1
    %p63 = por %p61, %p62
    %p65 = scmp.ne.s32.totalorder %s50, %s64
    %p66 = scmp.eq.s32.totalorder %s19, 0
    %p67 = por %p65, %p66
    %s69 = sadd.s32 %s68, 1
    %p72 = scmp.eq.s32.totalorder %s13, 1
    %p73 = scmp.ne.s32.totalorder %s68, %s70
    %p74 = scmp.eq.s32.totalorder %s13, 0
    %p75 = por %p73, %p74
    %p76 = scmp.ne.s32.totalorder %s68, %s70
    %p77 = scmp.eq.s32.totalorder %s18, 1
    %p78 = por %p76, %p77
    %p79 = scmp.ne.s32.totalorder %s70, %s71
    %p80 = scmp.eq.s32.totalorder %s18, 0
    %p81 = por %p79, %p80
    %p82 = scmp.ne.s32.totalorder %s70, %s71
    %p83 = scmp.eq.s32.totalorder %s19, 1
    %p84 = por %p82, %p83
    %p86 = scmp.ne.s32.totalorder %s71, %s85
    %p87 = scmp.eq.s32.totalorder %s19, 0
    %p88 = por %p86, %p87
    %s90 = sadd.s32 %s89, 1
    %p93 = scmp.eq.s32.totalorder %s13, 1
    %p94 = scmp.ne.s32.totalorder %s89, %s91
    %p95 = scmp.eq.s32.totalorder %s13, 0
    %p96 = por %p94, %p95
    %p97 = scmp.ne.s32.totalorder %s89, %s91
    %p98 = scmp.eq.s32.totalorder %s18, 1
    %p99 = por %p97, %p98
    %p100 = scmp.ne.s32.totalorder %s91, %s92
    %p101 = scmp.eq.s32.totalorder %s18, 0
    %p102 = por %p100, %p101
    %p103 = scmp.ne.s32.totalorder %s91, %s92
    %p104 = scmp.eq.s32.totalorder %s19, 1
    %p105 = por %p103, %p104
    %p107 = scmp.ne.s32.totalorder %s92, %s106
    %p108 = scmp.eq.s32.totalorder %s19, 0
    %p109 = por %p107, %p108
    %s111 = sadd.s32 %s110, 1
    %p114 = scmp.eq.s32.totalorder %s13, 1
    %p115 = scmp.ne.s32.totalorder %s110, %s112
    %p116 = scmp.eq.s32.totalorder %s13, 0
    %p117 = por %p115, %p116
    %p118 = scmp.ne.s32.totalorder %s110, %s112
    %p119 = scmp.eq.s32.totalorder %s18, 1
    %p120 = por %p118, %p119
    %p121 = scmp.ne.s32.totalorder %s112, %s113
    %p122 = scmp.eq.s32.totalorder %s18, 0
    %p123 = por %p121, %p122
    %p124 = scmp.ne.s32.totalorder %s112, %s113
    %p125 = scmp.eq.s32.totalorder %s19, 1
    %p126 = por %p124, %p125
    %p128 = scmp.ne.s32.totalorder %s113, %s127
    %p129 = scmp.eq.s32.totalorder %s19, 0
    %p130 = por %p128, %p129
    %s132 = sadd.s32 %s131, 1
    %p135 = scmp.eq.s32.totalorder %s13, 1
    %p136 = scmp.ne.s32.totalorder %s131, %s133
    %p137 = scmp.eq.s32.totalorder %s13, 0
    %p138 = por %p136, %p137
    %p139 = scmp.ne.s32.totalorder %s131, %s133
    %p140 = scmp.eq.s32.totalorder %s18, 1
    %p141 = por %p139, %p140
    %p142 = scmp.ne.s32.totalorder %s133, %s134
    %p143 = scmp.eq.s32.totalorder %s18, 0
    %p144 = por %p142, %p143
    %p145 = scmp.ne.s32.totalorder %s133, %s134
    %p146 = scmp.eq.s32.totalorder %s19, 1
    %p147 = por %p145, %p146
    %p149 = scmp.ne.s32.totalorder %s134, %s148
    %p150 = scmp.eq.s32.totalorder %s19, 0
    %p151 = por %p149, %p150
    %s153 = sadd.s32 %s152, 1
    %p156 = scmp.eq.s32.totalorder %s13, 1
    %p157 = scmp.ne.s32.totalorder %s152, %s154
    %p158 = scmp.eq.s32.totalorder %s13, 0
    %p159 = por %p157, %p158
    %p160 = scmp.ne.s32.totalorder %s152, %s154
    %p161 = scmp.eq.s32.totalorder %s18, 1
    %p162 = por %p160, %p161
    %p163 = scmp.ne.s32.totalorder %s154, %s155
    %p164 = scmp.eq.s32.totalorder %s18, 0
    %p165 = por %p163, %p164
    %p166 = scmp.ne.s32.totalorder %s154, %s155
    %p167 = scmp.eq.s32.totalorder %s19, 1
    %p168 = por %p166, %p167
    %p170 = scmp.ne.s32.totalorder %s155, %s169
    %p171 = scmp.eq.s32.totalorder %s19, 0
    %p172 = por %p170, %p171
    %s173 = ssub.s32 %s13, %s20
    %p174 = scmp.eq.s32.totalorder %s173, 0
    %s176 = sadd.s32 %s175, 1
    %s177 = scalar_select %p174, %s175, %s176
    %p180 = pneg %p174
    %p181 = scmp.eq.s32.totalorder %s13, 1
    %p182 = por %p180, %p181
    %p183 = scmp.ne.s32.totalorder %s175, %s178
    %p184 = scmp.eq.s32.totalorder %s13, 0
    %p185 = por %p183, %p184
    %p186 = scmp.ne.s32.totalorder %s175, %s178
    %p187 = scmp.eq.s32.totalorder %s18, 1
    %p188 = por %p186, %p187
    %p189 = scmp.ne.s32.totalorder %s178, %s179
    %p190 = scmp.eq.s32.totalorder %s18, 0
    %p191 = por %p189, %p190
    %p192 = scmp.ne.s32.totalorder %s178, %s179
    %p193 = scmp.eq.s32.totalorder %s19, 1
    %p194 = por %p192, %p193
    %p196 = scmp.ne.s32.totalorder %s179, %s195
    %p197 = scmp.eq.s32.totalorder %s19, 0
    %p198 = por %p196, %p197
    %p199 = scmp.le.s32.totalorder 1, %s13
    %p200 = scmp.lt.s32.totalorder %s13, 3
    %p201 = pnand %p199, %p200
    %p202 = pneg %p201
    // Predicated region
    $region9: #{tpu_custom_call.1} parent=5 // pred_check
      _
    $region10: #{tpu_custom_call.1} parent=5 // pred_check_branch
      %204 = sbr.rel (%p201) target = $region12
    $region11: #{tpu_custom_call.1} parent=5 // pred_region
      %s205 = ssub.s32 %s13, 1
      // Predicated region
      $region13: #{tpu_custom_call.1} parent=11 // pred_check
        %p206 = pneg %p60
      $region14: #{tpu_custom_call.1} parent=11 // pred_check_branch
        %208 = sbr.rel (%p206) target = $region16
      $region15: #{tpu_custom_call.1} parent=11 // pred_region
        _
      $region16: #{tpu_custom_call.1} parent=11 // pred_fallthru
        _
      // Predicated region
      $region17: #{tpu_custom_call.1} parent=11 // pred_check
        %p209 = pneg %p81
      $region18: #{tpu_custom_call.1} parent=11 // pred_check_branch
        %211 = sbr.rel (%p209) target = $region20
      $region19: #{tpu_custom_call.1} parent=11 // pred_region
        _
      $region20: #{tpu_custom_call.1} parent=11 // pred_fallthru
        _
      // Predicated region
      $region21: #{tpu_custom_call.1} parent=11 // pred_check
        %p212 = pneg %p102
      $region22: #{tpu_custom_call.1} parent=11 // pred_check_branch
        %214 = sbr.rel (%p212) target = $region24
      $region23: #{tpu_custom_call.1} parent=11 // pred_region
        _
      $region24: #{tpu_custom_call.1} parent=11 // pred_fallthru
        _
      // Predicated region
      $region25: #{tpu_custom_call.1} parent=11 // pred_check
        %p215 = pneg %p123
      $region26: #{tpu_custom_call.1} parent=11 // pred_check_branch
        %217 = sbr.rel (%p215) target = $region28
      $region27: #{tpu_custom_call.1} parent=11 // pred_region
        _
      $region28: #{tpu_custom_call.1} parent=11 // pred_fallthru
        _
      // Predicated region
      $region29: #{tpu_custom_call.1} parent=11 // pred_check
        %p218 = pneg %p144
      $region30: #{tpu_custom_call.1} parent=11 // pred_check_branch
        %220 = sbr.rel (%p218) target = $region32
      $region31: #{tpu_custom_call.1} parent=11 // pred_region
        _
      $region32: #{tpu_custom_call.1} parent=11 // pred_fallthru
        _
      // Predicated region
      $region33: #{tpu_custom_call.1} parent=11 // pred_check
        %p221 = pneg %p165
      $region34: #{tpu_custom_call.1} parent=11 // pred_check_branch
        %223 = sbr.rel (%p221) target = $region36
      $region35: #{tpu_custom_call.1} parent=11 // pred_region
        _
      $region36: #{tpu_custom_call.1} parent=11 // pred_fallthru
        _
    $region12: #{tpu_custom_call.1} parent=5 // pred_fallthru
      _
    %p224 = scmp.lt.s32.totalorder %s13, 2
    // Predicated region
    $region37: #{tpu_custom_call.1} parent=5 // pred_check
      %p225 = pneg %p224
    $region38: #{tpu_custom_call.1} parent=5 // pred_check_branch
      %227 = sbr.rel (%p225) target = $region40
    $region39: #{tpu_custom_call.1} parent=5 // pred_region
      // Predicated region
      $region41: #{tpu_custom_call.1} parent=39 // pred_check
        %p228 = pneg %p33
      $region42: #{tpu_custom_call.1} parent=39 // pred_check_branch
        %230 = sbr.rel (%p228) target = $region44
      $region43: #{tpu_custom_call.1} parent=39 // pred_region
        %p231 = scmp.lt.s32.totalorder %s13, 1
        %s232 = scalar_select %p231, %s13, 1
        %s233 = smul.addr %s232, 32
        %s234 = smul.addr %s233, 8
        %s235 = scalar_lea.vmem %s0, %s234
      $region44: #{tpu_custom_call.1} parent=39 // pred_fallthru
        _
    $region40: #{tpu_custom_call.1} parent=5 // pred_fallthru
      _
    %p236 = scmp.le.s32.totalorder 1, %s13
    %p237 = scmp.lt.s32.totalorder %s13, 3
    %p238 = pnand %p236, %p237
    %p239 = pneg %p238
    // Predicated region
    $region45: #{tpu_custom_call.1} parent=5 // pred_check
      _
    $region46: #{tpu_custom_call.1} parent=5 // pred_check_branch
      %241 = sbr.rel (%p238) target = $region48
    $region47: #{tpu_custom_call.1} parent=5 // pred_region
      %s242 = ssub.s32 %s13, 1
      %p243 = scmp.lt.s32.totalorder %s18, 1
      %s244 = scalar_select %p243, %s18, 1
      %s245 = smul.addr %s244, 32
      %s246 = smul.addr %s245, 8
      %s247 = scalar_lea.vmem %s0, %s246
      %p248 = pneg %p39
      %p249 = pneg %p36
      %p250 = pneg %p60
      %p251 = pneg %p57
      %p252 = pneg %p81
      %p253 = pneg %p78
      %p254 = pneg %p102
      %p255 = pneg %p99
      %p256 = pneg %p123
      %p257 = pneg %p120
      %p258 = pneg %p144
      %p259 = pneg %p141
      %p260 = pneg %p165
      %p261 = pneg %p162
      %p262 = pneg %p191
      %p263 = pneg %p188
      %p264 = scmp.lt.s32.totalorder %s18, 1
      %s265 = scalar_select %p264, %s18, 1
      %s266 = smul.addr %s265, 2
      %s267 = smul.addr %s266, 4
      %s268 = scalar_lea.vmem %s7, %s267
      %p269 = scmp.lt.s32.totalorder %s18, 1
      %s270 = scalar_select %p269, %s18, 1
      %s271 = smul.addr %s270, 32
      %s272 = smul.addr %s271, 8
      %s273 = scalar_lea.vmem %s0, %s272
      %p274 = scmp.lt.s32.totalorder %s18, 1
      %s275 = scalar_select %p274, %s18, 1
      %s276 = smul.addr %s275, 2
      %s277 = smul.addr %s276, 4
      %s278 = scalar_lea.vmem %s7, %s277
      %v280 = vld [vmem:[%s273] sm:$0xff]
      %v281 = vld [vmem:[%s273 + $0x8] sm:$0xff]
      %v282 = vld [vmem:[%s273 + $0x10] sm:$0xff]
      %v283 = vld [vmem:[%s273 + $0x18] sm:$0xff]
      %v284 = vld [vmem:[%s273 + $0x20] sm:$0xff]
      %v285 = vld [vmem:[%s273 + $0x28] sm:$0xff]
      %v286 = vld [vmem:[%s273 + $0x30] sm:$0xff]
      %v287 = vld [vmem:[%s273 + $0x38] sm:$0xff]
      %v288 = vld [vmem:[%s273 + $0x40] sm:$0xff]
      %v289 = vld [vmem:[%s273 + $0x48] sm:$0xff]
      %v290 = vld [vmem:[%s273 + $0x50] sm:$0xff]
      %v291 = vld [vmem:[%s273 + $0x58] sm:$0xff]
      %v292 = vld [vmem:[%s273 + $0x60] sm:$0xff]
      %v293 = vld [vmem:[%s273 + $0x68] sm:$0xff]
      %v294 = vld [vmem:[%s273 + $0x70] sm:$0xff]
      %v295 = vld [vmem:[%s273 + $0x78] sm:$0xff]
      %v296 = vld [vmem:[%s273 + $0x80] sm:$0xff]
      %v297 = vld [vmem:[%s273 + $0x88] sm:$0xff]
      %v298 = vld [vmem:[%s273 + $0x90] sm:$0xff]
      %v299 = vld [vmem:[%s273 + $0x98] sm:$0xff]
      %v300 = vld [vmem:[%s273 + $0xa0] sm:$0xff]
      %v301 = vld [vmem:[%s273 + $0xa8] sm:$0xff]
      %v302 = vld [vmem:[%s273 + $0xb0] sm:$0xff]
      %v303 = vld [vmem:[%s273 + $0xb8] sm:$0xff]
      %v304 = vld [vmem:[%s273 + $0xc0] sm:$0xff]
      %v305 = vld [vmem:[%s273 + $0xc8] sm:$0xff]
      %v306 = vld [vmem:[%s273 + $0xd0] sm:$0xff]
      %v307 = vld [vmem:[%s273 + $0xd8] sm:$0xff]
      %v308 = vld [vmem:[%s273 + $0xe0] sm:$0xff]
      %v309 = vld [vmem:[%s273 + $0xe8] sm:$0xff]
      %v310 = vld [vmem:[%s273 + $0xf0] sm:$0xff]
      %v311 = vld [vmem:[%s273 + $0xf8] sm:$0xff]
      %vm312 = vcmask 31744
      %313 = vst.msk [vmem:[#allocation2] sm:$0xff] %vm312, 0.0
      %314 = vst.msk [vmem:[#allocation2 + $0x8] sm:$0xff] %vm312, 0.0
      %315 = vst.msk [vmem:[#allocation2 + $0x10] sm:$0xff] %vm312, 0.0
      %316 = vst.msk [vmem:[#allocation2 + $0x18] sm:$0xff] %vm312, 0.0
      %317 = vst.msk [vmem:[#allocation2 + $0x20] sm:$0xff] %vm312, 0.0
      %318 = vst.msk [vmem:[#allocation2 + $0x28] sm:$0xff] %vm312, 0.0
      %319 = vst.msk [vmem:[#allocation2 + $0x30] sm:$0xff] %vm312, 0.0
      %320 = vst.msk [vmem:[#allocation2 + $0x38] sm:$0xff] %vm312, 0.0
      %321 = vst.msk [vmem:[#allocation2 + $0x40] sm:$0xff] %vm312, 0.0
      %322 = vst.msk [vmem:[#allocation2 + $0x48] sm:$0xff] %vm312, 0.0
      %323 = vst.msk [vmem:[#allocation2 + $0x50] sm:$0xff] %vm312, 0.0
      %324 = vst.msk [vmem:[#allocation2 + $0x58] sm:$0xff] %vm312, 0.0
      %325 = vst.msk [vmem:[#allocation2 + $0x60] sm:$0xff] %vm312, 0.0
      %326 = vst.msk [vmem:[#allocation2 + $0x68] sm:$0xff] %vm312, 0.0
      %327 = vst.msk [vmem:[#allocation2 + $0x70] sm:$0xff] %vm312, 0.0
      %328 = vst.msk [vmem:[#allocation2 + $0x78] sm:$0xff] %vm312, 0.0
      %329 = vst.msk [vmem:[#allocation2 + $0x80] sm:$0xff] %vm312, 0.0
      %330 = vst.msk [vmem:[#allocation2 + $0x88] sm:$0xff] %vm312, 0.0
      %331 = vst.msk [vmem:[#allocation2 + $0x90] sm:$0xff] %vm312, 0.0
      %332 = vst.msk [vmem:[#allocation2 + $0x98] sm:$0xff] %vm312, 0.0
      %333 = vst.msk [vmem:[#allocation2 + $0xa0] sm:$0xff] %vm312, 0.0
      %334 = vst.msk [vmem:[#allocation2 + $0xa8] sm:$0xff] %vm312, 0.0
      %335 = vst.msk [vmem:[#allocation2 + $0xb0] sm:$0xff] %vm312, 0.0
      %336 = vst.msk [vmem:[#allocation2 + $0xb8] sm:$0xff] %vm312, 0.0
      %337 = vst.msk [vmem:[#allocation2 + $0xc0] sm:$0xff] %vm312, 0.0
      %338 = vst.msk [vmem:[#allocation2 + $0xc8] sm:$0xff] %vm312, 0.0
      %339 = vst.msk [vmem:[#allocation2 + $0xd0] sm:$0xff] %vm312, 0.0
      %340 = vst.msk [vmem:[#allocation2 + $0xd8] sm:$0xff] %vm312, 0.0
      %341 = vst.msk [vmem:[#allocation2 + $0xe0] sm:$0xff] %vm312, 0.0
      %342 = vst.msk [vmem:[#allocation2 + $0xe8] sm:$0xff] %vm312, 0.0
      %343 = vst.msk [vmem:[#allocation2 + $0xf0] sm:$0xff] %vm312, 0.0
      %344 = vst.msk [vmem:[#allocation2 + $0xf8] sm:$0xff] %vm312, 0.0
      %345 = vst.msk [vmem:[#allocation2 + $0x100] sm:$0xff] %vm312, 0.0
      %346 = vst.msk [vmem:[#allocation2 + $0x108] sm:$0xff] %vm312, 0.0
      %347 = vst.msk [vmem:[#allocation2 + $0x110] sm:$0xff] %vm312, 0.0
      %348 = vst.msk [vmem:[#allocation2 + $0x118] sm:$0xff] %vm312, 0.0
      %349 = vst.msk [vmem:[#allocation2 + $0x120] sm:$0xff] %vm312, 0.0
      %350 = vst.msk [vmem:[#allocation2 + $0x128] sm:$0xff] %vm312, 0.0
      %351 = vst.msk [vmem:[#allocation2 + $0x130] sm:$0xff] %vm312, 0.0
      %352 = vst.msk [vmem:[#allocation2 + $0x138] sm:$0xff] %vm312, 0.0
      %353 = vst.msk [vmem:[#allocation2 + $0x140] sm:$0xff] %vm312, 0.0
      %354 = vst.msk [vmem:[#allocation2 + $0x148] sm:$0xff] %vm312, 0.0
      %355 = vst.msk [vmem:[#allocation2 + $0x150] sm:$0xff] %vm312, 0.0
      %356 = vst.msk [vmem:[#allocation2 + $0x158] sm:$0xff] %vm312, 0.0
      %357 = vst.msk [vmem:[#allocation2 + $0x160] sm:$0xff] %vm312, 0.0
      %358 = vst.msk [vmem:[#allocation2 + $0x168] sm:$0xff] %vm312, 0.0
      %359 = vst.msk [vmem:[#allocation2 + $0x170] sm:$0xff] %vm312, 0.0
      %360 = vst.msk [vmem:[#allocation2 + $0x178] sm:$0xff] %vm312, 0.0
      %361 = vst.msk [vmem:[#allocation2 + $0x180] sm:$0xff] %vm312, 0.0
      %362 = vst.msk [vmem:[#allocation2 + $0x188] sm:$0xff] %vm312, 0.0
      %363 = vst.msk [vmem:[#allocation2 + $0x190] sm:$0xff] %vm312, 0.0
      %364 = vst.msk [vmem:[#allocation2 + $0x198] sm:$0xff] %vm312, 0.0
      %365 = vst.msk [vmem:[#allocation2 + $0x1a0] sm:$0xff] %vm312, 0.0
      %366 = vst.msk [vmem:[#allocation2 + $0x1a8] sm:$0xff] %vm312, 0.0
      %367 = vst.msk [vmem:[#allocation2 + $0x1b0] sm:$0xff] %vm312, 0.0
      %368 = vst.msk [vmem:[#allocation2 + $0x1b8] sm:$0xff] %vm312, 0.0
      %369 = vst.msk [vmem:[#allocation2 + $0x1c0] sm:$0xff] %vm312, 0.0
      %370 = vst.msk [vmem:[#allocation2 + $0x1c8] sm:$0xff] %vm312, 0.0
      %371 = vst.msk [vmem:[#allocation2 + $0x1d0] sm:$0xff] %vm312, 0.0
      %372 = vst.msk [vmem:[#allocation2 + $0x1d8] sm:$0xff] %vm312, 0.0
      %373 = vst.msk [vmem:[#allocation2 + $0x1e0] sm:$0xff] %vm312, 0.0
      %374 = vst.msk [vmem:[#allocation2 + $0x1e8] sm:$0xff] %vm312, 0.0
      %375 = vst.msk [vmem:[#allocation2 + $0x1f0] sm:$0xff] %vm312, 0.0
      %376 = vst.msk [vmem:[#allocation2 + $0x1f8] sm:$0xff] %vm312, 0.0
      %377 = vst.msk [vmem:[#allocation2 + $0x200] sm:$0xff] %vm312, 0.0
      %378 = vst.msk [vmem:[#allocation2 + $0x208] sm:$0xff] %vm312, 0.0
      %379 = vst.msk [vmem:[#allocation2 + $0x210] sm:$0xff] %vm312, 0.0
      %380 = vst.msk [vmem:[#allocation2 + $0x218] sm:$0xff] %vm312, 0.0
      %381 = vst.msk [vmem:[#allocation2 + $0x220] sm:$0xff] %vm312, 0.0
      %382 = vst.msk [vmem:[#allocation2 + $0x228] sm:$0xff] %vm312, 0.0
      %383 = vst.msk [vmem:[#allocation2 + $0x230] sm:$0xff] %vm312, 0.0
      %384 = vst.msk [vmem:[#allocation2 + $0x238] sm:$0xff] %vm312, 0.0
      %s385 = scalar_lea.vmem [#allocation2], 32
      %386 = vst.msk [vmem:[%s385 + $0x8] sm:$0xff] %vm312, %v280
      %387 = vst.msk [vmem:[%s385 + $0x10] sm:$0xff] %vm312, %v281
      %388 = vst.msk [vmem:[%s385 + $0x28] sm:$0xff] %vm312, %v282
      %389 = vst.msk [vmem:[%s385 + $0x30] sm:$0xff] %vm312, %v283
      %390 = vst.msk [vmem:[%s385 + $0x48] sm:$0xff] %vm312, %v284
      %391 = vst.msk [vmem:[%s385 + $0x50] sm:$0xff] %vm312, %v285
      %392 = vst.msk [vmem:[%s385 + $0x68] sm:$0xff] %vm312, %v286
      %393 = vst.msk [vmem:[%s385 + $0x70] sm:$0xff] %vm312, %v287
      %394 = vst.msk [vmem:[%s385 + $0x88] sm:$0xff] %vm312, %v288
      %395 = vst.msk [vmem:[%s385 + $0x90] sm:$0xff] %vm312, %v289
      %396 = vst.msk [vmem:[%s385 + $0xa8] sm:$0xff] %vm312, %v290
      %397 = vst.msk [vmem:[%s385 + $0xb0] sm:$0xff] %vm312, %v291
      %398 = vst.msk [vmem:[%s385 + $0xc8] sm:$0xff] %vm312, %v292
      %399 = vst.msk [vmem:[%s385 + $0xd0] sm:$0xff] %vm312, %v293
      %400 = vst.msk [vmem:[%s385 + $0xe8] sm:$0xff] %vm312, %v294
      %401 = vst.msk [vmem:[%s385 + $0xf0] sm:$0xff] %vm312, %v295
      %402 = vst.msk [vmem:[%s385 + $0x108] sm:$0xff] %vm312, %v296
      %403 = vst.msk [vmem:[%s385 + $0x110] sm:$0xff] %vm312, %v297
      %404 = vst.msk [vmem:[%s385 + $0x128] sm:$0xff] %vm312, %v298
      %405 = vst.msk [vmem:[%s385 + $0x130] sm:$0xff] %vm312, %v299
      %406 = vst.msk [vmem:[%s385 + $0x148] sm:$0xff] %vm312, %v300
      %407 = vst.msk [vmem:[%s385 + $0x150] sm:$0xff] %vm312, %v301
      %408 = vst.msk [vmem:[%s385 + $0x168] sm:$0xff] %vm312, %v302
      %409 = vst.msk [vmem:[%s385 + $0x170] sm:$0xff] %vm312, %v303
      %410 = vst.msk [vmem:[%s385 + $0x188] sm:$0xff] %vm312, %v304
      %411 = vst.msk [vmem:[%s385 + $0x190] sm:$0xff] %vm312, %v305
      %412 = vst.msk [vmem:[%s385 + $0x1a8] sm:$0xff] %vm312, %v306
      %413 = vst.msk [vmem:[%s385 + $0x1b0] sm:$0xff] %vm312, %v307
      %414 = vst.msk [vmem:[%s385 + $0x1c8] sm:$0xff] %vm312, %v308
      %415 = vst.msk [vmem:[%s385 + $0x1d0] sm:$0xff] %vm312, %v309
      %416 = vst.msk [vmem:[%s385 + $0x1e8] sm:$0xff] %vm312, %v310
      %417 = vst.msk [vmem:[%s385 + $0x1f0] sm:$0xff] %vm312, %v311
      %v418 = vld [vmem:[#allocation2 + $0x7] sm:$0xff]
      %v419 = vld [vmem:[#allocation2 + $0xf] sm:$0xff]
      %v420 = vld [vmem:[#allocation2 + $0x27] sm:$0xff]
      %v421 = vld [vmem:[#allocation2 + $0x2f] sm:$0xff]
      %v422 = vld [vmem:[#allocation2 + $0x47] sm:$0xff]
      %v423 = vld [vmem:[#allocation2 + $0x4f] sm:$0xff]
      %v424 = vld [vmem:[#allocation2 + $0x67] sm:$0xff]
      %v425 = vld [vmem:[#allocation2 + $0x6f] sm:$0xff]
      %v426 = vld [vmem:[#allocation2 + $0x87] sm:$0xff]
      %v427 = vld [vmem:[#allocation2 + $0x8f] sm:$0xff]
      %v428 = vld [vmem:[#allocation2 + $0xa7] sm:$0xff]
      %v429 = vld [vmem:[#allocation2 + $0xaf] sm:$0xff]
      %v430 = vld [vmem:[#allocation2 + $0xc7] sm:$0xff]
      %v431 = vld [vmem:[#allocation2 + $0xcf] sm:$0xff]
      %v432 = vld [vmem:[#allocation2 + $0xe7] sm:$0xff]
      %v433 = vld [vmem:[#allocation2 + $0xef] sm:$0xff]
      %v434 = vld [vmem:[#allocation2 + $0x107] sm:$0xff]
      %v435 = vld [vmem:[#allocation2 + $0x10f] sm:$0xff]
      %v436 = vld [vmem:[#allocation2 + $0x127] sm:$0xff]
      %v437 = vld [vmem:[#allocation2 + $0x12f] sm:$0xff]
      %v438 = vld [vmem:[#allocation2 + $0x147] sm:$0xff]
      %v439 = vld [vmem:[#allocation2 + $0x14f] sm:$0xff]
      %v440 = vld [vmem:[#allocation2 + $0x167] sm:$0xff]
      %v441 = vld [vmem:[#allocation2 + $0x16f] sm:$0xff]
      %v442 = vld [vmem:[#allocation2 + $0x187] sm:$0xff]
      %v443 = vld [vmem:[#allocation2 + $0x18f] sm:$0xff]
      %v444 = vld [vmem:[#allocation2 + $0x1a7] sm:$0xff]
      %v445 = vld [vmem:[#allocation2 + $0x1af] sm:$0xff]
      %v446 = vld [vmem:[#allocation2 + $0x1c7] sm:$0xff]
      %v447 = vld [vmem:[#allocation2 + $0x1cf] sm:$0xff]
      %v448 = vld [vmem:[#allocation2 + $0x1e7] sm:$0xff]
      %v449 = vld [vmem:[#allocation2 + $0x1ef] sm:$0xff]
      %v450 = vpack.c.bf16 %v419, %v418
      %v451 = vpack.c.bf16 %v421, %v420
      %v452 = vpack.c.bf16 %v423, %v422
      %v453 = vpack.c.bf16 %v425, %v424
      %v454 = vpack.c.bf16 %v427, %v426
      %v455 = vpack.c.bf16 %v429, %v428
      %v456 = vpack.c.bf16 %v431, %v430
      %v457 = vpack.c.bf16 %v433, %v432
      %v458 = vpack.c.bf16 %v435, %v434
      %v459 = vpack.c.bf16 %v437, %v436
      %v460 = vpack.c.bf16 %v439, %v438
      %v461 = vpack.c.bf16 %v441, %v440
      %v462 = vpack.c.bf16 %v443, %v442
      %v463 = vpack.c.bf16 %v445, %v444
      %v464 = vpack.c.bf16 %v447, %v446
      %v465 = vpack.c.bf16 %v449, %v448
      %v466 = vld [vmem:[#allocation2 + $0x8] sm:$0xff]
      %v467 = vld [vmem:[#allocation2 + $0x10] sm:$0xff]
      %v468 = vld [vmem:[#allocation2 + $0x28] sm:$0xff]
      %v469 = vld [vmem:[#allocation2 + $0x30] sm:$0xff]
      %v470 = vld [vmem:[#allocation2 + $0x48] sm:$0xff]
      %v471 = vld [vmem:[#allocation2 + $0x50] sm:$0xff]
      %v472 = vld [vmem:[#allocation2 + $0x68] sm:$0xff]
      %v473 = vld [vmem:[#allocation2 + $0x70] sm:$0xff]
      %v474 = vld [vmem:[#allocation2 + $0x88] sm:$0xff]
      %v475 = vld [vmem:[#allocation2 + $0x90] sm:$0xff]
      %v476 = vld [vmem:[#allocation2 + $0xa8] sm:$0xff]
      %v477 = vld [vmem:[#allocation2 + $0xb0] sm:$0xff]
      %v478 = vld [vmem:[#allocation2 + $0xc8] sm:$0xff]
      %v479 = vld [vmem:[#allocation2 + $0xd0] sm:$0xff]
      %v480 = vld [vmem:[#allocation2 + $0xe8] sm:$0xff]
      %v481 = vld [vmem:[#allocation2 + $0xf0] sm:$0xff]
      %v482 = vld [vmem:[#allocation2 + $0x108] sm:$0xff]
      %v483 = vld [vmem:[#allocation2 + $0x110] sm:$0xff]
      %v484 = vld [vmem:[#allocation2 + $0x128] sm:$0xff]
      %v485 = vld [vmem:[#allocation2 + $0x130] sm:$0xff]
      %v486 = vld [vmem:[#allocation2 + $0x148] sm:$0xff]
      %v487 = vld [vmem:[#allocation2 + $0x150] sm:$0xff]
      %v488 = vld [vmem:[#allocation2 + $0x168] sm:$0xff]
      %v489 = vld [vmem:[#allocation2 + $0x170] sm:$0xff]
      %v490 = vld [vmem:[#allocation2 + $0x188] sm:$0xff]
      %v491 = vld [vmem:[#allocation2 + $0x190] sm:$0xff]
      %v492 = vld [vmem:[#allocation2 + $0x1a8] sm:$0xff]
      %v493 = vld [vmem:[#allocation2 + $0x1b0] sm:$0xff]
      %v494 = vld [vmem:[#allocation2 + $0x1c8] sm:$0xff]
      %v495 = vld [vmem:[#allocation2 + $0x1d0] sm:$0xff]
      %v496 = vld [vmem:[#allocation2 + $0x1e8] sm:$0xff]
      %v497 = vld [vmem:[#allocation2 + $0x1f0] sm:$0xff]
      %v498 = vpack.c.bf16 %v467, %v466
      %v499 = vpack.c.bf16 %v469, %v468
      %v500 = vpack.c.bf16 %v471, %v470
      %v501 = vpack.c.bf16 %v473, %v472
      %v502 = vpack.c.bf16 %v475, %v474
      %v503 = vpack.c.bf16 %v477, %v476
      %v504 = vpack.c.bf16 %v479, %v478
      %v505 = vpack.c.bf16 %v481, %v480
      %v506 = vpack.c.bf16 %v483, %v482
      %v507 = vpack.c.bf16 %v485, %v484
      %v508 = vpack.c.bf16 %v487, %v486
      %v509 = vpack.c.bf16 %v489, %v488
      %v510 = vpack.c.bf16 %v491, %v490
      %v511 = vpack.c.bf16 %v493, %v492
      %v512 = vpack.c.bf16 %v495, %v494
      %v513 = vpack.c.bf16 %v497, %v496
      %v514 = vld [vmem:[#allocation2 + $0x9] sm:$0xff]
      %v515 = vld [vmem:[#allocation2 + $0x11] sm:$0xff]
      %v516 = vld [vmem:[#allocation2 + $0x29] sm:$0xff]
      %v517 = vld [vmem:[#allocation2 + $0x31] sm:$0xff]
      %v518 = vld [vmem:[#allocation2 + $0x49] sm:$0xff]
      %v519 = vld [vmem:[#allocation2 + $0x51] sm:$0xff]
      %v520 = vld [vmem:[#allocation2 + $0x69] sm:$0xff]
      %v521 = vld [vmem:[#allocation2 + $0x71] sm:$0xff]
      %v522 = vld [vmem:[#allocation2 + $0x89] sm:$0xff]
      %v523 = vld [vmem:[#allocation2 + $0x91] sm:$0xff]
      %v524 = vld [vmem:[#allocation2 + $0xa9] sm:$0xff]
      %v525 = vld [vmem:[#allocation2 + $0xb1] sm:$0xff]
      %v526 = vld [vmem:[#allocation2 + $0xc9] sm:$0xff]
      %v527 = vld [vmem:[#allocation2 + $0xd1] sm:$0xff]
      %v528 = vld [vmem:[#allocation2 + $0xe9] sm:$0xff]
      %v529 = vld [vmem:[#allocation2 + $0xf1] sm:$0xff]
      %v530 = vld [vmem:[#allocation2 + $0x109] sm:$0xff]
      %v531 = vld [vmem:[#allocation2 + $0x111] sm:$0xff]
      %v532 = vld [vmem:[#allocation2 + $0x129] sm:$0xff]
      %v533 = vld [vmem:[#allocation2 + $0x131] sm:$0xff]
      %v534 = vld [vmem:[#allocation2 + $0x149] sm:$0xff]
      %v535 = vld [vmem:[#allocation2 + $0x151] sm:$0xff]
      %v536 = vld [vmem:[#allocation2 + $0x169] sm:$0xff]
      %v537 = vld [vmem:[#allocation2 + $0x171] sm:$0xff]
      %v538 = vld [vmem:[#allocation2 + $0x189] sm:$0xff]
      %v539 = vld [vmem:[#allocation2 + $0x191] sm:$0xff]
      %v540 = vld [vmem:[#allocation2 + $0x1a9] sm:$0xff]
      %v541 = vld [vmem:[#allocation2 + $0x1b1] sm:$0xff]
      %v542 = vld [vmem:[#allocation2 + $0x1c9] sm:$0xff]
      %v543 = vld [vmem:[#allocation2 + $0x1d1] sm:$0xff]
      %v544 = vld [vmem:[#allocation2 + $0x1e9] sm:$0xff]
      %v545 = vld [vmem:[#allocation2 + $0x1f1] sm:$0xff]
      %v546 = vpack.c.bf16 %v515, %v514
      %v547 = vpack.c.bf16 %v517, %v516
      %v548 = vpack.c.bf16 %v519, %v518
      %v549 = vpack.c.bf16 %v521, %v520
      %v550 = vpack.c.bf16 %v523, %v522
      %v551 = vpack.c.bf16 %v525, %v524
      %v552 = vpack.c.bf16 %v527, %v526
      %v553 = vpack.c.bf16 %v529, %v528
      %v554 = vpack.c.bf16 %v531, %v530
      %v555 = vpack.c.bf16 %v533, %v532
      %v556 = vpack.c.bf16 %v535, %v534
      %v557 = vpack.c.bf16 %v537, %v536
      %v558 = vpack.c.bf16 %v539, %v538
      %v559 = vpack.c.bf16 %v541, %v540
      %v560 = vpack.c.bf16 %v543, %v542
      %v561 = vpack.c.bf16 %v545, %v544
      %v562 = vld [vmem:[%s385 + $0x7] sm:$0xff]
      %v563 = vld [vmem:[%s385 + $0xf] sm:$0xff]
      %v564 = vld [vmem:[%s385 + $0x27] sm:$0xff]
      %v565 = vld [vmem:[%s385 + $0x2f] sm:$0xff]
      %v566 = vld [vmem:[%s385 + $0x47] sm:$0xff]
      %v567 = vld [vmem:[%s385 + $0x4f] sm:$0xff]
      %v568 = vld [vmem:[%s385 + $0x67] sm:$0xff]
      %v569 = vld [vmem:[%s385 + $0x6f] sm:$0xff]
      %v570 = vld [vmem:[%s385 + $0x87] sm:$0xff]
      %v571 = vld [vmem:[%s385 + $0x8f] sm:$0xff]
      %v572 = vld [vmem:[%s385 + $0xa7] sm:$0xff]
      %v573 = vld [vmem:[%s385 + $0xaf] sm:$0xff]
      %v574 = vld [vmem:[%s385 + $0xc7] sm:$0xff]
      %v575 = vld [vmem:[%s385 + $0xcf] sm:$0xff]
      %v576 = vld [vmem:[%s385 + $0xe7] sm:$0xff]
      %v577 = vld [vmem:[%s385 + $0xef] sm:$0xff]
      %v578 = vld [vmem:[%s385 + $0x107] sm:$0xff]
      %v579 = vld [vmem:[%s385 + $0x10f] sm:$0xff]
      %v580 = vld [vmem:[%s385 + $0x127] sm:$0xff]
      %v581 = vld [vmem:[%s385 + $0x12f] sm:$0xff]
      %v582 = vld [vmem:[%s385 + $0x147] sm:$0xff]
      %v583 = vld [vmem:[%s385 + $0x14f] sm:$0xff]
      %v584 = vld [vmem:[%s385 + $0x167] sm:$0xff]
      %v585 = vld [vmem:[%s385 + $0x16f] sm:$0xff]
      %v586 = vld [vmem:[%s385 + $0x187] sm:$0xff]
      %v587 = vld [vmem:[%s385 + $0x18f] sm:$0xff]
      %v588 = vld [vmem:[%s385 + $0x1a7] sm:$0xff]
      %v589 = vld [vmem:[%s385 + $0x1af] sm:$0xff]
      %v590 = vld [vmem:[%s385 + $0x1c7] sm:$0xff]
      %v591 = vld [vmem:[%s385 + $0x1cf] sm:$0xff]
      %v592 = vld [vmem:[%s385 + $0x1e7] sm:$0xff]
      %v593 = vld [vmem:[%s385 + $0x1ef] sm:$0xff]
      %v594 = vpack.c.bf16 %v563, %v562
      %v595 = vpack.c.bf16 %v565, %v564
      %v596 = vpack.c.bf16 %v567, %v566
      %v597 = vpack.c.bf16 %v569, %v568
      %v598 = vpack.c.bf16 %v571, %v570
      %v599 = vpack.c.bf16 %v573, %v572
      %v600 = vpack.c.bf16 %v575, %v574
      %v601 = vpack.c.bf16 %v577, %v576
      %v602 = vpack.c.bf16 %v579, %v578
      %v603 = vpack.c.bf16 %v581, %v580
      %v604 = vpack.c.bf16 %v583, %v582
      %v605 = vpack.c.bf16 %v585, %v584
      %v606 = vpack.c.bf16 %v587, %v586
      %v607 = vpack.c.bf16 %v589, %v588
      %v608 = vpack.c.bf16 %v591, %v590
      %v609 = vpack.c.bf16 %v593, %v592
      %v610 = vld [vmem:[%s385 + $0x8] sm:$0xff]
      %v611 = vld [vmem:[%s385 + $0x10] sm:$0xff]
      %v612 = vld [vmem:[%s385 + $0x28] sm:$0xff]
      %v613 = vld [vmem:[%s385 + $0x30] sm:$0xff]
      %v614 = vld [vmem:[%s385 + $0x48] sm:$0xff]
      %v615 = vld [vmem:[%s385 + $0x50] sm:$0xff]
      %v616 = vld [vmem:[%s385 + $0x68] sm:$0xff]
      %v617 = vld [vmem:[%s385 + $0x70] sm:$0xff]
      %v618 = vld [vmem:[%s385 + $0x88] sm:$0xff]
      %v619 = vld [vmem:[%s385 + $0x90] sm:$0xff]
      %v620 = vld [vmem:[%s385 + $0xa8] sm:$0xff]
      %v621 = vld [vmem:[%s385 + $0xb0] sm:$0xff]
      %v622 = vld [vmem:[%s385 + $0xc8] sm:$0xff]
      %v623 = vld [vmem:[%s385 + $0xd0] sm:$0xff]
      %v624 = vld [vmem:[%s385 + $0xe8] sm:$0xff]
      %v625 = vld [vmem:[%s385 + $0xf0] sm:$0xff]
      %v626 = vld [vmem:[%s385 + $0x108] sm:$0xff]
      %v627 = vld [vmem:[%s385 + $0x110] sm:$0xff]
      %v628 = vld [vmem:[%s385 + $0x128] sm:$0xff]
      %v629 = vld [vmem:[%s385 + $0x130] sm:$0xff]
      %v630 = vld [vmem:[%s385 + $0x148] sm:$0xff]
      %v631 = vld [vmem:[%s385 + $0x150] sm:$0xff]
      %v632 = vld [vmem:[%s385 + $0x168] sm:$0xff]
      %v633 = vld [vmem:[%s385 + $0x170] sm:$0xff]
      %v634 = vld [vmem:[%s385 + $0x188] sm:$0xff]
      %v635 = vld [vmem:[%s385 + $0x190] sm:$0xff]
      %v636 = vld [vmem:[%s385 + $0x1a8] sm:$0xff]
      %v637 = vld [vmem:[%s385 + $0x1b0] sm:$0xff]
      %v638 = vld [vmem:[%s385 + $0x1c8] sm:$0xff]
      %v639 = vld [vmem:[%s385 + $0x1d0] sm:$0xff]
      %v640 = vld [vmem:[%s385 + $0x1e8] sm:$0xff]
      %v641 = vld [vmem:[%s385 + $0x1f0] sm:$0xff]
      %v642 = vpack.c.bf16 %v611, %v610
      %v643 = vpack.c.bf16 %v613, %v612
      %v644 = vpack.c.bf16 %v615, %v614
      %v645 = vpack.c.bf16 %v617, %v616
      %v646 = vpack.c.bf16 %v619, %v618
      %v647 = vpack.c.bf16 %v621, %v620
      %v648 = vpack.c.bf16 %v623, %v622
      %v649 = vpack.c.bf16 %v625, %v624
      %v650 = vpack.c.bf16 %v627, %v626
      %v651 = vpack.c.bf16 %v629, %v628
      %v652 = vpack.c.bf16 %v631, %v630
      %v653 = vpack.c.bf16 %v633, %v632
      %v654 = vpack.c.bf16 %v635, %v634
      %v655 = vpack.c.bf16 %v637, %v636
      %v656 = vpack.c.bf16 %v639, %v638
      %v657 = vpack.c.bf16 %v641, %v640
      %v658 = vld [vmem:[%s385 + $0x9] sm:$0xff]
      %v659 = vld [vmem:[%s385 + $0x11] sm:$0xff]
      %v660 = vld [vmem:[%s385 + $0x29] sm:$0xff]
      %v661 = vld [vmem:[%s385 + $0x31] sm:$0xff]
      %v662 = vld [vmem:[%s385 + $0x49] sm:$0xff]
      %v663 = vld [vmem:[%s385 + $0x51] sm:$0xff]
      %v664 = vld [vmem:[%s385 + $0x69] sm:$0xff]
      %v665 = vld [vmem:[%s385 + $0x71] sm:$0xff]
      %v666 = vld [vmem:[%s385 + $0x89] sm:$0xff]
      %v667 = vld [vmem:[%s385 + $0x91] sm:$0xff]
      %v668 = vld [vmem:[%s385 + $0xa9] sm:$0xff]
      %v669 = vld [vmem:[%s385 + $0xb1] sm:$0xff]
      %v670 = vld [vmem:[%s385 + $0xc9] sm:$0xff]
      %v671 = vld [vmem:[%s385 + $0xd1] sm:$0xff]
      %v672 = vld [vmem:[%s385 + $0xe9] sm:$0xff]
      %v673 = vld [vmem:[%s385 + $0xf1] sm:$0xff]
      %v674 = vld [vmem:[%s385 + $0x109] sm:$0xff]
      %v675 = vld [vmem:[%s385 + $0x111] sm:$0xff]
      %v676 = vld [vmem:[%s385 + $0x129] sm:$0xff]
      %v677 = vld [vmem:[%s385 + $0x131] sm:$0xff]
      %v678 = vld [vmem:[%s385 + $0x149] sm:$0xff]
      %v679 = vld [vmem:[%s385 + $0x151] sm:$0xff]
      %v680 = vld [vmem:[%s385 + $0x169] sm:$0xff]
      %v681 = vld [vmem:[%s385 + $0x171] sm:$0xff]
      %v682 = vld [vmem:[%s385 + $0x189] sm:$0xff]
      %v683 = vld [vmem:[%s385 + $0x191] sm:$0xff]
      %v684 = vld [vmem:[%s385 + $0x1a9] sm:$0xff]
      %v685 = vld [vmem:[%s385 + $0x1b1] sm:$0xff]
      %v686 = vld [vmem:[%s385 + $0x1c9] sm:$0xff]
      %v687 = vld [vmem:[%s385 + $0x1d1] sm:$0xff]
      %v688 = vld [vmem:[%s385 + $0x1e9] sm:$0xff]
      %v689 = vld [vmem:[%s385 + $0x1f1] sm:$0xff]
      %v690 = vpack.c.bf16 %v659, %v658
      %v691 = vpack.c.bf16 %v661, %v660
      %v692 = vpack.c.bf16 %v663, %v662
      %v693 = vpack.c.bf16 %v665, %v664
      %v694 = vpack.c.bf16 %v667, %v666
      %v695 = vpack.c.bf16 %v669, %v668
      %v696 = vpack.c.bf16 %v671, %v670
      %v697 = vpack.c.bf16 %v673, %v672
      %v698 = vpack.c.bf16 %v675, %v674
      %v699 = vpack.c.bf16 %v677, %v676
      %v700 = vpack.c.bf16 %v679, %v678
      %v701 = vpack.c.bf16 %v681, %v680
      %v702 = vpack.c.bf16 %v683, %v682
      %v703 = vpack.c.bf16 %v685, %v684
      %v704 = vpack.c.bf16 %v687, %v686
      %v705 = vpack.c.bf16 %v689, %v688
      %s706 = scalar_lea.vmem [#allocation2], 64
      %v707 = vld [vmem:[%s706 + $0x7] sm:$0xff]
      %v708 = vld [vmem:[%s706 + $0xf] sm:$0xff]
      %v709 = vld [vmem:[%s706 + $0x27] sm:$0xff]
      %v710 = vld [vmem:[%s706 + $0x2f] sm:$0xff]
      %v711 = vld [vmem:[%s706 + $0x47] sm:$0xff]
      %v712 = vld [vmem:[%s706 + $0x4f] sm:$0xff]
      %v713 = vld [vmem:[%s706 + $0x67] sm:$0xff]
      %v714 = vld [vmem:[%s706 + $0x6f] sm:$0xff]
      %v715 = vld [vmem:[%s706 + $0x87] sm:$0xff]
      %v716 = vld [vmem:[%s706 + $0x8f] sm:$0xff]
      %v717 = vld [vmem:[%s706 + $0xa7] sm:$0xff]
      %v718 = vld [vmem:[%s706 + $0xaf] sm:$0xff]
      %v719 = vld [vmem:[%s706 + $0xc7] sm:$0xff]
      %v720 = vld [vmem:[%s706 + $0xcf] sm:$0xff]
      %v721 = vld [vmem:[%s706 + $0xe7] sm:$0xff]
      %v722 = vld [vmem:[%s706 + $0xef] sm:$0xff]
      %v723 = vld [vmem:[%s706 + $0x107] sm:$0xff]
      %v724 = vld [vmem:[%s706 + $0x10f] sm:$0xff]
      %v725 = vld [vmem:[%s706 + $0x127] sm:$0xff]
      %v726 = vld [vmem:[%s706 + $0x12f] sm:$0xff]
      %v727 = vld [vmem:[%s706 + $0x147] sm:$0xff]
      %v728 = vld [vmem:[%s706 + $0x14f] sm:$0xff]
      %v729 = vld [vmem:[%s706 + $0x167] sm:$0xff]
      %v730 = vld [vmem:[%s706 + $0x16f] sm:$0xff]
      %v731 = vld [vmem:[%s706 + $0x187] sm:$0xff]
      %v732 = vld [vmem:[%s706 + $0x18f] sm:$0xff]
      %v733 = vld [vmem:[%s706 + $0x1a7] sm:$0xff]
      %v734 = vld [vmem:[%s706 + $0x1af] sm:$0xff]
      %v735 = vld [vmem:[%s706 + $0x1c7] sm:$0xff]
      %v736 = vld [vmem:[%s706 + $0x1cf] sm:$0xff]
      %v737 = vld [vmem:[%s706 + $0x1e7] sm:$0xff]
      %v738 = vld [vmem:[%s706 + $0x1ef] sm:$0xff]
      %v739 = vpack.c.bf16 %v708, %v707
      %v740 = vpack.c.bf16 %v710, %v709
      %v741 = vpack.c.bf16 %v712, %v711
      %v742 = vpack.c.bf16 %v714, %v713
      %v743 = vpack.c.bf16 %v716, %v715
      %v744 = vpack.c.bf16 %v718, %v717
      %v745 = vpack.c.bf16 %v720, %v719
      %v746 = vpack.c.bf16 %v722, %v721
      %v747 = vpack.c.bf16 %v724, %v723
      %v748 = vpack.c.bf16 %v726, %v725
      %v749 = vpack.c.bf16 %v728, %v727
      %v750 = vpack.c.bf16 %v730, %v729
      %v751 = vpack.c.bf16 %v732, %v731
      %v752 = vpack.c.bf16 %v734, %v733
      %v753 = vpack.c.bf16 %v736, %v735
      %v754 = vpack.c.bf16 %v738, %v737
      %v755 = vld [vmem:[%s706 + $0x8] sm:$0xff]
      %v756 = vld [vmem:[%s706 + $0x10] sm:$0xff]
      %v757 = vld [vmem:[%s706 + $0x28] sm:$0xff]
      %v758 = vld [vmem:[%s706 + $0x30] sm:$0xff]
      %v759 = vld [vmem:[%s706 + $0x48] sm:$0xff]
      %v760 = vld [vmem:[%s706 + $0x50] sm:$0xff]
      %v761 = vld [vmem:[%s706 + $0x68] sm:$0xff]
      %v762 = vld [vmem:[%s706 + $0x70] sm:$0xff]
      %v763 = vld [vmem:[%s706 + $0x88] sm:$0xff]
      %v764 = vld [vmem:[%s706 + $0x90] sm:$0xff]
      %v765 = vld [vmem:[%s706 + $0xa8] sm:$0xff]
      %v766 = vld [vmem:[%s706 + $0xb0] sm:$0xff]
      %v767 = vld [vmem:[%s706 + $0xc8] sm:$0xff]
      %v768 = vld [vmem:[%s706 + $0xd0] sm:$0xff]
      %v769 = vld [vmem:[%s706 + $0xe8] sm:$0xff]
      %v770 = vld [vmem:[%s706 + $0xf0] sm:$0xff]
      %v771 = vld [vmem:[%s706 + $0x108] sm:$0xff]
      %v772 = vld [vmem:[%s706 + $0x110] sm:$0xff]
      %v773 = vld [vmem:[%s706 + $0x128] sm:$0xff]
      %v774 = vld [vmem:[%s706 + $0x130] sm:$0xff]
      %v775 = vld [vmem:[%s706 + $0x148] sm:$0xff]
      %v776 = vld [vmem:[%s706 + $0x150] sm:$0xff]
      %v777 = vld [vmem:[%s706 + $0x168] sm:$0xff]
      %v778 = vld [vmem:[%s706 + $0x170] sm:$0xff]
      %v779 = vld [vmem:[%s706 + $0x188] sm:$0xff]
      %v780 = vld [vmem:[%s706 + $0x190] sm:$0xff]
      %v781 = vld [vmem:[%s706 + $0x1a8] sm:$0xff]
      %v782 = vld [vmem:[%s706 + $0x1b0] sm:$0xff]
      %v783 = vld [vmem:[%s706 + $0x1c8] sm:$0xff]
      %v784 = vld [vmem:[%s706 + $0x1d0] sm:$0xff]
      %v785 = vld [vmem:[%s706 + $0x1e8] sm:$0xff]
      %v786 = vld [vmem:[%s706 + $0x1f0] sm:$0xff]
      %v787 = vpack.c.bf16 %v756, %v755
      %v788 = vpack.c.bf16 %v758, %v757
      %v789 = vpack.c.bf16 %v760, %v759
      %v790 = vpack.c.bf16 %v762, %v761
      %v791 = vpack.c.bf16 %v764, %v763
      %v792 = vpack.c.bf16 %v766, %v765
      %v793 = vpack.c.bf16 %v768, %v767
      %v794 = vpack.c.bf16 %v770, %v769
      %v795 = vpack.c.bf16 %v772, %v771
      %v796 = vpack.c.bf16 %v774, %v773
      %v797 = vpack.c.bf16 %v776, %v775
      %v798 = vpack.c.bf16 %v778, %v777
      %v799 = vpack.c.bf16 %v780, %v779
      %v800 = vpack.c.bf16 %v782, %v781
      %v801 = vpack.c.bf16 %v784, %v783
      %v802 = vpack.c.bf16 %v786, %v785
      %v803 = vld [vmem:[%s706 + $0x9] sm:$0xff]
      %v804 = vld [vmem:[%s706 + $0x11] sm:$0xff]
      %v805 = vld [vmem:[%s706 + $0x29] sm:$0xff]
      %v806 = vld [vmem:[%s706 + $0x31] sm:$0xff]
      %v807 = vld [vmem:[%s706 + $0x49] sm:$0xff]
      %v808 = vld [vmem:[%s706 + $0x51] sm:$0xff]
      %v809 = vld [vmem:[%s706 + $0x69] sm:$0xff]
      %v810 = vld [vmem:[%s706 + $0x71] sm:$0xff]
      %v811 = vld [vmem:[%s706 + $0x89] sm:$0xff]
      %v812 = vld [vmem:[%s706 + $0x91] sm:$0xff]
      %v813 = vld [vmem:[%s706 + $0xa9] sm:$0xff]
      %v814 = vld [vmem:[%s706 + $0xb1] sm:$0xff]
      %v815 = vld [vmem:[%s706 + $0xc9] sm:$0xff]
      %v816 = vld [vmem:[%s706 + $0xd1] sm:$0xff]
      %v817 = vld [vmem:[%s706 + $0xe9] sm:$0xff]
      %v818 = vld [vmem:[%s706 + $0xf1] sm:$0xff]
      %v819 = vld [vmem:[%s706 + $0x109] sm:$0xff]
      %v820 = vld [vmem:[%s706 + $0x111] sm:$0xff]
      %v821 = vld [vmem:[%s706 + $0x129] sm:$0xff]
      %v822 = vld [vmem:[%s706 + $0x131] sm:$0xff]
      %v823 = vld [vmem:[%s706 + $0x149] sm:$0xff]
      %v824 = vld [vmem:[%s706 + $0x151] sm:$0xff]
      %v825 = vld [vmem:[%s706 + $0x169] sm:$0xff]
      %v826 = vld [vmem:[%s706 + $0x171] sm:$0xff]
      %v827 = vld [vmem:[%s706 + $0x189] sm:$0xff]
      %v828 = vld [vmem:[%s706 + $0x191] sm:$0xff]
      %v829 = vld [vmem:[%s706 + $0x1a9] sm:$0xff]
      %v830 = vld [vmem:[%s706 + $0x1b1] sm:$0xff]
      %v831 = vld [vmem:[%s706 + $0x1c9] sm:$0xff]
      %v832 = vld [vmem:[%s706 + $0x1d1] sm:$0xff]
      %v833 = vld [vmem:[%s706 + $0x1e9] sm:$0xff]
      %v834 = vld [vmem:[%s706 + $0x1f1] sm:$0xff]
      %v835 = vpack.c.bf16 %v804, %v803
      %v836 = vpack.c.bf16 %v806, %v805
      %v837 = vpack.c.bf16 %v808, %v807
      %v838 = vpack.c.bf16 %v810, %v809
      %v839 = vpack.c.bf16 %v812, %v811
      %v840 = vpack.c.bf16 %v814, %v813
      %v841 = vpack.c.bf16 %v816, %v815
      %v842 = vpack.c.bf16 %v818, %v817
      %v843 = vpack.c.bf16 %v820, %v819
      %v844 = vpack.c.bf16 %v822, %v821
      %v845 = vpack.c.bf16 %v824, %v823
      %v846 = vpack.c.bf16 %v826, %v825
      %v847 = vpack.c.bf16 %v828, %v827
      %v848 = vpack.c.bf16 %v830, %v829
      %v849 = vpack.c.bf16 %v832, %v831
      %v850 = vpack.c.bf16 %v834, %v833
      %867 = vrot.lane.b32.xlu0 %v498, 4
      %v868 = vpop.permute.xlu0 %867
      %869 = vrot.lane.b32.xlu0 %v499, 4
      %v870 = vpop.permute.xlu0 %869
      %871 = vrot.lane.b32.xlu0 %v500, 4
      %v872 = vpop.permute.xlu0 %871
      %873 = vrot.lane.b32.xlu0 %v501, 4
      %v874 = vpop.permute.xlu0 %873
      %875 = vrot.lane.b32.xlu0 %v502, 4
      %v876 = vpop.permute.xlu0 %875
      %877 = vrot.lane.b32.xlu0 %v503, 4
      %v878 = vpop.permute.xlu0 %877
      %879 = vrot.lane.b32.xlu0 %v504, 4
      %v880 = vpop.permute.xlu0 %879
      %881 = vrot.lane.b32.xlu0 %v505, 4
      %v882 = vpop.permute.xlu0 %881
      %883 = vrot.lane.b32.xlu0 %v506, 4
      %v884 = vpop.permute.xlu0 %883
      %885 = vrot.lane.b32.xlu0 %v507, 4
      %v886 = vpop.permute.xlu0 %885
      %887 = vrot.lane.b32.xlu0 %v508, 4
      %v888 = vpop.permute.xlu0 %887
      %889 = vrot.lane.b32.xlu0 %v509, 4
      %v890 = vpop.permute.xlu0 %889
      %891 = vrot.lane.b32.xlu0 %v510, 4
      %v892 = vpop.permute.xlu0 %891
      %893 = vrot.lane.b32.xlu0 %v511, 4
      %v894 = vpop.permute.xlu0 %893
      %895 = vrot.lane.b32.xlu0 %v512, 4
      %v896 = vpop.permute.xlu0 %895
      %897 = vrot.lane.b32.xlu0 %v513, 4
      %v898 = vpop.permute.xlu0 %897
      %915 = vrot.lane.b32.xlu0 %v546, 8
      %v916 = vpop.permute.xlu0 %915
      %917 = vrot.lane.b32.xlu0 %v547, 8
      %v918 = vpop.permute.xlu0 %917
      %919 = vrot.lane.b32.xlu0 %v548, 8
      %v920 = vpop.permute.xlu0 %919
      %921 = vrot.lane.b32.xlu0 %v549, 8
      %v922 = vpop.permute.xlu0 %921
      %923 = vrot.lane.b32.xlu0 %v550, 8
      %v924 = vpop.permute.xlu0 %923
      %925 = vrot.lane.b32.xlu0 %v551, 8
      %v926 = vpop.permute.xlu0 %925
      %927 = vrot.lane.b32.xlu0 %v552, 8
      %v928 = vpop.permute.xlu0 %927
      %929 = vrot.lane.b32.xlu0 %v553, 8
      %v930 = vpop.permute.xlu0 %929
      %931 = vrot.lane.b32.xlu0 %v554, 8
      %v932 = vpop.permute.xlu0 %931
      %933 = vrot.lane.b32.xlu0 %v555, 8
      %v934 = vpop.permute.xlu0 %933
      %935 = vrot.lane.b32.xlu0 %v556, 8
      %v936 = vpop.permute.xlu0 %935
      %937 = vrot.lane.b32.xlu0 %v557, 8
      %v938 = vpop.permute.xlu0 %937
      %939 = vrot.lane.b32.xlu0 %v558, 8
      %v940 = vpop.permute.xlu0 %939
      %941 = vrot.lane.b32.xlu0 %v559, 8
      %v942 = vpop.permute.xlu0 %941
      %943 = vrot.lane.b32.xlu0 %v560, 8
      %v944 = vpop.permute.xlu0 %943
      %945 = vrot.lane.b32.xlu0 %v561, 8
      %v946 = vpop.permute.xlu0 %945
      %963 = vrot.lane.b32.xlu0 %v594, 12
      %v964 = vpop.permute.xlu0 %963
      %965 = vrot.lane.b32.xlu0 %v595, 12
      %v966 = vpop.permute.xlu0 %965
      %967 = vrot.lane.b32.xlu0 %v596, 12
      %v968 = vpop.permute.xlu0 %967
      %969 = vrot.lane.b32.xlu0 %v597, 12
      %v970 = vpop.permute.xlu0 %969
      %971 = vrot.lane.b32.xlu0 %v598, 12
      %v972 = vpop.permute.xlu0 %971
      %973 = vrot.lane.b32.xlu0 %v599, 12
      %v974 = vpop.permute.xlu0 %973
      %975 = vrot.lane.b32.xlu0 %v600, 12
      %v976 = vpop.permute.xlu0 %975
      %977 = vrot.lane.b32.xlu0 %v601, 12
      %v978 = vpop.permute.xlu0 %977
      %979 = vrot.lane.b32.xlu0 %v602, 12
      %v980 = vpop.permute.xlu0 %979
      %981 = vrot.lane.b32.xlu0 %v603, 12
      %v982 = vpop.permute.xlu0 %981
      %983 = vrot.lane.b32.xlu0 %v604, 12
      %v984 = vpop.permute.xlu0 %983
      %985 = vrot.lane.b32.xlu0 %v605, 12
      %v986 = vpop.permute.xlu0 %985
      %987 = vrot.lane.b32.xlu0 %v606, 12
      %v988 = vpop.permute.xlu0 %987
      %989 = vrot.lane.b32.xlu0 %v607, 12
      %v990 = vpop.permute.xlu0 %989
      %991 = vrot.lane.b32.xlu0 %v608, 12
      %v992 = vpop.permute.xlu0 %991
      %993 = vrot.lane.b32.xlu0 %v609, 12
      %v994 = vpop.permute.xlu0 %993
      %1011 = vrot.lane.b32.xlu0 %v642, 16
      %v1012 = vpop.permute.xlu0 %1011
      %1013 = vrot.lane.b32.xlu0 %v643, 16
      %v1014 = vpop.permute.xlu0 %1013
      %1015 = vrot.lane.b32.xlu0 %v644, 16
      %v1016 = vpop.permute.xlu0 %1015
      %1017 = vrot.lane.b32.xlu0 %v645, 16
      %v1018 = vpop.permute.xlu0 %1017
      %1019 = vrot.lane.b32.xlu0 %v646, 16
      %v1020 = vpop.permute.xlu0 %1019
      %1021 = vrot.lane.b32.xlu0 %v647, 16
      %v1022 = vpop.permute.xlu0 %1021
      %1023 = vrot.lane.b32.xlu0 %v648, 16
      %v1024 = vpop.permute.xlu0 %1023
      %1025 = vrot.lane.b32.xlu0 %v649, 16
      %v1026 = vpop.permute.xlu0 %1025
      %1027 = vrot.lane.b32.xlu0 %v650, 16
      %v1028 = vpop.permute.xlu0 %1027
      %1029 = vrot.lane.b32.xlu0 %v651, 16
      %v1030 = vpop.permute.xlu0 %1029
      %1031 = vrot.lane.b32.xlu0 %v652, 16
      %v1032 = vpop.permute.xlu0 %1031
      %1033 = vrot.lane.b32.xlu0 %v653, 16
      %v1034 = vpop.permute.xlu0 %1033
      %1035 = vrot.lane.b32.xlu0 %v654, 16
      %v1036 = vpop.permute.xlu0 %1035
      %1037 = vrot.lane.b32.xlu0 %v655, 16
      %v1038 = vpop.permute.xlu0 %1037
      %1039 = vrot.lane.b32.xlu0 %v656, 16
      %v1040 = vpop.permute.xlu0 %1039
      %1041 = vrot.lane.b32.xlu0 %v657, 16
      %v1042 = vpop.permute.xlu0 %1041
      %1059 = vrot.lane.b32.xlu0 %v690, 20
      %v1060 = vpop.permute.xlu0 %1059
      %1061 = vrot.lane.b32.xlu0 %v691, 20
      %v1062 = vpop.permute.xlu0 %1061
      %1063 = vrot.lane.b32.xlu0 %v692, 20
      %v1064 = vpop.permute.xlu0 %1063
      %1065 = vrot.lane.b32.xlu0 %v693, 20
      %v1066 = vpop.permute.xlu0 %1065
      %1067 = vrot.lane.b32.xlu0 %v694, 20
      %v1068 = vpop.permute.xlu0 %1067
      %1069 = vrot.lane.b32.xlu0 %v695, 20
      %v1070 = vpop.permute.xlu0 %1069
      %1071 = vrot.lane.b32.xlu0 %v696, 20
      %v1072 = vpop.permute.xlu0 %1071
      %1073 = vrot.lane.b32.xlu0 %v697, 20
      %v1074 = vpop.permute.xlu0 %1073
      %1075 = vrot.lane.b32.xlu0 %v698, 20
      %v1076 = vpop.permute.xlu0 %1075
      %1077 = vrot.lane.b32.xlu0 %v699, 20
      %v1078 = vpop.permute.xlu0 %1077
      %1079 = vrot.lane.b32.xlu0 %v700, 20
      %v1080 = vpop.permute.xlu0 %1079
      %1081 = vrot.lane.b32.xlu0 %v701, 20
      %v1082 = vpop.permute.xlu0 %1081
      %1083 = vrot.lane.b32.xlu0 %v702, 20
      %v1084 = vpop.permute.xlu0 %1083
      %1085 = vrot.lane.b32.xlu0 %v703, 20
      %v1086 = vpop.permute.xlu0 %1085
      %1087 = vrot.lane.b32.xlu0 %v704, 20
      %v1088 = vpop.permute.xlu0 %1087
      %1089 = vrot.lane.b32.xlu0 %v705, 20
      %v1090 = vpop.permute.xlu0 %1089
      %1107 = vrot.lane.b32.xlu0 %v739, 24
      %v1108 = vpop.permute.xlu0 %1107
      %1109 = vrot.lane.b32.xlu0 %v740, 24
      %v1110 = vpop.permute.xlu0 %1109
      %1111 = vrot.lane.b32.xlu0 %v741, 24
      %v1112 = vpop.permute.xlu0 %1111
      %1113 = vrot.lane.b32.xlu0 %v742, 24
      %v1114 = vpop.permute.xlu0 %1113
      %1115 = vrot.lane.b32.xlu0 %v743, 24
      %v1116 = vpop.permute.xlu0 %1115
      %1117 = vrot.lane.b32.xlu0 %v744, 24
      %v1118 = vpop.permute.xlu0 %1117
      %1119 = vrot.lane.b32.xlu0 %v745, 24
      %v1120 = vpop.permute.xlu0 %1119
      %1121 = vrot.lane.b32.xlu0 %v746, 24
      %v1122 = vpop.permute.xlu0 %1121
      %1123 = vrot.lane.b32.xlu0 %v747, 24
      %v1124 = vpop.permute.xlu0 %1123
      %1125 = vrot.lane.b32.xlu0 %v748, 24
      %v1126 = vpop.permute.xlu0 %1125
      %1127 = vrot.lane.b32.xlu0 %v749, 24
      %v1128 = vpop.permute.xlu0 %1127
      %1129 = vrot.lane.b32.xlu0 %v750, 24
      %v1130 = vpop.permute.xlu0 %1129
      %1131 = vrot.lane.b32.xlu0 %v751, 24
      %v1132 = vpop.permute.xlu0 %1131
      %1133 = vrot.lane.b32.xlu0 %v752, 24
      %v1134 = vpop.permute.xlu0 %1133
      %1135 = vrot.lane.b32.xlu0 %v753, 24
      %v1136 = vpop.permute.xlu0 %1135
      %1137 = vrot.lane.b32.xlu0 %v754, 24
      %v1138 = vpop.permute.xlu0 %1137
      %1155 = vrot.lane.b32.xlu0 %v787, 28
      %v1156 = vpop.permute.xlu0 %1155
      %1157 = vrot.lane.b32.xlu0 %v788, 28
      %v1158 = vpop.permute.xlu0 %1157
      %1159 = vrot.lane.b32.xlu0 %v789, 28
      %v1160 = vpop.permute.xlu0 %1159
      %1161 = vrot.lane.b32.xlu0 %v790, 28
      %v1162 = vpop.permute.xlu0 %1161
      %1163 = vrot.lane.b32.xlu0 %v791, 28
      %v1164 = vpop.permute.xlu0 %1163
      %1165 = vrot.lane.b32.xlu0 %v792, 28
      %v1166 = vpop.permute.xlu0 %1165
      %1167 = vrot.lane.b32.xlu0 %v793, 28
      %v1168 = vpop.permute.xlu0 %1167
      %1169 = vrot.lane.b32.xlu0 %v794, 28
      %v1170 = vpop.permute.xlu0 %1169
      %1171 = vrot.lane.b32.xlu0 %v795, 28
      %v1172 = vpop.permute.xlu0 %1171
      %1173 = vrot.lane.b32.xlu0 %v796, 28
      %v1174 = vpop.permute.xlu0 %1173
      %1175 = vrot.lane.b32.xlu0 %v797, 28
      %v1176 = vpop.permute.xlu0 %1175
      %1177 = vrot.lane.b32.xlu0 %v798, 28
      %v1178 = vpop.permute.xlu0 %1177
      %1179 = vrot.lane.b32.xlu0 %v799, 28
      %v1180 = vpop.permute.xlu0 %1179
      %1181 = vrot.lane.b32.xlu0 %v800, 28
      %v1182 = vpop.permute.xlu0 %1181
      %1183 = vrot.lane.b32.xlu0 %v801, 28
      %v1184 = vpop.permute.xlu0 %1183
      %1185 = vrot.lane.b32.xlu0 %v802, 28
      %v1186 = vpop.permute.xlu0 %1185
      %1203 = vrot.lane.b32.xlu0 %v835, 32
      %v1204 = vpop.permute.xlu0 %1203
      %1205 = vrot.lane.b32.xlu0 %v836, 32
      %v1206 = vpop.permute.xlu0 %1205
      %1207 = vrot.lane.b32.xlu0 %v837, 32
      %v1208 = vpop.permute.xlu0 %1207
      %1209 = vrot.lane.b32.xlu0 %v838, 32
      %v1210 = vpop.permute.xlu0 %1209
      %1211 = vrot.lane.b32.xlu0 %v839, 32
      %v1212 = vpop.permute.xlu0 %1211
      %1213 = vrot.lane.b32.xlu0 %v840, 32
      %v1214 = vpop.permute.xlu0 %1213
      %1215 = vrot.lane.b32.xlu0 %v841, 32
      %v1216 = vpop.permute.xlu0 %1215
      %1217 = vrot.lane.b32.xlu0 %v842, 32
      %v1218 = vpop.permute.xlu0 %1217
      %1219 = vrot.lane.b32.xlu0 %v843, 32
      %v1220 = vpop.permute.xlu0 %1219
      %1221 = vrot.lane.b32.xlu0 %v844, 32
      %v1222 = vpop.permute.xlu0 %1221
      %1223 = vrot.lane.b32.xlu0 %v845, 32
      %v1224 = vpop.permute.xlu0 %1223
      %1225 = vrot.lane.b32.xlu0 %v846, 32
      %v1226 = vpop.permute.xlu0 %1225
      %1227 = vrot.lane.b32.xlu0 %v847, 32
      %v1228 = vpop.permute.xlu0 %1227
      %1229 = vrot.lane.b32.xlu0 %v848, 32
      %v1230 = vpop.permute.xlu0 %1229
      %1231 = vrot.lane.b32.xlu0 %v849, 32
      %v1232 = vpop.permute.xlu0 %1231
      %1233 = vrot.lane.b32.xlu0 %v850, 32
      %v1234 = vpop.permute.xlu0 %1233
      %v1237 = vsel %vm312, %v450, %v868
      %v1240 = vsel %vm312, %v451, %v870
      %v1243 = vsel %vm312, %v452, %v872
      %v1246 = vsel %vm312, %v453, %v874
      %v1249 = vsel %vm312, %v454, %v876
      %v1252 = vsel %vm312, %v455, %v878
      %v1255 = vsel %vm312, %v456, %v880
      %v1258 = vsel %vm312, %v457, %v882
      %v1261 = vsel %vm312, %v458, %v884
      %v1264 = vsel %vm312, %v459, %v886
      %v1267 = vsel %vm312, %v460, %v888
      %v1270 = vsel %vm312, %v461, %v890
      %v1273 = vsel %vm312, %v462, %v892
      %v1276 = vsel %vm312, %v463, %v894
      %v1279 = vsel %vm312, %v464, %v896
      %v1282 = vsel %vm312, %v465, %v898
      %vm1283 = vcmask 64512
      %v1285 = vsel %vm1283, %v1237, %v916
      %v1287 = vsel %vm1283, %v1240, %v918
      %v1289 = vsel %vm1283, %v1243, %v920
      %v1291 = vsel %vm1283, %v1246, %v922
      %v1293 = vsel %vm1283, %v1249, %v924
      %v1295 = vsel %vm1283, %v1252, %v926
      %v1297 = vsel %vm1283, %v1255, %v928
      %v1299 = vsel %vm1283, %v1258, %v930
      %v1301 = vsel %vm1283, %v1261, %v932
      %v1303 = vsel %vm1283, %v1264, %v934
      %v1305 = vsel %vm1283, %v1267, %v936
      %v1307 = vsel %vm1283, %v1270, %v938
      %v1309 = vsel %vm1283, %v1273, %v940
      %v1311 = vsel %vm1283, %v1276, %v942
      %v1313 = vsel %vm1283, %v1279, %v944
      %v1315 = vsel %vm1283, %v1282, %v946
      %vm1316 = vcmask 97280
      %v1318 = vsel %vm1316, %v1285, %v964
      %v1320 = vsel %vm1316, %v1287, %v966
      %v1322 = vsel %vm1316, %v1289, %v968
      %v1324 = vsel %vm1316, %v1291, %v970
      %v1326 = vsel %vm1316, %v1293, %v972
      %v1328 = vsel %vm1316, %v1295, %v974
      %v1330 = vsel %vm1316, %v1297, %v976
      %v1332 = vsel %vm1316, %v1299, %v978
      %v1334 = vsel %vm1316, %v1301, %v980
      %v1336 = vsel %vm1316, %v1303, %v982
      %v1338 = vsel %vm1316, %v1305, %v984
      %v1340 = vsel %vm1316, %v1307, %v986
      %v1342 = vsel %vm1316, %v1309, %v988
      %v1344 = vsel %vm1316, %v1311, %v990
      %v1346 = vsel %vm1316, %v1313, %v992
      %v1348 = vsel %vm1316, %v1315, %v994
      %vm1349 = vcmask 130048
      %v1351 = vsel %vm1349, %v1318, %v1012
      %v1353 = vsel %vm1349, %v1320, %v1014
      %v1355 = vsel %vm1349, %v1322, %v1016
      %v1357 = vsel %vm1349, %v1324, %v1018
      %v1359 = vsel %vm1349, %v1326, %v1020
      %v1361 = vsel %vm1349, %v1328, %v1022
      %v1363 = vsel %vm1349, %v1330, %v1024
      %v1365 = vsel %vm1349, %v1332, %v1026
      %v1367 = vsel %vm1349, %v1334, %v1028
      %v1369 = vsel %vm1349, %v1336, %v1030
      %v1371 = vsel %vm1349, %v1338, %v1032
      %v1373 = vsel %vm1349, %v1340, %v1034
      %v1375 = vsel %vm1349, %v1342, %v1036
      %v1377 = vsel %vm1349, %v1344, %v1038
      %v1379 = vsel %vm1349, %v1346, %v1040
      %v1381 = vsel %vm1349, %v1348, %v1042
      %vm1382 = vcmask 162816
      %v1384 = vsel %vm1382, %v1351, %v1060
      %v1386 = vsel %vm1382, %v1353, %v1062
      %v1388 = vsel %vm1382, %v1355, %v1064
      %v1390 = vsel %vm1382, %v1357, %v1066
      %v1392 = vsel %vm1382, %v1359, %v1068
      %v1394 = vsel %vm1382, %v1361, %v1070
      %v1396 = vsel %vm1382, %v1363, %v1072
      %v1398 = vsel %vm1382, %v1365, %v1074
      %v1400 = vsel %vm1382, %v1367, %v1076
      %v1402 = vsel %vm1382, %v1369, %v1078
      %v1404 = vsel %vm1382, %v1371, %v1080
      %v1406 = vsel %vm1382, %v1373, %v1082
      %v1408 = vsel %vm1382, %v1375, %v1084
      %v1410 = vsel %vm1382, %v1377, %v1086
      %v1412 = vsel %vm1382, %v1379, %v1088
      %v1414 = vsel %vm1382, %v1381, %v1090
      %vm1415 = vcmask 195584
      %v1417 = vsel %vm1415, %v1384, %v1108
      %v1419 = vsel %vm1415, %v1386, %v1110
      %v1421 = vsel %vm1415, %v1388, %v1112
      %v1423 = vsel %vm1415, %v1390, %v1114
      %v1425 = vsel %vm1415, %v1392, %v1116
      %v1427 = vsel %vm1415, %v1394, %v1118
      %v1429 = vsel %vm1415, %v1396, %v1120
      %v1431 = vsel %vm1415, %v1398, %v1122
      %v1433 = vsel %vm1415, %v1400, %v1124
      %v1435 = vsel %vm1415, %v1402, %v1126
      %v1437 = vsel %vm1415, %v1404, %v1128
      %v1439 = vsel %vm1415, %v1406, %v1130
      %v1441 = vsel %vm1415, %v1408, %v1132
      %v1443 = vsel %vm1415, %v1410, %v1134
      %v1445 = vsel %vm1415, %v1412, %v1136
      %v1447 = vsel %vm1415, %v1414, %v1138
      %vm1448 = vcmask 228352
      %v1450 = vsel %vm1448, %v1417, %v1156
      %v1452 = vsel %vm1448, %v1419, %v1158
      %v1454 = vsel %vm1448, %v1421, %v1160
      %v1456 = vsel %vm1448, %v1423, %v1162
      %v1458 = vsel %vm1448, %v1425, %v1164
      %v1460 = vsel %vm1448, %v1427, %v1166
      %v1462 = vsel %vm1448, %v1429, %v1168
      %v1464 = vsel %vm1448, %v1431, %v1170
      %v1466 = vsel %vm1448, %v1433, %v1172
      %v1468 = vsel %vm1448, %v1435, %v1174
      %v1470 = vsel %vm1448, %v1437, %v1176
      %v1472 = vsel %vm1448, %v1439, %v1178
      %v1474 = vsel %vm1448, %v1441, %v1180
      %v1476 = vsel %vm1448, %v1443, %v1182
      %v1478 = vsel %vm1448, %v1445, %v1184
      %v1480 = vsel %vm1448, %v1447, %v1186
      %vm1481 = vcmask 261120
      %v1483 = vsel %vm1481, %v1450, %v1204
      %v1485 = vsel %vm1481, %v1452, %v1206
      %v1487 = vsel %vm1481, %v1454, %v1208
      %v1489 = vsel %vm1481, %v1456, %v1210
      %v1491 = vsel %vm1481, %v1458, %v1212
      %v1493 = vsel %vm1481, %v1460, %v1214
      %v1495 = vsel %vm1481, %v1462, %v1216
      %v1497 = vsel %vm1481, %v1464, %v1218
      %v1499 = vsel %vm1481, %v1466, %v1220
      %v1501 = vsel %vm1481, %v1468, %v1222
      %v1503 = vsel %vm1481, %v1470, %v1224
      %v1505 = vsel %vm1481, %v1472, %v1226
      %v1507 = vsel %vm1481, %v1474, %v1228
      %v1509 = vsel %vm1481, %v1476, %v1230
      %v1511 = vsel %vm1481, %v1478, %v1232
      %v1513 = vsel %vm1481, %v1480, %v1234
      %v1514 = vld [vmem:[%s1] sm:$0xf]
      %v1515 = vld [vmem:[%s1 + $0x4] sm:$0xf]
      %v1516 = vld [vmem:[%s1 + $0x8] sm:$0xf]
      %v1517 = vld [vmem:[%s1 + $0xc] sm:$0xf]
      %v1518 = vld [vmem:[%s1 + $0x10] sm:$0x3]
      %v1519 = vld [vmem:[%s2] sm:$0x1]
      %v1521 = vlaneseq
      %v1522 = vshrl.u32 %v1521, 7
      %v1523 = vsub.s32 0, %v1522
      %v1524 = vrot.slane %v1519, %v1523
      %v1531 = vunpack.c.l.b16 %v1514
      %v1532 = vunpack.c.l.b16 %v1515
      %v1533 = vunpack.c.l.b16 %v1516
      %v1534 = vunpack.c.l.b16 %v1517
      %v1535 = vunpack.c.l.b16 %v1518
      %v1536 = vpack.c.b16 %v1532, %v1531
      %v1537 = vpack.c.b16 %v1534, %v1533
      %v1538 = vpack.c.b16 %v1535, %v1535
      %vm1541 = vcmask 293888
      %v1542 = vsel %vm1541, %v1483, 0
      %v1544 = vsel %vm1541, %v1485, 0
      %v1546 = vsel %vm1541, %v1487, 0
      %v1548 = vsel %vm1541, %v1489, 0
      %v1550 = vsel %vm1541, %v1491, 0
      %v1552 = vsel %vm1541, %v1493, 0
      %v1554 = vsel %vm1541, %v1495, 0
      %v1556 = vsel %vm1541, %v1497, 0
      %v1558 = vsel %vm1541, %v1499, 0
      %v1560 = vsel %vm1541, %v1501, 0
      %v1562 = vsel %vm1541, %v1503, 0
      %v1564 = vsel %vm1541, %v1505, 0
      %v1566 = vsel %vm1541, %v1507, 0
      %v1568 = vsel %vm1541, %v1509, 0
      %v1570 = vsel %vm1541, %v1511, 0
      %v1572 = vsel %vm1541, %v1513, 0
      %vm1574 = vcmask 1041408
      %v1576 = vsel %vm1574, %v1538, 0
      %1578 = vmatprep.subr.bf16.mxu0 0
      %1579 = vmatpush1.bf16.msra.mxu0 %v1536
      %1580 = vmatprep.subr.bf16.mxu0 0
      %1581 = vmatpush1.bf16.msra.mxu0 %v1537
      %1582 = vmatprep.subr.bf16.mxu0 0
      %1583 = vmatpush1.bf16.msra.mxu0 %v1576
      %1584 = vmatprep.subr.bf16.mxu0 0
      %1585 = vmatpush1.bf16.msra.mxu0 0
      %1586 = vmatprep.subr.bf16.mxu0 0
      %1587 = vmatpush1.bf16.msra.mxu0 0
      %1588 = vmatprep.subr.bf16.mxu0 0
      %1589 = vmatpush1.bf16.msra.mxu0 0
      %1590 = vmatprep.subr.bf16.mxu0 0
      %1591 = vmatpush1.bf16.msra.mxu0 0
      %1592 = vmatprep.subr.bf16.mxu0 0
      %1593 = vmatpush1.bf16.msra.mxu0 0
      %1594 = vmatprep.subr.bf16.mxu0 0
      %1595 = vmatpush1.bf16.msra.mxu0 0
      %1596 = vmatprep.subr.bf16.mxu0 0
      %1597 = vmatpush1.bf16.msra.mxu0 0
      %1598 = vmatprep.subr.bf16.mxu0 0
      %1599 = vmatpush1.bf16.msra.mxu0 0
      %1600 = vmatprep.subr.bf16.mxu0 0
      %1601 = vmatpush1.bf16.msra.mxu0 0
      %1602 = vmatprep.subr.bf16.mxu0 0
      %1603 = vmatpush1.bf16.msra.mxu0 0
      %1604 = vmatprep.subr.bf16.mxu0 0
      %1605 = vmatpush1.bf16.msra.mxu0 0
      %1606 = vmatprep.subr.bf16.mxu0 0
      %1607 = vmatpush1.bf16.msra.mxu0 0
      %1608 = vmatprep.subr.bf16.mxu0 0
      %1609 = vmatpush1.bf16.msra.mxu0 0
      %1610 = vmatprep.mubr.bf16.mxu0 0
      %1611 = vmatmul.mubr.bf16.gmra.mrb[0].mxu0 %v1542
      %v1612 = vpop.f32.mrb[0].mxu0
      %v1613 = vadd.f32 %v1524, %v1612
      %v1614 = vpop.f32.mrb[0].mxu0
      %v1615 = vpop.f32.mrb[0].mxu0
      %v1616 = vadd.f32 %v1524, %v1615
      %v1617 = vpop.f32.mrb[0].mxu0
      %1618 = vmatprep.mubr.bf16.mxu0 0
      %1619 = vmatmul.mubr.bf16.gmra.mrb[0].mxu0 %v1544
      %v1620 = vpop.f32.mrb[0].mxu0
      %v1621 = vadd.f32 %v1524, %v1620
      %v1622 = vpop.f32.mrb[0].mxu0
      %v1623 = vpop.f32.mrb[0].mxu0
      %v1624 = vadd.f32 %v1524, %v1623
      %v1625 = vpop.f32.mrb[0].mxu0
      %1626 = vmatprep.mubr.bf16.mxu0 0
      %1627 = vmatmul.mubr.bf16.gmra.mrb[0].mxu0 %v1546
      %v1628 = vpop.f32.mrb[0].mxu0
      %v1629 = vadd.f32 %v1524, %v1628
      %v1630 = vpop.f32.mrb[0].mxu0
      %v1631 = vpop.f32.mrb[0].mxu0
      %v1632 = vadd.f32 %v1524, %v1631
      %v1633 = vpop.f32.mrb[0].mxu0
      %1634 = vmatprep.mubr.bf16.mxu0 0
      %1635 = vmatmul.mubr.bf16.gmra.mrb[0].mxu0 %v1548
      %v1636 = vpop.f32.mrb[0].mxu0
      %v1637 = vadd.f32 %v1524, %v1636
      %v1638 = vpop.f32.mrb[0].mxu0
      %v1639 = vpop.f32.mrb[0].mxu0
      %v1640 = vadd.f32 %v1524, %v1639
      %v1641 = vpop.f32.mrb[0].mxu0
      %1642 = vmatprep.mubr.bf16.mxu0 0
      %1643 = vmatmul.mubr.bf16.gmra.mrb[0].mxu0 %v1550
      %v1644 = vpop.f32.mrb[0].mxu0
      %v1645 = vadd.f32 %v1524, %v1644
      %v1646 = vpop.f32.mrb[0].mxu0
      %v1647 = vpop.f32.mrb[0].mxu0
      %v1648 = vadd.f32 %v1524, %v1647
      %v1649 = vpop.f32.mrb[0].mxu0
      %1650 = vmatprep.mubr.bf16.mxu0 0
      %1651 = vmatmul.mubr.bf16.gmra.mrb[0].mxu0 %v1552
      %v1652 = vpop.f32.mrb[0].mxu0
      %v1653 = vadd.f32 %v1524, %v1652
      %v1654 = vpop.f32.mrb[0].mxu0
      %v1655 = vpop.f32.mrb[0].mxu0
      %v1656 = vadd.f32 %v1524, %v1655
      %v1657 = vpop.f32.mrb[0].mxu0
      %1658 = vmatprep.mubr.bf16.mxu0 0
      %1659 = vmatmul.mubr.bf16.gmra.mrb[0].mxu0 %v1554
      %v1660 = vpop.f32.mrb[0].mxu0
      %v1661 = vadd.f32 %v1524, %v1660
      %v1662 = vpop.f32.mrb[0].mxu0
      %v1663 = vpop.f32.mrb[0].mxu0
      %v1664 = vadd.f32 %v1524, %v1663
      %v1665 = vpop.f32.mrb[0].mxu0
      %1666 = vmatprep.mubr.bf16.mxu0 0
      %1667 = vmatmul.mubr.bf16.gmra.mrb[0].mxu0 %v1556
      %v1668 = vpop.f32.mrb[0].mxu0
      %v1669 = vadd.f32 %v1524, %v1668
      %v1670 = vpop.f32.mrb[0].mxu0
      %v1671 = vpop.f32.mrb[0].mxu0
      %v1672 = vadd.f32 %v1524, %v1671
      %v1673 = vpop.f32.mrb[0].mxu0
      %1674 = vmatprep.mubr.bf16.mxu0 0
      %1675 = vmatmul.mubr.bf16.gmra.mrb[0].mxu0 %v1558
      %v1676 = vpop.f32.mrb[0].mxu0
      %v1677 = vadd.f32 %v1524, %v1676
      %v1678 = vpop.f32.mrb[0].mxu0
      %v1679 = vpop.f32.mrb[0].mxu0
      %v1680 = vadd.f32 %v1524, %v1679
      %v1681 = vpop.f32.mrb[0].mxu0
      %1682 = vmatprep.mubr.bf16.mxu0 0
      %1683 = vmatmul.mubr.bf16.gmra.mrb[0].mxu0 %v1560
      %v1684 = vpop.f32.mrb[0].mxu0
      %v1685 = vadd.f32 %v1524, %v1684
      %v1686 = vpop.f32.mrb[0].mxu0
      %v1687 = vpop.f32.mrb[0].mxu0
      %v1688 = vadd.f32 %v1524, %v1687
      %v1689 = vpop.f32.mrb[0].mxu0
      %1690 = vmatprep.mubr.bf16.mxu0 0
      %1691 = vmatmul.mubr.bf16.gmra.mrb[0].mxu0 %v1562
      %v1692 = vpop.f32.mrb[0].mxu0
      %v1693 = vadd.f32 %v1524, %v1692
      %v1694 = vpop.f32.mrb[0].mxu0
      %v1695 = vpop.f32.mrb[0].mxu0
      %v1696 = vadd.f32 %v1524, %v1695
      %v1697 = vpop.f32.mrb[0].mxu0
      %1698 = vmatprep.mubr.bf16.mxu0 0
      %1699 = vmatmul.mubr.bf16.gmra.mrb[0].mxu0 %v1564
      %v1700 = vpop.f32.mrb[0].mxu0
      %v1701 = vadd.f32 %v1524, %v1700
      %v1702 = vpop.f32.mrb[0].mxu0
      %v1703 = vpop.f32.mrb[0].mxu0
      %v1704 = vadd.f32 %v1524, %v1703
      %v1705 = vpop.f32.mrb[0].mxu0
      %1706 = vmatprep.mubr.bf16.mxu0 0
      %1707 = vmatmul.mubr.bf16.gmra.mrb[0].mxu0 %v1566
      %v1708 = vpop.f32.mrb[0].mxu0
      %v1709 = vadd.f32 %v1524, %v1708
      %v1710 = vpop.f32.mrb[0].mxu0
      %v1711 = vpop.f32.mrb[0].mxu0
      %v1712 = vadd.f32 %v1524, %v1711
      %v1713 = vpop.f32.mrb[0].mxu0
      %1714 = vmatprep.mubr.bf16.mxu0 0
      %1715 = vmatmul.mubr.bf16.gmra.mrb[0].mxu0 %v1568
      %v1716 = vpop.f32.mrb[0].mxu0
      %v1717 = vadd.f32 %v1524, %v1716
      %v1718 = vpop.f32.mrb[0].mxu0
      %v1719 = vpop.f32.mrb[0].mxu0
      %v1720 = vadd.f32 %v1524, %v1719
      %v1721 = vpop.f32.mrb[0].mxu0
      %1722 = vmatprep.mubr.bf16.mxu0 0
      %1723 = vmatmul.mubr.bf16.gmra.mrb[0].mxu0 %v1570
      %v1724 = vpop.f32.mrb[0].mxu0
      %v1725 = vadd.f32 %v1524, %v1724
      %v1726 = vpop.f32.mrb[0].mxu0
      %v1727 = vpop.f32.mrb[0].mxu0
      %v1728 = vadd.f32 %v1524, %v1727
      %v1729 = vpop.f32.mrb[0].mxu0
      %1730 = vmatprep.mubr.bf16.mxu0 0
      %1731 = vmatmul.mubr.bf16.gmra.mrb[0].mxu0 %v1572
      %v1732 = vpop.f32.mrb[0].mxu0
      %v1733 = vadd.f32 %v1524, %v1732
      %v1734 = vpop.f32.mrb[0].mxu0
      %v1735 = vpop.f32.mrb[0].mxu0
      %v1736 = vadd.f32 %v1524, %v1735
      %v1737 = vpop.f32.mrb[0].mxu0
      %1738 = vdwg.mxu0
      %v1739 = vmul.f32 %v1613, %v1613
      %v1740 = vmul.f32 %v1616, %v1616
      %v1741 = vmul.f32 %v1621, %v1621
      %v1742 = vmul.f32 %v1624, %v1624
      %v1743 = vmul.f32 %v1629, %v1629
      %v1744 = vmul.f32 %v1632, %v1632
      %v1745 = vmul.f32 %v1637, %v1637
      %v1746 = vmul.f32 %v1640, %v1640
      %v1747 = vmul.f32 %v1645, %v1645
      %v1748 = vmul.f32 %v1648, %v1648
      %v1749 = vmul.f32 %v1653, %v1653
      %v1750 = vmul.f32 %v1656, %v1656
      %v1751 = vmul.f32 %v1661, %v1661
      %v1752 = vmul.f32 %v1664, %v1664
      %v1753 = vmul.f32 %v1669, %v1669
      %v1754 = vmul.f32 %v1672, %v1672
      %v1755 = vmul.f32 %v1677, %v1677
      %v1756 = vmul.f32 %v1680, %v1680
      %v1757 = vmul.f32 %v1685, %v1685
      %v1758 = vmul.f32 %v1688, %v1688
      %v1759 = vmul.f32 %v1693, %v1693
      %v1760 = vmul.f32 %v1696, %v1696
      %v1761 = vmul.f32 %v1701, %v1701
      %v1762 = vmul.f32 %v1704, %v1704
      %v1763 = vmul.f32 %v1709, %v1709
      %v1764 = vmul.f32 %v1712, %v1712
      %v1765 = vmul.f32 %v1717, %v1717
      %v1766 = vmul.f32 %v1720, %v1720
      %v1767 = vmul.f32 %v1725, %v1725
      %v1768 = vmul.f32 %v1728, %v1728
      %v1769 = vmul.f32 %v1733, %v1733
      %v1770 = vmul.f32 %v1736, %v1736
      %v1771 = vsel %vm1283, %v1739, 0.0
      %1772 = vadd.xlane.f32.xlu0 %v1771
      %v1773 = vpop.xlane.xlu0 %1772
      %v1774 = vsel %vm1283, %v1740, 0.0
      %1775 = vadd.xlane.f32.xlu0 %v1774
      %v1776 = vpop.xlane.xlu0 %1775
      %v1777 = vsel %vm1283, %v1741, 0.0
      %1778 = vadd.xlane.f32.xlu0 %v1777
      %v1779 = vpop.xlane.xlu0 %1778
      %v1780 = vsel %vm1283, %v1742, 0.0
      %1781 = vadd.xlane.f32.xlu0 %v1780
      %v1782 = vpop.xlane.xlu0 %1781
      %v1783 = vsel %vm1283, %v1743, 0.0
      %1784 = vadd.xlane.f32.xlu0 %v1783
      %v1785 = vpop.xlane.xlu0 %1784
      %v1786 = vsel %vm1283, %v1744, 0.0
      %1787 = vadd.xlane.f32.xlu0 %v1786
      %v1788 = vpop.xlane.xlu0 %1787
      %v1789 = vsel %vm1283, %v1745, 0.0
      %1790 = vadd.xlane.f32.xlu0 %v1789
      %v1791 = vpop.xlane.xlu0 %1790
      %v1792 = vsel %vm1283, %v1746, 0.0
      %1793 = vadd.xlane.f32.xlu0 %v1792
      %v1794 = vpop.xlane.xlu0 %1793
      %v1795 = vsel %vm1283, %v1747, 0.0
      %1796 = vadd.xlane.f32.xlu0 %v1795
      %v1797 = vpop.xlane.xlu0 %1796
      %v1798 = vsel %vm1283, %v1748, 0.0
      %1799 = vadd.xlane.f32.xlu0 %v1798
      %v1800 = vpop.xlane.xlu0 %1799
      %v1801 = vsel %vm1283, %v1749, 0.0
      %1802 = vadd.xlane.f32.xlu0 %v1801
      %v1803 = vpop.xlane.xlu0 %1802
      %v1804 = vsel %vm1283, %v1750, 0.0
      %1805 = vadd.xlane.f32.xlu0 %v1804
      %v1806 = vpop.xlane.xlu0 %1805
      %v1807 = vsel %vm1283, %v1751, 0.0
      %1808 = vadd.xlane.f32.xlu0 %v1807
      %v1809 = vpop.xlane.xlu0 %1808
      %v1810 = vsel %vm1283, %v1752, 0.0
      %1811 = vadd.xlane.f32.xlu0 %v1810
      %v1812 = vpop.xlane.xlu0 %1811
      %v1813 = vsel %vm1283, %v1753, 0.0
      %1814 = vadd.xlane.f32.xlu0 %v1813
      %v1815 = vpop.xlane.xlu0 %1814
      %v1816 = vsel %vm1283, %v1754, 0.0
      %1817 = vadd.xlane.f32.xlu0 %v1816
      %v1818 = vpop.xlane.xlu0 %1817
      %v1819 = vsel %vm1283, %v1755, 0.0
      %1820 = vadd.xlane.f32.xlu0 %v1819
      %v1821 = vpop.xlane.xlu0 %1820
      %v1822 = vsel %vm1283, %v1756, 0.0
      %1823 = vadd.xlane.f32.xlu0 %v1822
      %v1824 = vpop.xlane.xlu0 %1823
      %v1825 = vsel %vm1283, %v1757, 0.0
      %1826 = vadd.xlane.f32.xlu0 %v1825
      %v1827 = vpop.xlane.xlu0 %1826
      %v1828 = vsel %vm1283, %v1758, 0.0
      %1829 = vadd.xlane.f32.xlu0 %v1828
      %v1830 = vpop.xlane.xlu0 %1829
      %v1831 = vsel %vm1283, %v1759, 0.0
      %1832 = vadd.xlane.f32.xlu0 %v1831
      %v1833 = vpop.xlane.xlu0 %1832
      %v1834 = vsel %vm1283, %v1760, 0.0
      %1835 = vadd.xlane.f32.xlu0 %v1834
      %v1836 = vpop.xlane.xlu0 %1835
      %v1837 = vsel %vm1283, %v1761, 0.0
      %1838 = vadd.xlane.f32.xlu0 %v1837
      %v1839 = vpop.xlane.xlu0 %1838
      %v1840 = vsel %vm1283, %v1762, 0.0
      %1841 = vadd.xlane.f32.xlu0 %v1840
      %v1842 = vpop.xlane.xlu0 %1841
      %v1843 = vsel %vm1283, %v1763, 0.0
      %1844 = vadd.xlane.f32.xlu0 %v1843
      %v1845 = vpop.xlane.xlu0 %1844
      %v1846 = vsel %vm1283, %v1764, 0.0
      %1847 = vadd.xlane.f32.xlu0 %v1846
      %v1848 = vpop.xlane.xlu0 %1847
      %v1849 = vsel %vm1283, %v1765, 0.0
      %1850 = vadd.xlane.f32.xlu0 %v1849
      %v1851 = vpop.xlane.xlu0 %1850
      %v1852 = vsel %vm1283, %v1766, 0.0
      %1853 = vadd.xlane.f32.xlu0 %v1852
      %v1854 = vpop.xlane.xlu0 %1853
      %v1855 = vsel %vm1283, %v1767, 0.0
      %1856 = vadd.xlane.f32.xlu0 %v1855
      %v1857 = vpop.xlane.xlu0 %1856
      %v1858 = vsel %vm1283, %v1768, 0.0
      %1859 = vadd.xlane.f32.xlu0 %v1858
      %v1860 = vpop.xlane.xlu0 %1859
      %v1861 = vsel %vm1283, %v1769, 0.0
      %1862 = vadd.xlane.f32.xlu0 %v1861
      %v1863 = vpop.xlane.xlu0 %1862
      %v1864 = vsel %vm1283, %v1770, 0.0
      %1865 = vadd.xlane.f32.xlu0 %v1864
      %v1866 = vpop.xlane.xlu0 %1865
      %v1867 = vrcp.pop 8.0
      %v1868 = vmul.f32 %v1773, %v1867
      %v1869 = vmul.f32 %v1776, %v1867
      %v1870 = vmul.f32 %v1779, %v1867
      %v1871 = vmul.f32 %v1782, %v1867
      %v1872 = vmul.f32 %v1785, %v1867
      %v1873 = vmul.f32 %v1788, %v1867
      %v1874 = vmul.f32 %v1791, %v1867
      %v1875 = vmul.f32 %v1794, %v1867
      %v1876 = vmul.f32 %v1797, %v1867
      %v1877 = vmul.f32 %v1800, %v1867
      %v1878 = vmul.f32 %v1803, %v1867
      %v1879 = vmul.f32 %v1806, %v1867
      %v1880 = vmul.f32 %v1809, %v1867
      %v1881 = vmul.f32 %v1812, %v1867
      %v1882 = vmul.f32 %v1815, %v1867
      %v1883 = vmul.f32 %v1818, %v1867
      %v1884 = vmul.f32 %v1821, %v1867
      %v1885 = vmul.f32 %v1824, %v1867
      %v1886 = vmul.f32 %v1827, %v1867
      %v1887 = vmul.f32 %v1830, %v1867
      %v1888 = vmul.f32 %v1833, %v1867
      %v1889 = vmul.f32 %v1836, %v1867
      %v1890 = vmul.f32 %v1839, %v1867
      %v1891 = vmul.f32 %v1842, %v1867
      %v1892 = vmul.f32 %v1845, %v1867
      %v1893 = vmul.f32 %v1848, %v1867
      %v1894 = vmul.f32 %v1851, %v1867
      %v1895 = vmul.f32 %v1854, %v1867
      %v1896 = vmul.f32 %v1857, %v1867
      %v1897 = vmul.f32 %v1860, %v1867
      %v1898 = vmul.f32 %v1863, %v1867
      %v1899 = vmul.f32 %v1866, %v1867
      %v1900 = vadd.f32 %v1868, 1e-08
      %v1901 = vadd.f32 %v1869, 1e-08
      %v1902 = vadd.f32 %v1870, 1e-08
      %v1903 = vadd.f32 %v1871, 1e-08
      %v1904 = vadd.f32 %v1872, 1e-08
      %v1905 = vadd.f32 %v1873, 1e-08
      %v1906 = vadd.f32 %v1874, 1e-08
      %v1907 = vadd.f32 %v1875, 1e-08
      %v1908 = vadd.f32 %v1876, 1e-08
      %v1909 = vadd.f32 %v1877, 1e-08
      %v1910 = vadd.f32 %v1878, 1e-08
      %v1911 = vadd.f32 %v1879, 1e-08
      %v1912 = vadd.f32 %v1880, 1e-08
      %v1913 = vadd.f32 %v1881, 1e-08
      %v1914 = vadd.f32 %v1882, 1e-08
      %v1915 = vadd.f32 %v1883, 1e-08
      %v1916 = vadd.f32 %v1884, 1e-08
      %v1917 = vadd.f32 %v1885, 1e-08
      %v1918 = vadd.f32 %v1886, 1e-08
      %v1919 = vadd.f32 %v1887, 1e-08
      %v1920 = vadd.f32 %v1888, 1e-08
      %v1921 = vadd.f32 %v1889, 1e-08
      %v1922 = vadd.f32 %v1890, 1e-08
      %v1923 = vadd.f32 %v1891, 1e-08
      %v1924 = vadd.f32 %v1892, 1e-08
      %v1925 = vadd.f32 %v1893, 1e-08
      %v1926 = vadd.f32 %v1894, 1e-08
      %v1927 = vadd.f32 %v1895, 1e-08
      %v1928 = vadd.f32 %v1896, 1e-08
      %v1929 = vadd.f32 %v1897, 1e-08
      %v1930 = vadd.f32 %v1898, 1e-08
      %v1931 = vadd.f32 %v1899, 1e-08
      %v1932 = vrsqrt.pop %v1900
      %v1933 = vrsqrt.pop %v1901
      %v1934 = vrsqrt.pop %v1902
      %v1935 = vrsqrt.pop %v1903
      %v1936 = vrsqrt.pop %v1904
      %v1937 = vrsqrt.pop %v1905
      %v1938 = vrsqrt.pop %v1906
      %v1939 = vrsqrt.pop %v1907
      %v1940 = vrsqrt.pop %v1908
      %v1941 = vrsqrt.pop %v1909
      %v1942 = vrsqrt.pop %v1910
      %v1943 = vrsqrt.pop %v1911
      %v1944 = vrsqrt.pop %v1912
      %v1945 = vrsqrt.pop %v1913
      %v1946 = vrsqrt.pop %v1914
      %v1947 = vrsqrt.pop %v1915
      %v1948 = vrsqrt.pop %v1916
      %v1949 = vrsqrt.pop %v1917
      %v1950 = vrsqrt.pop %v1918
      %v1951 = vrsqrt.pop %v1919
      %v1952 = vrsqrt.pop %v1920
      %v1953 = vrsqrt.pop %v1921
      %v1954 = vrsqrt.pop %v1922
      %v1955 = vrsqrt.pop %v1923
      %v1956 = vrsqrt.pop %v1924
      %v1957 = vrsqrt.pop %v1925
      %v1958 = vrsqrt.pop %v1926
      %v1959 = vrsqrt.pop %v1927
      %v1960 = vrsqrt.pop %v1928
      %v1961 = vrsqrt.pop %v1929
      %v1962 = vrsqrt.pop %v1930
      %v1963 = vrsqrt.pop %v1931
      %v1964 = vmul.f32 %v1613, %v1932
      %v1965 = vmul.f32 %v1616, %v1933
      %v1966 = vmul.f32 %v1621, %v1934
      %v1967 = vmul.f32 %v1624, %v1935
      %v1968 = vmul.f32 %v1629, %v1936
      %v1969 = vmul.f32 %v1632, %v1937
      %v1970 = vmul.f32 %v1637, %v1938
      %v1971 = vmul.f32 %v1640, %v1939
      %v1972 = vmul.f32 %v1645, %v1940
      %v1973 = vmul.f32 %v1648, %v1941
      %v1974 = vmul.f32 %v1653, %v1942
      %v1975 = vmul.f32 %v1656, %v1943
      %v1976 = vmul.f32 %v1661, %v1944
      %v1977 = vmul.f32 %v1664, %v1945
      %v1978 = vmul.f32 %v1669, %v1946
      %v1979 = vmul.f32 %v1672, %v1947
      %v1980 = vmul.f32 %v1677, %v1948
      %v1981 = vmul.f32 %v1680, %v1949
      %v1982 = vmul.f32 %v1685, %v1950
      %v1983 = vmul.f32 %v1688, %v1951
      %v1984 = vmul.f32 %v1693, %v1952
      %v1985 = vmul.f32 %v1696, %v1953
      %v1986 = vmul.f32 %v1701, %v1954
      %v1987 = vmul.f32 %v1704, %v1955
      %v1988 = vmul.f32 %v1709, %v1956
      %v1989 = vmul.f32 %v1712, %v1957
      %v1990 = vmul.f32 %v1717, %v1958
      %v1991 = vmul.f32 %v1720, %v1959
      %v1992 = vmul.f32 %v1725, %v1960
      %v1993 = vmul.f32 %v1728, %v1961
      %v1994 = vmul.f32 %v1733, %v1962
      %v1995 = vmul.f32 %v1736, %v1963
      %v1996 = vmul.f32 %v1964, 0.2
      %v1997 = vmul.f32 %v1965, 0.2
      %v1998 = vmul.f32 %v1966, 0.2
      %v1999 = vmul.f32 %v1967, 0.2
      %v2000 = vmul.f32 %v1968, 0.2
      %v2001 = vmul.f32 %v1969, 0.2
      %v2002 = vmul.f32 %v1970, 0.2
      %v2003 = vmul.f32 %v1971, 0.2
      %v2004 = vmul.f32 %v1972, 0.2
      %v2005 = vmul.f32 %v1973, 0.2
      %v2006 = vmul.f32 %v1974, 0.2
      %v2007 = vmul.f32 %v1975, 0.2
      %v2008 = vmul.f32 %v1976, 0.2
      %v2009 = vmul.f32 %v1977, 0.2
      %v2010 = vmul.f32 %v1978, 0.2
      %v2011 = vmul.f32 %v1979, 0.2
      %v2012 = vmul.f32 %v1980, 0.2
      %v2013 = vmul.f32 %v1981, 0.2
      %v2014 = vmul.f32 %v1982, 0.2
      %v2015 = vmul.f32 %v1983, 0.2
      %v2016 = vmul.f32 %v1984, 0.2
      %v2017 = vmul.f32 %v1985, 0.2
      %v2018 = vmul.f32 %v1986, 0.2
      %v2019 = vmul.f32 %v1987, 0.2
      %v2020 = vmul.f32 %v1988, 0.2
      %v2021 = vmul.f32 %v1989, 0.2
      %v2022 = vmul.f32 %v1990, 0.2
      %v2023 = vmul.f32 %v1991, 0.2
      %v2024 = vmul.f32 %v1992, 0.2
      %v2025 = vmul.f32 %v1993, 0.2
      %v2026 = vmul.f32 %v1994, 0.2
      %v2027 = vmul.f32 %v1995, 0.2
      %v2028 = vmax.f32 %v1964, %v1996
      %v2029 = vmax.f32 %v1965, %v1997
      %v2030 = vmax.f32 %v1966, %v1998
      %v2031 = vmax.f32 %v1967, %v1999
      %v2032 = vmax.f32 %v1968, %v2000
      %v2033 = vmax.f32 %v1969, %v2001
      %v2034 = vmax.f32 %v1970, %v2002
      %v2035 = vmax.f32 %v1971, %v2003
      %v2036 = vmax.f32 %v1972, %v2004
      %v2037 = vmax.f32 %v1973, %v2005
      %v2038 = vmax.f32 %v1974, %v2006
      %v2039 = vmax.f32 %v1975, %v2007
      %v2040 = vmax.f32 %v1976, %v2008
      %v2041 = vmax.f32 %v1977, %v2009
      %v2042 = vmax.f32 %v1978, %v2010
      %v2043 = vmax.f32 %v1979, %v2011
      %v2044 = vmax.f32 %v1980, %v2012
      %v2045 = vmax.f32 %v1981, %v2013
      %v2046 = vmax.f32 %v1982, %v2014
      %v2047 = vmax.f32 %v1983, %v2015
      %v2048 = vmax.f32 %v1984, %v2016
      %v2049 = vmax.f32 %v1985, %v2017
      %v2050 = vmax.f32 %v1986, %v2018
      %v2051 = vmax.f32 %v1987, %v2019
      %v2052 = vmax.f32 %v1988, %v2020
      %v2053 = vmax.f32 %v1989, %v2021
      %v2054 = vmax.f32 %v1990, %v2022
      %v2055 = vmax.f32 %v1991, %v2023
      %v2056 = vmax.f32 %v1992, %v2024
      %v2057 = vmax.f32 %v1993, %v2025
      %v2058 = vmax.f32 %v1994, %v2026
      %v2059 = vmax.f32 %v1995, %v2027
      %2060 = vst.msk [vmem:[#allocation3] sm:$0xff] %vm1283, 0.0
      %2061 = vst.msk [vmem:[#allocation3 + $0x8] sm:$0xff] %vm1283, 0.0
      %2062 = vst.msk [vmem:[#allocation3 + $0x10] sm:$0xff] %vm1283, 0.0
      %2063 = vst.msk [vmem:[#allocation3 + $0x18] sm:$0xff] %vm1283, 0.0
      %2064 = vst.msk [vmem:[#allocation3 + $0x20] sm:$0xff] %vm1283, 0.0
      %2065 = vst.msk [vmem:[#allocation3 + $0x28] sm:$0xff] %vm1283, 0.0
      %2066 = vst.msk [vmem:[#allocation3 + $0x30] sm:$0xff] %vm1283, 0.0
      %2067 = vst.msk [vmem:[#allocation3 + $0x38] sm:$0xff] %vm1283, 0.0
      %2068 = vst.msk [vmem:[#allocation3 + $0x40] sm:$0xff] %vm1283, 0.0
      %2069 = vst.msk [vmem:[#allocation3 + $0x48] sm:$0xff] %vm1283, 0.0
      %2070 = vst.msk [vmem:[#allocation3 + $0x50] sm:$0xff] %vm1283, 0.0
      %2071 = vst.msk [vmem:[#allocation3 + $0x58] sm:$0xff] %vm1283, 0.0
      %2072 = vst.msk [vmem:[#allocation3 + $0x60] sm:$0xff] %vm1283, 0.0
      %2073 = vst.msk [vmem:[#allocation3 + $0x68] sm:$0xff] %vm1283, 0.0
      %2074 = vst.msk [vmem:[#allocation3 + $0x70] sm:$0xff] %vm1283, 0.0
      %2075 = vst.msk [vmem:[#allocation3 + $0x78] sm:$0xff] %vm1283, 0.0
      %2076 = vst.msk [vmem:[#allocation3 + $0x80] sm:$0xff] %vm1283, 0.0
      %2077 = vst.msk [vmem:[#allocation3 + $0x88] sm:$0xff] %vm1283, 0.0
      %2078 = vst.msk [vmem:[#allocation3 + $0x90] sm:$0xff] %vm1283, 0.0
      %2079 = vst.msk [vmem:[#allocation3 + $0x98] sm:$0xff] %vm1283, 0.0
      %2080 = vst.msk [vmem:[#allocation3 + $0xa0] sm:$0xff] %vm1283, 0.0
      %2081 = vst.msk [vmem:[#allocation3 + $0xa8] sm:$0xff] %vm1283, 0.0
      %2082 = vst.msk [vmem:[#allocation3 + $0xb0] sm:$0xff] %vm1283, 0.0
      %2083 = vst.msk [vmem:[#allocation3 + $0xb8] sm:$0xff] %vm1283, 0.0
      %2084 = vst.msk [vmem:[#allocation3 + $0xc0] sm:$0xff] %vm1283, 0.0
      %2085 = vst.msk [vmem:[#allocation3 + $0xc8] sm:$0xff] %vm1283, 0.0
      %2086 = vst.msk [vmem:[#allocation3 + $0xd0] sm:$0xff] %vm1283, 0.0
      %2087 = vst.msk [vmem:[#allocation3 + $0xd8] sm:$0xff] %vm1283, 0.0
      %2088 = vst.msk [vmem:[#allocation3 + $0xe0] sm:$0xff] %vm1283, 0.0
      %2089 = vst.msk [vmem:[#allocation3 + $0xe8] sm:$0xff] %vm1283, 0.0
      %2090 = vst.msk [vmem:[#allocation3 + $0xf0] sm:$0xff] %vm1283, 0.0
      %2091 = vst.msk [vmem:[#allocation3 + $0xf8] sm:$0xff] %vm1283, 0.0
      %2092 = vst.msk [vmem:[#allocation3 + $0x100] sm:$0xff] %vm1283, 0.0
      %2093 = vst.msk [vmem:[#allocation3 + $0x108] sm:$0xff] %vm1283, 0.0
      %2094 = vst.msk [vmem:[#allocation3 + $0x110] sm:$0xff] %vm1283, 0.0
      %2095 = vst.msk [vmem:[#allocation3 + $0x118] sm:$0xff] %vm1283, 0.0
      %2096 = vst.msk [vmem:[#allocation3 + $0x120] sm:$0xff] %vm1283, 0.0
      %2097 = vst.msk [vmem:[#allocation3 + $0x128] sm:$0xff] %vm1283, 0.0
      %2098 = vst.msk [vmem:[#allocation3 + $0x130] sm:$0xff] %vm1283, 0.0
      %2099 = vst.msk [vmem:[#allocation3 + $0x138] sm:$0xff] %vm1283, 0.0
      %2100 = vst.msk [vmem:[#allocation3 + $0x140] sm:$0xff] %vm1283, 0.0
      %2101 = vst.msk [vmem:[#allocation3 + $0x148] sm:$0xff] %vm1283, 0.0
      %2102 = vst.msk [vmem:[#allocation3 + $0x150] sm:$0xff] %vm1283, 0.0
      %2103 = vst.msk [vmem:[#allocation3 + $0x158] sm:$0xff] %vm1283, 0.0
      %2104 = vst.msk [vmem:[#allocation3 + $0x160] sm:$0xff] %vm1283, 0.0
      %2105 = vst.msk [vmem:[#allocation3 + $0x168] sm:$0xff] %vm1283, 0.0
      %2106 = vst.msk [vmem:[#allocation3 + $0x170] sm:$0xff] %vm1283, 0.0
      %2107 = vst.msk [vmem:[#allocation3 + $0x178] sm:$0xff] %vm1283, 0.0
      %2108 = vst.msk [vmem:[#allocation3 + $0x180] sm:$0xff] %vm1283, 0.0
      %2109 = vst.msk [vmem:[#allocation3 + $0x188] sm:$0xff] %vm1283, 0.0
      %2110 = vst.msk [vmem:[#allocation3 + $0x190] sm:$0xff] %vm1283, 0.0
      %2111 = vst.msk [vmem:[#allocation3 + $0x198] sm:$0xff] %vm1283, 0.0
      %2112 = vst.msk [vmem:[#allocation3 + $0x1a0] sm:$0xff] %vm1283, 0.0
      %2113 = vst.msk [vmem:[#allocation3 + $0x1a8] sm:$0xff] %vm1283, 0.0
      %2114 = vst.msk [vmem:[#allocation3 + $0x1b0] sm:$0xff] %vm1283, 0.0
      %2115 = vst.msk [vmem:[#allocation3 + $0x1b8] sm:$0xff] %vm1283, 0.0
      %2116 = vst.msk [vmem:[#allocation3 + $0x1c0] sm:$0xff] %vm1283, 0.0
      %2117 = vst.msk [vmem:[#allocation3 + $0x1c8] sm:$0xff] %vm1283, 0.0
      %2118 = vst.msk [vmem:[#allocation3 + $0x1d0] sm:$0xff] %vm1283, 0.0
      %2119 = vst.msk [vmem:[#allocation3 + $0x1d8] sm:$0xff] %vm1283, 0.0
      %2120 = vst.msk [vmem:[#allocation3 + $0x1e0] sm:$0xff] %vm1283, 0.0
      %2121 = vst.msk [vmem:[#allocation3 + $0x1e8] sm:$0xff] %vm1283, 0.0
      %2122 = vst.msk [vmem:[#allocation3 + $0x1f0] sm:$0xff] %vm1283, 0.0
      %2123 = vst.msk [vmem:[#allocation3 + $0x1f8] sm:$0xff] %vm1283, 0.0
      %2124 = vst.msk [vmem:[#allocation3 + $0x200] sm:$0xff] %vm1283, 0.0
      %2125 = vst.msk [vmem:[#allocation3 + $0x208] sm:$0xff] %vm1283, 0.0
      %2126 = vst.msk [vmem:[#allocation3 + $0x210] sm:$0xff] %vm1283, 0.0
      %2127 = vst.msk [vmem:[#allocation3 + $0x218] sm:$0xff] %vm1283, 0.0
      %2128 = vst.msk [vmem:[#allocation3 + $0x220] sm:$0xff] %vm1283, 0.0
      %2129 = vst.msk [vmem:[#allocation3 + $0x228] sm:$0xff] %vm1283, 0.0
      %2130 = vst.msk [vmem:[#allocation3 + $0x230] sm:$0xff] %vm1283, 0.0
      %2131 = vst.msk [vmem:[#allocation3 + $0x238] sm:$0xff] %vm1283, 0.0
      %s2132 = scalar_lea.vmem [#allocation3], 32
      %2133 = vst.msk [vmem:[%s2132 + $0x8] sm:$0xff] %vm1283, %v2028
      %2134 = vst.msk [vmem:[%s2132 + $0x10] sm:$0xff] %vm1283, %v2029
      %2135 = vst.msk [vmem:[%s2132 + $0x28] sm:$0xff] %vm1283, %v2030
      %2136 = vst.msk [vmem:[%s2132 + $0x30] sm:$0xff] %vm1283, %v2031
      %2137 = vst.msk [vmem:[%s2132 + $0x48] sm:$0xff] %vm1283, %v2032
      %2138 = vst.msk [vmem:[%s2132 + $0x50] sm:$0xff] %vm1283, %v2033
      %2139 = vst.msk [vmem:[%s2132 + $0x68] sm:$0xff] %vm1283, %v2034
      %2140 = vst.msk [vmem:[%s2132 + $0x70] sm:$0xff] %vm1283, %v2035
      %2141 = vst.msk [vmem:[%s2132 + $0x88] sm:$0xff] %vm1283, %v2036
      %2142 = vst.msk [vmem:[%s2132 + $0x90] sm:$0xff] %vm1283, %v2037
      %2143 = vst.msk [vmem:[%s2132 + $0xa8] sm:$0xff] %vm1283, %v2038
      %2144 = vst.msk [vmem:[%s2132 + $0xb0] sm:$0xff] %vm1283, %v2039
      %2145 = vst.msk [vmem:[%s2132 + $0xc8] sm:$0xff] %vm1283, %v2040
      %2146 = vst.msk [vmem:[%s2132 + $0xd0] sm:$0xff] %vm1283, %v2041
      %2147 = vst.msk [vmem:[%s2132 + $0xe8] sm:$0xff] %vm1283, %v2042
      %2148 = vst.msk [vmem:[%s2132 + $0xf0] sm:$0xff] %vm1283, %v2043
      %2149 = vst.msk [vmem:[%s2132 + $0x108] sm:$0xff] %vm1283, %v2044
      %2150 = vst.msk [vmem:[%s2132 + $0x110] sm:$0xff] %vm1283, %v2045
      %2151 = vst.msk [vmem:[%s2132 + $0x128] sm:$0xff] %vm1283, %v2046
      %2152 = vst.msk [vmem:[%s2132 + $0x130] sm:$0xff] %vm1283, %v2047
      %2153 = vst.msk [vmem:[%s2132 + $0x148] sm:$0xff] %vm1283, %v2048
      %2154 = vst.msk [vmem:[%s2132 + $0x150] sm:$0xff] %vm1283, %v2049
      %2155 = vst.msk [vmem:[%s2132 + $0x168] sm:$0xff] %vm1283, %v2050
      %2156 = vst.msk [vmem:[%s2132 + $0x170] sm:$0xff] %vm1283, %v2051
      %2157 = vst.msk [vmem:[%s2132 + $0x188] sm:$0xff] %vm1283, %v2052
      %2158 = vst.msk [vmem:[%s2132 + $0x190] sm:$0xff] %vm1283, %v2053
      %2159 = vst.msk [vmem:[%s2132 + $0x1a8] sm:$0xff] %vm1283, %v2054
      %2160 = vst.msk [vmem:[%s2132 + $0x1b0] sm:$0xff] %vm1283, %v2055
      %2161 = vst.msk [vmem:[%s2132 + $0x1c8] sm:$0xff] %vm1283, %v2056
      %2162 = vst.msk [vmem:[%s2132 + $0x1d0] sm:$0xff] %vm1283, %v2057
      %2163 = vst.msk [vmem:[%s2132 + $0x1e8] sm:$0xff] %vm1283, %v2058
      %2164 = vst.msk [vmem:[%s2132 + $0x1f0] sm:$0xff] %vm1283, %v2059
      %v2165 = vld [vmem:[#allocation3 + $0x7] sm:$0xff]
      %v2166 = vld [vmem:[#allocation3 + $0xf] sm:$0xff]
      %v2167 = vld [vmem:[#allocation3 + $0x27] sm:$0xff]
      %v2168 = vld [vmem:[#allocation3 + $0x2f] sm:$0xff]
      %v2169 = vld [vmem:[#allocation3 + $0x47] sm:$0xff]
      %v2170 = vld [vmem:[#allocation3 + $0x4f] sm:$0xff]
      %v2171 = vld [vmem:[#allocation3 + $0x67] sm:$0xff]
      %v2172 = vld [vmem:[#allocation3 + $0x6f] sm:$0xff]
      %v2173 = vld [vmem:[#allocation3 + $0x87] sm:$0xff]
      %v2174 = vld [vmem:[#allocation3 + $0x8f] sm:$0xff]
      %v2175 = vld [vmem:[#allocation3 + $0xa7] sm:$0xff]
      %v2176 = vld [vmem:[#allocation3 + $0xaf] sm:$0xff]
      %v2177 = vld [vmem:[#allocation3 + $0xc7] sm:$0xff]
      %v2178 = vld [vmem:[#allocation3 + $0xcf] sm:$0xff]
      %v2179 = vld [vmem:[#allocation3 + $0xe7] sm:$0xff]
      %v2180 = vld [vmem:[#allocation3 + $0xef] sm:$0xff]
      %v2181 = vld [vmem:[#allocation3 + $0x107] sm:$0xff]
      %v2182 = vld [vmem:[#allocation3 + $0x10f] sm:$0xff]
      %v2183 = vld [vmem:[#allocation3 + $0x127] sm:$0xff]
      %v2184 = vld [vmem:[#allocation3 + $0x12f] sm:$0xff]
      %v2185 = vld [vmem:[#allocation3 + $0x147] sm:$0xff]
      %v2186 = vld [vmem:[#allocation3 + $0x14f] sm:$0xff]
      %v2187 = vld [vmem:[#allocation3 + $0x167] sm:$0xff]
      %v2188 = vld [vmem:[#allocation3 + $0x16f] sm:$0xff]
      %v2189 = vld [vmem:[#allocation3 + $0x187] sm:$0xff]
      %v2190 = vld [vmem:[#allocation3 + $0x18f] sm:$0xff]
      %v2191 = vld [vmem:[#allocation3 + $0x1a7] sm:$0xff]
      %v2192 = vld [vmem:[#allocation3 + $0x1af] sm:$0xff]
      %v2193 = vld [vmem:[#allocation3 + $0x1c7] sm:$0xff]
      %v2194 = vld [vmem:[#allocation3 + $0x1cf] sm:$0xff]
      %v2195 = vld [vmem:[#allocation3 + $0x1e7] sm:$0xff]
      %v2196 = vld [vmem:[#allocation3 + $0x1ef] sm:$0xff]
      %v2197 = vpack.c.bf16 %v2166, %v2165
      %v2198 = vpack.c.bf16 %v2168, %v2167
      %v2199 = vpack.c.bf16 %v2170, %v2169
      %v2200 = vpack.c.bf16 %v2172, %v2171
      %v2201 = vpack.c.bf16 %v2174, %v2173
      %v2202 = vpack.c.bf16 %v2176, %v2175
      %v2203 = vpack.c.bf16 %v2178, %v2177
      %v2204 = vpack.c.bf16 %v2180, %v2179
      %v2205 = vpack.c.bf16 %v2182, %v2181
      %v2206 = vpack.c.bf16 %v2184, %v2183
      %v2207 = vpack.c.bf16 %v2186, %v2185
      %v2208 = vpack.c.bf16 %v2188, %v2187
      %v2209 = vpack.c.bf16 %v2190, %v2189
      %v2210 = vpack.c.bf16 %v2192, %v2191
      %v2211 = vpack.c.bf16 %v2194, %v2193
      %v2212 = vpack.c.bf16 %v2196, %v2195
      %v2213 = vld [vmem:[#allocation3 + $0x8] sm:$0xff]
      %v2214 = vld [vmem:[#allocation3 + $0x10] sm:$0xff]
      %v2215 = vld [vmem:[#allocation3 + $0x28] sm:$0xff]
      %v2216 = vld [vmem:[#allocation3 + $0x30] sm:$0xff]
      %v2217 = vld [vmem:[#allocation3 + $0x48] sm:$0xff]
      %v2218 = vld [vmem:[#allocation3 + $0x50] sm:$0xff]
      %v2219 = vld [vmem:[#allocation3 + $0x68] sm:$0xff]
      %v2220 = vld [vmem:[#allocation3 + $0x70] sm:$0xff]
      %v2221 = vld [vmem:[#allocation3 + $0x88] sm:$0xff]
      %v2222 = vld [vmem:[#allocation3 + $0x90] sm:$0xff]
      %v2223 = vld [vmem:[#allocation3 + $0xa8] sm:$0xff]
      %v2224 = vld [vmem:[#allocation3 + $0xb0] sm:$0xff]
      %v2225 = vld [vmem:[#allocation3 + $0xc8] sm:$0xff]
      %v2226 = vld [vmem:[#allocation3 + $0xd0] sm:$0xff]
      %v2227 = vld [vmem:[#allocation3 + $0xe8] sm:$0xff]
      %v2228 = vld [vmem:[#allocation3 + $0xf0] sm:$0xff]
      %v2229 = vld [vmem:[#allocation3 + $0x108] sm:$0xff]
      %v2230 = vld [vmem:[#allocation3 + $0x110] sm:$0xff]
      %v2231 = vld [vmem:[#allocation3 + $0x128] sm:$0xff]
      %v2232 = vld [vmem:[#allocation3 + $0x130] sm:$0xff]
      %v2233 = vld [vmem:[#allocation3 + $0x148] sm:$0xff]
      %v2234 = vld [vmem:[#allocation3 + $0x150] sm:$0xff]
      %v2235 = vld [vmem:[#allocation3 + $0x168] sm:$0xff]
      %v2236 = vld [vmem:[#allocation3 + $0x170] sm:$0xff]
      %v2237 = vld [vmem:[#allocation3 + $0x188] sm:$0xff]
      %v2238 = vld [vmem:[#allocation3 + $0x190] sm:$0xff]
      %v2239 = vld [vmem:[#allocation3 + $0x1a8] sm:$0xff]
      %v2240 = vld [vmem:[#allocation3 + $0x1b0] sm:$0xff]
      %v2241 = vld [vmem:[#allocation3 + $0x1c8] sm:$0xff]
      %v2242 = vld [vmem:[#allocation3 + $0x1d0] sm:$0xff]
      %v2243 = vld [vmem:[#allocation3 + $0x1e8] sm:$0xff]
      %v2244 = vld [vmem:[#allocation3 + $0x1f0] sm:$0xff]
      %v2245 = vpack.c.bf16 %v2214, %v2213
      %v2246 = vpack.c.bf16 %v2216, %v2215
      %v2247 = vpack.c.bf16 %v2218, %v2217
      %v2248 = vpack.c.bf16 %v2220, %v2219
      %v2249 = vpack.c.bf16 %v2222, %v2221
      %v2250 = vpack.c.bf16 %v2224, %v2223
      %v2251 = vpack.c.bf16 %v2226, %v2225
      %v2252 = vpack.c.bf16 %v2228, %v2227
      %v2253 = vpack.c.bf16 %v2230, %v2229
      %v2254 = vpack.c.bf16 %v2232, %v2231
      %v2255 = vpack.c.bf16 %v2234, %v2233
      %v2256 = vpack.c.bf16 %v2236, %v2235
      %v2257 = vpack.c.bf16 %v2238, %v2237
      %v2258 = vpack.c.bf16 %v2240, %v2239
      %v2259 = vpack.c.bf16 %v2242, %v2241
      %v2260 = vpack.c.bf16 %v2244, %v2243
      %v2261 = vld [vmem:[#allocation3 + $0x9] sm:$0xff]
      %v2262 = vld [vmem:[#allocation3 + $0x11] sm:$0xff]
      %v2263 = vld [vmem:[#allocation3 + $0x29] sm:$0xff]
      %v2264 = vld [vmem:[#allocation3 + $0x31] sm:$0xff]
      %v2265 = vld [vmem:[#allocation3 + $0x49] sm:$0xff]
      %v2266 = vld [vmem:[#allocation3 + $0x51] sm:$0xff]
      %v2267 = vld [vmem:[#allocation3 + $0x69] sm:$0xff]
      %v2268 = vld [vmem:[#allocation3 + $0x71] sm:$0xff]
      %v2269 = vld [vmem:[#allocation3 + $0x89] sm:$0xff]
      %v2270 = vld [vmem:[#allocation3 + $0x91] sm:$0xff]
      %v2271 = vld [vmem:[#allocation3 + $0xa9] sm:$0xff]
      %v2272 = vld [vmem:[#allocation3 + $0xb1] sm:$0xff]
      %v2273 = vld [vmem:[#allocation3 + $0xc9] sm:$0xff]
      %v2274 = vld [vmem:[#allocation3 + $0xd1] sm:$0xff]
      %v2275 = vld [vmem:[#allocation3 + $0xe9] sm:$0xff]
      %v2276 = vld [vmem:[#allocation3 + $0xf1] sm:$0xff]
      %v2277 = vld [vmem:[#allocation3 + $0x109] sm:$0xff]
      %v2278 = vld [vmem:[#allocation3 + $0x111] sm:$0xff]
      %v2279 = vld [vmem:[#allocation3 + $0x129] sm:$0xff]
      %v2280 = vld [vmem:[#allocation3 + $0x131] sm:$0xff]
      %v2281 = vld [vmem:[#allocation3 + $0x149] sm:$0xff]
      %v2282 = vld [vmem:[#allocation3 + $0x151] sm:$0xff]
      %v2283 = vld [vmem:[#allocation3 + $0x169] sm:$0xff]
      %v2284 = vld [vmem:[#allocation3 + $0x171] sm:$0xff]
      %v2285 = vld [vmem:[#allocation3 + $0x189] sm:$0xff]
      %v2286 = vld [vmem:[#allocation3 + $0x191] sm:$0xff]
      %v2287 = vld [vmem:[#allocation3 + $0x1a9] sm:$0xff]
      %v2288 = vld [vmem:[#allocation3 + $0x1b1] sm:$0xff]
      %v2289 = vld [vmem:[#allocation3 + $0x1c9] sm:$0xff]
      %v2290 = vld [vmem:[#allocation3 + $0x1d1] sm:$0xff]
      %v2291 = vld [vmem:[#allocation3 + $0x1e9] sm:$0xff]
      %v2292 = vld [vmem:[#allocation3 + $0x1f1] sm:$0xff]
      %v2293 = vpack.c.bf16 %v2262, %v2261
      %v2294 = vpack.c.bf16 %v2264, %v2263
      %v2295 = vpack.c.bf16 %v2266, %v2265
      %v2296 = vpack.c.bf16 %v2268, %v2267
      %v2297 = vpack.c.bf16 %v2270, %v2269
      %v2298 = vpack.c.bf16 %v2272, %v2271
      %v2299 = vpack.c.bf16 %v2274, %v2273
      %v2300 = vpack.c.bf16 %v2276, %v2275
      %v2301 = vpack.c.bf16 %v2278, %v2277
      %v2302 = vpack.c.bf16 %v2280, %v2279
      %v2303 = vpack.c.bf16 %v2282, %v2281
      %v2304 = vpack.c.bf16 %v2284, %v2283
      %v2305 = vpack.c.bf16 %v2286, %v2285
      %v2306 = vpack.c.bf16 %v2288, %v2287
      %v2307 = vpack.c.bf16 %v2290, %v2289
      %v2308 = vpack.c.bf16 %v2292, %v2291
      %v2309 = vld [vmem:[%s2132 + $0x7] sm:$0xff]
      %v2310 = vld [vmem:[%s2132 + $0xf] sm:$0xff]
      %v2311 = vld [vmem:[%s2132 + $0x27] sm:$0xff]
      %v2312 = vld [vmem:[%s2132 + $0x2f] sm:$0xff]
      %v2313 = vld [vmem:[%s2132 + $0x47] sm:$0xff]
      %v2314 = vld [vmem:[%s2132 + $0x4f] sm:$0xff]
      %v2315 = vld [vmem:[%s2132 + $0x67] sm:$0xff]
      %v2316 = vld [vmem:[%s2132 + $0x6f] sm:$0xff]
      %v2317 = vld [vmem:[%s2132 + $0x87] sm:$0xff]
      %v2318 = vld [vmem:[%s2132 + $0x8f] sm:$0xff]
      %v2319 = vld [vmem:[%s2132 + $0xa7] sm:$0xff]
      %v2320 = vld [vmem:[%s2132 + $0xaf] sm:$0xff]
      %v2321 = vld [vmem:[%s2132 + $0xc7] sm:$0xff]
      %v2322 = vld [vmem:[%s2132 + $0xcf] sm:$0xff]
      %v2323 = vld [vmem:[%s2132 + $0xe7] sm:$0xff]
      %v2324 = vld [vmem:[%s2132 + $0xef] sm:$0xff]
      %v2325 = vld [vmem:[%s2132 + $0x107] sm:$0xff]
      %v2326 = vld [vmem:[%s2132 + $0x10f] sm:$0xff]
      %v2327 = vld [vmem:[%s2132 + $0x127] sm:$0xff]
      %v2328 = vld [vmem:[%s2132 + $0x12f] sm:$0xff]
      %v2329 = vld [vmem:[%s2132 + $0x147] sm:$0xff]
      %v2330 = vld [vmem:[%s2132 + $0x14f] sm:$0xff]
      %v2331 = vld [vmem:[%s2132 + $0x167] sm:$0xff]
      %v2332 = vld [vmem:[%s2132 + $0x16f] sm:$0xff]
      %v2333 = vld [vmem:[%s2132 + $0x187] sm:$0xff]
      %v2334 = vld [vmem:[%s2132 + $0x18f] sm:$0xff]
      %v2335 = vld [vmem:[%s2132 + $0x1a7] sm:$0xff]
      %v2336 = vld [vmem:[%s2132 + $0x1af] sm:$0xff]
      %v2337 = vld [vmem:[%s2132 + $0x1c7] sm:$0xff]
      %v2338 = vld [vmem:[%s2132 + $0x1cf] sm:$0xff]
      %v2339 = vld [vmem:[%s2132 + $0x1e7] sm:$0xff]
      %v2340 = vld [vmem:[%s2132 + $0x1ef] sm:$0xff]
      %v2341 = vpack.c.bf16 %v2310, %v2309
      %v2342 = vpack.c.bf16 %v2312, %v2311
      %v2343 = vpack.c.bf16 %v2314, %v2313
      %v2344 = vpack.c.bf16 %v2316, %v2315
      %v2345 = vpack.c.bf16 %v2318, %v2317
      %v2346 = vpack.c.bf16 %v2320, %v2319
      %v2347 = vpack.c.bf16 %v2322, %v2321
      %v2348 = vpack.c.bf16 %v2324, %v2323
      %v2349 = vpack.c.bf16 %v2326, %v2325
      %v2350 = vpack.c.bf16 %v2328, %v2327
      %v2351 = vpack.c.bf16 %v2330, %v2329
      %v2352 = vpack.c.bf16 %v2332, %v2331
      %v2353 = vpack.c.bf16 %v2334, %v2333
      %v2354 = vpack.c.bf16 %v2336, %v2335
      %v2355 = vpack.c.bf16 %v2338, %v2337
      %v2356 = vpack.c.bf16 %v2340, %v2339
      %v2357 = vld [vmem:[%s2132 + $0x8] sm:$0xff]
      %v2358 = vld [vmem:[%s2132 + $0x10] sm:$0xff]
      %v2359 = vld [vmem:[%s2132 + $0x28] sm:$0xff]
      %v2360 = vld [vmem:[%s2132 + $0x30] sm:$0xff]
      %v2361 = vld [vmem:[%s2132 + $0x48] sm:$0xff]
      %v2362 = vld [vmem:[%s2132 + $0x50] sm:$0xff]
      %v2363 = vld [vmem:[%s2132 + $0x68] sm:$0xff]
      %v2364 = vld [vmem:[%s2132 + $0x70] sm:$0xff]
      %v2365 = vld [vmem:[%s2132 + $0x88] sm:$0xff]
      %v2366 = vld [vmem:[%s2132 + $0x90] sm:$0xff]
      %v2367 = vld [vmem:[%s2132 + $0xa8] sm:$0xff]
      %v2368 = vld [vmem:[%s2132 + $0xb0] sm:$0xff]
      %v2369 = vld [vmem:[%s2132 + $0xc8] sm:$0xff]
      %v2370 = vld [vmem:[%s2132 + $0xd0] sm:$0xff]
      %v2371 = vld [vmem:[%s2132 + $0xe8] sm:$0xff]
      %v2372 = vld [vmem:[%s2132 + $0xf0] sm:$0xff]
      %v2373 = vld [vmem:[%s2132 + $0x108] sm:$0xff]
      %v2374 = vld [vmem:[%s2132 + $0x110] sm:$0xff]
      %v2375 = vld [vmem:[%s2132 + $0x128] sm:$0xff]
      %v2376 = vld [vmem:[%s2132 + $0x130] sm:$0xff]
      %v2377 = vld [vmem:[%s2132 + $0x148] sm:$0xff]
      %v2378 = vld [vmem:[%s2132 + $0x150] sm:$0xff]
      %v2379 = vld [vmem:[%s2132 + $0x168] sm:$0xff]
      %v2380 = vld [vmem:[%s2132 + $0x170] sm:$0xff]
      %v2381 = vld [vmem:[%s2132 + $0x188] sm:$0xff]
      %v2382 = vld [vmem:[%s2132 + $0x190] sm:$0xff]
      %v2383 = vld [vmem:[%s2132 + $0x1a8] sm:$0xff]
      %v2384 = vld [vmem:[%s2132 + $0x1b0] sm:$0xff]
      %v2385 = vld [vmem:[%s2132 + $0x1c8] sm:$0xff]
      %v2386 = vld [vmem:[%s2132 + $0x1d0] sm:$0xff]
      %v2387 = vld [vmem:[%s2132 + $0x1e8] sm:$0xff]
      %v2388 = vld [vmem:[%s2132 + $0x1f0] sm:$0xff]
      %v2389 = vpack.c.bf16 %v2358, %v2357
      %v2390 = vpack.c.bf16 %v2360, %v2359
      %v2391 = vpack.c.bf16 %v2362, %v2361
      %v2392 = vpack.c.bf16 %v2364, %v2363
      %v2393 = vpack.c.bf16 %v2366, %v2365
      %v2394 = vpack.c.bf16 %v2368, %v2367
      %v2395 = vpack.c.bf16 %v2370, %v2369
      %v2396 = vpack.c.bf16 %v2372, %v2371
      %v2397 = vpack.c.bf16 %v2374, %v2373
      %v2398 = vpack.c.bf16 %v2376, %v2375
      %v2399 = vpack.c.bf16 %v2378, %v2377
      %v2400 = vpack.c.bf16 %v2380, %v2379
      %v2401 = vpack.c.bf16 %v2382, %v2381
      %v2402 = vpack.c.bf16 %v2384, %v2383
      %v2403 = vpack.c.bf16 %v2386, %v2385
      %v2404 = vpack.c.bf16 %v2388, %v2387
      %v2405 = vld [vmem:[%s2132 + $0x9] sm:$0xff]
      %v2406 = vld [vmem:[%s2132 + $0x11] sm:$0xff]
      %v2407 = vld [vmem:[%s2132 + $0x29] sm:$0xff]
      %v2408 = vld [vmem:[%s2132 + $0x31] sm:$0xff]
      %v2409 = vld [vmem:[%s2132 + $0x49] sm:$0xff]
      %v2410 = vld [vmem:[%s2132 + $0x51] sm:$0xff]
      %v2411 = vld [vmem:[%s2132 + $0x69] sm:$0xff]
      %v2412 = vld [vmem:[%s2132 + $0x71] sm:$0xff]
      %v2413 = vld [vmem:[%s2132 + $0x89] sm:$0xff]
      %v2414 = vld [vmem:[%s2132 + $0x91] sm:$0xff]
      %v2415 = vld [vmem:[%s2132 + $0xa9] sm:$0xff]
      %v2416 = vld [vmem:[%s2132 + $0xb1] sm:$0xff]
      %v2417 = vld [vmem:[%s2132 + $0xc9] sm:$0xff]
      %v2418 = vld [vmem:[%s2132 + $0xd1] sm:$0xff]
      %v2419 = vld [vmem:[%s2132 + $0xe9] sm:$0xff]
      %v2420 = vld [vmem:[%s2132 + $0xf1] sm:$0xff]
      %v2421 = vld [vmem:[%s2132 + $0x109] sm:$0xff]
      %v2422 = vld [vmem:[%s2132 + $0x111] sm:$0xff]
      %v2423 = vld [vmem:[%s2132 + $0x129] sm:$0xff]
      %v2424 = vld [vmem:[%s2132 + $0x131] sm:$0xff]
      %v2425 = vld [vmem:[%s2132 + $0x149] sm:$0xff]
      %v2426 = vld [vmem:[%s2132 + $0x151] sm:$0xff]
      %v2427 = vld [vmem:[%s2132 + $0x169] sm:$0xff]
      %v2428 = vld [vmem:[%s2132 + $0x171] sm:$0xff]
      %v2429 = vld [vmem:[%s2132 + $0x189] sm:$0xff]
      %v2430 = vld [vmem:[%s2132 + $0x191] sm:$0xff]
      %v2431 = vld [vmem:[%s2132 + $0x1a9] sm:$0xff]
      %v2432 = vld [vmem:[%s2132 + $0x1b1] sm:$0xff]
      %v2433 = vld [vmem:[%s2132 + $0x1c9] sm:$0xff]
      %v2434 = vld [vmem:[%s2132 + $0x1d1] sm:$0xff]
      %v2435 = vld [vmem:[%s2132 + $0x1e9] sm:$0xff]
      %v2436 = vld [vmem:[%s2132 + $0x1f1] sm:$0xff]
      %v2437 = vpack.c.bf16 %v2406, %v2405
      %v2438 = vpack.c.bf16 %v2408, %v2407
      %v2439 = vpack.c.bf16 %v2410, %v2409
      %v2440 = vpack.c.bf16 %v2412, %v2411
      %v2441 = vpack.c.bf16 %v2414, %v2413
      %v2442 = vpack.c.bf16 %v2416, %v2415
      %v2443 = vpack.c.bf16 %v2418, %v2417
      %v2444 = vpack.c.bf16 %v2420, %v2419
      %v2445 = vpack.c.bf16 %v2422, %v2421
      %v2446 = vpack.c.bf16 %v2424, %v2423
      %v2447 = vpack.c.bf16 %v2426, %v2425
      %v2448 = vpack.c.bf16 %v2428, %v2427
      %v2449 = vpack.c.bf16 %v2430, %v2429
      %v2450 = vpack.c.bf16 %v2432, %v2431
      %v2451 = vpack.c.bf16 %v2434, %v2433
      %v2452 = vpack.c.bf16 %v2436, %v2435
      %s2453 = scalar_lea.vmem [#allocation3], 64
      %v2454 = vld [vmem:[%s2453 + $0x7] sm:$0xff]
      %v2455 = vld [vmem:[%s2453 + $0xf] sm:$0xff]
      %v2456 = vld [vmem:[%s2453 + $0x27] sm:$0xff]
      %v2457 = vld [vmem:[%s2453 + $0x2f] sm:$0xff]
      %v2458 = vld [vmem:[%s2453 + $0x47] sm:$0xff]
      %v2459 = vld [vmem:[%s2453 + $0x4f] sm:$0xff]
      %v2460 = vld [vmem:[%s2453 + $0x67] sm:$0xff]
      %v2461 = vld [vmem:[%s2453 + $0x6f] sm:$0xff]
      %v2462 = vld [vmem:[%s2453 + $0x87] sm:$0xff]
      %v2463 = vld [vmem:[%s2453 + $0x8f] sm:$0xff]
      %v2464 = vld [vmem:[%s2453 + $0xa7] sm:$0xff]
      %v2465 = vld [vmem:[%s2453 + $0xaf] sm:$0xff]
      %v2466 = vld [vmem:[%s2453 + $0xc7] sm:$0xff]
      %v2467 = vld [vmem:[%s2453 + $0xcf] sm:$0xff]
      %v2468 = vld [vmem:[%s2453 + $0xe7] sm:$0xff]
      %v2469 = vld [vmem:[%s2453 + $0xef] sm:$0xff]
      %v2470 = vld [vmem:[%s2453 + $0x107] sm:$0xff]
      %v2471 = vld [vmem:[%s2453 + $0x10f] sm:$0xff]
      %v2472 = vld [vmem:[%s2453 + $0x127] sm:$0xff]
      %v2473 = vld [vmem:[%s2453 + $0x12f] sm:$0xff]
      %v2474 = vld [vmem:[%s2453 + $0x147] sm:$0xff]
      %v2475 = vld [vmem:[%s2453 + $0x14f] sm:$0xff]
      %v2476 = vld [vmem:[%s2453 + $0x167] sm:$0xff]
      %v2477 = vld [vmem:[%s2453 + $0x16f] sm:$0xff]
      %v2478 = vld [vmem:[%s2453 + $0x187] sm:$0xff]
      %v2479 = vld [vmem:[%s2453 + $0x18f] sm:$0xff]
      %v2480 = vld [vmem:[%s2453 + $0x1a7] sm:$0xff]
      %v2481 = vld [vmem:[%s2453 + $0x1af] sm:$0xff]
      %v2482 = vld [vmem:[%s2453 + $0x1c7] sm:$0xff]
      %v2483 = vld [vmem:[%s2453 + $0x1cf] sm:$0xff]
      %v2484 = vld [vmem:[%s2453 + $0x1e7] sm:$0xff]
      %v2485 = vld [vmem:[%s2453 + $0x1ef] sm:$0xff]
      %v2486 = vpack.c.bf16 %v2455, %v2454
      %v2487 = vpack.c.bf16 %v2457, %v2456
      %v2488 = vpack.c.bf16 %v2459, %v2458
      %v2489 = vpack.c.bf16 %v2461, %v2460
      %v2490 = vpack.c.bf16 %v2463, %v2462
      %v2491 = vpack.c.bf16 %v2465, %v2464
      %v2492 = vpack.c.bf16 %v2467, %v2466
      %v2493 = vpack.c.bf16 %v2469, %v2468
      %v2494 = vpack.c.bf16 %v2471, %v2470
      %v2495 = vpack.c.bf16 %v2473, %v2472
      %v2496 = vpack.c.bf16 %v2475, %v2474
      %v2497 = vpack.c.bf16 %v2477, %v2476
      %v2498 = vpack.c.bf16 %v2479, %v2478
      %v2499 = vpack.c.bf16 %v2481, %v2480
      %v2500 = vpack.c.bf16 %v2483, %v2482
      %v2501 = vpack.c.bf16 %v2485, %v2484
      %v2502 = vld [vmem:[%s2453 + $0x8] sm:$0xff]
      %v2503 = vld [vmem:[%s2453 + $0x10] sm:$0xff]
      %v2504 = vld [vmem:[%s2453 + $0x28] sm:$0xff]
      %v2505 = vld [vmem:[%s2453 + $0x30] sm:$0xff]
      %v2506 = vld [vmem:[%s2453 + $0x48] sm:$0xff]
      %v2507 = vld [vmem:[%s2453 + $0x50] sm:$0xff]
      %v2508 = vld [vmem:[%s2453 + $0x68] sm:$0xff]
      %v2509 = vld [vmem:[%s2453 + $0x70] sm:$0xff]
      %v2510 = vld [vmem:[%s2453 + $0x88] sm:$0xff]
      %v2511 = vld [vmem:[%s2453 + $0x90] sm:$0xff]
      %v2512 = vld [vmem:[%s2453 + $0xa8] sm:$0xff]
      %v2513 = vld [vmem:[%s2453 + $0xb0] sm:$0xff]
      %v2514 = vld [vmem:[%s2453 + $0xc8] sm:$0xff]
      %v2515 = vld [vmem:[%s2453 + $0xd0] sm:$0xff]
      %v2516 = vld [vmem:[%s2453 + $0xe8] sm:$0xff]
      %v2517 = vld [vmem:[%s2453 + $0xf0] sm:$0xff]
      %v2518 = vld [vmem:[%s2453 + $0x108] sm:$0xff]
      %v2519 = vld [vmem:[%s2453 + $0x110] sm:$0xff]
      %v2520 = vld [vmem:[%s2453 + $0x128] sm:$0xff]
      %v2521 = vld [vmem:[%s2453 + $0x130] sm:$0xff]
      %v2522 = vld [vmem:[%s2453 + $0x148] sm:$0xff]
      %v2523 = vld [vmem:[%s2453 + $0x150] sm:$0xff]
      %v2524 = vld [vmem:[%s2453 + $0x168] sm:$0xff]
      %v2525 = vld [vmem:[%s2453 + $0x170] sm:$0xff]
      %v2526 = vld [vmem:[%s2453 + $0x188] sm:$0xff]
      %v2527 = vld [vmem:[%s2453 + $0x190] sm:$0xff]
      %v2528 = vld [vmem:[%s2453 + $0x1a8] sm:$0xff]
      %v2529 = vld [vmem:[%s2453 + $0x1b0] sm:$0xff]
      %v2530 = vld [vmem:[%s2453 + $0x1c8] sm:$0xff]
      %v2531 = vld [vmem:[%s2453 + $0x1d0] sm:$0xff]
      %v2532 = vld [vmem:[%s2453 + $0x1e8] sm:$0xff]
      %v2533 = vld [vmem:[%s2453 + $0x1f0] sm:$0xff]
      %v2534 = vpack.c.bf16 %v2503, %v2502
      %v2535 = vpack.c.bf16 %v2505, %v2504
      %v2536 = vpack.c.bf16 %v2507, %v2506
      %v2537 = vpack.c.bf16 %v2509, %v2508
      %v2538 = vpack.c.bf16 %v2511, %v2510
      %v2539 = vpack.c.bf16 %v2513, %v2512
      %v2540 = vpack.c.bf16 %v2515, %v2514
      %v2541 = vpack.c.bf16 %v2517, %v2516
      %v2542 = vpack.c.bf16 %v2519, %v2518
      %v2543 = vpack.c.bf16 %v2521, %v2520
      %v2544 = vpack.c.bf16 %v2523, %v2522
      %v2545 = vpack.c.bf16 %v2525, %v2524
      %v2546 = vpack.c.bf16 %v2527, %v2526
      %v2547 = vpack.c.bf16 %v2529, %v2528
      %v2548 = vpack.c.bf16 %v2531, %v2530
      %v2549 = vpack.c.bf16 %v2533, %v2532
      %v2550 = vld [vmem:[%s2453 + $0x9] sm:$0xff]
      %v2551 = vld [vmem:[%s2453 + $0x11] sm:$0xff]
      %v2552 = vld [vmem:[%s2453 + $0x29] sm:$0xff]
      %v2553 = vld [vmem:[%s2453 + $0x31] sm:$0xff]
      %v2554 = vld [vmem:[%s2453 + $0x49] sm:$0xff]
      %v2555 = vld [vmem:[%s2453 + $0x51] sm:$0xff]
      %v2556 = vld [vmem:[%s2453 + $0x69] sm:$0xff]
      %v2557 = vld [vmem:[%s2453 + $0x71] sm:$0xff]
      %v2558 = vld [vmem:[%s2453 + $0x89] sm:$0xff]
      %v2559 = vld [vmem:[%s2453 + $0x91] sm:$0xff]
      %v2560 = vld [vmem:[%s2453 + $0xa9] sm:$0xff]
      %v2561 = vld [vmem:[%s2453 + $0xb1] sm:$0xff]
      %v2562 = vld [vmem:[%s2453 + $0xc9] sm:$0xff]
      %v2563 = vld [vmem:[%s2453 + $0xd1] sm:$0xff]
      %v2564 = vld [vmem:[%s2453 + $0xe9] sm:$0xff]
      %v2565 = vld [vmem:[%s2453 + $0xf1] sm:$0xff]
      %v2566 = vld [vmem:[%s2453 + $0x109] sm:$0xff]
      %v2567 = vld [vmem:[%s2453 + $0x111] sm:$0xff]
      %v2568 = vld [vmem:[%s2453 + $0x129] sm:$0xff]
      %v2569 = vld [vmem:[%s2453 + $0x131] sm:$0xff]
      %v2570 = vld [vmem:[%s2453 + $0x149] sm:$0xff]
      %v2571 = vld [vmem:[%s2453 + $0x151] sm:$0xff]
      %v2572 = vld [vmem:[%s2453 + $0x169] sm:$0xff]
      %v2573 = vld [vmem:[%s2453 + $0x171] sm:$0xff]
      %v2574 = vld [vmem:[%s2453 + $0x189] sm:$0xff]
      %v2575 = vld [vmem:[%s2453 + $0x191] sm:$0xff]
      %v2576 = vld [vmem:[%s2453 + $0x1a9] sm:$0xff]
      %v2577 = vld [vmem:[%s2453 + $0x1b1] sm:$0xff]
      %v2578 = vld [vmem:[%s2453 + $0x1c9] sm:$0xff]
      %v2579 = vld [vmem:[%s2453 + $0x1d1] sm:$0xff]
      %v2580 = vld [vmem:[%s2453 + $0x1e9] sm:$0xff]
      %v2581 = vld [vmem:[%s2453 + $0x1f1] sm:$0xff]
      %v2582 = vpack.c.bf16 %v2551, %v2550
      %v2583 = vpack.c.bf16 %v2553, %v2552
      %v2584 = vpack.c.bf16 %v2555, %v2554
      %v2585 = vpack.c.bf16 %v2557, %v2556
      %v2586 = vpack.c.bf16 %v2559, %v2558
      %v2587 = vpack.c.bf16 %v2561, %v2560
      %v2588 = vpack.c.bf16 %v2563, %v2562
      %v2589 = vpack.c.bf16 %v2565, %v2564
      %v2590 = vpack.c.bf16 %v2567, %v2566
      %v2591 = vpack.c.bf16 %v2569, %v2568
      %v2592 = vpack.c.bf16 %v2571, %v2570
      %v2593 = vpack.c.bf16 %v2573, %v2572
      %v2594 = vpack.c.bf16 %v2575, %v2574
      %v2595 = vpack.c.bf16 %v2577, %v2576
      %v2596 = vpack.c.bf16 %v2579, %v2578
      %v2597 = vpack.c.bf16 %v2581, %v2580
      %2614 = vrot.lane.b32.xlu0 %v2245, 8
      %v2615 = vpop.permute.xlu0 %2614
      %2616 = vrot.lane.b32.xlu0 %v2246, 8
      %v2617 = vpop.permute.xlu0 %2616
      %2618 = vrot.lane.b32.xlu0 %v2247, 8
      %v2619 = vpop.permute.xlu0 %2618
      %2620 = vrot.lane.b32.xlu0 %v2248, 8
      %v2621 = vpop.permute.xlu0 %2620
      %2622 = vrot.lane.b32.xlu0 %v2249, 8
      %v2623 = vpop.permute.xlu0 %2622
      %2624 = vrot.lane.b32.xlu0 %v2250, 8
      %v2625 = vpop.permute.xlu0 %2624
      %2626 = vrot.lane.b32.xlu0 %v2251, 8
      %v2627 = vpop.permute.xlu0 %2626
      %2628 = vrot.lane.b32.xlu0 %v2252, 8
      %v2629 = vpop.permute.xlu0 %2628
      %2630 = vrot.lane.b32.xlu0 %v2253, 8
      %v2631 = vpop.permute.xlu0 %2630
      %2632 = vrot.lane.b32.xlu0 %v2254, 8
      %v2633 = vpop.permute.xlu0 %2632
      %2634 = vrot.lane.b32.xlu0 %v2255, 8
      %v2635 = vpop.permute.xlu0 %2634
      %2636 = vrot.lane.b32.xlu0 %v2256, 8
      %v2637 = vpop.permute.xlu0 %2636
      %2638 = vrot.lane.b32.xlu0 %v2257, 8
      %v2639 = vpop.permute.xlu0 %2638
      %2640 = vrot.lane.b32.xlu0 %v2258, 8
      %v2641 = vpop.permute.xlu0 %2640
      %2642 = vrot.lane.b32.xlu0 %v2259, 8
      %v2643 = vpop.permute.xlu0 %2642
      %2644 = vrot.lane.b32.xlu0 %v2260, 8
      %v2645 = vpop.permute.xlu0 %2644
      %2662 = vrot.lane.b32.xlu0 %v2293, 16
      %v2663 = vpop.permute.xlu0 %2662
      %2664 = vrot.lane.b32.xlu0 %v2294, 16
      %v2665 = vpop.permute.xlu0 %2664
      %2666 = vrot.lane.b32.xlu0 %v2295, 16
      %v2667 = vpop.permute.xlu0 %2666
      %2668 = vrot.lane.b32.xlu0 %v2296, 16
      %v2669 = vpop.permute.xlu0 %2668
      %2670 = vrot.lane.b32.xlu0 %v2297, 16
      %v2671 = vpop.permute.xlu0 %2670
      %2672 = vrot.lane.b32.xlu0 %v2298, 16
      %v2673 = vpop.permute.xlu0 %2672
      %2674 = vrot.lane.b32.xlu0 %v2299, 16
      %v2675 = vpop.permute.xlu0 %2674
      %2676 = vrot.lane.b32.xlu0 %v2300, 16
      %v2677 = vpop.permute.xlu0 %2676
      %2678 = vrot.lane.b32.xlu0 %v2301, 16
      %v2679 = vpop.permute.xlu0 %2678
      %2680 = vrot.lane.b32.xlu0 %v2302, 16
      %v2681 = vpop.permute.xlu0 %2680
      %2682 = vrot.lane.b32.xlu0 %v2303, 16
      %v2683 = vpop.permute.xlu0 %2682
      %2684 = vrot.lane.b32.xlu0 %v2304, 16
      %v2685 = vpop.permute.xlu0 %2684
      %2686 = vrot.lane.b32.xlu0 %v2305, 16
      %v2687 = vpop.permute.xlu0 %2686
      %2688 = vrot.lane.b32.xlu0 %v2306, 16
      %v2689 = vpop.permute.xlu0 %2688
      %2690 = vrot.lane.b32.xlu0 %v2307, 16
      %v2691 = vpop.permute.xlu0 %2690
      %2692 = vrot.lane.b32.xlu0 %v2308, 16
      %v2693 = vpop.permute.xlu0 %2692
      %2710 = vrot.lane.b32.xlu0 %v2341, 24
      %v2711 = vpop.permute.xlu0 %2710
      %2712 = vrot.lane.b32.xlu0 %v2342, 24
      %v2713 = vpop.permute.xlu0 %2712
      %2714 = vrot.lane.b32.xlu0 %v2343, 24
      %v2715 = vpop.permute.xlu0 %2714
      %2716 = vrot.lane.b32.xlu0 %v2344, 24
      %v2717 = vpop.permute.xlu0 %2716
      %2718 = vrot.lane.b32.xlu0 %v2345, 24
      %v2719 = vpop.permute.xlu0 %2718
      %2720 = vrot.lane.b32.xlu0 %v2346, 24
      %v2721 = vpop.permute.xlu0 %2720
      %2722 = vrot.lane.b32.xlu0 %v2347, 24
      %v2723 = vpop.permute.xlu0 %2722
      %2724 = vrot.lane.b32.xlu0 %v2348, 24
      %v2725 = vpop.permute.xlu0 %2724
      %2726 = vrot.lane.b32.xlu0 %v2349, 24
      %v2727 = vpop.permute.xlu0 %2726
      %2728 = vrot.lane.b32.xlu0 %v2350, 24
      %v2729 = vpop.permute.xlu0 %2728
      %2730 = vrot.lane.b32.xlu0 %v2351, 24
      %v2731 = vpop.permute.xlu0 %2730
      %2732 = vrot.lane.b32.xlu0 %v2352, 24
      %v2733 = vpop.permute.xlu0 %2732
      %2734 = vrot.lane.b32.xlu0 %v2353, 24
      %v2735 = vpop.permute.xlu0 %2734
      %2736 = vrot.lane.b32.xlu0 %v2354, 24
      %v2737 = vpop.permute.xlu0 %2736
      %2738 = vrot.lane.b32.xlu0 %v2355, 24
      %v2739 = vpop.permute.xlu0 %2738
      %2740 = vrot.lane.b32.xlu0 %v2356, 24
      %v2741 = vpop.permute.xlu0 %2740
      %2758 = vrot.lane.b32.xlu0 %v2389, 32
      %v2759 = vpop.permute.xlu0 %2758
      %2760 = vrot.lane.b32.xlu0 %v2390, 32
      %v2761 = vpop.permute.xlu0 %2760
      %2762 = vrot.lane.b32.xlu0 %v2391, 32
      %v2763 = vpop.permute.xlu0 %2762
      %2764 = vrot.lane.b32.xlu0 %v2392, 32
      %v2765 = vpop.permute.xlu0 %2764
      %2766 = vrot.lane.b32.xlu0 %v2393, 32
      %v2767 = vpop.permute.xlu0 %2766
      %2768 = vrot.lane.b32.xlu0 %v2394, 32
      %v2769 = vpop.permute.xlu0 %2768
      %2770 = vrot.lane.b32.xlu0 %v2395, 32
      %v2771 = vpop.permute.xlu0 %2770
      %2772 = vrot.lane.b32.xlu0 %v2396, 32
      %v2773 = vpop.permute.xlu0 %2772
      %2774 = vrot.lane.b32.xlu0 %v2397, 32
      %v2775 = vpop.permute.xlu0 %2774
      %2776 = vrot.lane.b32.xlu0 %v2398, 32
      %v2777 = vpop.permute.xlu0 %2776
      %2778 = vrot.lane.b32.xlu0 %v2399, 32
      %v2779 = vpop.permute.xlu0 %2778
      %2780 = vrot.lane.b32.xlu0 %v2400, 32
      %v2781 = vpop.permute.xlu0 %2780
      %2782 = vrot.lane.b32.xlu0 %v2401, 32
      %v2783 = vpop.permute.xlu0 %2782
      %2784 = vrot.lane.b32.xlu0 %v2402, 32
      %v2785 = vpop.permute.xlu0 %2784
      %2786 = vrot.lane.b32.xlu0 %v2403, 32
      %v2787 = vpop.permute.xlu0 %2786
      %2788 = vrot.lane.b32.xlu0 %v2404, 32
      %v2789 = vpop.permute.xlu0 %2788
      %2806 = vrot.lane.b32.xlu0 %v2437, 40
      %v2807 = vpop.permute.xlu0 %2806
      %2808 = vrot.lane.b32.xlu0 %v2438, 40
      %v2809 = vpop.permute.xlu0 %2808
      %2810 = vrot.lane.b32.xlu0 %v2439, 40
      %v2811 = vpop.permute.xlu0 %2810
      %2812 = vrot.lane.b32.xlu0 %v2440, 40
      %v2813 = vpop.permute.xlu0 %2812
      %2814 = vrot.lane.b32.xlu0 %v2441, 40
      %v2815 = vpop.permute.xlu0 %2814
      %2816 = vrot.lane.b32.xlu0 %v2442, 40
      %v2817 = vpop.permute.xlu0 %2816
      %2818 = vrot.lane.b32.xlu0 %v2443, 40
      %v2819 = vpop.permute.xlu0 %2818
      %2820 = vrot.lane.b32.xlu0 %v2444, 40
      %v2821 = vpop.permute.xlu0 %2820
      %2822 = vrot.lane.b32.xlu0 %v2445, 40
      %v2823 = vpop.permute.xlu0 %2822
      %2824 = vrot.lane.b32.xlu0 %v2446, 40
      %v2825 = vpop.permute.xlu0 %2824
      %2826 = vrot.lane.b32.xlu0 %v2447, 40
      %v2827 = vpop.permute.xlu0 %2826
      %2828 = vrot.lane.b32.xlu0 %v2448, 40
      %v2829 = vpop.permute.xlu0 %2828
      %2830 = vrot.lane.b32.xlu0 %v2449, 40
      %v2831 = vpop.permute.xlu0 %2830
      %2832 = vrot.lane.b32.xlu0 %v2450, 40
      %v2833 = vpop.permute.xlu0 %2832
      %2834 = vrot.lane.b32.xlu0 %v2451, 40
      %v2835 = vpop.permute.xlu0 %2834
      %2836 = vrot.lane.b32.xlu0 %v2452, 40
      %v2837 = vpop.permute.xlu0 %2836
      %2854 = vrot.lane.b32.xlu0 %v2486, 48
      %v2855 = vpop.permute.xlu0 %2854
      %2856 = vrot.lane.b32.xlu0 %v2487, 48
      %v2857 = vpop.permute.xlu0 %2856
      %2858 = vrot.lane.b32.xlu0 %v2488, 48
      %v2859 = vpop.permute.xlu0 %2858
      %2860 = vrot.lane.b32.xlu0 %v2489, 48
      %v2861 = vpop.permute.xlu0 %2860
      %2862 = vrot.lane.b32.xlu0 %v2490, 48
      %v2863 = vpop.permute.xlu0 %2862
      %2864 = vrot.lane.b32.xlu0 %v2491, 48
      %v2865 = vpop.permute.xlu0 %2864
      %2866 = vrot.lane.b32.xlu0 %v2492, 48
      %v2867 = vpop.permute.xlu0 %2866
      %2868 = vrot.lane.b32.xlu0 %v2493, 48
      %v2869 = vpop.permute.xlu0 %2868
      %2870 = vrot.lane.b32.xlu0 %v2494, 48
      %v2871 = vpop.permute.xlu0 %2870
      %2872 = vrot.lane.b32.xlu0 %v2495, 48
      %v2873 = vpop.permute.xlu0 %2872
      %2874 = vrot.lane.b32.xlu0 %v2496, 48
      %v2875 = vpop.permute.xlu0 %2874
      %2876 = vrot.lane.b32.xlu0 %v2497, 48
      %v2877 = vpop.permute.xlu0 %2876
      %2878 = vrot.lane.b32.xlu0 %v2498, 48
      %v2879 = vpop.permute.xlu0 %2878
      %2880 = vrot.lane.b32.xlu0 %v2499, 48
      %v2881 = vpop.permute.xlu0 %2880
      %2882 = vrot.lane.b32.xlu0 %v2500, 48
      %v2883 = vpop.permute.xlu0 %2882
      %2884 = vrot.lane.b32.xlu0 %v2501, 48
      %v2885 = vpop.permute.xlu0 %2884
      %2902 = vrot.lane.b32.xlu0 %v2534, 56
      %v2903 = vpop.permute.xlu0 %2902
      %2904 = vrot.lane.b32.xlu0 %v2535, 56
      %v2905 = vpop.permute.xlu0 %2904
      %2906 = vrot.lane.b32.xlu0 %v2536, 56
      %v2907 = vpop.permute.xlu0 %2906
      %2908 = vrot.lane.b32.xlu0 %v2537, 56
      %v2909 = vpop.permute.xlu0 %2908
      %2910 = vrot.lane.b32.xlu0 %v2538, 56
      %v2911 = vpop.permute.xlu0 %2910
      %2912 = vrot.lane.b32.xlu0 %v2539, 56
      %v2913 = vpop.permute.xlu0 %2912
      %2914 = vrot.lane.b32.xlu0 %v2540, 56
      %v2915 = vpop.permute.xlu0 %2914
      %2916 = vrot.lane.b32.xlu0 %v2541, 56
      %v2917 = vpop.permute.xlu0 %2916
      %2918 = vrot.lane.b32.xlu0 %v2542, 56
      %v2919 = vpop.permute.xlu0 %2918
      %2920 = vrot.lane.b32.xlu0 %v2543, 56
      %v2921 = vpop.permute.xlu0 %2920
      %2922 = vrot.lane.b32.xlu0 %v2544, 56
      %v2923 = vpop.permute.xlu0 %2922
      %2924 = vrot.lane.b32.xlu0 %v2545, 56
      %v2925 = vpop.permute.xlu0 %2924
      %2926 = vrot.lane.b32.xlu0 %v2546, 56
      %v2927 = vpop.permute.xlu0 %2926
      %2928 = vrot.lane.b32.xlu0 %v2547, 56
      %v2929 = vpop.permute.xlu0 %2928
      %2930 = vrot.lane.b32.xlu0 %v2548, 56
      %v2931 = vpop.permute.xlu0 %2930
      %2932 = vrot.lane.b32.xlu0 %v2549, 56
      %v2933 = vpop.permute.xlu0 %2932
      %2950 = vrot.lane.b32.xlu0 %v2582, 64
      %v2951 = vpop.permute.xlu0 %2950
      %2952 = vrot.lane.b32.xlu0 %v2583, 64
      %v2953 = vpop.permute.xlu0 %2952
      %2954 = vrot.lane.b32.xlu0 %v2584, 64
      %v2955 = vpop.permute.xlu0 %2954
      %2956 = vrot.lane.b32.xlu0 %v2585, 64
      %v2957 = vpop.permute.xlu0 %2956
      %2958 = vrot.lane.b32.xlu0 %v2586, 64
      %v2959 = vpop.permute.xlu0 %2958
      %2960 = vrot.lane.b32.xlu0 %v2587, 64
      %v2961 = vpop.permute.xlu0 %2960
      %2962 = vrot.lane.b32.xlu0 %v2588, 64
      %v2963 = vpop.permute.xlu0 %2962
      %2964 = vrot.lane.b32.xlu0 %v2589, 64
      %v2965 = vpop.permute.xlu0 %2964
      %2966 = vrot.lane.b32.xlu0 %v2590, 64
      %v2967 = vpop.permute.xlu0 %2966
      %2968 = vrot.lane.b32.xlu0 %v2591, 64
      %v2969 = vpop.permute.xlu0 %2968
      %2970 = vrot.lane.b32.xlu0 %v2592, 64
      %v2971 = vpop.permute.xlu0 %2970
      %2972 = vrot.lane.b32.xlu0 %v2593, 64
      %v2973 = vpop.permute.xlu0 %2972
      %2974 = vrot.lane.b32.xlu0 %v2594, 64
      %v2975 = vpop.permute.xlu0 %2974
      %2976 = vrot.lane.b32.xlu0 %v2595, 64
      %v2977 = vpop.permute.xlu0 %2976
      %2978 = vrot.lane.b32.xlu0 %v2596, 64
      %v2979 = vpop.permute.xlu0 %2978
      %2980 = vrot.lane.b32.xlu0 %v2597, 64
      %v2981 = vpop.permute.xlu0 %2980
      %v2984 = vsel %vm1283, %v2197, %v2615
      %v2987 = vsel %vm1283, %v2198, %v2617
      %v2990 = vsel %vm1283, %v2199, %v2619
      %v2993 = vsel %vm1283, %v2200, %v2621
      %v2996 = vsel %vm1283, %v2201, %v2623
      %v2999 = vsel %vm1283, %v2202, %v2625
      %v3002 = vsel %vm1283, %v2203, %v2627
      %v3005 = vsel %vm1283, %v2204, %v2629
      %v3008 = vsel %vm1283, %v2205, %v2631
      %v3011 = vsel %vm1283, %v2206, %v2633
      %v3014 = vsel %vm1283, %v2207, %v2635
      %v3017 = vsel %vm1283, %v2208, %v2637
      %v3020 = vsel %vm1283, %v2209, %v2639
      %v3023 = vsel %vm1283, %v2210, %v2641
      %v3026 = vsel %vm1283, %v2211, %v2643
      %v3029 = vsel %vm1283, %v2212, %v2645
      %v3031 = vsel %vm1349, %v2984, %v2663
      %v3033 = vsel %vm1349, %v2987, %v2665
      %v3035 = vsel %vm1349, %v2990, %v2667
      %v3037 = vsel %vm1349, %v2993, %v2669
      %v3039 = vsel %vm1349, %v2996, %v2671
      %v3041 = vsel %vm1349, %v2999, %v2673
      %v3043 = vsel %vm1349, %v3002, %v2675
      %v3045 = vsel %vm1349, %v3005, %v2677
      %v3047 = vsel %vm1349, %v3008, %v2679
      %v3049 = vsel %vm1349, %v3011, %v2681
      %v3051 = vsel %vm1349, %v3014, %v2683
      %v3053 = vsel %vm1349, %v3017, %v2685
      %v3055 = vsel %vm1349, %v3020, %v2687
      %v3057 = vsel %vm1349, %v3023, %v2689
      %v3059 = vsel %vm1349, %v3026, %v2691
      %v3061 = vsel %vm1349, %v3029, %v2693
      %v3063 = vsel %vm1415, %v3031, %v2711
      %v3065 = vsel %vm1415, %v3033, %v2713
      %v3067 = vsel %vm1415, %v3035, %v2715
      %v3069 = vsel %vm1415, %v3037, %v2717
      %v3071 = vsel %vm1415, %v3039, %v2719
      %v3073 = vsel %vm1415, %v3041, %v2721
      %v3075 = vsel %vm1415, %v3043, %v2723
      %v3077 = vsel %vm1415, %v3045, %v2725
      %v3079 = vsel %vm1415, %v3047, %v2727
      %v3081 = vsel %vm1415, %v3049, %v2729
      %v3083 = vsel %vm1415, %v3051, %v2731
      %v3085 = vsel %vm1415, %v3053, %v2733
      %v3087 = vsel %vm1415, %v3055, %v2735
      %v3089 = vsel %vm1415, %v3057, %v2737
      %v3091 = vsel %vm1415, %v3059, %v2739
      %v3093 = vsel %vm1415, %v3061, %v2741
      %v3095 = vsel %vm1481, %v3063, %v2759
      %v3097 = vsel %vm1481, %v3065, %v2761
      %v3099 = vsel %vm1481, %v3067, %v2763
      %v3101 = vsel %vm1481, %v3069, %v2765
      %v3103 = vsel %vm1481, %v3071, %v2767
      %v3105 = vsel %vm1481, %v3073, %v2769
      %v3107 = vsel %vm1481, %v3075, %v2771
      %v3109 = vsel %vm1481, %v3077, %v2773
      %v3111 = vsel %vm1481, %v3079, %v2775
      %v3113 = vsel %vm1481, %v3081, %v2777
      %v3115 = vsel %vm1481, %v3083, %v2779
      %v3117 = vsel %vm1481, %v3085, %v2781
      %v3119 = vsel %vm1481, %v3087, %v2783
      %v3121 = vsel %vm1481, %v3089, %v2785
      %v3123 = vsel %vm1481, %v3091, %v2787
      %v3125 = vsel %vm1481, %v3093, %v2789
      %vm3126 = vcmask 326656
      %v3128 = vsel %vm3126, %v3095, %v2807
      %v3130 = vsel %vm3126, %v3097, %v2809
      %v3132 = vsel %vm3126, %v3099, %v2811
      %v3134 = vsel %vm3126, %v3101, %v2813
      %v3136 = vsel %vm3126, %v3103, %v2815
      %v3138 = vsel %vm3126, %v3105, %v2817
      %v3140 = vsel %vm3126, %v3107, %v2819
      %v3142 = vsel %vm3126, %v3109, %v2821
      %v3144 = vsel %vm3126, %v3111, %v2823
      %v3146 = vsel %vm3126, %v3113, %v2825
      %v3148 = vsel %vm3126, %v3115, %v2827
      %v3150 = vsel %vm3126, %v3117, %v2829
      %v3152 = vsel %vm3126, %v3119, %v2831
      %v3154 = vsel %vm3126, %v3121, %v2833
      %v3156 = vsel %vm3126, %v3123, %v2835
      %v3158 = vsel %vm3126, %v3125, %v2837
      %vm3159 = vcmask 392192
      %v3161 = vsel %vm3159, %v3128, %v2855
      %v3163 = vsel %vm3159, %v3130, %v2857
      %v3165 = vsel %vm3159, %v3132, %v2859
      %v3167 = vsel %vm3159, %v3134, %v2861
      %v3169 = vsel %vm3159, %v3136, %v2863
      %v3171 = vsel %vm3159, %v3138, %v2865
      %v3173 = vsel %vm3159, %v3140, %v2867
      %v3175 = vsel %vm3159, %v3142, %v2869
      %v3177 = vsel %vm3159, %v3144, %v2871
      %v3179 = vsel %vm3159, %v3146, %v2873
      %v3181 = vsel %vm3159, %v3148, %v2875
      %v3183 = vsel %vm3159, %v3150, %v2877
      %v3185 = vsel %vm3159, %v3152, %v2879
      %v3187 = vsel %vm3159, %v3154, %v2881
      %v3189 = vsel %vm3159, %v3156, %v2883
      %v3191 = vsel %vm3159, %v3158, %v2885
      %vm3192 = vcmask 457728
      %v3194 = vsel %vm3192, %v3161, %v2903
      %v3196 = vsel %vm3192, %v3163, %v2905
      %v3198 = vsel %vm3192, %v3165, %v2907
      %v3200 = vsel %vm3192, %v3167, %v2909
      %v3202 = vsel %vm3192, %v3169, %v2911
      %v3204 = vsel %vm3192, %v3171, %v2913
      %v3206 = vsel %vm3192, %v3173, %v2915
      %v3208 = vsel %vm3192, %v3175, %v2917
      %v3210 = vsel %vm3192, %v3177, %v2919
      %v3212 = vsel %vm3192, %v3179, %v2921
      %v3214 = vsel %vm3192, %v3181, %v2923
      %v3216 = vsel %vm3192, %v3183, %v2925
      %v3218 = vsel %vm3192, %v3185, %v2927
      %v3220 = vsel %vm3192, %v3187, %v2929
      %v3222 = vsel %vm3192, %v3189, %v2931
      %v3224 = vsel %vm3192, %v3191, %v2933
      %vm3225 = vcmask 523264
      %v3227 = vsel %vm3225, %v3194, %v2951
      %v3229 = vsel %vm3225, %v3196, %v2953
      %v3231 = vsel %vm3225, %v3198, %v2955
      %v3233 = vsel %vm3225, %v3200, %v2957
      %v3235 = vsel %vm3225, %v3202, %v2959
      %v3237 = vsel %vm3225, %v3204, %v2961
      %v3239 = vsel %vm3225, %v3206, %v2963
      %v3241 = vsel %vm3225, %v3208, %v2965
      %v3243 = vsel %vm3225, %v3210, %v2967
      %v3245 = vsel %vm3225, %v3212, %v2969
      %v3247 = vsel %vm3225, %v3214, %v2971
      %v3249 = vsel %vm3225, %v3216, %v2973
      %v3251 = vsel %vm3225, %v3218, %v2975
      %v3253 = vsel %vm3225, %v3220, %v2977
      %v3255 = vsel %vm3225, %v3222, %v2979
      %v3257 = vsel %vm3225, %v3224, %v2981
      %v3258 = vld [vmem:[%s3] sm:$0xf]
      %v3259 = vld [vmem:[%s3 + $0x4] sm:$0xf]
      %v3260 = vld [vmem:[%s3 + $0x8] sm:$0xf]
      %v3261 = vld [vmem:[%s3 + $0xc] sm:$0xf]
      %v3262 = vld [vmem:[%s3 + $0x10] sm:$0xf]
      %v3263 = vld [vmem:[%s3 + $0x14] sm:$0xf]
      %v3264 = vld [vmem:[%s3 + $0x18] sm:$0xf]
      %v3265 = vld [vmem:[%s3 + $0x1c] sm:$0xf]
      %v3266 = vld [vmem:[%s3 + $0x20] sm:$0xf]
      %v3267 = vld [vmem:[%s4] sm:$0x1]
      %v3269 = vlaneseq
      %v3270 = vshrl.u32 %v3269, 7
      %v3271 = vsub.s32 0, %v3270
      %v3272 = vrot.slane %v3267, %v3271
      %v3283 = vunpack.c.l.b16 %v3258
      %v3284 = vunpack.c.l.b16 %v3259
      %v3285 = vunpack.c.l.b16 %v3260
      %v3286 = vunpack.c.l.b16 %v3261
      %v3287 = vunpack.c.l.b16 %v3262
      %v3288 = vunpack.c.l.b16 %v3263
      %v3289 = vunpack.c.l.b16 %v3264
      %v3290 = vunpack.c.l.b16 %v3265
      %v3291 = vunpack.c.l.b16 %v3266
      %v3292 = vpack.c.b16 %v3284, %v3283
      %v3293 = vpack.c.b16 %v3286, %v3285
      %v3294 = vpack.c.b16 %v3288, %v3287
      %v3295 = vpack.c.b16 %v3290, %v3289
      %v3296 = vpack.c.b16 %v3291, %v3291
      %vm3301 = vcmask 588800
      %v3302 = vsel %vm3301, %v3227, 0
      %v3304 = vsel %vm3301, %v3229, 0
      %v3306 = vsel %vm3301, %v3231, 0
      %v3308 = vsel %vm3301, %v3233, 0
      %v3310 = vsel %vm3301, %v3235, 0
      %v3312 = vsel %vm3301, %v3237, 0
      %v3314 = vsel %vm3301, %v3239, 0
      %v3316 = vsel %vm3301, %v3241, 0
      %v3318 = vsel %vm3301, %v3243, 0
      %v3320 = vsel %vm3301, %v3245, 0
      %v3322 = vsel %vm3301, %v3247, 0
      %v3324 = vsel %vm3301, %v3249, 0
      %v3326 = vsel %vm3301, %v3251, 0
      %v3328 = vsel %vm3301, %v3253, 0
      %v3330 = vsel %vm3301, %v3255, 0
      %v3332 = vsel %vm3301, %v3257, 0
      %vm3334 = vcmask 1043456
      %v3336 = vsel %vm3334, %v3296, 0
      %3338 = vmatprep.subr.bf16.mxu0 0
      %3339 = vmatpush1.bf16.msra.mxu0 %v3292
      %3340 = vmatprep.subr.bf16.mxu0 0
      %3341 = vmatpush1.bf16.msra.mxu0 %v3293
      %3342 = vmatprep.subr.bf16.mxu0 0
      %3343 = vmatpush1.bf16.msra.mxu0 %v3294
      %3344 = vmatprep.subr.bf16.mxu0 0
      %3345 = vmatpush1.bf16.msra.mxu0 %v3295
      %3346 = vmatprep.subr.bf16.mxu0 0
      %3347 = vmatpush1.bf16.msra.mxu0 %v3336
      %3348 = vmatprep.subr.bf16.mxu0 0
      %3349 = vmatpush1.bf16.msra.mxu0 0
      %3350 = vmatprep.subr.bf16.mxu0 0
      %3351 = vmatpush1.bf16.msra.mxu0 0
      %3352 = vmatprep.subr.bf16.mxu0 0
      %3353 = vmatpush1.bf16.msra.mxu0 0
      %3354 = vmatprep.subr.bf16.mxu0 0
      %3355 = vmatpush1.bf16.msra.mxu0 0
      %3356 = vmatprep.subr.bf16.mxu0 0
      %3357 = vmatpush1.bf16.msra.mxu0 0
      %3358 = vmatprep.subr.bf16.mxu0 0
      %3359 = vmatpush1.bf16.msra.mxu0 0
      %3360 = vmatprep.subr.bf16.mxu0 0
      %3361 = vmatpush1.bf16.msra.mxu0 0
      %3362 = vmatprep.subr.bf16.mxu0 0
      %3363 = vmatpush1.bf16.msra.mxu0 0
      %3364 = vmatprep.subr.bf16.mxu0 0
      %3365 = vmatpush1.bf16.msra.mxu0 0
      %3366 = vmatprep.subr.bf16.mxu0 0
      %3367 = vmatpush1.bf16.msra.mxu0 0
      %3368 = vmatprep.subr.bf16.mxu0 0
      %3369 = vmatpush1.bf16.msra.mxu0 0
      %3370 = vmatprep.mubr.bf16.mxu0 0
      %3371 = vmatmul.mubr.bf16.gmra.mrb[0].mxu0 %v3302
      %v3372 = vpop.f32.mrb[0].mxu0
      %v3373 = vadd.f32 %v3272, %v3372
      %v3374 = vpop.f32.mrb[0].mxu0
      %v3375 = vpop.f32.mrb[0].mxu0
      %v3376 = vadd.f32 %v3272, %v3375
      %v3377 = vpop.f32.mrb[0].mxu0
      %3378 = vmatprep.mubr.bf16.mxu0 0
      %3379 = vmatmul.mubr.bf16.gmra.mrb[0].mxu0 %v3304
      %v3380 = vpop.f32.mrb[0].mxu0
      %v3381 = vadd.f32 %v3272, %v3380
      %v3382 = vpop.f32.mrb[0].mxu0
      %v3383 = vpop.f32.mrb[0].mxu0
      %v3384 = vadd.f32 %v3272, %v3383
      %v3385 = vpop.f32.mrb[0].mxu0
      %3386 = vmatprep.mubr.bf16.mxu0 0
      %3387 = vmatmul.mubr.bf16.gmra.mrb[0].mxu0 %v3306
      %v3388 = vpop.f32.mrb[0].mxu0
      %v3389 = vadd.f32 %v3272, %v3388
      %v3390 = vpop.f32.mrb[0].mxu0
      %v3391 = vpop.f32.mrb[0].mxu0
      %v3392 = vadd.f32 %v3272, %v3391
      %v3393 = vpop.f32.mrb[0].mxu0
      %3394 = vmatprep.mubr.bf16.mxu0 0
      %3395 = vmatmul.mubr.bf16.gmra.mrb[0].mxu0 %v3308
      %v3396 = vpop.f32.mrb[0].mxu0
      %v3397 = vadd.f32 %v3272, %v3396
      %v3398 = vpop.f32.mrb[0].mxu0
      %v3399 = vpop.f32.mrb[0].mxu0
      %v3400 = vadd.f32 %v3272, %v3399
      %v3401 = vpop.f32.mrb[0].mxu0
      %3402 = vmatprep.mubr.bf16.mxu0 0
      %3403 = vmatmul.mubr.bf16.gmra.mrb[0].mxu0 %v3310
      %v3404 = vpop.f32.mrb[0].mxu0
      %v3405 = vadd.f32 %v3272, %v3404
      %v3406 = vpop.f32.mrb[0].mxu0
      %v3407 = vpop.f32.mrb[0].mxu0
      %v3408 = vadd.f32 %v3272, %v3407
      %v3409 = vpop.f32.mrb[0].mxu0
      %3410 = vmatprep.mubr.bf16.mxu0 0
      %3411 = vmatmul.mubr.bf16.gmra.mrb[0].mxu0 %v3312
      %v3412 = vpop.f32.mrb[0].mxu0
      %v3413 = vadd.f32 %v3272, %v3412
      %v3414 = vpop.f32.mrb[0].mxu0
      %v3415 = vpop.f32.mrb[0].mxu0
      %v3416 = vadd.f32 %v3272, %v3415
      %v3417 = vpop.f32.mrb[0].mxu0
      %3418 = vmatprep.mubr.bf16.mxu0 0
      %3419 = vmatmul.mubr.bf16.gmra.mrb[0].mxu0 %v3314
      %v3420 = vpop.f32.mrb[0].mxu0
      %v3421 = vadd.f32 %v3272, %v3420
      %v3422 = vpop.f32.mrb[0].mxu0
      %v3423 = vpop.f32.mrb[0].mxu0
      %v3424 = vadd.f32 %v3272, %v3423
      %v3425 = vpop.f32.mrb[0].mxu0
      %3426 = vmatprep.mubr.bf16.mxu0 0
      %3427 = vmatmul.mubr.bf16.gmra.mrb[0].mxu0 %v3316
      %v3428 = vpop.f32.mrb[0].mxu0
      %v3429 = vadd.f32 %v3272, %v3428
      %v3430 = vpop.f32.mrb[0].mxu0
      %v3431 = vpop.f32.mrb[0].mxu0
      %v3432 = vadd.f32 %v3272, %v3431
      %v3433 = vpop.f32.mrb[0].mxu0
      %3434 = vmatprep.mubr.bf16.mxu0 0
      %3435 = vmatmul.mubr.bf16.gmra.mrb[0].mxu0 %v3318
      %v3436 = vpop.f32.mrb[0].mxu0
      %v3437 = vadd.f32 %v3272, %v3436
      %v3438 = vpop.f32.mrb[0].mxu0
      %v3439 = vpop.f32.mrb[0].mxu0
      %v3440 = vadd.f32 %v3272, %v3439
      %v3441 = vpop.f32.mrb[0].mxu0
      %3442 = vmatprep.mubr.bf16.mxu0 0
      %3443 = vmatmul.mubr.bf16.gmra.mrb[0].mxu0 %v3320
      %v3444 = vpop.f32.mrb[0].mxu0
      %v3445 = vadd.f32 %v3272, %v3444
      %v3446 = vpop.f32.mrb[0].mxu0
      %v3447 = vpop.f32.mrb[0].mxu0
      %v3448 = vadd.f32 %v3272, %v3447
      %v3449 = vpop.f32.mrb[0].mxu0
      %3450 = vmatprep.mubr.bf16.mxu0 0
      %3451 = vmatmul.mubr.bf16.gmra.mrb[0].mxu0 %v3322
      %v3452 = vpop.f32.mrb[0].mxu0
      %v3453 = vadd.f32 %v3272, %v3452
      %v3454 = vpop.f32.mrb[0].mxu0
      %v3455 = vpop.f32.mrb[0].mxu0
      %v3456 = vadd.f32 %v3272, %v3455
      %v3457 = vpop.f32.mrb[0].mxu0
      %3458 = vmatprep.mubr.bf16.mxu0 0
      %3459 = vmatmul.mubr.bf16.gmra.mrb[0].mxu0 %v3324
      %v3460 = vpop.f32.mrb[0].mxu0
      %v3461 = vadd.f32 %v3272, %v3460
      %v3462 = vpop.f32.mrb[0].mxu0
      %v3463 = vpop.f32.mrb[0].mxu0
      %v3464 = vadd.f32 %v3272, %v3463
      %v3465 = vpop.f32.mrb[0].mxu0
      %3466 = vmatprep.mubr.bf16.mxu0 0
      %3467 = vmatmul.mubr.bf16.gmra.mrb[0].mxu0 %v3326
      %v3468 = vpop.f32.mrb[0].mxu0
      %v3469 = vadd.f32 %v3272, %v3468
      %v3470 = vpop.f32.mrb[0].mxu0
      %v3471 = vpop.f32.mrb[0].mxu0
      %v3472 = vadd.f32 %v3272, %v3471
      %v3473 = vpop.f32.mrb[0].mxu0
      %3474 = vmatprep.mubr.bf16.mxu0 0
      %3475 = vmatmul.mubr.bf16.gmra.mrb[0].mxu0 %v3328
      %v3476 = vpop.f32.mrb[0].mxu0
      %v3477 = vadd.f32 %v3272, %v3476
      %v3478 = vpop.f32.mrb[0].mxu0
      %v3479 = vpop.f32.mrb[0].mxu0
      %v3480 = vadd.f32 %v3272, %v3479
      %v3481 = vpop.f32.mrb[0].mxu0
      %3482 = vmatprep.mubr.bf16.mxu0 0
      %3483 = vmatmul.mubr.bf16.gmra.mrb[0].mxu0 %v3330
      %v3484 = vpop.f32.mrb[0].mxu0
      %v3485 = vadd.f32 %v3272, %v3484
      %v3486 = vpop.f32.mrb[0].mxu0
      %v3487 = vpop.f32.mrb[0].mxu0
      %v3488 = vadd.f32 %v3272, %v3487
      %v3489 = vpop.f32.mrb[0].mxu0
      %3490 = vmatprep.mubr.bf16.mxu0 0
      %3491 = vmatmul.mubr.bf16.gmra.mrb[0].mxu0 %v3332
      %v3492 = vpop.f32.mrb[0].mxu0
      %v3493 = vadd.f32 %v3272, %v3492
      %v3494 = vpop.f32.mrb[0].mxu0
      %v3495 = vpop.f32.mrb[0].mxu0
      %v3496 = vadd.f32 %v3272, %v3495
      %v3497 = vpop.f32.mrb[0].mxu0
      %3498 = vdwg.mxu0
      %v3499 = vmul.f32 %v3373, %v3373
      %v3500 = vmul.f32 %v3376, %v3376
      %v3501 = vmul.f32 %v3381, %v3381
      %v3502 = vmul.f32 %v3384, %v3384
      %v3503 = vmul.f32 %v3389, %v3389
      %v3504 = vmul.f32 %v3392, %v3392
      %v3505 = vmul.f32 %v3397, %v3397
      %v3506 = vmul.f32 %v3400, %v3400
      %v3507 = vmul.f32 %v3405, %v3405
      %v3508 = vmul.f32 %v3408, %v3408
      %v3509 = vmul.f32 %v3413, %v3413
      %v3510 = vmul.f32 %v3416, %v3416
      %v3511 = vmul.f32 %v3421, %v3421
      %v3512 = vmul.f32 %v3424, %v3424
      %v3513 = vmul.f32 %v3429, %v3429
      %v3514 = vmul.f32 %v3432, %v3432
      %v3515 = vmul.f32 %v3437, %v3437
      %v3516 = vmul.f32 %v3440, %v3440
      %v3517 = vmul.f32 %v3445, %v3445
      %v3518 = vmul.f32 %v3448, %v3448
      %v3519 = vmul.f32 %v3453, %v3453
      %v3520 = vmul.f32 %v3456, %v3456
      %v3521 = vmul.f32 %v3461, %v3461
      %v3522 = vmul.f32 %v3464, %v3464
      %v3523 = vmul.f32 %v3469, %v3469
      %v3524 = vmul.f32 %v3472, %v3472
      %v3525 = vmul.f32 %v3477, %v3477
      %v3526 = vmul.f32 %v3480, %v3480
      %v3527 = vmul.f32 %v3485, %v3485
      %v3528 = vmul.f32 %v3488, %v3488
      %v3529 = vmul.f32 %v3493, %v3493
      %v3530 = vmul.f32 %v3496, %v3496
      %v3531 = vsel %vm1283, %v3499, 0.0
      %3532 = vadd.xlane.f32.xlu0 %v3531
      %v3533 = vpop.xlane.xlu0 %3532
      %v3534 = vsel %vm1283, %v3500, 0.0
      %3535 = vadd.xlane.f32.xlu0 %v3534
      %v3536 = vpop.xlane.xlu0 %3535
      %v3537 = vsel %vm1283, %v3501, 0.0
      %3538 = vadd.xlane.f32.xlu0 %v3537
      %v3539 = vpop.xlane.xlu0 %3538
      %v3540 = vsel %vm1283, %v3502, 0.0
      %3541 = vadd.xlane.f32.xlu0 %v3540
      %v3542 = vpop.xlane.xlu0 %3541
      %v3543 = vsel %vm1283, %v3503, 0.0
      %3544 = vadd.xlane.f32.xlu0 %v3543
      %v3545 = vpop.xlane.xlu0 %3544
      %v3546 = vsel %vm1283, %v3504, 0.0
      %3547 = vadd.xlane.f32.xlu0 %v3546
      %v3548 = vpop.xlane.xlu0 %3547
      %v3549 = vsel %vm1283, %v3505, 0.0
      %3550 = vadd.xlane.f32.xlu0 %v3549
      %v3551 = vpop.xlane.xlu0 %3550
      %v3552 = vsel %vm1283, %v3506, 0.0
      %3553 = vadd.xlane.f32.xlu0 %v3552
      %v3554 = vpop.xlane.xlu0 %3553
      %v3555 = vsel %vm1283, %v3507, 0.0
      %3556 = vadd.xlane.f32.xlu0 %v3555
      %v3557 = vpop.xlane.xlu0 %3556
      %v3558 = vsel %vm1283, %v3508, 0.0
      %3559 = vadd.xlane.f32.xlu0 %v3558
      %v3560 = vpop.xlane.xlu0 %3559
      %v3561 = vsel %vm1283, %v3509, 0.0
      %3562 = vadd.xlane.f32.xlu0 %v3561
      %v3563 = vpop.xlane.xlu0 %3562
      %v3564 = vsel %vm1283, %v3510, 0.0
      %3565 = vadd.xlane.f32.xlu0 %v3564
      %v3566 = vpop.xlane.xlu0 %3565
      %v3567 = vsel %vm1283, %v3511, 0.0
      %3568 = vadd.xlane.f32.xlu0 %v3567
      %v3569 = vpop.xlane.xlu0 %3568
      %v3570 = vsel %vm1283, %v3512, 0.0
      %3571 = vadd.xlane.f32.xlu0 %v3570
      %v3572 = vpop.xlane.xlu0 %3571
      %v3573 = vsel %vm1283, %v3513, 0.0
      %3574 = vadd.xlane.f32.xlu0 %v3573
      %v3575 = vpop.xlane.xlu0 %3574
      %v3576 = vsel %vm1283, %v3514, 0.0
      %3577 = vadd.xlane.f32.xlu0 %v3576
      %v3578 = vpop.xlane.xlu0 %3577
      %v3579 = vsel %vm1283, %v3515, 0.0
      %3580 = vadd.xlane.f32.xlu0 %v3579
      %v3581 = vpop.xlane.xlu0 %3580
      %v3582 = vsel %vm1283, %v3516, 0.0
      %3583 = vadd.xlane.f32.xlu0 %v3582
      %v3584 = vpop.xlane.xlu0 %3583
      %v3585 = vsel %vm1283, %v3517, 0.0
      %3586 = vadd.xlane.f32.xlu0 %v3585
      %v3587 = vpop.xlane.xlu0 %3586
      %v3588 = vsel %vm1283, %v3518, 0.0
      %3589 = vadd.xlane.f32.xlu0 %v3588
      %v3590 = vpop.xlane.xlu0 %3589
      %v3591 = vsel %vm1283, %v3519, 0.0
      %3592 = vadd.xlane.f32.xlu0 %v3591
      %v3593 = vpop.xlane.xlu0 %3592
      %v3594 = vsel %vm1283, %v3520, 0.0
      %3595 = vadd.xlane.f32.xlu0 %v3594
      %v3596 = vpop.xlane.xlu0 %3595
      %v3597 = vsel %vm1283, %v3521, 0.0
      %3598 = vadd.xlane.f32.xlu0 %v3597
      %v3599 = vpop.xlane.xlu0 %3598
      %v3600 = vsel %vm1283, %v3522, 0.0
      %3601 = vadd.xlane.f32.xlu0 %v3600
      %v3602 = vpop.xlane.xlu0 %3601
      %v3603 = vsel %vm1283, %v3523, 0.0
      %3604 = vadd.xlane.f32.xlu0 %v3603
      %v3605 = vpop.xlane.xlu0 %3604
      %v3606 = vsel %vm1283, %v3524, 0.0
      %3607 = vadd.xlane.f32.xlu0 %v3606
      %v3608 = vpop.xlane.xlu0 %3607
      %v3609 = vsel %vm1283, %v3525, 0.0
      %3610 = vadd.xlane.f32.xlu0 %v3609
      %v3611 = vpop.xlane.xlu0 %3610
      %v3612 = vsel %vm1283, %v3526, 0.0
      %3613 = vadd.xlane.f32.xlu0 %v3612
      %v3614 = vpop.xlane.xlu0 %3613
      %v3615 = vsel %vm1283, %v3527, 0.0
      %3616 = vadd.xlane.f32.xlu0 %v3615
      %v3617 = vpop.xlane.xlu0 %3616
      %v3618 = vsel %vm1283, %v3528, 0.0
      %3619 = vadd.xlane.f32.xlu0 %v3618
      %v3620 = vpop.xlane.xlu0 %3619
      %v3621 = vsel %vm1283, %v3529, 0.0
      %3622 = vadd.xlane.f32.xlu0 %v3621
      %v3623 = vpop.xlane.xlu0 %3622
      %v3624 = vsel %vm1283, %v3530, 0.0
      %3625 = vadd.xlane.f32.xlu0 %v3624
      %v3626 = vpop.xlane.xlu0 %3625
      %v3627 = vmul.f32 %v3533, %v1867
      %v3628 = vmul.f32 %v3536, %v1867
      %v3629 = vmul.f32 %v3539, %v1867
      %v3630 = vmul.f32 %v3542, %v1867
      %v3631 = vmul.f32 %v3545, %v1867
      %v3632 = vmul.f32 %v3548, %v1867
      %v3633 = vmul.f32 %v3551, %v1867
      %v3634 = vmul.f32 %v3554, %v1867
      %v3635 = vmul.f32 %v3557, %v1867
      %v3636 = vmul.f32 %v3560, %v1867
      %v3637 = vmul.f32 %v3563, %v1867
      %v3638 = vmul.f32 %v3566, %v1867
      %v3639 = vmul.f32 %v3569, %v1867
      %v3640 = vmul.f32 %v3572, %v1867
      %v3641 = vmul.f32 %v3575, %v1867
      %v3642 = vmul.f32 %v3578, %v1867
      %v3643 = vmul.f32 %v3581, %v1867
      %v3644 = vmul.f32 %v3584, %v1867
      %v3645 = vmul.f32 %v3587, %v1867
      %v3646 = vmul.f32 %v3590, %v1867
      %v3647 = vmul.f32 %v3593, %v1867
      %v3648 = vmul.f32 %v3596, %v1867
      %v3649 = vmul.f32 %v3599, %v1867
      %v3650 = vmul.f32 %v3602, %v1867
      %v3651 = vmul.f32 %v3605, %v1867
      %v3652 = vmul.f32 %v3608, %v1867
      %v3653 = vmul.f32 %v3611, %v1867
      %v3654 = vmul.f32 %v3614, %v1867
      %v3655 = vmul.f32 %v3617, %v1867
      %v3656 = vmul.f32 %v3620, %v1867
      %v3657 = vmul.f32 %v3623, %v1867
      %v3658 = vmul.f32 %v3626, %v1867
      %v3659 = vadd.f32 %v3627, 1e-08
      %v3660 = vadd.f32 %v3628, 1e-08
      %v3661 = vadd.f32 %v3629, 1e-08
      %v3662 = vadd.f32 %v3630, 1e-08
      %v3663 = vadd.f32 %v3631, 1e-08
      %v3664 = vadd.f32 %v3632, 1e-08
      %v3665 = vadd.f32 %v3633, 1e-08
      %v3666 = vadd.f32 %v3634, 1e-08
      %v3667 = vadd.f32 %v3635, 1e-08
      %v3668 = vadd.f32 %v3636, 1e-08
      %v3669 = vadd.f32 %v3637, 1e-08
      %v3670 = vadd.f32 %v3638, 1e-08
      %v3671 = vadd.f32 %v3639, 1e-08
      %v3672 = vadd.f32 %v3640, 1e-08
      %v3673 = vadd.f32 %v3641, 1e-08
      %v3674 = vadd.f32 %v3642, 1e-08
      %v3675 = vadd.f32 %v3643, 1e-08
      %v3676 = vadd.f32 %v3644, 1e-08
      %v3677 = vadd.f32 %v3645, 1e-08
      %v3678 = vadd.f32 %v3646, 1e-08
      %v3679 = vadd.f32 %v3647, 1e-08
      %v3680 = vadd.f32 %v3648, 1e-08
      %v3681 = vadd.f32 %v3649, 1e-08
      %v3682 = vadd.f32 %v3650, 1e-08
      %v3683 = vadd.f32 %v3651, 1e-08
      %v3684 = vadd.f32 %v3652, 1e-08
      %v3685 = vadd.f32 %v3653, 1e-08
      %v3686 = vadd.f32 %v3654, 1e-08
      %v3687 = vadd.f32 %v3655, 1e-08
      %v3688 = vadd.f32 %v3656, 1e-08
      %v3689 = vadd.f32 %v3657, 1e-08
      %v3690 = vadd.f32 %v3658, 1e-08
      %v3691 = vrsqrt.pop %v3659
      %v3692 = vrsqrt.pop %v3660
      %v3693 = vrsqrt.pop %v3661
      %v3694 = vrsqrt.pop %v3662
      %v3695 = vrsqrt.pop %v3663
      %v3696 = vrsqrt.pop %v3664
      %v3697 = vrsqrt.pop %v3665
      %v3698 = vrsqrt.pop %v3666
      %v3699 = vrsqrt.pop %v3667
      %v3700 = vrsqrt.pop %v3668
      %v3701 = vrsqrt.pop %v3669
      %v3702 = vrsqrt.pop %v3670
      %v3703 = vrsqrt.pop %v3671
      %v3704 = vrsqrt.pop %v3672
      %v3705 = vrsqrt.pop %v3673
      %v3706 = vrsqrt.pop %v3674
      %v3707 = vrsqrt.pop %v3675
      %v3708 = vrsqrt.pop %v3676
      %v3709 = vrsqrt.pop %v3677
      %v3710 = vrsqrt.pop %v3678
      %v3711 = vrsqrt.pop %v3679
      %v3712 = vrsqrt.pop %v3680
      %v3713 = vrsqrt.pop %v3681
      %v3714 = vrsqrt.pop %v3682
      %v3715 = vrsqrt.pop %v3683
      %v3716 = vrsqrt.pop %v3684
      %v3717 = vrsqrt.pop %v3685
      %v3718 = vrsqrt.pop %v3686
      %v3719 = vrsqrt.pop %v3687
      %v3720 = vrsqrt.pop %v3688
      %v3721 = vrsqrt.pop %v3689
      %v3722 = vrsqrt.pop %v3690
      %v3723 = vmul.f32 %v3373, %v3691
      %v3724 = vmul.f32 %v3376, %v3692
      %v3725 = vmul.f32 %v3381, %v3693
      %v3726 = vmul.f32 %v3384, %v3694
      %v3727 = vmul.f32 %v3389, %v3695
      %v3728 = vmul.f32 %v3392, %v3696
      %v3729 = vmul.f32 %v3397, %v3697
      %v3730 = vmul.f32 %v3400, %v3698
      %v3731 = vmul.f32 %v3405, %v3699
      %v3732 = vmul.f32 %v3408, %v3700
      %v3733 = vmul.f32 %v3413, %v3701
      %v3734 = vmul.f32 %v3416, %v3702
      %v3735 = vmul.f32 %v3421, %v3703
      %v3736 = vmul.f32 %v3424, %v3704
      %v3737 = vmul.f32 %v3429, %v3705
      %v3738 = vmul.f32 %v3432, %v3706
      %v3739 = vmul.f32 %v3437, %v3707
      %v3740 = vmul.f32 %v3440, %v3708
      %v3741 = vmul.f32 %v3445, %v3709
      %v3742 = vmul.f32 %v3448, %v3710
      %v3743 = vmul.f32 %v3453, %v3711
      %v3744 = vmul.f32 %v3456, %v3712
      %v3745 = vmul.f32 %v3461, %v3713
      %v3746 = vmul.f32 %v3464, %v3714
      %v3747 = vmul.f32 %v3469, %v3715
      %v3748 = vmul.f32 %v3472, %v3716
      %v3749 = vmul.f32 %v3477, %v3717
      %v3750 = vmul.f32 %v3480, %v3718
      %v3751 = vmul.f32 %v3485, %v3719
      %v3752 = vmul.f32 %v3488, %v3720
      %v3753 = vmul.f32 %v3493, %v3721
      %v3754 = vmul.f32 %v3496, %v3722
      %v3755 = vmul.f32 %v3723, 0.2
      %v3756 = vmul.f32 %v3724, 0.2
      %v3757 = vmul.f32 %v3725, 0.2
      %v3758 = vmul.f32 %v3726, 0.2
      %v3759 = vmul.f32 %v3727, 0.2
      %v3760 = vmul.f32 %v3728, 0.2
      %v3761 = vmul.f32 %v3729, 0.2
      %v3762 = vmul.f32 %v3730, 0.2
      %v3763 = vmul.f32 %v3731, 0.2
      %v3764 = vmul.f32 %v3732, 0.2
      %v3765 = vmul.f32 %v3733, 0.2
      %v3766 = vmul.f32 %v3734, 0.2
      %v3767 = vmul.f32 %v3735, 0.2
      %v3768 = vmul.f32 %v3736, 0.2
      %v3769 = vmul.f32 %v3737, 0.2
      %v3770 = vmul.f32 %v3738, 0.2
      %v3771 = vmul.f32 %v3739, 0.2
      %v3772 = vmul.f32 %v3740, 0.2
      %v3773 = vmul.f32 %v3741, 0.2
      %v3774 = vmul.f32 %v3742, 0.2
      %v3775 = vmul.f32 %v3743, 0.2
      %v3776 = vmul.f32 %v3744, 0.2
      %v3777 = vmul.f32 %v3745, 0.2
      %v3778 = vmul.f32 %v3746, 0.2
      %v3779 = vmul.f32 %v3747, 0.2
      %v3780 = vmul.f32 %v3748, 0.2
      %v3781 = vmul.f32 %v3749, 0.2
      %v3782 = vmul.f32 %v3750, 0.2
      %v3783 = vmul.f32 %v3751, 0.2
      %v3784 = vmul.f32 %v3752, 0.2
      %v3785 = vmul.f32 %v3753, 0.2
      %v3786 = vmul.f32 %v3754, 0.2
      %v3787 = vmax.f32 %v3723, %v3755
      %v3788 = vmax.f32 %v3724, %v3756
      %v3789 = vmax.f32 %v3725, %v3757
      %v3790 = vmax.f32 %v3726, %v3758
      %v3791 = vmax.f32 %v3727, %v3759
      %v3792 = vmax.f32 %v3728, %v3760
      %v3793 = vmax.f32 %v3729, %v3761
      %v3794 = vmax.f32 %v3730, %v3762
      %v3795 = vmax.f32 %v3731, %v3763
      %v3796 = vmax.f32 %v3732, %v3764
      %v3797 = vmax.f32 %v3733, %v3765
      %v3798 = vmax.f32 %v3734, %v3766
      %v3799 = vmax.f32 %v3735, %v3767
      %v3800 = vmax.f32 %v3736, %v3768
      %v3801 = vmax.f32 %v3737, %v3769
      %v3802 = vmax.f32 %v3738, %v3770
      %v3803 = vmax.f32 %v3739, %v3771
      %v3804 = vmax.f32 %v3740, %v3772
      %v3805 = vmax.f32 %v3741, %v3773
      %v3806 = vmax.f32 %v3742, %v3774
      %v3807 = vmax.f32 %v3743, %v3775
      %v3808 = vmax.f32 %v3744, %v3776
      %v3809 = vmax.f32 %v3745, %v3777
      %v3810 = vmax.f32 %v3746, %v3778
      %v3811 = vmax.f32 %v3747, %v3779
      %v3812 = vmax.f32 %v3748, %v3780
      %v3813 = vmax.f32 %v3749, %v3781
      %v3814 = vmax.f32 %v3750, %v3782
      %v3815 = vmax.f32 %v3751, %v3783
      %v3816 = vmax.f32 %v3752, %v3784
      %v3817 = vmax.f32 %v3753, %v3785
      %v3818 = vmax.f32 %v3754, %v3786
      %3819 = vst.msk [vmem:[#allocation4] sm:$0xff] %vm1283, 0.0
      %3820 = vst.msk [vmem:[#allocation4 + $0x8] sm:$0xff] %vm1283, 0.0
      %3821 = vst.msk [vmem:[#allocation4 + $0x10] sm:$0xff] %vm1283, 0.0
      %3822 = vst.msk [vmem:[#allocation4 + $0x18] sm:$0xff] %vm1283, 0.0
      %3823 = vst.msk [vmem:[#allocation4 + $0x20] sm:$0xff] %vm1283, 0.0
      %3824 = vst.msk [vmem:[#allocation4 + $0x28] sm:$0xff] %vm1283, 0.0
      %3825 = vst.msk [vmem:[#allocation4 + $0x30] sm:$0xff] %vm1283, 0.0
      %3826 = vst.msk [vmem:[#allocation4 + $0x38] sm:$0xff] %vm1283, 0.0
      %3827 = vst.msk [vmem:[#allocation4 + $0x40] sm:$0xff] %vm1283, 0.0
      %3828 = vst.msk [vmem:[#allocation4 + $0x48] sm:$0xff] %vm1283, 0.0
      %3829 = vst.msk [vmem:[#allocation4 + $0x50] sm:$0xff] %vm1283, 0.0
      %3830 = vst.msk [vmem:[#allocation4 + $0x58] sm:$0xff] %vm1283, 0.0
      %3831 = vst.msk [vmem:[#allocation4 + $0x60] sm:$0xff] %vm1283, 0.0
      %3832 = vst.msk [vmem:[#allocation4 + $0x68] sm:$0xff] %vm1283, 0.0
      %3833 = vst.msk [vmem:[#allocation4 + $0x70] sm:$0xff] %vm1283, 0.0
      %3834 = vst.msk [vmem:[#allocation4 + $0x78] sm:$0xff] %vm1283, 0.0
      %3835 = vst.msk [vmem:[#allocation4 + $0x80] sm:$0xff] %vm1283, 0.0
      %3836 = vst.msk [vmem:[#allocation4 + $0x88] sm:$0xff] %vm1283, 0.0
      %3837 = vst.msk [vmem:[#allocation4 + $0x90] sm:$0xff] %vm1283, 0.0
      %3838 = vst.msk [vmem:[#allocation4 + $0x98] sm:$0xff] %vm1283, 0.0
      %3839 = vst.msk [vmem:[#allocation4 + $0xa0] sm:$0xff] %vm1283, 0.0
      %3840 = vst.msk [vmem:[#allocation4 + $0xa8] sm:$0xff] %vm1283, 0.0
      %3841 = vst.msk [vmem:[#allocation4 + $0xb0] sm:$0xff] %vm1283, 0.0
      %3842 = vst.msk [vmem:[#allocation4 + $0xb8] sm:$0xff] %vm1283, 0.0
      %3843 = vst.msk [vmem:[#allocation4 + $0xc0] sm:$0xff] %vm1283, 0.0
      %3844 = vst.msk [vmem:[#allocation4 + $0xc8] sm:$0xff] %vm1283, 0.0
      %3845 = vst.msk [vmem:[#allocation4 + $0xd0] sm:$0xff] %vm1283, 0.0
      %3846 = vst.msk [vmem:[#allocation4 + $0xd8] sm:$0xff] %vm1283, 0.0
      %3847 = vst.msk [vmem:[#allocation4 + $0xe0] sm:$0xff] %vm1283, 0.0
      %3848 = vst.msk [vmem:[#allocation4 + $0xe8] sm:$0xff] %vm1283, 0.0
      %3849 = vst.msk [vmem:[#allocation4 + $0xf0] sm:$0xff] %vm1283, 0.0
      %3850 = vst.msk [vmem:[#allocation4 + $0xf8] sm:$0xff] %vm1283, 0.0
      %3851 = vst.msk [vmem:[#allocation4 + $0x100] sm:$0xff] %vm1283, 0.0
      %3852 = vst.msk [vmem:[#allocation4 + $0x108] sm:$0xff] %vm1283, 0.0
      %3853 = vst.msk [vmem:[#allocation4 + $0x110] sm:$0xff] %vm1283, 0.0
      %3854 = vst.msk [vmem:[#allocation4 + $0x118] sm:$0xff] %vm1283, 0.0
      %3855 = vst.msk [vmem:[#allocation4 + $0x120] sm:$0xff] %vm1283, 0.0
      %3856 = vst.msk [vmem:[#allocation4 + $0x128] sm:$0xff] %vm1283, 0.0
      %3857 = vst.msk [vmem:[#allocation4 + $0x130] sm:$0xff] %vm1283, 0.0
      %3858 = vst.msk [vmem:[#allocation4 + $0x138] sm:$0xff] %vm1283, 0.0
      %3859 = vst.msk [vmem:[#allocation4 + $0x140] sm:$0xff] %vm1283, 0.0
      %3860 = vst.msk [vmem:[#allocation4 + $0x148] sm:$0xff] %vm1283, 0.0
      %3861 = vst.msk [vmem:[#allocation4 + $0x150] sm:$0xff] %vm1283, 0.0
      %3862 = vst.msk [vmem:[#allocation4 + $0x158] sm:$0xff] %vm1283, 0.0
      %3863 = vst.msk [vmem:[#allocation4 + $0x160] sm:$0xff] %vm1283, 0.0
      %3864 = vst.msk [vmem:[#allocation4 + $0x168] sm:$0xff] %vm1283, 0.0
      %3865 = vst.msk [vmem:[#allocation4 + $0x170] sm:$0xff] %vm1283, 0.0
      %3866 = vst.msk [vmem:[#allocation4 + $0x178] sm:$0xff] %vm1283, 0.0
      %3867 = vst.msk [vmem:[#allocation4 + $0x180] sm:$0xff] %vm1283, 0.0
      %3868 = vst.msk [vmem:[#allocation4 + $0x188] sm:$0xff] %vm1283, 0.0
      %3869 = vst.msk [vmem:[#allocation4 + $0x190] sm:$0xff] %vm1283, 0.0
      %3870 = vst.msk [vmem:[#allocation4 + $0x198] sm:$0xff] %vm1283, 0.0
      %3871 = vst.msk [vmem:[#allocation4 + $0x1a0] sm:$0xff] %vm1283, 0.0
      %3872 = vst.msk [vmem:[#allocation4 + $0x1a8] sm:$0xff] %vm1283, 0.0
      %3873 = vst.msk [vmem:[#allocation4 + $0x1b0] sm:$0xff] %vm1283, 0.0
      %3874 = vst.msk [vmem:[#allocation4 + $0x1b8] sm:$0xff] %vm1283, 0.0
      %3875 = vst.msk [vmem:[#allocation4 + $0x1c0] sm:$0xff] %vm1283, 0.0
      %3876 = vst.msk [vmem:[#allocation4 + $0x1c8] sm:$0xff] %vm1283, 0.0
      %3877 = vst.msk [vmem:[#allocation4 + $0x1d0] sm:$0xff] %vm1283, 0.0
      %3878 = vst.msk [vmem:[#allocation4 + $0x1d8] sm:$0xff] %vm1283, 0.0
      %3879 = vst.msk [vmem:[#allocation4 + $0x1e0] sm:$0xff] %vm1283, 0.0
      %3880 = vst.msk [vmem:[#allocation4 + $0x1e8] sm:$0xff] %vm1283, 0.0
      %3881 = vst.msk [vmem:[#allocation4 + $0x1f0] sm:$0xff] %vm1283, 0.0
      %3882 = vst.msk [vmem:[#allocation4 + $0x1f8] sm:$0xff] %vm1283, 0.0
      %3883 = vst.msk [vmem:[#allocation4 + $0x200] sm:$0xff] %vm1283, 0.0
      %3884 = vst.msk [vmem:[#allocation4 + $0x208] sm:$0xff] %vm1283, 0.0
      %3885 = vst.msk [vmem:[#allocation4 + $0x210] sm:$0xff] %vm1283, 0.0
      %3886 = vst.msk [vmem:[#allocation4 + $0x218] sm:$0xff] %vm1283, 0.0
      %3887 = vst.msk [vmem:[#allocation4 + $0x220] sm:$0xff] %vm1283, 0.0
      %3888 = vst.msk [vmem:[#allocation4 + $0x228] sm:$0xff] %vm1283, 0.0
      %3889 = vst.msk [vmem:[#allocation4 + $0x230] sm:$0xff] %vm1283, 0.0
      %3890 = vst.msk [vmem:[#allocation4 + $0x238] sm:$0xff] %vm1283, 0.0
      %s3891 = scalar_lea.vmem [#allocation4], 32
      %3892 = vst.msk [vmem:[%s3891 + $0x8] sm:$0xff] %vm1283, %v3787
      %3893 = vst.msk [vmem:[%s3891 + $0x10] sm:$0xff] %vm1283, %v3788
      %3894 = vst.msk [vmem:[%s3891 + $0x28] sm:$0xff] %vm1283, %v3789
      %3895 = vst.msk [vmem:[%s3891 + $0x30] sm:$0xff] %vm1283, %v3790
      %3896 = vst.msk [vmem:[%s3891 + $0x48] sm:$0xff] %vm1283, %v3791
      %3897 = vst.msk [vmem:[%s3891 + $0x50] sm:$0xff] %vm1283, %v3792
      %3898 = vst.msk [vmem:[%s3891 + $0x68] sm:$0xff] %vm1283, %v3793
      %3899 = vst.msk [vmem:[%s3891 + $0x70] sm:$0xff] %vm1283, %v3794
      %3900 = vst.msk [vmem:[%s3891 + $0x88] sm:$0xff] %vm1283, %v3795
      %3901 = vst.msk [vmem:[%s3891 + $0x90] sm:$0xff] %vm1283, %v3796
      %3902 = vst.msk [vmem:[%s3891 + $0xa8] sm:$0xff] %vm1283, %v3797
      %3903 = vst.msk [vmem:[%s3891 + $0xb0] sm:$0xff] %vm1283, %v3798
      %3904 = vst.msk [vmem:[%s3891 + $0xc8] sm:$0xff] %vm1283, %v3799
      %3905 = vst.msk [vmem:[%s3891 + $0xd0] sm:$0xff] %vm1283, %v3800
      %3906 = vst.msk [vmem:[%s3891 + $0xe8] sm:$0xff] %vm1283, %v3801
      %3907 = vst.msk [vmem:[%s3891 + $0xf0] sm:$0xff] %vm1283, %v3802
      %3908 = vst.msk [vmem:[%s3891 + $0x108] sm:$0xff] %vm1283, %v3803
      %3909 = vst.msk [vmem:[%s3891 + $0x110] sm:$0xff] %vm1283, %v3804
      %3910 = vst.msk [vmem:[%s3891 + $0x128] sm:$0xff] %vm1283, %v3805
      %3911 = vst.msk [vmem:[%s3891 + $0x130] sm:$0xff] %vm1283, %v3806
      %3912 = vst.msk [vmem:[%s3891 + $0x148] sm:$0xff] %vm1283, %v3807
      %3913 = vst.msk [vmem:[%s3891 + $0x150] sm:$0xff] %vm1283, %v3808
      %3914 = vst.msk [vmem:[%s3891 + $0x168] sm:$0xff] %vm1283, %v3809
      %3915 = vst.msk [vmem:[%s3891 + $0x170] sm:$0xff] %vm1283, %v3810
      %3916 = vst.msk [vmem:[%s3891 + $0x188] sm:$0xff] %vm1283, %v3811
      %3917 = vst.msk [vmem:[%s3891 + $0x190] sm:$0xff] %vm1283, %v3812
      %3918 = vst.msk [vmem:[%s3891 + $0x1a8] sm:$0xff] %vm1283, %v3813
      %3919 = vst.msk [vmem:[%s3891 + $0x1b0] sm:$0xff] %vm1283, %v3814
      %3920 = vst.msk [vmem:[%s3891 + $0x1c8] sm:$0xff] %vm1283, %v3815
      %3921 = vst.msk [vmem:[%s3891 + $0x1d0] sm:$0xff] %vm1283, %v3816
      %3922 = vst.msk [vmem:[%s3891 + $0x1e8] sm:$0xff] %vm1283, %v3817
      %3923 = vst.msk [vmem:[%s3891 + $0x1f0] sm:$0xff] %vm1283, %v3818
      %v3924 = vld [vmem:[#allocation4 + $0x7] sm:$0xff]
      %v3925 = vld [vmem:[#allocation4 + $0xf] sm:$0xff]
      %v3926 = vld [vmem:[#allocation4 + $0x27] sm:$0xff]
      %v3927 = vld [vmem:[#allocation4 + $0x2f] sm:$0xff]
      %v3928 = vld [vmem:[#allocation4 + $0x47] sm:$0xff]
      %v3929 = vld [vmem:[#allocation4 + $0x4f] sm:$0xff]
      %v3930 = vld [vmem:[#allocation4 + $0x67] sm:$0xff]
      %v3931 = vld [vmem:[#allocation4 + $0x6f] sm:$0xff]
      %v3932 = vld [vmem:[#allocation4 + $0x87] sm:$0xff]
      %v3933 = vld [vmem:[#allocation4 + $0x8f] sm:$0xff]
      %v3934 = vld [vmem:[#allocation4 + $0xa7] sm:$0xff]
      %v3935 = vld [vmem:[#allocation4 + $0xaf] sm:$0xff]
      %v3936 = vld [vmem:[#allocation4 + $0xc7] sm:$0xff]
      %v3937 = vld [vmem:[#allocation4 + $0xcf] sm:$0xff]
      %v3938 = vld [vmem:[#allocation4 + $0xe7] sm:$0xff]
      %v3939 = vld [vmem:[#allocation4 + $0xef] sm:$0xff]
      %v3940 = vld [vmem:[#allocation4 + $0x107] sm:$0xff]
      %v3941 = vld [vmem:[#allocation4 + $0x10f] sm:$0xff]
      %v3942 = vld [vmem:[#allocation4 + $0x127] sm:$0xff]
      %v3943 = vld [vmem:[#allocation4 + $0x12f] sm:$0xff]
      %v3944 = vld [vmem:[#allocation4 + $0x147] sm:$0xff]
      %v3945 = vld [vmem:[#allocation4 + $0x14f] sm:$0xff]
      %v3946 = vld [vmem:[#allocation4 + $0x167] sm:$0xff]
      %v3947 = vld [vmem:[#allocation4 + $0x16f] sm:$0xff]
      %v3948 = vld [vmem:[#allocation4 + $0x187] sm:$0xff]
      %v3949 = vld [vmem:[#allocation4 + $0x18f] sm:$0xff]
      %v3950 = vld [vmem:[#allocation4 + $0x1a7] sm:$0xff]
      %v3951 = vld [vmem:[#allocation4 + $0x1af] sm:$0xff]
      %v3952 = vld [vmem:[#allocation4 + $0x1c7] sm:$0xff]
      %v3953 = vld [vmem:[#allocation4 + $0x1cf] sm:$0xff]
      %v3954 = vld [vmem:[#allocation4 + $0x1e7] sm:$0xff]
      %v3955 = vld [vmem:[#allocation4 + $0x1ef] sm:$0xff]
      %v3956 = vpack.c.bf16 %v3925, %v3924
      %v3957 = vpack.c.bf16 %v3927, %v3926
      %v3958 = vpack.c.bf16 %v3929, %v3928
      %v3959 = vpack.c.bf16 %v3931, %v3930
      %v3960 = vpack.c.bf16 %v3933, %v3932
      %v3961 = vpack.c.bf16 %v3935, %v3934
      %v3962 = vpack.c.bf16 %v3937, %v3936
      %v3963 = vpack.c.bf16 %v3939, %v3938
      %v3964 = vpack.c.bf16 %v3941, %v3940
      %v3965 = vpack.c.bf16 %v3943, %v3942
      %v3966 = vpack.c.bf16 %v3945, %v3944
      %v3967 = vpack.c.bf16 %v3947, %v3946
      %v3968 = vpack.c.bf16 %v3949, %v3948
      %v3969 = vpack.c.bf16 %v3951, %v3950
      %v3970 = vpack.c.bf16 %v3953, %v3952
      %v3971 = vpack.c.bf16 %v3955, %v3954
      %v3972 = vld [vmem:[#allocation4 + $0x8] sm:$0xff]
      %v3973 = vld [vmem:[#allocation4 + $0x10] sm:$0xff]
      %v3974 = vld [vmem:[#allocation4 + $0x28] sm:$0xff]
      %v3975 = vld [vmem:[#allocation4 + $0x30] sm:$0xff]
      %v3976 = vld [vmem:[#allocation4 + $0x48] sm:$0xff]
      %v3977 = vld [vmem:[#allocation4 + $0x50] sm:$0xff]
      %v3978 = vld [vmem:[#allocation4 + $0x68] sm:$0xff]
      %v3979 = vld [vmem:[#allocation4 + $0x70] sm:$0xff]
      %v3980 = vld [vmem:[#allocation4 + $0x88] sm:$0xff]
      %v3981 = vld [vmem:[#allocation4 + $0x90] sm:$0xff]
      %v3982 = vld [vmem:[#allocation4 + $0xa8] sm:$0xff]
      %v3983 = vld [vmem:[#allocation4 + $0xb0] sm:$0xff]
      %v3984 = vld [vmem:[#allocation4 + $0xc8] sm:$0xff]
      %v3985 = vld [vmem:[#allocation4 + $0xd0] sm:$0xff]
      %v3986 = vld [vmem:[#allocation4 + $0xe8] sm:$0xff]
      %v3987 = vld [vmem:[#allocation4 + $0xf0] sm:$0xff]
      %v3988 = vld [vmem:[#allocation4 + $0x108] sm:$0xff]
      %v3989 = vld [vmem:[#allocation4 + $0x110] sm:$0xff]
      %v3990 = vld [vmem:[#allocation4 + $0x128] sm:$0xff]
      %v3991 = vld [vmem:[#allocation4 + $0x130] sm:$0xff]
      %v3992 = vld [vmem:[#allocation4 + $0x148] sm:$0xff]
      %v3993 = vld [vmem:[#allocation4 + $0x150] sm:$0xff]
      %v3994 = vld [vmem:[#allocation4 + $0x168] sm:$0xff]
      %v3995 = vld [vmem:[#allocation4 + $0x170] sm:$0xff]
      %v3996 = vld [vmem:[#allocation4 + $0x188] sm:$0xff]
      %v3997 = vld [vmem:[#allocation4 + $0x190] sm:$0xff]
      %v3998 = vld [vmem:[#allocation4 + $0x1a8] sm:$0xff]
      %v3999 = vld [vmem:[#allocation4 + $0x1b0] sm:$0xff]
      %v4000 = vld [vmem:[#allocation4 + $0x1c8] sm:$0xff]
      %v4001 = vld [vmem:[#allocation4 + $0x1d0] sm:$0xff]
      %v4002 = vld [vmem:[#allocation4 + $0x1e8] sm:$0xff]
      %v4003 = vld [vmem:[#allocation4 + $0x1f0] sm:$0xff]
      %v4004 = vpack.c.bf16 %v3973, %v3972
      %v4005 = vpack.c.bf16 %v3975, %v3974
      %v4006 = vpack.c.bf16 %v3977, %v3976
      %v4007 = vpack.c.bf16 %v3979, %v3978
      %v4008 = vpack.c.bf16 %v3981, %v3980
      %v4009 = vpack.c.bf16 %v3983, %v3982
      %v4010 = vpack.c.bf16 %v3985, %v3984
      %v4011 = vpack.c.bf16 %v3987, %v3986
      %v4012 = vpack.c.bf16 %v3989, %v3988
      %v4013 = vpack.c.bf16 %v3991, %v3990
      %v4014 = vpack.c.bf16 %v3993, %v3992
      %v4015 = vpack.c.bf16 %v3995, %v3994
      %v4016 = vpack.c.bf16 %v3997, %v3996
      %v4017 = vpack.c.bf16 %v3999, %v3998
      %v4018 = vpack.c.bf16 %v4001, %v4000
      %v4019 = vpack.c.bf16 %v4003, %v4002
      %v4020 = vld [vmem:[#allocation4 + $0x9] sm:$0xff]
      %v4021 = vld [vmem:[#allocation4 + $0x11] sm:$0xff]
      %v4022 = vld [vmem:[#allocation4 + $0x29] sm:$0xff]
      %v4023 = vld [vmem:[#allocation4 + $0x31] sm:$0xff]
      %v4024 = vld [vmem:[#allocation4 + $0x49] sm:$0xff]
      %v4025 = vld [vmem:[#allocation4 + $0x51] sm:$0xff]
      %v4026 = vld [vmem:[#allocation4 + $0x69] sm:$0xff]
      %v4027 = vld [vmem:[#allocation4 + $0x71] sm:$0xff]
      %v4028 = vld [vmem:[#allocation4 + $0x89] sm:$0xff]
      %v4029 = vld [vmem:[#allocation4 + $0x91] sm:$0xff]
      %v4030 = vld [vmem:[#allocation4 + $0xa9] sm:$0xff]
      %v4031 = vld [vmem:[#allocation4 + $0xb1] sm:$0xff]
      %v4032 = vld [vmem:[#allocation4 + $0xc9] sm:$0xff]
      %v4033 = vld [vmem:[#allocation4 + $0xd1] sm:$0xff]
      %v4034 = vld [vmem:[#allocation4 + $0xe9] sm:$0xff]
      %v4035 = vld [vmem:[#allocation4 + $0xf1] sm:$0xff]
      %v4036 = vld [vmem:[#allocation4 + $0x109] sm:$0xff]
      %v4037 = vld [vmem:[#allocation4 + $0x111] sm:$0xff]
      %v4038 = vld [vmem:[#allocation4 + $0x129] sm:$0xff]
      %v4039 = vld [vmem:[#allocation4 + $0x131] sm:$0xff]
      %v4040 = vld [vmem:[#allocation4 + $0x149] sm:$0xff]
      %v4041 = vld [vmem:[#allocation4 + $0x151] sm:$0xff]
      %v4042 = vld [vmem:[#allocation4 + $0x169] sm:$0xff]
      %v4043 = vld [vmem:[#allocation4 + $0x171] sm:$0xff]
      %v4044 = vld [vmem:[#allocation4 + $0x189] sm:$0xff]
      %v4045 = vld [vmem:[#allocation4 + $0x191] sm:$0xff]
      %v4046 = vld [vmem:[#allocation4 + $0x1a9] sm:$0xff]
      %v4047 = vld [vmem:[#allocation4 + $0x1b1] sm:$0xff]
      %v4048 = vld [vmem:[#allocation4 + $0x1c9] sm:$0xff]
      %v4049 = vld [vmem:[#allocation4 + $0x1d1] sm:$0xff]
      %v4050 = vld [vmem:[#allocation4 + $0x1e9] sm:$0xff]
      %v4051 = vld [vmem:[#allocation4 + $0x1f1] sm:$0xff]
      %v4052 = vpack.c.bf16 %v4021, %v4020
      %v4053 = vpack.c.bf16 %v4023, %v4022
      %v4054 = vpack.c.bf16 %v4025, %v4024
      %v4055 = vpack.c.bf16 %v4027, %v4026
      %v4056 = vpack.c.bf16 %v4029, %v4028
      %v4057 = vpack.c.bf16 %v4031, %v4030
      %v4058 = vpack.c.bf16 %v4033, %v4032
      %v4059 = vpack.c.bf16 %v4035, %v4034
      %v4060 = vpack.c.bf16 %v4037, %v4036
      %v4061 = vpack.c.bf16 %v4039, %v4038
      %v4062 = vpack.c.bf16 %v4041, %v4040
      %v4063 = vpack.c.bf16 %v4043, %v4042
      %v4064 = vpack.c.bf16 %v4045, %v4044
      %v4065 = vpack.c.bf16 %v4047, %v4046
      %v4066 = vpack.c.bf16 %v4049, %v4048
      %v4067 = vpack.c.bf16 %v4051, %v4050
      %v4068 = vld [vmem:[%s3891 + $0x7] sm:$0xff]
      %v4069 = vld [vmem:[%s3891 + $0xf] sm:$0xff]
      %v4070 = vld [vmem:[%s3891 + $0x27] sm:$0xff]
      %v4071 = vld [vmem:[%s3891 + $0x2f] sm:$0xff]
      %v4072 = vld [vmem:[%s3891 + $0x47] sm:$0xff]
      %v4073 = vld [vmem:[%s3891 + $0x4f] sm:$0xff]
      %v4074 = vld [vmem:[%s3891 + $0x67] sm:$0xff]
      %v4075 = vld [vmem:[%s3891 + $0x6f] sm:$0xff]
      %v4076 = vld [vmem:[%s3891 + $0x87] sm:$0xff]
      %v4077 = vld [vmem:[%s3891 + $0x8f] sm:$0xff]
      %v4078 = vld [vmem:[%s3891 + $0xa7] sm:$0xff]
      %v4079 = vld [vmem:[%s3891 + $0xaf] sm:$0xff]
      %v4080 = vld [vmem:[%s3891 + $0xc7] sm:$0xff]
      %v4081 = vld [vmem:[%s3891 + $0xcf] sm:$0xff]
      %v4082 = vld [vmem:[%s3891 + $0xe7] sm:$0xff]
      %v4083 = vld [vmem:[%s3891 + $0xef] sm:$0xff]
      %v4084 = vld [vmem:[%s3891 + $0x107] sm:$0xff]
      %v4085 = vld [vmem:[%s3891 + $0x10f] sm:$0xff]
      %v4086 = vld [vmem:[%s3891 + $0x127] sm:$0xff]
      %v4087 = vld [vmem:[%s3891 + $0x12f] sm:$0xff]
      %v4088 = vld [vmem:[%s3891 + $0x147] sm:$0xff]
      %v4089 = vld [vmem:[%s3891 + $0x14f] sm:$0xff]
      %v4090 = vld [vmem:[%s3891 + $0x167] sm:$0xff]
      %v4091 = vld [vmem:[%s3891 + $0x16f] sm:$0xff]
      %v4092 = vld [vmem:[%s3891 + $0x187] sm:$0xff]
      %v4093 = vld [vmem:[%s3891 + $0x18f] sm:$0xff]
      %v4094 = vld [vmem:[%s3891 + $0x1a7] sm:$0xff]
      %v4095 = vld [vmem:[%s3891 + $0x1af] sm:$0xff]
      %v4096 = vld [vmem:[%s3891 + $0x1c7] sm:$0xff]
      %v4097 = vld [vmem:[%s3891 + $0x1cf] sm:$0xff]
      %v4098 = vld [vmem:[%s3891 + $0x1e7] sm:$0xff]
      %v4099 = vld [vmem:[%s3891 + $0x1ef] sm:$0xff]
      %v4100 = vpack.c.bf16 %v4069, %v4068
      %v4101 = vpack.c.bf16 %v4071, %v4070
      %v4102 = vpack.c.bf16 %v4073, %v4072
      %v4103 = vpack.c.bf16 %v4075, %v4074
      %v4104 = vpack.c.bf16 %v4077, %v4076
      %v4105 = vpack.c.bf16 %v4079, %v4078
      %v4106 = vpack.c.bf16 %v4081, %v4080
      %v4107 = vpack.c.bf16 %v4083, %v4082
      %v4108 = vpack.c.bf16 %v4085, %v4084
      %v4109 = vpack.c.bf16 %v4087, %v4086
      %v4110 = vpack.c.bf16 %v4089, %v4088
      %v4111 = vpack.c.bf16 %v4091, %v4090
      %v4112 = vpack.c.bf16 %v4093, %v4092
      %v4113 = vpack.c.bf16 %v4095, %v4094
      %v4114 = vpack.c.bf16 %v4097, %v4096
      %v4115 = vpack.c.bf16 %v4099, %v4098
      %v4116 = vld [vmem:[%s3891 + $0x8] sm:$0xff]
      %v4117 = vld [vmem:[%s3891 + $0x10] sm:$0xff]
      %v4118 = vld [vmem:[%s3891 + $0x28] sm:$0xff]
      %v4119 = vld [vmem:[%s3891 + $0x30] sm:$0xff]
      %v4120 = vld [vmem:[%s3891 + $0x48] sm:$0xff]
      %v4121 = vld [vmem:[%s3891 + $0x50] sm:$0xff]
      %v4122 = vld [vmem:[%s3891 + $0x68] sm:$0xff]
      %v4123 = vld [vmem:[%s3891 + $0x70] sm:$0xff]
      %v4124 = vld [vmem:[%s3891 + $0x88] sm:$0xff]
      %v4125 = vld [vmem:[%s3891 + $0x90] sm:$0xff]
      %v4126 = vld [vmem:[%s3891 + $0xa8] sm:$0xff]
      %v4127 = vld [vmem:[%s3891 + $0xb0] sm:$0xff]
      %v4128 = vld [vmem:[%s3891 + $0xc8] sm:$0xff]
      %v4129 = vld [vmem:[%s3891 + $0xd0] sm:$0xff]
      %v4130 = vld [vmem:[%s3891 + $0xe8] sm:$0xff]
      %v4131 = vld [vmem:[%s3891 + $0xf0] sm:$0xff]
      %v4132 = vld [vmem:[%s3891 + $0x108] sm:$0xff]
      %v4133 = vld [vmem:[%s3891 + $0x110] sm:$0xff]
      %v4134 = vld [vmem:[%s3891 + $0x128] sm:$0xff]
      %v4135 = vld [vmem:[%s3891 + $0x130] sm:$0xff]
      %v4136 = vld [vmem:[%s3891 + $0x148] sm:$0xff]
      %v4137 = vld [vmem:[%s3891 + $0x150] sm:$0xff]
      %v4138 = vld [vmem:[%s3891 + $0x168] sm:$0xff]
      %v4139 = vld [vmem:[%s3891 + $0x170] sm:$0xff]
      %v4140 = vld [vmem:[%s3891 + $0x188] sm:$0xff]
      %v4141 = vld [vmem:[%s3891 + $0x190] sm:$0xff]
      %v4142 = vld [vmem:[%s3891 + $0x1a8] sm:$0xff]
      %v4143 = vld [vmem:[%s3891 + $0x1b0] sm:$0xff]
      %v4144 = vld [vmem:[%s3891 + $0x1c8] sm:$0xff]
      %v4145 = vld [vmem:[%s3891 + $0x1d0] sm:$0xff]
      %v4146 = vld [vmem:[%s3891 + $0x1e8] sm:$0xff]
      %v4147 = vld [vmem:[%s3891 + $0x1f0] sm:$0xff]
      %v4148 = vpack.c.bf16 %v4117, %v4116
      %v4149 = vpack.c.bf16 %v4119, %v4118
      %v4150 = vpack.c.bf16 %v4121, %v4120
      %v4151 = vpack.c.bf16 %v4123, %v4122
      %v4152 = vpack.c.bf16 %v4125, %v4124
      %v4153 = vpack.c.bf16 %v4127, %v4126
      %v4154 = vpack.c.bf16 %v4129, %v4128
      %v4155 = vpack.c.bf16 %v4131, %v4130
      %v4156 = vpack.c.bf16 %v4133, %v4132
      %v4157 = vpack.c.bf16 %v4135, %v4134
      %v4158 = vpack.c.bf16 %v4137, %v4136
      %v4159 = vpack.c.bf16 %v4139, %v4138
      %v4160 = vpack.c.bf16 %v4141, %v4140
      %v4161 = vpack.c.bf16 %v4143, %v4142
      %v4162 = vpack.c.bf16 %v4145, %v4144
      %v4163 = vpack.c.bf16 %v4147, %v4146
      %v4164 = vld [vmem:[%s3891 + $0x9] sm:$0xff]
      %v4165 = vld [vmem:[%s3891 + $0x11] sm:$0xff]
      %v4166 = vld [vmem:[%s3891 + $0x29] sm:$0xff]
      %v4167 = vld [vmem:[%s3891 + $0x31] sm:$0xff]
      %v4168 = vld [vmem:[%s3891 + $0x49] sm:$0xff]
      %v4169 = vld [vmem:[%s3891 + $0x51] sm:$0xff]
      %v4170 = vld [vmem:[%s3891 + $0x69] sm:$0xff]
      %v4171 = vld [vmem:[%s3891 + $0x71] sm:$0xff]
      %v4172 = vld [vmem:[%s3891 + $0x89] sm:$0xff]
      %v4173 = vld [vmem:[%s3891 + $0x91] sm:$0xff]
      %v4174 = vld [vmem:[%s3891 + $0xa9] sm:$0xff]
      %v4175 = vld [vmem:[%s3891 + $0xb1] sm:$0xff]
      %v4176 = vld [vmem:[%s3891 + $0xc9] sm:$0xff]
      %v4177 = vld [vmem:[%s3891 + $0xd1] sm:$0xff]
      %v4178 = vld [vmem:[%s3891 + $0xe9] sm:$0xff]
      %v4179 = vld [vmem:[%s3891 + $0xf1] sm:$0xff]
      %v4180 = vld [vmem:[%s3891 + $0x109] sm:$0xff]
      %v4181 = vld [vmem:[%s3891 + $0x111] sm:$0xff]
      %v4182 = vld [vmem:[%s3891 + $0x129] sm:$0xff]
      %v4183 = vld [vmem:[%s3891 + $0x131] sm:$0xff]
      %v4184 = vld [vmem:[%s3891 + $0x149] sm:$0xff]
      %v4185 = vld [vmem:[%s3891 + $0x151] sm:$0xff]
      %v4186 = vld [vmem:[%s3891 + $0x169] sm:$0xff]
      %v4187 = vld [vmem:[%s3891 + $0x171] sm:$0xff]
      %v4188 = vld [vmem:[%s3891 + $0x189] sm:$0xff]
      %v4189 = vld [vmem:[%s3891 + $0x191] sm:$0xff]
      %v4190 = vld [vmem:[%s3891 + $0x1a9] sm:$0xff]
      %v4191 = vld [vmem:[%s3891 + $0x1b1] sm:$0xff]
      %v4192 = vld [vmem:[%s3891 + $0x1c9] sm:$0xff]
      %v4193 = vld [vmem:[%s3891 + $0x1d1] sm:$0xff]
      %v4194 = vld [vmem:[%s3891 + $0x1e9] sm:$0xff]
      %v4195 = vld [vmem:[%s3891 + $0x1f1] sm:$0xff]
      %v4196 = vpack.c.bf16 %v4165, %v4164
      %v4197 = vpack.c.bf16 %v4167, %v4166
      %v4198 = vpack.c.bf16 %v4169, %v4168
      %v4199 = vpack.c.bf16 %v4171, %v4170
      %v4200 = vpack.c.bf16 %v4173, %v4172
      %v4201 = vpack.c.bf16 %v4175, %v4174
      %v4202 = vpack.c.bf16 %v4177, %v4176
      %v4203 = vpack.c.bf16 %v4179, %v4178
      %v4204 = vpack.c.bf16 %v4181, %v4180
      %v4205 = vpack.c.bf16 %v4183, %v4182
      %v4206 = vpack.c.bf16 %v4185, %v4184
      %v4207 = vpack.c.bf16 %v4187, %v4186
      %v4208 = vpack.c.bf16 %v4189, %v4188
      %v4209 = vpack.c.bf16 %v4191, %v4190
      %v4210 = vpack.c.bf16 %v4193, %v4192
      %v4211 = vpack.c.bf16 %v4195, %v4194
      %s4212 = scalar_lea.vmem [#allocation4], 64
      %v4213 = vld [vmem:[%s4212 + $0x7] sm:$0xff]
      %v4214 = vld [vmem:[%s4212 + $0xf] sm:$0xff]
      %v4215 = vld [vmem:[%s4212 + $0x27] sm:$0xff]
      %v4216 = vld [vmem:[%s4212 + $0x2f] sm:$0xff]
      %v4217 = vld [vmem:[%s4212 + $0x47] sm:$0xff]
      %v4218 = vld [vmem:[%s4212 + $0x4f] sm:$0xff]
      %v4219 = vld [vmem:[%s4212 + $0x67] sm:$0xff]
      %v4220 = vld [vmem:[%s4212 + $0x6f] sm:$0xff]
      %v4221 = vld [vmem:[%s4212 + $0x87] sm:$0xff]
      %v4222 = vld [vmem:[%s4212 + $0x8f] sm:$0xff]
      %v4223 = vld [vmem:[%s4212 + $0xa7] sm:$0xff]
      %v4224 = vld [vmem:[%s4212 + $0xaf] sm:$0xff]
      %v4225 = vld [vmem:[%s4212 + $0xc7] sm:$0xff]
      %v4226 = vld [vmem:[%s4212 + $0xcf] sm:$0xff]
      %v4227 = vld [vmem:[%s4212 + $0xe7] sm:$0xff]
      %v4228 = vld [vmem:[%s4212 + $0xef] sm:$0xff]
      %v4229 = vld [vmem:[%s4212 + $0x107] sm:$0xff]
      %v4230 = vld [vmem:[%s4212 + $0x10f] sm:$0xff]
      %v4231 = vld [vmem:[%s4212 + $0x127] sm:$0xff]
      %v4232 = vld [vmem:[%s4212 + $0x12f] sm:$0xff]
      %v4233 = vld [vmem:[%s4212 + $0x147] sm:$0xff]
      %v4234 = vld [vmem:[%s4212 + $0x14f] sm:$0xff]
      %v4235 = vld [vmem:[%s4212 + $0x167] sm:$0xff]
      %v4236 = vld [vmem:[%s4212 + $0x16f] sm:$0xff]
      %v4237 = vld [vmem:[%s4212 + $0x187] sm:$0xff]
      %v4238 = vld [vmem:[%s4212 + $0x18f] sm:$0xff]
      %v4239 = vld [vmem:[%s4212 + $0x1a7] sm:$0xff]
      %v4240 = vld [vmem:[%s4212 + $0x1af] sm:$0xff]
      %v4241 = vld [vmem:[%s4212 + $0x1c7] sm:$0xff]
      %v4242 = vld [vmem:[%s4212 + $0x1cf] sm:$0xff]
      %v4243 = vld [vmem:[%s4212 + $0x1e7] sm:$0xff]
      %v4244 = vld [vmem:[%s4212 + $0x1ef] sm:$0xff]
      %v4245 = vpack.c.bf16 %v4214, %v4213
      %v4246 = vpack.c.bf16 %v4216, %v4215
      %v4247 = vpack.c.bf16 %v4218, %v4217
      %v4248 = vpack.c.bf16 %v4220, %v4219
      %v4249 = vpack.c.bf16 %v4222, %v4221
      %v4250 = vpack.c.bf16 %v4224, %v4223
      %v4251 = vpack.c.bf16 %v4226, %v4225
      %v4252 = vpack.c.bf16 %v4228, %v4227
      %v4253 = vpack.c.bf16 %v4230, %v4229
      %v4254 = vpack.c.bf16 %v4232, %v4231
      %v4255 = vpack.c.bf16 %v4234, %v4233
      %v4256 = vpack.c.bf16 %v4236, %v4235
      %v4257 = vpack.c.bf16 %v4238, %v4237
      %v4258 = vpack.c.bf16 %v4240, %v4239
      %v4259 = vpack.c.bf16 %v4242, %v4241
      %v4260 = vpack.c.bf16 %v4244, %v4243
      %v4261 = vld [vmem:[%s4212 + $0x8] sm:$0xff]
      %v4262 = vld [vmem:[%s4212 + $0x10] sm:$0xff]
      %v4263 = vld [vmem:[%s4212 + $0x28] sm:$0xff]
      %v4264 = vld [vmem:[%s4212 + $0x30] sm:$0xff]
      %v4265 = vld [vmem:[%s4212 + $0x48] sm:$0xff]
      %v4266 = vld [vmem:[%s4212 + $0x50] sm:$0xff]
      %v4267 = vld [vmem:[%s4212 + $0x68] sm:$0xff]
      %v4268 = vld [vmem:[%s4212 + $0x70] sm:$0xff]
      %v4269 = vld [vmem:[%s4212 + $0x88] sm:$0xff]
      %v4270 = vld [vmem:[%s4212 + $0x90] sm:$0xff]
      %v4271 = vld [vmem:[%s4212 + $0xa8] sm:$0xff]
      %v4272 = vld [vmem:[%s4212 + $0xb0] sm:$0xff]
      %v4273 = vld [vmem:[%s4212 + $0xc8] sm:$0xff]
      %v4274 = vld [vmem:[%s4212 + $0xd0] sm:$0xff]
      %v4275 = vld [vmem:[%s4212 + $0xe8] sm:$0xff]
      %v4276 = vld [vmem:[%s4212 + $0xf0] sm:$0xff]
      %v4277 = vld [vmem:[%s4212 + $0x108] sm:$0xff]
      %v4278 = vld [vmem:[%s4212 + $0x110] sm:$0xff]
      %v4279 = vld [vmem:[%s4212 + $0x128] sm:$0xff]
      %v4280 = vld [vmem:[%s4212 + $0x130] sm:$0xff]
      %v4281 = vld [vmem:[%s4212 + $0x148] sm:$0xff]
      %v4282 = vld [vmem:[%s4212 + $0x150] sm:$0xff]
      %v4283 = vld [vmem:[%s4212 + $0x168] sm:$0xff]
      %v4284 = vld [vmem:[%s4212 + $0x170] sm:$0xff]
      %v4285 = vld [vmem:[%s4212 + $0x188] sm:$0xff]
      %v4286 = vld [vmem:[%s4212 + $0x190] sm:$0xff]
      %v4287 = vld [vmem:[%s4212 + $0x1a8] sm:$0xff]
      %v4288 = vld [vmem:[%s4212 + $0x1b0] sm:$0xff]
      %v4289 = vld [vmem:[%s4212 + $0x1c8] sm:$0xff]
      %v4290 = vld [vmem:[%s4212 + $0x1d0] sm:$0xff]
      %v4291 = vld [vmem:[%s4212 + $0x1e8] sm:$0xff]
      %v4292 = vld [vmem:[%s4212 + $0x1f0] sm:$0xff]
      %v4293 = vpack.c.bf16 %v4262, %v4261
      %v4294 = vpack.c.bf16 %v4264, %v4263
      %v4295 = vpack.c.bf16 %v4266, %v4265
      %v4296 = vpack.c.bf16 %v4268, %v4267
      %v4297 = vpack.c.bf16 %v4270, %v4269
      %v4298 = vpack.c.bf16 %v4272, %v4271
      %v4299 = vpack.c.bf16 %v4274, %v4273
      %v4300 = vpack.c.bf16 %v4276, %v4275
      %v4301 = vpack.c.bf16 %v4278, %v4277
      %v4302 = vpack.c.bf16 %v4280, %v4279
      %v4303 = vpack.c.bf16 %v4282, %v4281
      %v4304 = vpack.c.bf16 %v4284, %v4283
      %v4305 = vpack.c.bf16 %v4286, %v4285
      %v4306 = vpack.c.bf16 %v4288, %v4287
      %v4307 = vpack.c.bf16 %v4290, %v4289
      %v4308 = vpack.c.bf16 %v4292, %v4291
      %v4309 = vld [vmem:[%s4212 + $0x9] sm:$0xff]
      %v4310 = vld [vmem:[%s4212 + $0x11] sm:$0xff]
      %v4311 = vld [vmem:[%s4212 + $0x29] sm:$0xff]
      %v4312 = vld [vmem:[%s4212 + $0x31] sm:$0xff]
      %v4313 = vld [vmem:[%s4212 + $0x49] sm:$0xff]
      %v4314 = vld [vmem:[%s4212 + $0x51] sm:$0xff]
      %v4315 = vld [vmem:[%s4212 + $0x69] sm:$0xff]
      %v4316 = vld [vmem:[%s4212 + $0x71] sm:$0xff]
      %v4317 = vld [vmem:[%s4212 + $0x89] sm:$0xff]
      %v4318 = vld [vmem:[%s4212 + $0x91] sm:$0xff]
      %v4319 = vld [vmem:[%s4212 + $0xa9] sm:$0xff]
      %v4320 = vld [vmem:[%s4212 + $0xb1] sm:$0xff]
      %v4321 = vld [vmem:[%s4212 + $0xc9] sm:$0xff]
      %v4322 = vld [vmem:[%s4212 + $0xd1] sm:$0xff]
      %v4323 = vld [vmem:[%s4212 + $0xe9] sm:$0xff]
      %v4324 = vld [vmem:[%s4212 + $0xf1] sm:$0xff]
      %v4325 = vld [vmem:[%s4212 + $0x109] sm:$0xff]
      %v4326 = vld [vmem:[%s4212 + $0x111] sm:$0xff]
      %v4327 = vld [vmem:[%s4212 + $0x129] sm:$0xff]
      %v4328 = vld [vmem:[%s4212 + $0x131] sm:$0xff]
      %v4329 = vld [vmem:[%s4212 + $0x149] sm:$0xff]
      %v4330 = vld [vmem:[%s4212 + $0x151] sm:$0xff]
      %v4331 = vld [vmem:[%s4212 + $0x169] sm:$0xff]
      %v4332 = vld [vmem:[%s4212 + $0x171] sm:$0xff]
      %v4333 = vld [vmem:[%s4212 + $0x189] sm:$0xff]
      %v4334 = vld [vmem:[%s4212 + $0x191] sm:$0xff]
      %v4335 = vld [vmem:[%s4212 + $0x1a9] sm:$0xff]
      %v4336 = vld [vmem:[%s4212 + $0x1b1] sm:$0xff]
      %v4337 = vld [vmem:[%s4212 + $0x1c9] sm:$0xff]
      %v4338 = vld [vmem:[%s4212 + $0x1d1] sm:$0xff]
      %v4339 = vld [vmem:[%s4212 + $0x1e9] sm:$0xff]
      %v4340 = vld [vmem:[%s4212 + $0x1f1] sm:$0xff]
      %v4341 = vpack.c.bf16 %v4310, %v4309
      %v4342 = vpack.c.bf16 %v4312, %v4311
      %v4343 = vpack.c.bf16 %v4314, %v4313
      %v4344 = vpack.c.bf16 %v4316, %v4315
      %v4345 = vpack.c.bf16 %v4318, %v4317
      %v4346 = vpack.c.bf16 %v4320, %v4319
      %v4347 = vpack.c.bf16 %v4322, %v4321
      %v4348 = vpack.c.bf16 %v4324, %v4323
      %v4349 = vpack.c.bf16 %v4326, %v4325
      %v4350 = vpack.c.bf16 %v4328, %v4327
      %v4351 = vpack.c.bf16 %v4330, %v4329
      %v4352 = vpack.c.bf16 %v4332, %v4331
      %v4353 = vpack.c.bf16 %v4334, %v4333
      %v4354 = vpack.c.bf16 %v4336, %v4335
      %v4355 = vpack.c.bf16 %v4338, %v4337
      %v4356 = vpack.c.bf16 %v4340, %v4339
      %4373 = vrot.lane.b32.xlu0 %v4004, 8
      %v4374 = vpop.permute.xlu0 %4373
      %4375 = vrot.lane.b32.xlu0 %v4005, 8
      %v4376 = vpop.permute.xlu0 %4375
      %4377 = vrot.lane.b32.xlu0 %v4006, 8
      %v4378 = vpop.permute.xlu0 %4377
      %4379 = vrot.lane.b32.xlu0 %v4007, 8
      %v4380 = vpop.permute.xlu0 %4379
      %4381 = vrot.lane.b32.xlu0 %v4008, 8
      %v4382 = vpop.permute.xlu0 %4381
      %4383 = vrot.lane.b32.xlu0 %v4009, 8
      %v4384 = vpop.permute.xlu0 %4383
      %4385 = vrot.lane.b32.xlu0 %v4010, 8
      %v4386 = vpop.permute.xlu0 %4385
      %4387 = vrot.lane.b32.xlu0 %v4011, 8
      %v4388 = vpop.permute.xlu0 %4387
      %4389 = vrot.lane.b32.xlu0 %v4012, 8
      %v4390 = vpop.permute.xlu0 %4389
      %4391 = vrot.lane.b32.xlu0 %v4013, 8
      %v4392 = vpop.permute.xlu0 %4391
      %4393 = vrot.lane.b32.xlu0 %v4014, 8
      %v4394 = vpop.permute.xlu0 %4393
      %4395 = vrot.lane.b32.xlu0 %v4015, 8
      %v4396 = vpop.permute.xlu0 %4395
      %4397 = vrot.lane.b32.xlu0 %v4016, 8
      %v4398 = vpop.permute.xlu0 %4397
      %4399 = vrot.lane.b32.xlu0 %v4017, 8
      %v4400 = vpop.permute.xlu0 %4399
      %4401 = vrot.lane.b32.xlu0 %v4018, 8
      %v4402 = vpop.permute.xlu0 %4401
      %4403 = vrot.lane.b32.xlu0 %v4019, 8
      %v4404 = vpop.permute.xlu0 %4403
      %4421 = vrot.lane.b32.xlu0 %v4052, 16
      %v4422 = vpop.permute.xlu0 %4421
      %4423 = vrot.lane.b32.xlu0 %v4053, 16
      %v4424 = vpop.permute.xlu0 %4423
      %4425 = vrot.lane.b32.xlu0 %v4054, 16
      %v4426 = vpop.permute.xlu0 %4425
      %4427 = vrot.lane.b32.xlu0 %v4055, 16
      %v4428 = vpop.permute.xlu0 %4427
      %4429 = vrot.lane.b32.xlu0 %v4056, 16
      %v4430 = vpop.permute.xlu0 %4429
      %4431 = vrot.lane.b32.xlu0 %v4057, 16
      %v4432 = vpop.permute.xlu0 %4431
      %4433 = vrot.lane.b32.xlu0 %v4058, 16
      %v4434 = vpop.permute.xlu0 %4433
      %4435 = vrot.lane.b32.xlu0 %v4059, 16
      %v4436 = vpop.permute.xlu0 %4435
      %4437 = vrot.lane.b32.xlu0 %v4060, 16
      %v4438 = vpop.permute.xlu0 %4437
      %4439 = vrot.lane.b32.xlu0 %v4061, 16
      %v4440 = vpop.permute.xlu0 %4439
      %4441 = vrot.lane.b32.xlu0 %v4062, 16
      %v4442 = vpop.permute.xlu0 %4441
      %4443 = vrot.lane.b32.xlu0 %v4063, 16
      %v4444 = vpop.permute.xlu0 %4443
      %4445 = vrot.lane.b32.xlu0 %v4064, 16
      %v4446 = vpop.permute.xlu0 %4445
      %4447 = vrot.lane.b32.xlu0 %v4065, 16
      %v4448 = vpop.permute.xlu0 %4447
      %4449 = vrot.lane.b32.xlu0 %v4066, 16
      %v4450 = vpop.permute.xlu0 %4449
      %4451 = vrot.lane.b32.xlu0 %v4067, 16
      %v4452 = vpop.permute.xlu0 %4451
      %4469 = vrot.lane.b32.xlu0 %v4100, 24
      %v4470 = vpop.permute.xlu0 %4469
      %4471 = vrot.lane.b32.xlu0 %v4101, 24
      %v4472 = vpop.permute.xlu0 %4471
      %4473 = vrot.lane.b32.xlu0 %v4102, 24
      %v4474 = vpop.permute.xlu0 %4473
      %4475 = vrot.lane.b32.xlu0 %v4103, 24
      %v4476 = vpop.permute.xlu0 %4475
      %4477 = vrot.lane.b32.xlu0 %v4104, 24
      %v4478 = vpop.permute.xlu0 %4477
      %4479 = vrot.lane.b32.xlu0 %v4105, 24
      %v4480 = vpop.permute.xlu0 %4479
      %4481 = vrot.lane.b32.xlu0 %v4106, 24
      %v4482 = vpop.permute.xlu0 %4481
      %4483 = vrot.lane.b32.xlu0 %v4107, 24
      %v4484 = vpop.permute.xlu0 %4483
      %4485 = vrot.lane.b32.xlu0 %v4108, 24
      %v4486 = vpop.permute.xlu0 %4485
      %4487 = vrot.lane.b32.xlu0 %v4109, 24
      %v4488 = vpop.permute.xlu0 %4487
      %4489 = vrot.lane.b32.xlu0 %v4110, 24
      %v4490 = vpop.permute.xlu0 %4489
      %4491 = vrot.lane.b32.xlu0 %v4111, 24
      %v4492 = vpop.permute.xlu0 %4491
      %4493 = vrot.lane.b32.xlu0 %v4112, 24
      %v4494 = vpop.permute.xlu0 %4493
      %4495 = vrot.lane.b32.xlu0 %v4113, 24
      %v4496 = vpop.permute.xlu0 %4495
      %4497 = vrot.lane.b32.xlu0 %v4114, 24
      %v4498 = vpop.permute.xlu0 %4497
      %4499 = vrot.lane.b32.xlu0 %v4115, 24
      %v4500 = vpop.permute.xlu0 %4499
      %4517 = vrot.lane.b32.xlu0 %v4148, 32
      %v4518 = vpop.permute.xlu0 %4517
      %4519 = vrot.lane.b32.xlu0 %v4149, 32
      %v4520 = vpop.permute.xlu0 %4519
      %4521 = vrot.lane.b32.xlu0 %v4150, 32
      %v4522 = vpop.permute.xlu0 %4521
      %4523 = vrot.lane.b32.xlu0 %v4151, 32
      %v4524 = vpop.permute.xlu0 %4523
      %4525 = vrot.lane.b32.xlu0 %v4152, 32
      %v4526 = vpop.permute.xlu0 %4525
      %4527 = vrot.lane.b32.xlu0 %v4153, 32
      %v4528 = vpop.permute.xlu0 %4527
      %4529 = vrot.lane.b32.xlu0 %v4154, 32
      %v4530 = vpop.permute.xlu0 %4529
      %4531 = vrot.lane.b32.xlu0 %v4155, 32
      %v4532 = vpop.permute.xlu0 %4531
      %4533 = vrot.lane.b32.xlu0 %v4156, 32
      %v4534 = vpop.permute.xlu0 %4533
      %4535 = vrot.lane.b32.xlu0 %v4157, 32
      %v4536 = vpop.permute.xlu0 %4535
      %4537 = vrot.lane.b32.xlu0 %v4158, 32
      %v4538 = vpop.permute.xlu0 %4537
      %4539 = vrot.lane.b32.xlu0 %v4159, 32
      %v4540 = vpop.permute.xlu0 %4539
      %4541 = vrot.lane.b32.xlu0 %v4160, 32
      %v4542 = vpop.permute.xlu0 %4541
      %4543 = vrot.lane.b32.xlu0 %v4161, 32
      %v4544 = vpop.permute.xlu0 %4543
      %4545 = vrot.lane.b32.xlu0 %v4162, 32
      %v4546 = vpop.permute.xlu0 %4545
      %4547 = vrot.lane.b32.xlu0 %v4163, 32
      %v4548 = vpop.permute.xlu0 %4547
      %4565 = vrot.lane.b32.xlu0 %v4196, 40
      %v4566 = vpop.permute.xlu0 %4565
      %4567 = vrot.lane.b32.xlu0 %v4197, 40
      %v4568 = vpop.permute.xlu0 %4567
      %4569 = vrot.lane.b32.xlu0 %v4198, 40
      %v4570 = vpop.permute.xlu0 %4569
      %4571 = vrot.lane.b32.xlu0 %v4199, 40
      %v4572 = vpop.permute.xlu0 %4571
      %4573 = vrot.lane.b32.xlu0 %v4200, 40
      %v4574 = vpop.permute.xlu0 %4573
      %4575 = vrot.lane.b32.xlu0 %v4201, 40
      %v4576 = vpop.permute.xlu0 %4575
      %4577 = vrot.lane.b32.xlu0 %v4202, 40
      %v4578 = vpop.permute.xlu0 %4577
      %4579 = vrot.lane.b32.xlu0 %v4203, 40
      %v4580 = vpop.permute.xlu0 %4579
      %4581 = vrot.lane.b32.xlu0 %v4204, 40
      %v4582 = vpop.permute.xlu0 %4581
      %4583 = vrot.lane.b32.xlu0 %v4205, 40
      %v4584 = vpop.permute.xlu0 %4583
      %4585 = vrot.lane.b32.xlu0 %v4206, 40
      %v4586 = vpop.permute.xlu0 %4585
      %4587 = vrot.lane.b32.xlu0 %v4207, 40
      %v4588 = vpop.permute.xlu0 %4587
      %4589 = vrot.lane.b32.xlu0 %v4208, 40
      %v4590 = vpop.permute.xlu0 %4589
      %4591 = vrot.lane.b32.xlu0 %v4209, 40
      %v4592 = vpop.permute.xlu0 %4591
      %4593 = vrot.lane.b32.xlu0 %v4210, 40
      %v4594 = vpop.permute.xlu0 %4593
      %4595 = vrot.lane.b32.xlu0 %v4211, 40
      %v4596 = vpop.permute.xlu0 %4595
      %4613 = vrot.lane.b32.xlu0 %v4245, 48
      %v4614 = vpop.permute.xlu0 %4613
      %4615 = vrot.lane.b32.xlu0 %v4246, 48
      %v4616 = vpop.permute.xlu0 %4615
      %4617 = vrot.lane.b32.xlu0 %v4247, 48
      %v4618 = vpop.permute.xlu0 %4617
      %4619 = vrot.lane.b32.xlu0 %v4248, 48
      %v4620 = vpop.permute.xlu0 %4619
      %4621 = vrot.lane.b32.xlu0 %v4249, 48
      %v4622 = vpop.permute.xlu0 %4621
      %4623 = vrot.lane.b32.xlu0 %v4250, 48
      %v4624 = vpop.permute.xlu0 %4623
      %4625 = vrot.lane.b32.xlu0 %v4251, 48
      %v4626 = vpop.permute.xlu0 %4625
      %4627 = vrot.lane.b32.xlu0 %v4252, 48
      %v4628 = vpop.permute.xlu0 %4627
      %4629 = vrot.lane.b32.xlu0 %v4253, 48
      %v4630 = vpop.permute.xlu0 %4629
      %4631 = vrot.lane.b32.xlu0 %v4254, 48
      %v4632 = vpop.permute.xlu0 %4631
      %4633 = vrot.lane.b32.xlu0 %v4255, 48
      %v4634 = vpop.permute.xlu0 %4633
      %4635 = vrot.lane.b32.xlu0 %v4256, 48
      %v4636 = vpop.permute.xlu0 %4635
      %4637 = vrot.lane.b32.xlu0 %v4257, 48
      %v4638 = vpop.permute.xlu0 %4637
      %4639 = vrot.lane.b32.xlu0 %v4258, 48
      %v4640 = vpop.permute.xlu0 %4639
      %4641 = vrot.lane.b32.xlu0 %v4259, 48
      %v4642 = vpop.permute.xlu0 %4641
      %4643 = vrot.lane.b32.xlu0 %v4260, 48
      %v4644 = vpop.permute.xlu0 %4643
      %4661 = vrot.lane.b32.xlu0 %v4293, 56
      %v4662 = vpop.permute.xlu0 %4661
      %4663 = vrot.lane.b32.xlu0 %v4294, 56
      %v4664 = vpop.permute.xlu0 %4663
      %4665 = vrot.lane.b32.xlu0 %v4295, 56
      %v4666 = vpop.permute.xlu0 %4665
      %4667 = vrot.lane.b32.xlu0 %v4296, 56
      %v4668 = vpop.permute.xlu0 %4667
      %4669 = vrot.lane.b32.xlu0 %v4297, 56
      %v4670 = vpop.permute.xlu0 %4669
      %4671 = vrot.lane.b32.xlu0 %v4298, 56
      %v4672 = vpop.permute.xlu0 %4671
      %4673 = vrot.lane.b32.xlu0 %v4299, 56
      %v4674 = vpop.permute.xlu0 %4673
      %4675 = vrot.lane.b32.xlu0 %v4300, 56
      %v4676 = vpop.permute.xlu0 %4675
      %4677 = vrot.lane.b32.xlu0 %v4301, 56
      %v4678 = vpop.permute.xlu0 %4677
      %4679 = vrot.lane.b32.xlu0 %v4302, 56
      %v4680 = vpop.permute.xlu0 %4679
      %4681 = vrot.lane.b32.xlu0 %v4303, 56
      %v4682 = vpop.permute.xlu0 %4681
      %4683 = vrot.lane.b32.xlu0 %v4304, 56
      %v4684 = vpop.permute.xlu0 %4683
      %4685 = vrot.lane.b32.xlu0 %v4305, 56
      %v4686 = vpop.permute.xlu0 %4685
      %4687 = vrot.lane.b32.xlu0 %v4306, 56
      %v4688 = vpop.permute.xlu0 %4687
      %4689 = vrot.lane.b32.xlu0 %v4307, 56
      %v4690 = vpop.permute.xlu0 %4689
      %4691 = vrot.lane.b32.xlu0 %v4308, 56
      %v4692 = vpop.permute.xlu0 %4691
      %4709 = vrot.lane.b32.xlu0 %v4341, 64
      %v4710 = vpop.permute.xlu0 %4709
      %4711 = vrot.lane.b32.xlu0 %v4342, 64
      %v4712 = vpop.permute.xlu0 %4711
      %4713 = vrot.lane.b32.xlu0 %v4343, 64
      %v4714 = vpop.permute.xlu0 %4713
      %4715 = vrot.lane.b32.xlu0 %v4344, 64
      %v4716 = vpop.permute.xlu0 %4715
      %4717 = vrot.lane.b32.xlu0 %v4345, 64
      %v4718 = vpop.permute.xlu0 %4717
      %4719 = vrot.lane.b32.xlu0 %v4346, 64
      %v4720 = vpop.permute.xlu0 %4719
      %4721 = vrot.lane.b32.xlu0 %v4347, 64
      %v4722 = vpop.permute.xlu0 %4721
      %4723 = vrot.lane.b32.xlu0 %v4348, 64
      %v4724 = vpop.permute.xlu0 %4723
      %4725 = vrot.lane.b32.xlu0 %v4349, 64
      %v4726 = vpop.permute.xlu0 %4725
      %4727 = vrot.lane.b32.xlu0 %v4350, 64
      %v4728 = vpop.permute.xlu0 %4727
      %4729 = vrot.lane.b32.xlu0 %v4351, 64
      %v4730 = vpop.permute.xlu0 %4729
      %4731 = vrot.lane.b32.xlu0 %v4352, 64
      %v4732 = vpop.permute.xlu0 %4731
      %4733 = vrot.lane.b32.xlu0 %v4353, 64
      %v4734 = vpop.permute.xlu0 %4733
      %4735 = vrot.lane.b32.xlu0 %v4354, 64
      %v4736 = vpop.permute.xlu0 %4735
      %4737 = vrot.lane.b32.xlu0 %v4355, 64
      %v4738 = vpop.permute.xlu0 %4737
      %4739 = vrot.lane.b32.xlu0 %v4356, 64
      %v4740 = vpop.permute.xlu0 %4739
      %v4743 = vsel %vm1283, %v3956, %v4374
      %v4746 = vsel %vm1283, %v3957, %v4376
      %v4749 = vsel %vm1283, %v3958, %v4378
      %v4752 = vsel %vm1283, %v3959, %v4380
      %v4755 = vsel %vm1283, %v3960, %v4382
      %v4758 = vsel %vm1283, %v3961, %v4384
      %v4761 = vsel %vm1283, %v3962, %v4386
      %v4764 = vsel %vm1283, %v3963, %v4388
      %v4767 = vsel %vm1283, %v3964, %v4390
      %v4770 = vsel %vm1283, %v3965, %v4392
      %v4773 = vsel %vm1283, %v3966, %v4394
      %v4776 = vsel %vm1283, %v3967, %v4396
      %v4779 = vsel %vm1283, %v3968, %v4398
      %v4782 = vsel %vm1283, %v3969, %v4400
      %v4785 = vsel %vm1283, %v3970, %v4402
      %v4788 = vsel %vm1283, %v3971, %v4404
      %v4790 = vsel %vm1349, %v4743, %v4422
      %v4792 = vsel %vm1349, %v4746, %v4424
      %v4794 = vsel %vm1349, %v4749, %v4426
      %v4796 = vsel %vm1349, %v4752, %v4428
      %v4798 = vsel %vm1349, %v4755, %v4430
      %v4800 = vsel %vm1349, %v4758, %v4432
      %v4802 = vsel %vm1349, %v4761, %v4434
      %v4804 = vsel %vm1349, %v4764, %v4436
      %v4806 = vsel %vm1349, %v4767, %v4438
      %v4808 = vsel %vm1349, %v4770, %v4440
      %v4810 = vsel %vm1349, %v4773, %v4442
      %v4812 = vsel %vm1349, %v4776, %v4444
      %v4814 = vsel %vm1349, %v4779, %v4446
      %v4816 = vsel %vm1349, %v4782, %v4448
      %v4818 = vsel %vm1349, %v4785, %v4450
      %v4820 = vsel %vm1349, %v4788, %v4452
      %v4822 = vsel %vm1415, %v4790, %v4470
      %v4824 = vsel %vm1415, %v4792, %v4472
      %v4826 = vsel %vm1415, %v4794, %v4474
      %v4828 = vsel %vm1415, %v4796, %v4476
      %v4830 = vsel %vm1415, %v4798, %v4478
      %v4832 = vsel %vm1415, %v4800, %v4480
      %v4834 = vsel %vm1415, %v4802, %v4482
      %v4836 = vsel %vm1415, %v4804, %v4484
      %v4838 = vsel %vm1415, %v4806, %v4486
      %v4840 = vsel %vm1415, %v4808, %v4488
      %v4842 = vsel %vm1415, %v4810, %v4490
      %v4844 = vsel %vm1415, %v4812, %v4492
      %v4846 = vsel %vm1415, %v4814, %v4494
      %v4848 = vsel %vm1415, %v4816, %v4496
      %v4850 = vsel %vm1415, %v4818, %v4498
      %v4852 = vsel %vm1415, %v4820, %v4500
      %v4854 = vsel %vm1481, %v4822, %v4518
      %v4856 = vsel %vm1481, %v4824, %v4520
      %v4858 = vsel %vm1481, %v4826, %v4522
      %v4860 = vsel %vm1481, %v4828, %v4524
      %v4862 = vsel %vm1481, %v4830, %v4526
      %v4864 = vsel %vm1481, %v4832, %v4528
      %v4866 = vsel %vm1481, %v4834, %v4530
      %v4868 = vsel %vm1481, %v4836, %v4532
      %v4870 = vsel %vm1481, %v4838, %v4534
      %v4872 = vsel %vm1481, %v4840, %v4536
      %v4874 = vsel %vm1481, %v4842, %v4538
      %v4876 = vsel %vm1481, %v4844, %v4540
      %v4878 = vsel %vm1481, %v4846, %v4542
      %v4880 = vsel %vm1481, %v4848, %v4544
      %v4882 = vsel %vm1481, %v4850, %v4546
      %v4884 = vsel %vm1481, %v4852, %v4548
      %v4886 = vsel %vm3126, %v4854, %v4566
      %v4888 = vsel %vm3126, %v4856, %v4568
      %v4890 = vsel %vm3126, %v4858, %v4570
      %v4892 = vsel %vm3126, %v4860, %v4572
      %v4894 = vsel %vm3126, %v4862, %v4574
      %v4896 = vsel %vm3126, %v4864, %v4576
      %v4898 = vsel %vm3126, %v4866, %v4578
      %v4900 = vsel %vm3126, %v4868, %v4580
      %v4902 = vsel %vm3126, %v4870, %v4582
      %v4904 = vsel %vm3126, %v4872, %v4584
      %v4906 = vsel %vm3126, %v4874, %v4586
      %v4908 = vsel %vm3126, %v4876, %v4588
      %v4910 = vsel %vm3126, %v4878, %v4590
      %v4912 = vsel %vm3126, %v4880, %v4592
      %v4914 = vsel %vm3126, %v4882, %v4594
      %v4916 = vsel %vm3126, %v4884, %v4596
      %v4918 = vsel %vm3159, %v4886, %v4614
      %v4920 = vsel %vm3159, %v4888, %v4616
      %v4922 = vsel %vm3159, %v4890, %v4618
      %v4924 = vsel %vm3159, %v4892, %v4620
      %v4926 = vsel %vm3159, %v4894, %v4622
      %v4928 = vsel %vm3159, %v4896, %v4624
      %v4930 = vsel %vm3159, %v4898, %v4626
      %v4932 = vsel %vm3159, %v4900, %v4628
      %v4934 = vsel %vm3159, %v4902, %v4630
      %v4936 = vsel %vm3159, %v4904, %v4632
      %v4938 = vsel %vm3159, %v4906, %v4634
      %v4940 = vsel %vm3159, %v4908, %v4636
      %v4942 = vsel %vm3159, %v4910, %v4638
      %v4944 = vsel %vm3159, %v4912, %v4640
      %v4946 = vsel %vm3159, %v4914, %v4642
      %v4948 = vsel %vm3159, %v4916, %v4644
      %v4950 = vsel %vm3192, %v4918, %v4662
      %v4952 = vsel %vm3192, %v4920, %v4664
      %v4954 = vsel %vm3192, %v4922, %v4666
      %v4956 = vsel %vm3192, %v4924, %v4668
      %v4958 = vsel %vm3192, %v4926, %v4670
      %v4960 = vsel %vm3192, %v4928, %v4672
      %v4962 = vsel %vm3192, %v4930, %v4674
      %v4964 = vsel %vm3192, %v4932, %v4676
      %v4966 = vsel %vm3192, %v4934, %v4678
      %v4968 = vsel %vm3192, %v4936, %v4680
      %v4970 = vsel %vm3192, %v4938, %v4682
      %v4972 = vsel %vm3192, %v4940, %v4684
      %v4974 = vsel %vm3192, %v4942, %v4686
      %v4976 = vsel %vm3192, %v4944, %v4688
      %v4978 = vsel %vm3192, %v4946, %v4690
      %v4980 = vsel %vm3192, %v4948, %v4692
      %v4982 = vsel %vm3225, %v4950, %v4710
      %v4984 = vsel %vm3225, %v4952, %v4712
      %v4986 = vsel %vm3225, %v4954, %v4714
      %v4988 = vsel %vm3225, %v4956, %v4716
      %v4990 = vsel %vm3225, %v4958, %v4718
      %v4992 = vsel %vm3225, %v4960, %v4720
      %v4994 = vsel %vm3225, %v4962, %v4722
      %v4996 = vsel %vm3225, %v4964, %v4724
      %v4998 = vsel %vm3225, %v4966, %v4726
      %v5000 = vsel %vm3225, %v4968, %v4728
      %v5002 = vsel %vm3225, %v4970, %v4730
      %v5004 = vsel %vm3225, %v4972, %v4732
      %v5006 = vsel %vm3225, %v4974, %v4734
      %v5008 = vsel %vm3225, %v4976, %v4736
      %v5010 = vsel %vm3225, %v4978, %v4738
      %v5012 = vsel %vm3225, %v4980, %v4740
      %v5013 = vld [vmem:[%s5] sm:$0x3]
      %v5014 = vld [vmem:[%s6] sm:$0x7]
      %5016 = vset.pattern.permute.xlu0 0
      %5017 = vperm.xlu0 %5016, %v5014
      %v5018 = vpop.permute.xlu0 %5017
      %v5021 = vsel %vm3301, %v5013, 0
      %v5023 = vsel %vm3301, %v4982, 0
      %v5025 = vsel %vm3301, %v4984, 0
      %v5027 = vsel %vm3301, %v4986, 0
      %v5029 = vsel %vm3301, %v4988, 0
      %v5031 = vsel %vm3301, %v4990, 0
      %v5033 = vsel %vm3301, %v4992, 0
      %v5035 = vsel %vm3301, %v4994, 0
      %v5037 = vsel %vm3301, %v4996, 0
      %v5039 = vsel %vm3301, %v4998, 0
      %v5041 = vsel %vm3301, %v5000, 0
      %v5043 = vsel %vm3301, %v5002, 0
      %v5045 = vsel %vm3301, %v5004, 0
      %v5047 = vsel %vm3301, %v5006, 0
      %v5049 = vsel %vm3301, %v5008, 0
      %v5051 = vsel %vm3301, %v5010, 0
      %v5053 = vsel %vm3301, %v5012, 0
      %5055 = vmatprep.subr.bf16.mxu0 0
      %5056 = vmatpush1.bf16.xpose.msra.mxu0 %v5023
      %5057 = vmatprep.subr.bf16.mxu0 0
      %5058 = vmatpush1.bf16.xpose.msra.mxu0 %v5025
      %5059 = vmatprep.subr.bf16.mxu0 0
      %5060 = vmatpush1.bf16.xpose.msra.mxu0 %v5027
      %5061 = vmatprep.subr.bf16.mxu0 0
      %5062 = vmatpush1.bf16.xpose.msra.mxu0 %v5029
      %5063 = vmatprep.subr.bf16.mxu0 0
      %5064 = vmatpush1.bf16.xpose.msra.mxu0 %v5031
      %5065 = vmatprep.subr.bf16.mxu0 0
      %5066 = vmatpush1.bf16.xpose.msra.mxu0 %v5033
      %5067 = vmatprep.subr.bf16.mxu0 0
      %5068 = vmatpush1.bf16.xpose.msra.mxu0 %v5035
      %5069 = vmatprep.subr.bf16.mxu0 0
      %5070 = vmatpush1.bf16.xpose.msra.mxu0 %v5037
      %5071 = vmatprep.subr.bf16.mxu0 0
      %5072 = vmatpush1.bf16.xpose.msra.mxu0 %v5039
      %5073 = vmatprep.subr.bf16.mxu0 0
      %5074 = vmatpush1.bf16.xpose.msra.mxu0 %v5041
      %5075 = vmatprep.subr.bf16.mxu0 0
      %5076 = vmatpush1.bf16.xpose.msra.mxu0 %v5043
      %5077 = vmatprep.subr.bf16.mxu0 0
      %5078 = vmatpush1.bf16.xpose.msra.mxu0 %v5045
      %5079 = vmatprep.subr.bf16.mxu0 0
      %5080 = vmatpush1.bf16.xpose.msra.mxu0 %v5047
      %5081 = vmatprep.subr.bf16.mxu0 0
      %5082 = vmatpush1.bf16.xpose.msra.mxu0 %v5049
      %5083 = vmatprep.subr.bf16.mxu0 0
      %5084 = vmatpush1.bf16.xpose.msra.mxu0 %v5051
      %5085 = vmatprep.subr.bf16.mxu0 0
      %5086 = vmatpush1.bf16.xpose.msra.mxu0 %v5053
      %5087 = vmatprep.mubr.bf16.mxu0 0
      %5088 = vmatmul.mubr.bf16.gmra.mrb[0].mxu0 %v5021
      %v5089 = vpop.f32.mrb[0].mxu0
      %v5090 = vadd.f32 %v5018, %v5089
      %v5091 = vpop.f32.mrb[0].mxu0
      %v5092 = vadd.f32 %v5018, %v5091
      %v5093 = vpop.f32.mrb[0].mxu0
      %v5094 = vpop.f32.mrb[0].mxu0
      %5095 = vdwg.mxu0
      %v5098 = vcombine.low %v5090, %v5092
      %5100 = vst [vmem:[%s278] sm:$0x77] %v5098
      %p5101 = scmp.lt.s32.totalorder %s18, 1
      %s5102 = scalar_select %p5101, %s18, 1
      %s5103 = smul.addr %s5102, 2
      %s5104 = smul.addr %s5103, 4
      %s5105 = scalar_lea.vmem %s7, %s5104
      // Predicated region
      $region49: #{tpu_custom_call.1} parent=47 // pred_check
        %p5106 = pneg %p188
      $region50: #{tpu_custom_call.1} parent=47 // pred_check_branch
        %5108 = sbr.rel (%p5106) target = $region52
      $region51: #{tpu_custom_call.1} parent=47 // pred_region
        _
      $region52: #{tpu_custom_call.1} parent=47 // pred_fallthru
        _
    $region48: #{tpu_custom_call.1} parent=5 // pred_fallthru
      _
    %p5109 = scmp.le.s32.totalorder 2, %s13
    // Predicated region
    $region53: #{tpu_custom_call.1} parent=5 // pred_check
      %p5110 = pneg %p5109
    $region54: #{tpu_custom_call.1} parent=5 // pred_check_branch
      %5112 = sbr.rel (%p5110) target = $region56
    $region55: #{tpu_custom_call.1} parent=5 // pred_region
      %s5113 = ssub.s32 %s13, 2
      // Predicated region
      $region57: #{tpu_custom_call.1} parent=55 // pred_check
        %p5114 = pneg %p194
      $region58: #{tpu_custom_call.1} parent=55 // pred_check_branch
        %5116 = sbr.rel (%p5114) target = $region60
      $region59: #{tpu_custom_call.1} parent=55 // pred_region
        %p5117 = scmp.lt.s32.totalorder %s19, 1
        %s5118 = scalar_select %p5117, %s19, 1
        %s5119 = smul.addr %s5118, 2
        %s5120 = smul.addr %s5119, 4
        %s5121 = scalar_lea.vmem %s7, %s5120
      $region60: #{tpu_custom_call.1} parent=55 // pred_fallthru
        _
    $region56: #{tpu_custom_call.1} parent=5 // pred_fallthru
      _
  $region6: #{tpu_custom_call.1} parent=0 // loop_footer
    %s17 = sadd.s32 1, %s13
  $region7: #{tpu_custom_call.1} parent=0 // loop_footer_branch
    %12 = sbr.rel target = $region3
  $region8: #{tpu_custom_call.1} parent=0 // loop_exit
    _

// kernel: tpu_custom_call.1
$region0: #{tpu_custom_call.1}
  #allocation0 [shape = 'u32[]', space=smem, size = 0x4, offset = 0x4, fixed_abs, tag = 'smem constant byte address 0x4 - core index']
  #allocation1 [shape = 'u32[144,128]{1,0:T(1,128)}', space=vmem, size = 0x12000, scoped, tag = 'internal scratch']
  %s0 = inlined_call_operand.vmem [shape: f32[2,18,18,4], index: 0, kind: input, shape index: {}]
  %s1 = inlined_call_operand.vmem [shape: f32[3,3,4,8], index: 1, kind: input, shape index: {}]
  %s2 = inlined_call_operand.vmem [shape: f32[1,8], index: 2, kind: input, shape index: {}]
  %s3 = inlined_call_operand.vmem [shape: f32[2,16,16,8], index: 3, kind: output, shape index: {}]
  %s4 = sld [smem:[#allocation0]]
  $region45: #{tpu_custom_call.1} parent=0
    _
  %s6 = ssub.s32 1, %s4
  %s7 = scalar_select 0, %s6, %s4
  loop: start=0, step=1, limit=4
  $region2: #{tpu_custom_call.1} parent=0 // loop_pre_header
    _
  $region3: #{tpu_custom_call.1} parent=0 // loop_header
    %s9 = sphi 0, %s13
    %p10 = scmp.ge.s32.totalorder %s9, 4
    %s19 = sphi 0, %s21
    %s22 = sphi 0, %s19
    %s23 = sphi 0, %s22
    %s39 = sphi 0, %s23
    %s43 = sphi 0, %s43
    %s45 = sphi 0, %s43
    %s46 = sphi 0, %s45
    %s60 = sphi 0, %s46
    %s64 = sphi 0, %s64
    %s66 = sphi 0, %s64
    %s67 = sphi 0, %s66
    %s81 = sphi 0, %s67
    %s87 = sphi 0, %s89
    %s90 = sphi 0, %s87
    %s91 = sphi 0, %s90
    %s107 = sphi 0, %s91
  $region4: #{tpu_custom_call.1} parent=0 // loop_header_branch
    %12 = sbr.rel (%p10) target = $region8
  $region5: #{tpu_custom_call.1} parent=0 // loop_body
    %s14 = ssub.s32 %s9, 1
    %s15 = ssub.s32 %s9, 2
    %s16 = sadd.s32 %s9, 1
    %s17 = ssub.s32 %s9, %s16
    %p18 = scmp.eq.s32.totalorder %s17, 0
    %s20 = sadd.s32 %s19, 1
    %s21 = scalar_select %p18, %s19, %s20
    %p24 = pneg %p18
    %p25 = scmp.eq.s32.totalorder %s9, 1
    %p26 = por %p24, %p25
    %p27 = scmp.ne.s32.totalorder %s19, %s22
    %p28 = scmp.eq.s32.totalorder %s9, 0
    %p29 = por %p27, %p28
    %p30 = scmp.ne.s32.totalorder %s19, %s22
    %p31 = scmp.eq.s32.totalorder %s14, 1
    %p32 = por %p30, %p31
    %p33 = scmp.ne.s32.totalorder %s22, %s23
    %p34 = scmp.eq.s32.totalorder %s14, 0
    %p35 = por %p33, %p34
    %p36 = scmp.ne.s32.totalorder %s22, %s23
    %p37 = scmp.eq.s32.totalorder %s15, 1
    %p38 = por %p36, %p37
    %p40 = scmp.ne.s32.totalorder %s23, %s39
    %p41 = scmp.eq.s32.totalorder %s15, 0
    %p42 = por %p40, %p41
    %s44 = sadd.s32 %s43, 1
    %p47 = scmp.eq.s32.totalorder %s9, 1
    %p48 = scmp.ne.s32.totalorder %s43, %s45
    %p49 = scmp.eq.s32.totalorder %s9, 0
    %p50 = por %p48, %p49
    %p51 = scmp.ne.s32.totalorder %s43, %s45
    %p52 = scmp.eq.s32.totalorder %s14, 1
    %p53 = por %p51, %p52
    %p54 = scmp.ne.s32.totalorder %s45, %s46
    %p55 = scmp.eq.s32.totalorder %s14, 0
    %p56 = por %p54, %p55
    %p57 = scmp.ne.s32.totalorder %s45, %s46
    %p58 = scmp.eq.s32.totalorder %s15, 1
    %p59 = por %p57, %p58
    %p61 = scmp.ne.s32.totalorder %s46, %s60
    %p62 = scmp.eq.s32.totalorder %s15, 0
    %p63 = por %p61, %p62
    %s65 = sadd.s32 %s64, 1
    %p68 = scmp.eq.s32.totalorder %s9, 1
    %p69 = scmp.ne.s32.totalorder %s64, %s66
    %p70 = scmp.eq.s32.totalorder %s9, 0
    %p71 = por %p69, %p70
    %p72 = scmp.ne.s32.totalorder %s64, %s66
    %p73 = scmp.eq.s32.totalorder %s14, 1
    %p74 = por %p72, %p73
    %p75 = scmp.ne.s32.totalorder %s66, %s67
    %p76 = scmp.eq.s32.totalorder %s14, 0
    %p77 = por %p75, %p76
    %p78 = scmp.ne.s32.totalorder %s66, %s67
    %p79 = scmp.eq.s32.totalorder %s15, 1
    %p80 = por %p78, %p79
    %p82 = scmp.ne.s32.totalorder %s67, %s81
    %p83 = scmp.eq.s32.totalorder %s15, 0
    %p84 = por %p82, %p83
    %s85 = ssub.s32 %s9, %s16
    %p86 = scmp.eq.s32.totalorder %s85, 0
    %s88 = sadd.s32 %s87, 1
    %s89 = scalar_select %p86, %s87, %s88
    %p92 = pneg %p86
    %p93 = scmp.eq.s32.totalorder %s9, 1
    %p94 = por %p92, %p93
    %p95 = scmp.ne.s32.totalorder %s87, %s90
    %p96 = scmp.eq.s32.totalorder %s9, 0
    %p97 = por %p95, %p96
    %p98 = scmp.ne.s32.totalorder %s87, %s90
    %p99 = scmp.eq.s32.totalorder %s14, 1
    %p100 = por %p98, %p99
    %p101 = scmp.ne.s32.totalorder %s90, %s91
    %p102 = scmp.eq.s32.totalorder %s14, 0
    %p103 = por %p101, %p102
    %p104 = scmp.ne.s32.totalorder %s90, %s91
    %p105 = scmp.eq.s32.totalorder %s15, 1
    %p106 = por %p104, %p105
    %p108 = scmp.ne.s32.totalorder %s91, %s107
    %p109 = scmp.eq.s32.totalorder %s15, 0
    %p110 = por %p108, %p109
    %p111 = scmp.le.s32.totalorder 1, %s9
    %p112 = scmp.lt.s32.totalorder %s9, 3
    %p113 = pnand %p111, %p112
    %p114 = pneg %p113
    // Predicated region
    $region9: #{tpu_custom_call.1} parent=5 // pred_check
      _
    $region10: #{tpu_custom_call.1} parent=5 // pred_check_branch
      %116 = sbr.rel (%p113) target = $region12
    $region11: #{tpu_custom_call.1} parent=5 // pred_region
      %s117 = ssub.s32 %s9, 1
      // Predicated region
      $region13: #{tpu_custom_call.1} parent=11 // pred_check
        %p118 = pneg %p56
      $region14: #{tpu_custom_call.1} parent=11 // pred_check_branch
        %120 = sbr.rel (%p118) target = $region16
      $region15: #{tpu_custom_call.1} parent=11 // pred_region
        _
      $region16: #{tpu_custom_call.1} parent=11 // pred_fallthru
        _
      // Predicated region
      $region17: #{tpu_custom_call.1} parent=11 // pred_check
        %p121 = pneg %p77
      $region18: #{tpu_custom_call.1} parent=11 // pred_check_branch
        %123 = sbr.rel (%p121) target = $region20
      $region19: #{tpu_custom_call.1} parent=11 // pred_region
        _
      $region20: #{tpu_custom_call.1} parent=11 // pred_fallthru
        _
    $region12: #{tpu_custom_call.1} parent=5 // pred_fallthru
      _
    %p124 = scmp.lt.s32.totalorder %s9, 2
    // Predicated region
    $region21: #{tpu_custom_call.1} parent=5 // pred_check
      %p125 = pneg %p124
    $region22: #{tpu_custom_call.1} parent=5 // pred_check_branch
      %127 = sbr.rel (%p125) target = $region24
    $region23: #{tpu_custom_call.1} parent=5 // pred_region
      // Predicated region
      $region25: #{tpu_custom_call.1} parent=23 // pred_check
        %p128 = pneg %p29
      $region26: #{tpu_custom_call.1} parent=23 // pred_check_branch
        %130 = sbr.rel (%p128) target = $region28
      $region27: #{tpu_custom_call.1} parent=23 // pred_region
        %p131 = scmp.lt.s32.totalorder %s9, 1
        %s132 = scalar_select %p131, %s9, 1
        %s133 = smul.addr %s132, 54
        %s134 = smul.addr %s133, 8
        %s135 = scalar_lea.vmem %s0, %s134
      $region28: #{tpu_custom_call.1} parent=23 // pred_fallthru
        _
    $region24: #{tpu_custom_call.1} parent=5 // pred_fallthru
      _
    %p136 = scmp.le.s32.totalorder 1, %s9
    %p137 = scmp.lt.s32.totalorder %s9, 3
    %p138 = pnand %p136, %p137
    %p139 = pneg %p138
    // Predicated region
    $region29: #{tpu_custom_call.1} parent=5 // pred_check
      _
    $region30: #{tpu_custom_call.1} parent=5 // pred_check_branch
      %141 = sbr.rel (%p138) target = $region32
    $region31: #{tpu_custom_call.1} parent=5 // pred_region
      %s142 = ssub.s32 %s9, 1
      %p143 = scmp.lt.s32.totalorder %s14, 1
      %s144 = scalar_select %p143, %s14, 1
      %s145 = smul.addr %s144, 54
      %s146 = smul.addr %s145, 8
      %s147 = scalar_lea.vmem %s0, %s146
      %p148 = pneg %p35
      %p149 = pneg %p32
      %p150 = pneg %p56
      %p151 = pneg %p53
      %p152 = pneg %p77
      %p153 = pneg %p74
      %p154 = pneg %p103
      %p155 = pneg %p100
      %p156 = scmp.lt.s32.totalorder %s14, 1
      %s157 = scalar_select %p156, %s14, 1
      %s158 = smul.addr %s157, 32
      %s159 = smul.addr %s158, 8
      %s160 = scalar_lea.vmem %s3, %s159
      %p161 = scmp.lt.s32.totalorder %s14, 1
      %s162 = scalar_select %p161, %s14, 1
      %s163 = smul.addr %s162, 54
      %s164 = smul.addr %s163, 8
      %s165 = scalar_lea.vmem %s0, %s164
      %p166 = scmp.lt.s32.totalorder %s14, 1
      %s167 = scalar_select %p166, %s14, 1
      %s168 = smul.addr %s167, 32
      %s169 = smul.addr %s168, 8
      %s170 = scalar_lea.vmem %s3, %s169
      %v171 = vld [vmem:[%s165] sm:$0xff]
      %v172 = vld [vmem:[%s165 + $0x8] sm:$0xff]
      %v173 = vld [vmem:[%s165 + $0x18] sm:$0xff]
      %v174 = vld [vmem:[%s165 + $0x20] sm:$0xff]
      %v175 = vld [vmem:[%s165 + $0x30] sm:$0xff]
      %v176 = vld [vmem:[%s165 + $0x38] sm:$0xff]
      %v177 = vld [vmem:[%s165 + $0x48] sm:$0xff]
      %v178 = vld [vmem:[%s165 + $0x50] sm:$0xff]
      %v179 = vld [vmem:[%s165 + $0x60] sm:$0xff]
      %v180 = vld [vmem:[%s165 + $0x68] sm:$0xff]
      %v181 = vld [vmem:[%s165 + $0x78] sm:$0xff]
      %v182 = vld [vmem:[%s165 + $0x80] sm:$0xff]
      %v183 = vld [vmem:[%s165 + $0x90] sm:$0xff]
      %v184 = vld [vmem:[%s165 + $0x98] sm:$0xff]
      %v185 = vld [vmem:[%s165 + $0xa8] sm:$0xff]
      %v186 = vld [vmem:[%s165 + $0xb0] sm:$0xff]
      %v187 = vld [vmem:[%s165 + $0xc0] sm:$0xff]
      %v188 = vld [vmem:[%s165 + $0xc8] sm:$0xff]
      %v189 = vld [vmem:[%s165 + $0xd8] sm:$0xff]
      %v190 = vld [vmem:[%s165 + $0xe0] sm:$0xff]
      %v191 = vld [vmem:[%s165 + $0xf0] sm:$0xff]
      %v192 = vld [vmem:[%s165 + $0xf8] sm:$0xff]
      %v193 = vld [vmem:[%s165 + $0x108] sm:$0xff]
      %v194 = vld [vmem:[%s165 + $0x110] sm:$0xff]
      %v195 = vld [vmem:[%s165 + $0x120] sm:$0xff]
      %v196 = vld [vmem:[%s165 + $0x128] sm:$0xff]
      %v197 = vld [vmem:[%s165 + $0x138] sm:$0xff]
      %v198 = vld [vmem:[%s165 + $0x140] sm:$0xff]
      %v199 = vld [vmem:[%s165 + $0x150] sm:$0xff]
      %v200 = vld [vmem:[%s165 + $0x158] sm:$0xff]
      %v201 = vld [vmem:[%s165 + $0x168] sm:$0xff]
      %v202 = vld [vmem:[%s165 + $0x170] sm:$0xff]
      %v203 = vld [vmem:[%s1] sm:$0xf]
      %v204 = vld [vmem:[%s165 + $0x1] sm:$0xff]
      %v205 = vld [vmem:[%s165 + $0x9] sm:$0xff]
      %v206 = vld [vmem:[%s165 + $0x19] sm:$0xff]
      %v207 = vld [vmem:[%s165 + $0x21] sm:$0xff]
      %v208 = vld [vmem:[%s165 + $0x31] sm:$0xff]
      %v209 = vld [vmem:[%s165 + $0x39] sm:$0xff]
      %v210 = vld [vmem:[%s165 + $0x49] sm:$0xff]
      %v211 = vld [vmem:[%s165 + $0x51] sm:$0xff]
      %v212 = vld [vmem:[%s165 + $0x61] sm:$0xff]
      %v213 = vld [vmem:[%s165 + $0x69] sm:$0xff]
      %v214 = vld [vmem:[%s165 + $0x79] sm:$0xff]
      %v215 = vld [vmem:[%s165 + $0x81] sm:$0xff]
      %v216 = vld [vmem:[%s165 + $0x91] sm:$0xff]
      %v217 = vld [vmem:[%s165 + $0x99] sm:$0xff]
      %v218 = vld [vmem:[%s165 + $0xa9] sm:$0xff]
      %v219 = vld [vmem:[%s165 + $0xb1] sm:$0xff]
      %v220 = vld [vmem:[%s165 + $0xc1] sm:$0xff]
      %v221 = vld [vmem:[%s165 + $0xc9] sm:$0xff]
      %v222 = vld [vmem:[%s165 + $0xd9] sm:$0xff]
      %v223 = vld [vmem:[%s165 + $0xe1] sm:$0xff]
      %v224 = vld [vmem:[%s165 + $0xf1] sm:$0xff]
      %v225 = vld [vmem:[%s165 + $0xf9] sm:$0xff]
      %v226 = vld [vmem:[%s165 + $0x109] sm:$0xff]
      %v227 = vld [vmem:[%s165 + $0x111] sm:$0xff]
      %v228 = vld [vmem:[%s165 + $0x121] sm:$0xff]
      %v229 = vld [vmem:[%s165 + $0x129] sm:$0xff]
      %v230 = vld [vmem:[%s165 + $0x139] sm:$0xff]
      %v231 = vld [vmem:[%s165 + $0x141] sm:$0xff]
      %v232 = vld [vmem:[%s165 + $0x151] sm:$0xff]
      %v233 = vld [vmem:[%s165 + $0x159] sm:$0xff]
      %v234 = vld [vmem:[%s165 + $0x169] sm:$0xff]
      %v235 = vld [vmem:[%s165 + $0x171] sm:$0xff]
      %s236 = scalar_lea.vmem %s1, 4
      %v237 = vld [vmem:[%s236] sm:$0xf]
      %vm238 = vcmask 31744
      %v240 = vsel %vm238, %v204, 0
      %v243 = vsel %vm238, %v205, 0
      %v246 = vsel %vm238, %v206, 0
      %v249 = vsel %vm238, %v207, 0
      %v252 = vsel %vm238, %v208, 0
      %v255 = vsel %vm238, %v209, 0
      %v258 = vsel %vm238, %v210, 0
      %v261 = vsel %vm238, %v211, 0
      %v264 = vsel %vm238, %v212, 0
      %v267 = vsel %vm238, %v213, 0
      %v270 = vsel %vm238, %v214, 0
      %v273 = vsel %vm238, %v215, 0
      %v276 = vsel %vm238, %v216, 0
      %v279 = vsel %vm238, %v217, 0
      %v282 = vsel %vm238, %v218, 0
      %v285 = vsel %vm238, %v219, 0
      %v288 = vsel %vm238, %v220, 0
      %v291 = vsel %vm238, %v221, 0
      %v294 = vsel %vm238, %v222, 0
      %v297 = vsel %vm238, %v223, 0
      %v300 = vsel %vm238, %v224, 0
      %v303 = vsel %vm238, %v225, 0
      %v306 = vsel %vm238, %v226, 0
      %v309 = vsel %vm238, %v227, 0
      %v312 = vsel %vm238, %v228, 0
      %v315 = vsel %vm238, %v229, 0
      %v318 = vsel %vm238, %v230, 0
      %v321 = vsel %vm238, %v231, 0
      %v324 = vsel %vm238, %v232, 0
      %v327 = vsel %vm238, %v233, 0
      %v330 = vsel %vm238, %v234, 0
      %v333 = vsel %vm238, %v235, 0
      %vm335 = vcmask 1043456
      %v337 = vsel %vm335, %v237, 0
      %339 = vmatprep.subr.mxu0 0.0
      %340 = vmatpush1.msra.mxu0 %v337
      %341 = vmatprep.subr.mxu0 0.0
      %342 = vmatpush1.msra.mxu0 0.0
      %343 = vmatprep.subr.mxu0 0.0
      %344 = vmatpush1.msra.mxu0 0.0
      %345 = vmatprep.subr.mxu0 0.0
      %346 = vmatpush1.msra.mxu0 0.0
      %347 = vmatprep.subr.mxu0 0.0
      %348 = vmatpush1.msra.mxu0 0.0
      %349 = vmatprep.subr.mxu0 0.0
      %350 = vmatpush1.msra.mxu0 0.0
      %351 = vmatprep.subr.mxu0 0.0
      %352 = vmatpush1.msra.mxu0 0.0
      %353 = vmatprep.subr.mxu0 0.0
      %354 = vmatpush1.msra.mxu0 0.0
      %355 = vmatprep.subr.mxu0 0.0
      %356 = vmatpush1.msra.mxu0 0.0
      %357 = vmatprep.subr.mxu0 0.0
      %358 = vmatpush1.msra.mxu0 0.0
      %359 = vmatprep.subr.mxu0 0.0
      %360 = vmatpush1.msra.mxu0 0.0
      %361 = vmatprep.subr.mxu0 0.0
      %362 = vmatpush1.msra.mxu0 0.0
      %363 = vmatprep.subr.mxu0 0.0
      %364 = vmatpush1.msra.mxu0 0.0
      %365 = vmatprep.subr.mxu0 0.0
      %366 = vmatpush1.msra.mxu0 0.0
      %367 = vmatprep.subr.mxu0 0.0
      %368 = vmatpush1.msra.mxu0 0.0
      %369 = vmatprep.subr.mxu0 0.0
      %370 = vmatpush1.msra.mxu0 0.0
      %371 = vmatprep.subr.mxu0 0.0
      %372 = vmatpush1.msra.mxu0 0.0
      %373 = vmatprep.subr.mxu0 0.0
      %374 = vmatpush1.msra.mxu0 0.0
      %375 = vmatprep.subr.mxu0 0.0
      %376 = vmatpush1.msra.mxu0 0.0
      %377 = vmatprep.subr.mxu0 0.0
      %378 = vmatpush1.msra.mxu0 0.0
      %379 = vmatprep.subr.mxu0 0.0
      %380 = vmatpush1.msra.mxu0 0.0
      %381 = vmatprep.subr.mxu0 0.0
      %382 = vmatpush1.msra.mxu0 0.0
      %383 = vmatprep.subr.mxu0 0.0
      %384 = vmatpush1.msra.mxu0 0.0
      %385 = vmatprep.subr.mxu0 0.0
      %386 = vmatpush1.msra.mxu0 0.0
      %387 = vmatprep.subr.mxu0 0.0
      %388 = vmatpush1.msra.mxu0 0.0
      %389 = vmatprep.subr.mxu0 0.0
      %390 = vmatpush1.msra.mxu0 0.0
      %391 = vmatprep.subr.mxu0 0.0
      %392 = vmatpush1.msra.mxu0 0.0
      %393 = vmatprep.subr.mxu0 0.0
      %394 = vmatpush1.msra.mxu0 0.0
      %395 = vmatprep.subr.mxu0 0.0
      %396 = vmatpush1.msra.mxu0 0.0
      %397 = vmatprep.subr.mxu0 0.0
      %398 = vmatpush1.msra.mxu0 0.0
      %399 = vmatprep.subr.mxu0 0.0
      %400 = vmatpush1.msra.mxu0 0.0
      %401 = vmatprep.subr.mxu0 0.0
      %402 = vmatpush1.msra.mxu0 0.0
      %403 = vmatprep.mubr.f32.mxu0 0.0
      %404 = vmatmul.mubr.f32.gmra.mrb[0].mxu0 %v240
      %v405 = vpop.f32.mrb[0].mxu0
      %v406 = vadd.f32 0.0, %v405
      %v407 = vpop.f32.mrb[0].mxu0
      %408 = vmatprep.mubr.f32.mxu0 0.0
      %409 = vmatmul.mubr.f32.gmra.mrb[0].mxu0 %v243
      %v410 = vpop.f32.mrb[0].mxu0
      %v411 = vadd.f32 0.0, %v410
      %v412 = vpop.f32.mrb[0].mxu0
      %413 = vmatprep.mubr.f32.mxu0 0.0
      %414 = vmatmul.mubr.f32.gmra.mrb[0].mxu0 %v246
      %v415 = vpop.f32.mrb[0].mxu0
      %v416 = vadd.f32 0.0, %v415
      %v417 = vpop.f32.mrb[0].mxu0
      %418 = vmatprep.mubr.f32.mxu0 0.0
      %419 = vmatmul.mubr.f32.gmra.mrb[0].mxu0 %v249
      %v420 = vpop.f32.mrb[0].mxu0
      %v421 = vadd.f32 0.0, %v420
      %v422 = vpop.f32.mrb[0].mxu0
      %423 = vmatprep.mubr.f32.mxu0 0.0
      %424 = vmatmul.mubr.f32.gmra.mrb[0].mxu0 %v252
      %v425 = vpop.f32.mrb[0].mxu0
      %v426 = vadd.f32 0.0, %v425
      %v427 = vpop.f32.mrb[0].mxu0
      %428 = vmatprep.mubr.f32.mxu0 0.0
      %429 = vmatmul.mubr.f32.gmra.mrb[0].mxu0 %v255
      %v430 = vpop.f32.mrb[0].mxu0
      %v431 = vadd.f32 0.0, %v430
      %v432 = vpop.f32.mrb[0].mxu0
      %433 = vmatprep.mubr.f32.mxu0 0.0
      %434 = vmatmul.mubr.f32.gmra.mrb[0].mxu0 %v258
      %v435 = vpop.f32.mrb[0].mxu0
      %v436 = vadd.f32 0.0, %v435
      %v437 = vpop.f32.mrb[0].mxu0
      %438 = vmatprep.mubr.f32.mxu0 0.0
      %439 = vmatmul.mubr.f32.gmra.mrb[0].mxu0 %v261
      %v440 = vpop.f32.mrb[0].mxu0
      %v441 = vadd.f32 0.0, %v440
      %v442 = vpop.f32.mrb[0].mxu0
      %443 = vmatprep.mubr.f32.mxu0 0.0
      %444 = vmatmul.mubr.f32.gmra.mrb[0].mxu0 %v264
      %v445 = vpop.f32.mrb[0].mxu0
      %v446 = vadd.f32 0.0, %v445
      %v447 = vpop.f32.mrb[0].mxu0
      %448 = vmatprep.mubr.f32.mxu0 0.0
      %449 = vmatmul.mubr.f32.gmra.mrb[0].mxu0 %v267
      %v450 = vpop.f32.mrb[0].mxu0
      %v451 = vadd.f32 0.0, %v450
      %v452 = vpop.f32.mrb[0].mxu0
      %453 = vmatprep.mubr.f32.mxu0 0.0
      %454 = vmatmul.mubr.f32.gmra.mrb[0].mxu0 %v270
      %v455 = vpop.f32.mrb[0].mxu0
      %v456 = vadd.f32 0.0, %v455
      %v457 = vpop.f32.mrb[0].mxu0
      %458 = vmatprep.mubr.f32.mxu0 0.0
      %459 = vmatmul.mubr.f32.gmra.mrb[0].mxu0 %v273
      %v460 = vpop.f32.mrb[0].mxu0
      %v461 = vadd.f32 0.0, %v460
      %v462 = vpop.f32.mrb[0].mxu0
      %463 = vmatprep.mubr.f32.mxu0 0.0
      %464 = vmatmul.mubr.f32.gmra.mrb[0].mxu0 %v276
      %v465 = vpop.f32.mrb[0].mxu0
      %v466 = vadd.f32 0.0, %v465
      %v467 = vpop.f32.mrb[0].mxu0
      %468 = vmatprep.mubr.f32.mxu0 0.0
      %469 = vmatmul.mubr.f32.gmra.mrb[0].mxu0 %v279
      %v470 = vpop.f32.mrb[0].mxu0
      %v471 = vadd.f32 0.0, %v470
      %v472 = vpop.f32.mrb[0].mxu0
      %473 = vmatprep.mubr.f32.mxu0 0.0
      %474 = vmatmul.mubr.f32.gmra.mrb[0].mxu0 %v282
      %v475 = vpop.f32.mrb[0].mxu0
      %v476 = vadd.f32 0.0, %v475
      %v477 = vpop.f32.mrb[0].mxu0
      %478 = vmatprep.mubr.f32.mxu0 0.0
      %479 = vmatmul.mubr.f32.gmra.mrb[0].mxu0 %v285
      %v480 = vpop.f32.mrb[0].mxu0
      %v481 = vadd.f32 0.0, %v480
      %v482 = vpop.f32.mrb[0].mxu0
      %483 = vmatprep.mubr.f32.mxu0 0.0
      %484 = vmatmul.mubr.f32.gmra.mrb[0].mxu0 %v288
      %v485 = vpop.f32.mrb[0].mxu0
      %v486 = vadd.f32 0.0, %v485
      %v487 = vpop.f32.mrb[0].mxu0
      %488 = vmatprep.mubr.f32.mxu0 0.0
      %489 = vmatmul.mubr.f32.gmra.mrb[0].mxu0 %v291
      %v490 = vpop.f32.mrb[0].mxu0
      %v491 = vadd.f32 0.0, %v490
      %v492 = vpop.f32.mrb[0].mxu0
      %493 = vmatprep.mubr.f32.mxu0 0.0
      %494 = vmatmul.mubr.f32.gmra.mrb[0].mxu0 %v294
      %v495 = vpop.f32.mrb[0].mxu0
      %v496 = vadd.f32 0.0, %v495
      %v497 = vpop.f32.mrb[0].mxu0
      %498 = vmatprep.mubr.f32.mxu0 0.0
      %499 = vmatmul.mubr.f32.gmra.mrb[0].mxu0 %v297
      %v500 = vpop.f32.mrb[0].mxu0
      %v501 = vadd.f32 0.0, %v500
      %v502 = vpop.f32.mrb[0].mxu0
      %503 = vmatprep.mubr.f32.mxu0 0.0
      %504 = vmatmul.mubr.f32.gmra.mrb[0].mxu0 %v300
      %v505 = vpop.f32.mrb[0].mxu0
      %v506 = vadd.f32 0.0, %v505
      %v507 = vpop.f32.mrb[0].mxu0
      %508 = vmatprep.mubr.f32.mxu0 0.0
      %509 = vmatmul.mubr.f32.gmra.mrb[0].mxu0 %v303
      %v510 = vpop.f32.mrb[0].mxu0
      %v511 = vadd.f32 0.0, %v510
      %v512 = vpop.f32.mrb[0].mxu0
      %513 = vmatprep.mubr.f32.mxu0 0.0
      %514 = vmatmul.mubr.f32.gmra.mrb[0].mxu0 %v306
      %v515 = vpop.f32.mrb[0].mxu0
      %v516 = vadd.f32 0.0, %v515
      %v517 = vpop.f32.mrb[0].mxu0
      %518 = vmatprep.mubr.f32.mxu0 0.0
      %519 = vmatmul.mubr.f32.gmra.mrb[0].mxu0 %v309
      %v520 = vpop.f32.mrb[0].mxu0
      %v521 = vadd.f32 0.0, %v520
      %v522 = vpop.f32.mrb[0].mxu0
      %523 = vmatprep.mubr.f32.mxu0 0.0
      %524 = vmatmul.mubr.f32.gmra.mrb[0].mxu0 %v312
      %v525 = vpop.f32.mrb[0].mxu0
      %v526 = vadd.f32 0.0, %v525
      %v527 = vpop.f32.mrb[0].mxu0
      %528 = vmatprep.mubr.f32.mxu0 0.0
      %529 = vmatmul.mubr.f32.gmra.mrb[0].mxu0 %v315
      %v530 = vpop.f32.mrb[0].mxu0
      %v531 = vadd.f32 0.0, %v530
      %v532 = vpop.f32.mrb[0].mxu0
      %533 = vmatprep.mubr.f32.mxu0 0.0
      %534 = vmatmul.mubr.f32.gmra.mrb[0].mxu0 %v318
      %v535 = vpop.f32.mrb[0].mxu0
      %v536 = vadd.f32 0.0, %v535
      %v537 = vpop.f32.mrb[0].mxu0
      %538 = vmatprep.mubr.f32.mxu0 0.0
      %539 = vmatmul.mubr.f32.gmra.mrb[0].mxu0 %v321
      %v540 = vpop.f32.mrb[0].mxu0
      %v541 = vadd.f32 0.0, %v540
      %v542 = vpop.f32.mrb[0].mxu0
      %543 = vmatprep.mubr.f32.mxu0 0.0
      %544 = vmatmul.mubr.f32.gmra.mrb[0].mxu0 %v324
      %v545 = vpop.f32.mrb[0].mxu0
      %v546 = vadd.f32 0.0, %v545
      %v547 = vpop.f32.mrb[0].mxu0
      %548 = vmatprep.mubr.f32.mxu0 0.0
      %549 = vmatmul.mubr.f32.gmra.mrb[0].mxu0 %v327
      %v550 = vpop.f32.mrb[0].mxu0
      %v551 = vadd.f32 0.0, %v550
      %v552 = vpop.f32.mrb[0].mxu0
      %553 = vmatprep.mubr.f32.mxu0 0.0
      %554 = vmatmul.mubr.f32.gmra.mrb[0].mxu0 %v330
      %v555 = vpop.f32.mrb[0].mxu0
      %v556 = vadd.f32 0.0, %v555
      %v557 = vpop.f32.mrb[0].mxu0
      %558 = vmatprep.mubr.f32.mxu0 0.0
      %559 = vmatmul.mubr.f32.gmra.mrb[0].mxu0 %v333
      %v560 = vpop.f32.mrb[0].mxu0
      %v561 = vadd.f32 0.0, %v560
      %v562 = vpop.f32.mrb[0].mxu0
      %563 = vdwg.mxu0
      %v565 = vsel %vm238, %v171, 0
      %v568 = vsel %vm238, %v172, 0
      %v571 = vsel %vm238, %v173, 0
      %v574 = vsel %vm238, %v174, 0
      %v577 = vsel %vm238, %v175, 0
      %v580 = vsel %vm238, %v176, 0
      %v583 = vsel %vm238, %v177, 0
      %v586 = vsel %vm238, %v178, 0
      %v589 = vsel %vm238, %v179, 0
      %v592 = vsel %vm238, %v180, 0
      %v595 = vsel %vm238, %v181, 0
      %v598 = vsel %vm238, %v182, 0
      %v601 = vsel %vm238, %v183, 0
      %v604 = vsel %vm238, %v184, 0
      %v607 = vsel %vm238, %v185, 0
      %v610 = vsel %vm238, %v186, 0
      %v613 = vsel %vm238, %v187, 0
      %v616 = vsel %vm238, %v188, 0
      %v619 = vsel %vm238, %v189, 0
      %v622 = vsel %vm238, %v190, 0
      %v625 = vsel %vm238, %v191, 0
      %v628 = vsel %vm238, %v192, 0
      %v631 = vsel %vm238, %v193, 0
      %v634 = vsel %vm238, %v194, 0
      %v637 = vsel %vm238, %v195, 0
      %v640 = vsel %vm238, %v196, 0
      %v643 = vsel %vm238, %v197, 0
      %v646 = vsel %vm238, %v198, 0
      %v649 = vsel %vm238, %v199, 0
      %v652 = vsel %vm238, %v200, 0
      %v655 = vsel %vm238, %v201, 0
      %v658 = vsel %vm238, %v202, 0
      %v661 = vsel %vm335, %v203, 0
      %663 = vmatprep.subr.mxu0 0.0
      %664 = vmatpush1.msra.mxu0 %v661
      %665 = vmatprep.subr.mxu0 0.0
      %666 = vmatpush1.msra.mxu0 0.0
      %667 = vmatprep.subr.mxu0 0.0
      %668 = vmatpush1.msra.mxu0 0.0
      %669 = vmatprep.subr.mxu0 0.0
      %670 = vmatpush1.msra.mxu0 0.0
      %671 = vmatprep.subr.mxu0 0.0
      %672 = vmatpush1.msra.mxu0 0.0
      %673 = vmatprep.subr.mxu0 0.0
      %674 = vmatpush1.msra.mxu0 0.0
      %675 = vmatprep.subr.mxu0 0.0
      %676 = vmatpush1.msra.mxu0 0.0
      %677 = vmatprep.subr.mxu0 0.0
      %678 = vmatpush1.msra.mxu0 0.0
      %679 = vmatprep.subr.mxu0 0.0
      %680 = vmatpush1.msra.mxu0 0.0
      %681 = vmatprep.subr.mxu0 0.0
      %682 = vmatpush1.msra.mxu0 0.0
      %683 = vmatprep.subr.mxu0 0.0
      %684 = vmatpush1.msra.mxu0 0.0
      %685 = vmatprep.subr.mxu0 0.0
      %686 = vmatpush1.msra.mxu0 0.0
      %687 = vmatprep.subr.mxu0 0.0
      %688 = vmatpush1.msra.mxu0 0.0
      %689 = vmatprep.subr.mxu0 0.0
      %690 = vmatpush1.msra.mxu0 0.0
      %691 = vmatprep.subr.mxu0 0.0
      %692 = vmatpush1.msra.mxu0 0.0
      %693 = vmatprep.subr.mxu0 0.0
      %694 = vmatpush1.msra.mxu0 0.0
      %695 = vmatprep.subr.mxu0 0.0
      %696 = vmatpush1.msra.mxu0 0.0
      %697 = vmatprep.subr.mxu0 0.0
      %698 = vmatpush1.msra.mxu0 0.0
      %699 = vmatprep.subr.mxu0 0.0
      %700 = vmatpush1.msra.mxu0 0.0
      %701 = vmatprep.subr.mxu0 0.0
      %702 = vmatpush1.msra.mxu0 0.0
      %703 = vmatprep.subr.mxu0 0.0
      %704 = vmatpush1.msra.mxu0 0.0
      %705 = vmatprep.subr.mxu0 0.0
      %706 = vmatpush1.msra.mxu0 0.0
      %707 = vmatprep.subr.mxu0 0.0
      %708 = vmatpush1.msra.mxu0 0.0
      %709 = vmatprep.subr.mxu0 0.0
      %710 = vmatpush1.msra.mxu0 0.0
      %711 = vmatprep.subr.mxu0 0.0
      %712 = vmatpush1.msra.mxu0 0.0
      %713 = vmatprep.subr.mxu0 0.0
      %714 = vmatpush1.msra.mxu0 0.0
      %715 = vmatprep.subr.mxu0 0.0
      %716 = vmatpush1.msra.mxu0 0.0
      %717 = vmatprep.subr.mxu0 0.0
      %718 = vmatpush1.msra.mxu0 0.0
      %719 = vmatprep.subr.mxu0 0.0
      %720 = vmatpush1.msra.mxu0 0.0
      %721 = vmatprep.subr.mxu0 0.0
      %722 = vmatpush1.msra.mxu0 0.0
      %723 = vmatprep.subr.mxu0 0.0
      %724 = vmatpush1.msra.mxu0 0.0
      %725 = vmatprep.subr.mxu0 0.0
      %726 = vmatpush1.msra.mxu0 0.0
      %727 = vmatprep.mubr.f32.mxu0 0.0
      %728 = vmatmul.mubr.f32.gmra.mrb[0].mxu0 %v565
      %v729 = vpop.f32.mrb[0].mxu0
      %v730 = vadd.f32 %v406, %v729
      %v731 = vpop.f32.mrb[0].mxu0
      %732 = vmatprep.mubr.f32.mxu0 0.0
      %733 = vmatmul.mubr.f32.gmra.mrb[0].mxu0 %v568
      %v734 = vpop.f32.mrb[0].mxu0
      %v735 = vadd.f32 %v411, %v734
      %v736 = vpop.f32.mrb[0].mxu0
      %737 = vmatprep.mubr.f32.mxu0 0.0
      %738 = vmatmul.mubr.f32.gmra.mrb[0].mxu0 %v571
      %v739 = vpop.f32.mrb[0].mxu0
      %v740 = vadd.f32 %v416, %v739
      %v741 = vpop.f32.mrb[0].mxu0
      %742 = vmatprep.mubr.f32.mxu0 0.0
      %743 = vmatmul.mubr.f32.gmra.mrb[0].mxu0 %v574
      %v744 = vpop.f32.mrb[0].mxu0
      %v745 = vadd.f32 %v421, %v744
      %v746 = vpop.f32.mrb[0].mxu0
      %747 = vmatprep.mubr.f32.mxu0 0.0
      %748 = vmatmul.mubr.f32.gmra.mrb[0].mxu0 %v577
      %v749 = vpop.f32.mrb[0].mxu0
      %v750 = vadd.f32 %v426, %v749
      %v751 = vpop.f32.mrb[0].mxu0
      %752 = vmatprep.mubr.f32.mxu0 0.0
      %753 = vmatmul.mubr.f32.gmra.mrb[0].mxu0 %v580
      %v754 = vpop.f32.mrb[0].mxu0
      %v755 = vadd.f32 %v431, %v754
      %v756 = vpop.f32.mrb[0].mxu0
      %757 = vmatprep.mubr.f32.mxu0 0.0
      %758 = vmatmul.mubr.f32.gmra.mrb[0].mxu0 %v583
      %v759 = vpop.f32.mrb[0].mxu0
      %v760 = vadd.f32 %v436, %v759
      %v761 = vpop.f32.mrb[0].mxu0
      %762 = vmatprep.mubr.f32.mxu0 0.0
      %763 = vmatmul.mubr.f32.gmra.mrb[0].mxu0 %v586
      %v764 = vpop.f32.mrb[0].mxu0
      %v765 = vadd.f32 %v441, %v764
      %v766 = vpop.f32.mrb[0].mxu0
      %767 = vmatprep.mubr.f32.mxu0 0.0
      %768 = vmatmul.mubr.f32.gmra.mrb[0].mxu0 %v589
      %v769 = vpop.f32.mrb[0].mxu0
      %v770 = vadd.f32 %v446, %v769
      %v771 = vpop.f32.mrb[0].mxu0
      %772 = vmatprep.mubr.f32.mxu0 0.0
      %773 = vmatmul.mubr.f32.gmra.mrb[0].mxu0 %v592
      %v774 = vpop.f32.mrb[0].mxu0
      %v775 = vadd.f32 %v451, %v774
      %v776 = vpop.f32.mrb[0].mxu0
      %777 = vmatprep.mubr.f32.mxu0 0.0
      %778 = vmatmul.mubr.f32.gmra.mrb[0].mxu0 %v595
      %v779 = vpop.f32.mrb[0].mxu0
      %v780 = vadd.f32 %v456, %v779
      %v781 = vpop.f32.mrb[0].mxu0
      %782 = vmatprep.mubr.f32.mxu0 0.0
      %783 = vmatmul.mubr.f32.gmra.mrb[0].mxu0 %v598
      %v784 = vpop.f32.mrb[0].mxu0
      %v785 = vadd.f32 %v461, %v784
      %v786 = vpop.f32.mrb[0].mxu0
      %787 = vmatprep.mubr.f32.mxu0 0.0
      %788 = vmatmul.mubr.f32.gmra.mrb[0].mxu0 %v601
      %v789 = vpop.f32.mrb[0].mxu0
      %v790 = vadd.f32 %v466, %v789
      %v791 = vpop.f32.mrb[0].mxu0
      %792 = vmatprep.mubr.f32.mxu0 0.0
      %793 = vmatmul.mubr.f32.gmra.mrb[0].mxu0 %v604
      %v794 = vpop.f32.mrb[0].mxu0
      %v795 = vadd.f32 %v471, %v794
      %v796 = vpop.f32.mrb[0].mxu0
      %797 = vmatprep.mubr.f32.mxu0 0.0
      %798 = vmatmul.mubr.f32.gmra.mrb[0].mxu0 %v607
      %v799 = vpop.f32.mrb[0].mxu0
      %v800 = vadd.f32 %v476, %v799
      %v801 = vpop.f32.mrb[0].mxu0
      %802 = vmatprep.mubr.f32.mxu0 0.0
      %803 = vmatmul.mubr.f32.gmra.mrb[0].mxu0 %v610
      %v804 = vpop.f32.mrb[0].mxu0
      %v805 = vadd.f32 %v481, %v804
      %v806 = vpop.f32.mrb[0].mxu0
      %807 = vmatprep.mubr.f32.mxu0 0.0
      %808 = vmatmul.mubr.f32.gmra.mrb[0].mxu0 %v613
      %v809 = vpop.f32.mrb[0].mxu0
      %v810 = vadd.f32 %v486, %v809
      %v811 = vpop.f32.mrb[0].mxu0
      %812 = vmatprep.mubr.f32.mxu0 0.0
      %813 = vmatmul.mubr.f32.gmra.mrb[0].mxu0 %v616
      %v814 = vpop.f32.mrb[0].mxu0
      %v815 = vadd.f32 %v491, %v814
      %v816 = vpop.f32.mrb[0].mxu0
      %817 = vmatprep.mubr.f32.mxu0 0.0
      %818 = vmatmul.mubr.f32.gmra.mrb[0].mxu0 %v619
      %v819 = vpop.f32.mrb[0].mxu0
      %v820 = vadd.f32 %v496, %v819
      %v821 = vpop.f32.mrb[0].mxu0
      %822 = vmatprep.mubr.f32.mxu0 0.0
      %823 = vmatmul.mubr.f32.gmra.mrb[0].mxu0 %v622
      %v824 = vpop.f32.mrb[0].mxu0
      %v825 = vadd.f32 %v501, %v824
      %v826 = vpop.f32.mrb[0].mxu0
      %827 = vmatprep.mubr.f32.mxu0 0.0
      %828 = vmatmul.mubr.f32.gmra.mrb[0].mxu0 %v625
      %v829 = vpop.f32.mrb[0].mxu0
      %v830 = vadd.f32 %v506, %v829
      %v831 = vpop.f32.mrb[0].mxu0
      %832 = vmatprep.mubr.f32.mxu0 0.0
      %833 = vmatmul.mubr.f32.gmra.mrb[0].mxu0 %v628
      %v834 = vpop.f32.mrb[0].mxu0
      %v835 = vadd.f32 %v511, %v834
      %v836 = vpop.f32.mrb[0].mxu0
      %837 = vmatprep.mubr.f32.mxu0 0.0
      %838 = vmatmul.mubr.f32.gmra.mrb[0].mxu0 %v631
      %v839 = vpop.f32.mrb[0].mxu0
      %v840 = vadd.f32 %v516, %v839
      %v841 = vpop.f32.mrb[0].mxu0
      %842 = vmatprep.mubr.f32.mxu0 0.0
      %843 = vmatmul.mubr.f32.gmra.mrb[0].mxu0 %v634
      %v844 = vpop.f32.mrb[0].mxu0
      %v845 = vadd.f32 %v521, %v844
      %v846 = vpop.f32.mrb[0].mxu0
      %847 = vmatprep.mubr.f32.mxu0 0.0
      %848 = vmatmul.mubr.f32.gmra.mrb[0].mxu0 %v637
      %v849 = vpop.f32.mrb[0].mxu0
      %v850 = vadd.f32 %v526, %v849
      %v851 = vpop.f32.mrb[0].mxu0
      %852 = vmatprep.mubr.f32.mxu0 0.0
      %853 = vmatmul.mubr.f32.gmra.mrb[0].mxu0 %v640
      %v854 = vpop.f32.mrb[0].mxu0
      %v855 = vadd.f32 %v531, %v854
      %v856 = vpop.f32.mrb[0].mxu0
      %857 = vmatprep.mubr.f32.mxu0 0.0
      %858 = vmatmul.mubr.f32.gmra.mrb[0].mxu0 %v643
      %v859 = vpop.f32.mrb[0].mxu0
      %v860 = vadd.f32 %v536, %v859
      %v861 = vpop.f32.mrb[0].mxu0
      %862 = vmatprep.mubr.f32.mxu0 0.0
      %863 = vmatmul.mubr.f32.gmra.mrb[0].mxu0 %v646
      %v864 = vpop.f32.mrb[0].mxu0
      %v865 = vadd.f32 %v541, %v864
      %v866 = vpop.f32.mrb[0].mxu0
      %867 = vmatprep.mubr.f32.mxu0 0.0
      %868 = vmatmul.mubr.f32.gmra.mrb[0].mxu0 %v649
      %v869 = vpop.f32.mrb[0].mxu0
      %v870 = vadd.f32 %v546, %v869
      %v871 = vpop.f32.mrb[0].mxu0
      %872 = vmatprep.mubr.f32.mxu0 0.0
      %873 = vmatmul.mubr.f32.gmra.mrb[0].mxu0 %v652
      %v874 = vpop.f32.mrb[0].mxu0
      %v875 = vadd.f32 %v551, %v874
      %v876 = vpop.f32.mrb[0].mxu0
      %877 = vmatprep.mubr.f32.mxu0 0.0
      %878 = vmatmul.mubr.f32.gmra.mrb[0].mxu0 %v655
      %v879 = vpop.f32.mrb[0].mxu0
      %v880 = vadd.f32 %v556, %v879
      %v881 = vpop.f32.mrb[0].mxu0
      %882 = vmatprep.mubr.f32.mxu0 0.0
      %883 = vmatmul.mubr.f32.gmra.mrb[0].mxu0 %v658
      %v884 = vpop.f32.mrb[0].mxu0
      %v885 = vadd.f32 %v561, %v884
      %v886 = vpop.f32.mrb[0].mxu0
      %887 = vdwg.mxu0
      %v888 = vld [vmem:[%s165 + $0x2] sm:$0xff]
      %v889 = vld [vmem:[%s165 + $0xa] sm:$0xff]
      %v890 = vld [vmem:[%s165 + $0x1a] sm:$0xff]
      %v891 = vld [vmem:[%s165 + $0x22] sm:$0xff]
      %v892 = vld [vmem:[%s165 + $0x32] sm:$0xff]
      %v893 = vld [vmem:[%s165 + $0x3a] sm:$0xff]
      %v894 = vld [vmem:[%s165 + $0x4a] sm:$0xff]
      %v895 = vld [vmem:[%s165 + $0x52] sm:$0xff]
      %v896 = vld [vmem:[%s165 + $0x62] sm:$0xff]
      %v897 = vld [vmem:[%s165 + $0x6a] sm:$0xff]
      %v898 = vld [vmem:[%s165 + $0x7a] sm:$0xff]
      %v899 = vld [vmem:[%s165 + $0x82] sm:$0xff]
      %v900 = vld [vmem:[%s165 + $0x92] sm:$0xff]
      %v901 = vld [vmem:[%s165 + $0x9a] sm:$0xff]
      %v902 = vld [vmem:[%s165 + $0xaa] sm:$0xff]
      %v903 = vld [vmem:[%s165 + $0xb2] sm:$0xff]
      %v904 = vld [vmem:[%s165 + $0xc2] sm:$0xff]
      %v905 = vld [vmem:[%s165 + $0xca] sm:$0xff]
      %v906 = vld [vmem:[%s165 + $0xda] sm:$0xff]
      %v907 = vld [vmem:[%s165 + $0xe2] sm:$0xff]
      %v908 = vld [vmem:[%s165 + $0xf2] sm:$0xff]
      %v909 = vld [vmem:[%s165 + $0xfa] sm:$0xff]
      %v910 = vld [vmem:[%s165 + $0x10a] sm:$0xff]
      %v911 = vld [vmem:[%s165 + $0x112] sm:$0xff]
      %v912 = vld [vmem:[%s165 + $0x122] sm:$0xff]
      %v913 = vld [vmem:[%s165 + $0x12a] sm:$0xff]
      %v914 = vld [vmem:[%s165 + $0x13a] sm:$0xff]
      %v915 = vld [vmem:[%s165 + $0x142] sm:$0xff]
      %v916 = vld [vmem:[%s165 + $0x152] sm:$0xff]
      %v917 = vld [vmem:[%s165 + $0x15a] sm:$0xff]
      %v918 = vld [vmem:[%s165 + $0x16a] sm:$0xff]
      %v919 = vld [vmem:[%s165 + $0x172] sm:$0xff]
      %s920 = scalar_lea.vmem %s1, 8
      %v921 = vld [vmem:[%s920] sm:$0xf]
      %v923 = vsel %vm238, %v888, 0
      %v926 = vsel %vm238, %v889, 0
      %v929 = vsel %vm238, %v890, 0
      %v932 = vsel %vm238, %v891, 0
      %v935 = vsel %vm238, %v892, 0
      %v938 = vsel %vm238, %v893, 0
      %v941 = vsel %vm238, %v894, 0
      %v944 = vsel %vm238, %v895, 0
      %v947 = vsel %vm238, %v896, 0
      %v950 = vsel %vm238, %v897, 0
      %v953 = vsel %vm238, %v898, 0
      %v956 = vsel %vm238, %v899, 0
      %v959 = vsel %vm238, %v900, 0
      %v962 = vsel %vm238, %v901, 0
      %v965 = vsel %vm238, %v902, 0
      %v968 = vsel %vm238, %v903, 0
      %v971 = vsel %vm238, %v904, 0
      %v974 = vsel %vm238, %v905, 0
      %v977 = vsel %vm238, %v906, 0
      %v980 = vsel %vm238, %v907, 0
      %v983 = vsel %vm238, %v908, 0
      %v986 = vsel %vm238, %v909, 0
      %v989 = vsel %vm238, %v910, 0
      %v992 = vsel %vm238, %v911, 0
      %v995 = vsel %vm238, %v912, 0
      %v998 = vsel %vm238, %v913, 0
      %v1001 = vsel %vm238, %v914, 0
      %v1004 = vsel %vm238, %v915, 0
      %v1007 = vsel %vm238, %v916, 0
      %v1010 = vsel %vm238, %v917, 0
      %v1013 = vsel %vm238, %v918, 0
      %v1016 = vsel %vm238, %v919, 0
      %v1019 = vsel %vm335, %v921, 0
      %1021 = vmatprep.subr.mxu0 0.0
      %1022 = vmatpush1.msra.mxu0 %v1019
      %1023 = vmatprep.subr.mxu0 0.0
      %1024 = vmatpush1.msra.mxu0 0.0
      %1025 = vmatprep.subr.mxu0 0.0
      %1026 = vmatpush1.msra.mxu0 0.0
      %1027 = vmatprep.subr.mxu0 0.0
      %1028 = vmatpush1.msra.mxu0 0.0
      %1029 = vmatprep.subr.mxu0 0.0
      %1030 = vmatpush1.msra.mxu0 0.0
      %1031 = vmatprep.subr.mxu0 0.0
      %1032 = vmatpush1.msra.mxu0 0.0
      %1033 = vmatprep.subr.mxu0 0.0
      %1034 = vmatpush1.msra.mxu0 0.0
      %1035 = vmatprep.subr.mxu0 0.0
      %1036 = vmatpush1.msra.mxu0 0.0
      %1037 = vmatprep.subr.mxu0 0.0
      %1038 = vmatpush1.msra.mxu0 0.0
      %1039 = vmatprep.subr.mxu0 0.0
      %1040 = vmatpush1.msra.mxu0 0.0
      %1041 = vmatprep.subr.mxu0 0.0
      %1042 = vmatpush1.msra.mxu0 0.0
      %1043 = vmatprep.subr.mxu0 0.0
      %1044 = vmatpush1.msra.mxu0 0.0
      %1045 = vmatprep.subr.mxu0 0.0
      %1046 = vmatpush1.msra.mxu0 0.0
      %1047 = vmatprep.subr.mxu0 0.0
      %1048 = vmatpush1.msra.mxu0 0.0
      %1049 = vmatprep.subr.mxu0 0.0
      %1050 = vmatpush1.msra.mxu0 0.0
      %1051 = vmatprep.subr.mxu0 0.0
      %1052 = vmatpush1.msra.mxu0 0.0
      %1053 = vmatprep.subr.mxu0 0.0
      %1054 = vmatpush1.msra.mxu0 0.0
      %1055 = vmatprep.subr.mxu0 0.0
      %1056 = vmatpush1.msra.mxu0 0.0
      %1057 = vmatprep.subr.mxu0 0.0
      %1058 = vmatpush1.msra.mxu0 0.0
      %1059 = vmatprep.subr.mxu0 0.0
      %1060 = vmatpush1.msra.mxu0 0.0
      %1061 = vmatprep.subr.mxu0 0.0
      %1062 = vmatpush1.msra.mxu0 0.0
      %1063 = vmatprep.subr.mxu0 0.0
      %1064 = vmatpush1.msra.mxu0 0.0
      %1065 = vmatprep.subr.mxu0 0.0
      %1066 = vmatpush1.msra.mxu0 0.0
      %1067 = vmatprep.subr.mxu0 0.0
      %1068 = vmatpush1.msra.mxu0 0.0
      %1069 = vmatprep.subr.mxu0 0.0
      %1070 = vmatpush1.msra.mxu0 0.0
      %1071 = vmatprep.subr.mxu0 0.0
      %1072 = vmatpush1.msra.mxu0 0.0
      %1073 = vmatprep.subr.mxu0 0.0
      %1074 = vmatpush1.msra.mxu0 0.0
      %1075 = vmatprep.subr.mxu0 0.0
      %1076 = vmatpush1.msra.mxu0 0.0
      %1077 = vmatprep.subr.mxu0 0.0
      %1078 = vmatpush1.msra.mxu0 0.0
      %1079 = vmatprep.subr.mxu0 0.0
      %1080 = vmatpush1.msra.mxu0 0.0
      %1081 = vmatprep.subr.mxu0 0.0
      %1082 = vmatpush1.msra.mxu0 0.0
      %1083 = vmatprep.subr.mxu0 0.0
      %1084 = vmatpush1.msra.mxu0 0.0
      %1085 = vmatprep.mubr.f32.mxu0 0.0
      %1086 = vmatmul.mubr.f32.gmra.mrb[0].mxu0 %v923
      %v1087 = vpop.f32.mrb[0].mxu0
      %v1088 = vadd.f32 0.0, %v1087
      %v1089 = vpop.f32.mrb[0].mxu0
      %1090 = vmatprep.mubr.f32.mxu0 0.0
      %1091 = vmatmul.mubr.f32.gmra.mrb[0].mxu0 %v926
      %v1092 = vpop.f32.mrb[0].mxu0
      %v1093 = vadd.f32 0.0, %v1092
      %v1094 = vpop.f32.mrb[0].mxu0
      %1095 = vmatprep.mubr.f32.mxu0 0.0
      %1096 = vmatmul.mubr.f32.gmra.mrb[0].mxu0 %v929
      %v1097 = vpop.f32.mrb[0].mxu0
      %v1098 = vadd.f32 0.0, %v1097
      %v1099 = vpop.f32.mrb[0].mxu0
      %1100 = vmatprep.mubr.f32.mxu0 0.0
      %1101 = vmatmul.mubr.f32.gmra.mrb[0].mxu0 %v932
      %v1102 = vpop.f32.mrb[0].mxu0
      %v1103 = vadd.f32 0.0, %v1102
      %v1104 = vpop.f32.mrb[0].mxu0
      %1105 = vmatprep.mubr.f32.mxu0 0.0
      %1106 = vmatmul.mubr.f32.gmra.mrb[0].mxu0 %v935
      %v1107 = vpop.f32.mrb[0].mxu0
      %v1108 = vadd.f32 0.0, %v1107
      %v1109 = vpop.f32.mrb[0].mxu0
      %1110 = vmatprep.mubr.f32.mxu0 0.0
      %1111 = vmatmul.mubr.f32.gmra.mrb[0].mxu0 %v938
      %v1112 = vpop.f32.mrb[0].mxu0
      %v1113 = vadd.f32 0.0, %v1112
      %v1114 = vpop.f32.mrb[0].mxu0
      %1115 = vmatprep.mubr.f32.mxu0 0.0
      %1116 = vmatmul.mubr.f32.gmra.mrb[0].mxu0 %v941
      %v1117 = vpop.f32.mrb[0].mxu0
      %v1118 = vadd.f32 0.0, %v1117
      %v1119 = vpop.f32.mrb[0].mxu0
      %1120 = vmatprep.mubr.f32.mxu0 0.0
      %1121 = vmatmul.mubr.f32.gmra.mrb[0].mxu0 %v944
      %v1122 = vpop.f32.mrb[0].mxu0
      %v1123 = vadd.f32 0.0, %v1122
      %v1124 = vpop.f32.mrb[0].mxu0
      %1125 = vmatprep.mubr.f32.mxu0 0.0
      %1126 = vmatmul.mubr.f32.gmra.mrb[0].mxu0 %v947
      %v1127 = vpop.f32.mrb[0].mxu0
      %v1128 = vadd.f32 0.0, %v1127
      %v1129 = vpop.f32.mrb[0].mxu0
      %1130 = vmatprep.mubr.f32.mxu0 0.0
      %1131 = vmatmul.mubr.f32.gmra.mrb[0].mxu0 %v950
      %v1132 = vpop.f32.mrb[0].mxu0
      %v1133 = vadd.f32 0.0, %v1132
      %v1134 = vpop.f32.mrb[0].mxu0
      %1135 = vmatprep.mubr.f32.mxu0 0.0
      %1136 = vmatmul.mubr.f32.gmra.mrb[0].mxu0 %v953
      %v1137 = vpop.f32.mrb[0].mxu0
      %v1138 = vadd.f32 0.0, %v1137
      %v1139 = vpop.f32.mrb[0].mxu0
      %1140 = vmatprep.mubr.f32.mxu0 0.0
      %1141 = vmatmul.mubr.f32.gmra.mrb[0].mxu0 %v956
      %v1142 = vpop.f32.mrb[0].mxu0
      %v1143 = vadd.f32 0.0, %v1142
      %v1144 = vpop.f32.mrb[0].mxu0
      %1145 = vmatprep.mubr.f32.mxu0 0.0
      %1146 = vmatmul.mubr.f32.gmra.mrb[0].mxu0 %v959
      %v1147 = vpop.f32.mrb[0].mxu0
      %v1148 = vadd.f32 0.0, %v1147
      %v1149 = vpop.f32.mrb[0].mxu0
      %1150 = vmatprep.mubr.f32.mxu0 0.0
      %1151 = vmatmul.mubr.f32.gmra.mrb[0].mxu0 %v962
      %v1152 = vpop.f32.mrb[0].mxu0
      %v1153 = vadd.f32 0.0, %v1152
      %v1154 = vpop.f32.mrb[0].mxu0
      %1155 = vmatprep.mubr.f32.mxu0 0.0
      %1156 = vmatmul.mubr.f32.gmra.mrb[0].mxu0 %v965
      %v1157 = vpop.f32.mrb[0].mxu0
      %v1158 = vadd.f32 0.0, %v1157
      %v1159 = vpop.f32.mrb[0].mxu0
      %1160 = vmatprep.mubr.f32.mxu0 0.0
      %1161 = vmatmul.mubr.f32.gmra.mrb[0].mxu0 %v968
      %v1162 = vpop.f32.mrb[0].mxu0
      %v1163 = vadd.f32 0.0, %v1162
      %v1164 = vpop.f32.mrb[0].mxu0
      %1165 = vmatprep.mubr.f32.mxu0 0.0
      %1166 = vmatmul.mubr.f32.gmra.mrb[0].mxu0 %v971
      %v1167 = vpop.f32.mrb[0].mxu0
      %v1168 = vadd.f32 0.0, %v1167
      %v1169 = vpop.f32.mrb[0].mxu0
      %1170 = vmatprep.mubr.f32.mxu0 0.0
      %1171 = vmatmul.mubr.f32.gmra.mrb[0].mxu0 %v974
      %v1172 = vpop.f32.mrb[0].mxu0
      %v1173 = vadd.f32 0.0, %v1172
      %v1174 = vpop.f32.mrb[0].mxu0
      %1175 = vmatprep.mubr.f32.mxu0 0.0
      %1176 = vmatmul.mubr.f32.gmra.mrb[0].mxu0 %v977
      %v1177 = vpop.f32.mrb[0].mxu0
      %v1178 = vadd.f32 0.0, %v1177
      %v1179 = vpop.f32.mrb[0].mxu0
      %1180 = vmatprep.mubr.f32.mxu0 0.0
      %1181 = vmatmul.mubr.f32.gmra.mrb[0].mxu0 %v980
      %v1182 = vpop.f32.mrb[0].mxu0
      %v1183 = vadd.f32 0.0, %v1182
      %v1184 = vpop.f32.mrb[0].mxu0
      %1185 = vmatprep.mubr.f32.mxu0 0.0
      %1186 = vmatmul.mubr.f32.gmra.mrb[0].mxu0 %v983
      %v1187 = vpop.f32.mrb[0].mxu0
      %v1188 = vadd.f32 0.0, %v1187
      %v1189 = vpop.f32.mrb[0].mxu0
      %1190 = vmatprep.mubr.f32.mxu0 0.0
      %1191 = vmatmul.mubr.f32.gmra.mrb[0].mxu0 %v986
      %v1192 = vpop.f32.mrb[0].mxu0
      %v1193 = vadd.f32 0.0, %v1192
      %v1194 = vpop.f32.mrb[0].mxu0
      %1195 = vmatprep.mubr.f32.mxu0 0.0
      %1196 = vmatmul.mubr.f32.gmra.mrb[0].mxu0 %v989
      %v1197 = vpop.f32.mrb[0].mxu0
      %v1198 = vadd.f32 0.0, %v1197
      %v1199 = vpop.f32.mrb[0].mxu0
      %1200 = vmatprep.mubr.f32.mxu0 0.0
      %1201 = vmatmul.mubr.f32.gmra.mrb[0].mxu0 %v992
      %v1202 = vpop.f32.mrb[0].mxu0
      %v1203 = vadd.f32 0.0, %v1202
      %v1204 = vpop.f32.mrb[0].mxu0
      %1205 = vmatprep.mubr.f32.mxu0 0.0
      %1206 = vmatmul.mubr.f32.gmra.mrb[0].mxu0 %v995
      %v1207 = vpop.f32.mrb[0].mxu0
      %v1208 = vadd.f32 0.0, %v1207
      %v1209 = vpop.f32.mrb[0].mxu0
      %1210 = vmatprep.mubr.f32.mxu0 0.0
      %1211 = vmatmul.mubr.f32.gmra.mrb[0].mxu0 %v998
      %v1212 = vpop.f32.mrb[0].mxu0
      %v1213 = vadd.f32 0.0, %v1212
      %v1214 = vpop.f32.mrb[0].mxu0
      %1215 = vmatprep.mubr.f32.mxu0 0.0
      %1216 = vmatmul.mubr.f32.gmra.mrb[0].mxu0 %v1001
      %v1217 = vpop.f32.mrb[0].mxu0
      %v1218 = vadd.f32 0.0, %v1217
      %v1219 = vpop.f32.mrb[0].mxu0
      %1220 = vmatprep.mubr.f32.mxu0 0.0
      %1221 = vmatmul.mubr.f32.gmra.mrb[0].mxu0 %v1004
      %v1222 = vpop.f32.mrb[0].mxu0
      %v1223 = vadd.f32 0.0, %v1222
      %v1224 = vpop.f32.mrb[0].mxu0
      %1225 = vmatprep.mubr.f32.mxu0 0.0
      %1226 = vmatmul.mubr.f32.gmra.mrb[0].mxu0 %v1007
      %v1227 = vpop.f32.mrb[0].mxu0
      %v1228 = vadd.f32 0.0, %v1227
      %v1229 = vpop.f32.mrb[0].mxu0
      %1230 = vmatprep.mubr.f32.mxu0 0.0
      %1231 = vmatmul.mubr.f32.gmra.mrb[0].mxu0 %v1010
      %v1232 = vpop.f32.mrb[0].mxu0
      %v1233 = vadd.f32 0.0, %v1232
      %v1234 = vpop.f32.mrb[0].mxu0
      %1235 = vmatprep.mubr.f32.mxu0 0.0
      %1236 = vmatmul.mubr.f32.gmra.mrb[0].mxu0 %v1013
      %v1237 = vpop.f32.mrb[0].mxu0
      %v1238 = vadd.f32 0.0, %v1237
      %v1239 = vpop.f32.mrb[0].mxu0
      %1240 = vmatprep.mubr.f32.mxu0 0.0
      %1241 = vmatmul.mubr.f32.gmra.mrb[0].mxu0 %v1016
      %v1242 = vpop.f32.mrb[0].mxu0
      %v1243 = vadd.f32 0.0, %v1242
      %v1244 = vpop.f32.mrb[0].mxu0
      %1245 = vdwg.mxu0
      %v1246 = vadd.f32 %v730, %v1088
      %v1247 = vadd.f32 %v735, %v1093
      %v1248 = vadd.f32 %v740, %v1098
      %v1249 = vadd.f32 %v745, %v1103
      %v1250 = vadd.f32 %v750, %v1108
      %v1251 = vadd.f32 %v755, %v1113
      %v1252 = vadd.f32 %v760, %v1118
      %v1253 = vadd.f32 %v765, %v1123
      %v1254 = vadd.f32 %v770, %v1128
      %v1255 = vadd.f32 %v775, %v1133
      %v1256 = vadd.f32 %v780, %v1138
      %v1257 = vadd.f32 %v785, %v1143
      %v1258 = vadd.f32 %v790, %v1148
      %v1259 = vadd.f32 %v795, %v1153
      %v1260 = vadd.f32 %v800, %v1158
      %v1261 = vadd.f32 %v805, %v1163
      %v1262 = vadd.f32 %v810, %v1168
      %v1263 = vadd.f32 %v815, %v1173
      %v1264 = vadd.f32 %v820, %v1178
      %v1265 = vadd.f32 %v825, %v1183
      %v1266 = vadd.f32 %v830, %v1188
      %v1267 = vadd.f32 %v835, %v1193
      %v1268 = vadd.f32 %v840, %v1198
      %v1269 = vadd.f32 %v845, %v1203
      %v1270 = vadd.f32 %v850, %v1208
      %v1271 = vadd.f32 %v855, %v1213
      %v1272 = vadd.f32 %v860, %v1218
      %v1273 = vadd.f32 %v865, %v1223
      %v1274 = vadd.f32 %v870, %v1228
      %v1275 = vadd.f32 %v875, %v1233
      %v1276 = vadd.f32 %v880, %v1238
      %v1277 = vadd.f32 %v885, %v1243
      %s1278 = scalar_lea.vmem %s165, 24
      %v1279 = vld [vmem:[%s1278] sm:$0xff]
      %v1280 = vld [vmem:[%s1278 + $0x8] sm:$0xff]
      %v1281 = vld [vmem:[%s1278 + $0x18] sm:$0xff]
      %v1282 = vld [vmem:[%s1278 + $0x20] sm:$0xff]
      %v1283 = vld [vmem:[%s1278 + $0x30] sm:$0xff]
      %v1284 = vld [vmem:[%s1278 + $0x38] sm:$0xff]
      %v1285 = vld [vmem:[%s1278 + $0x48] sm:$0xff]
      %v1286 = vld [vmem:[%s1278 + $0x50] sm:$0xff]
      %v1287 = vld [vmem:[%s1278 + $0x60] sm:$0xff]
      %v1288 = vld [vmem:[%s1278 + $0x68] sm:$0xff]
      %v1289 = vld [vmem:[%s1278 + $0x78] sm:$0xff]
      %v1290 = vld [vmem:[%s1278 + $0x80] sm:$0xff]
      %v1291 = vld [vmem:[%s1278 + $0x90] sm:$0xff]
      %v1292 = vld [vmem:[%s1278 + $0x98] sm:$0xff]
      %v1293 = vld [vmem:[%s1278 + $0xa8] sm:$0xff]
      %v1294 = vld [vmem:[%s1278 + $0xb0] sm:$0xff]
      %v1295 = vld [vmem:[%s1278 + $0xc0] sm:$0xff]
      %v1296 = vld [vmem:[%s1278 + $0xc8] sm:$0xff]
      %v1297 = vld [vmem:[%s1278 + $0xd8] sm:$0xff]
      %v1298 = vld [vmem:[%s1278 + $0xe0] sm:$0xff]
      %v1299 = vld [vmem:[%s1278 + $0xf0] sm:$0xff]
      %v1300 = vld [vmem:[%s1278 + $0xf8] sm:$0xff]
      %v1301 = vld [vmem:[%s1278 + $0x108] sm:$0xff]
      %v1302 = vld [vmem:[%s1278 + $0x110] sm:$0xff]
      %v1303 = vld [vmem:[%s1278 + $0x120] sm:$0xff]
      %v1304 = vld [vmem:[%s1278 + $0x128] sm:$0xff]
      %v1305 = vld [vmem:[%s1278 + $0x138] sm:$0xff]
      %v1306 = vld [vmem:[%s1278 + $0x140] sm:$0xff]
      %v1307 = vld [vmem:[%s1278 + $0x150] sm:$0xff]
      %v1308 = vld [vmem:[%s1278 + $0x158] sm:$0xff]
      %v1309 = vld [vmem:[%s1278 + $0x168] sm:$0xff]
      %v1310 = vld [vmem:[%s1278 + $0x170] sm:$0xff]
      %s1311 = scalar_lea.vmem %s1, 12
      %v1312 = vld [vmem:[%s1311] sm:$0xf]
      %v1314 = vsel %vm238, %v1279, 0
      %v1317 = vsel %vm238, %v1280, 0
      %v1320 = vsel %vm238, %v1281, 0
      %v1323 = vsel %vm238, %v1282, 0
      %v1326 = vsel %vm238, %v1283, 0
      %v1329 = vsel %vm238, %v1284, 0
      %v1332 = vsel %vm238, %v1285, 0
      %v1335 = vsel %vm238, %v1286, 0
      %v1338 = vsel %vm238, %v1287, 0
      %v1341 = vsel %vm238, %v1288, 0
      %v1344 = vsel %vm238, %v1289, 0
      %v1347 = vsel %vm238, %v1290, 0
      %v1350 = vsel %vm238, %v1291, 0
      %v1353 = vsel %vm238, %v1292, 0
      %v1356 = vsel %vm238, %v1293, 0
      %v1359 = vsel %vm238, %v1294, 0
      %v1362 = vsel %vm238, %v1295, 0
      %v1365 = vsel %vm238, %v1296, 0
      %v1368 = vsel %vm238, %v1297, 0
      %v1371 = vsel %vm238, %v1298, 0
      %v1374 = vsel %vm238, %v1299, 0
      %v1377 = vsel %vm238, %v1300, 0
      %v1380 = vsel %vm238, %v1301, 0
      %v1383 = vsel %vm238, %v1302, 0
      %v1386 = vsel %vm238, %v1303, 0
      %v1389 = vsel %vm238, %v1304, 0
      %v1392 = vsel %vm238, %v1305, 0
      %v1395 = vsel %vm238, %v1306, 0
      %v1398 = vsel %vm238, %v1307, 0
      %v1401 = vsel %vm238, %v1308, 0
      %v1404 = vsel %vm238, %v1309, 0
      %v1407 = vsel %vm238, %v1310, 0
      %v1410 = vsel %vm335, %v1312, 0
      %1412 = vmatprep.subr.mxu0 0.0
      %1413 = vmatpush1.msra.mxu0 %v1410
      %1414 = vmatprep.subr.mxu0 0.0
      %1415 = vmatpush1.msra.mxu0 0.0
      %1416 = vmatprep.subr.mxu0 0.0
      %1417 = vmatpush1.msra.mxu0 0.0
      %1418 = vmatprep.subr.mxu0 0.0
      %1419 = vmatpush1.msra.mxu0 0.0
      %1420 = vmatprep.subr.mxu0 0.0
      %1421 = vmatpush1.msra.mxu0 0.0
      %1422 = vmatprep.subr.mxu0 0.0
      %1423 = vmatpush1.msra.mxu0 0.0
      %1424 = vmatprep.subr.mxu0 0.0
      %1425 = vmatpush1.msra.mxu0 0.0
      %1426 = vmatprep.subr.mxu0 0.0
      %1427 = vmatpush1.msra.mxu0 0.0
      %1428 = vmatprep.subr.mxu0 0.0
      %1429 = vmatpush1.msra.mxu0 0.0
      %1430 = vmatprep.subr.mxu0 0.0
      %1431 = vmatpush1.msra.mxu0 0.0
      %1432 = vmatprep.subr.mxu0 0.0
      %1433 = vmatpush1.msra.mxu0 0.0
      %1434 = vmatprep.subr.mxu0 0.0
      %1435 = vmatpush1.msra.mxu0 0.0
      %1436 = vmatprep.subr.mxu0 0.0
      %1437 = vmatpush1.msra.mxu0 0.0
      %1438 = vmatprep.subr.mxu0 0.0
      %1439 = vmatpush1.msra.mxu0 0.0
      %1440 = vmatprep.subr.mxu0 0.0
      %1441 = vmatpush1.msra.mxu0 0.0
      %1442 = vmatprep.subr.mxu0 0.0
      %1443 = vmatpush1.msra.mxu0 0.0
      %1444 = vmatprep.subr.mxu0 0.0
      %1445 = vmatpush1.msra.mxu0 0.0
      %1446 = vmatprep.subr.mxu0 0.0
      %1447 = vmatpush1.msra.mxu0 0.0
      %1448 = vmatprep.subr.mxu0 0.0
      %1449 = vmatpush1.msra.mxu0 0.0
      %1450 = vmatprep.subr.mxu0 0.0
      %1451 = vmatpush1.msra.mxu0 0.0
      %1452 = vmatprep.subr.mxu0 0.0
      %1453 = vmatpush1.msra.mxu0 0.0
      %1454 = vmatprep.subr.mxu0 0.0
      %1455 = vmatpush1.msra.mxu0 0.0
      %1456 = vmatprep.subr.mxu0 0.0
      %1457 = vmatpush1.msra.mxu0 0.0
      %1458 = vmatprep.subr.mxu0 0.0
      %1459 = vmatpush1.msra.mxu0 0.0
      %1460 = vmatprep.subr.mxu0 0.0
      %1461 = vmatpush1.msra.mxu0 0.0
      %1462 = vmatprep.subr.mxu0 0.0
      %1463 = vmatpush1.msra.mxu0 0.0
      %1464 = vmatprep.subr.mxu0 0.0
      %1465 = vmatpush1.msra.mxu0 0.0
      %1466 = vmatprep.subr.mxu0 0.0
      %1467 = vmatpush1.msra.mxu0 0.0
      %1468 = vmatprep.subr.mxu0 0.0
      %1469 = vmatpush1.msra.mxu0 0.0
      %1470 = vmatprep.subr.mxu0 0.0
      %1471 = vmatpush1.msra.mxu0 0.0
      %1472 = vmatprep.subr.mxu0 0.0
      %1473 = vmatpush1.msra.mxu0 0.0
      %1474 = vmatprep.subr.mxu0 0.0
      %1475 = vmatpush1.msra.mxu0 0.0
      %1476 = vmatprep.mubr.f32.mxu0 0.0
      %1477 = vmatmul.mubr.f32.gmra.mrb[0].mxu0 %v1314
      %v1478 = vpop.f32.mrb[0].mxu0
      %v1479 = vadd.f32 0.0, %v1478
      %v1480 = vpop.f32.mrb[0].mxu0
      %1481 = vmatprep.mubr.f32.mxu0 0.0
      %1482 = vmatmul.mubr.f32.gmra.mrb[0].mxu0 %v1317
      %v1483 = vpop.f32.mrb[0].mxu0
      %v1484 = vadd.f32 0.0, %v1483
      %v1485 = vpop.f32.mrb[0].mxu0
      %1486 = vmatprep.mubr.f32.mxu0 0.0
      %1487 = vmatmul.mubr.f32.gmra.mrb[0].mxu0 %v1320
      %v1488 = vpop.f32.mrb[0].mxu0
      %v1489 = vadd.f32 0.0, %v1488
      %v1490 = vpop.f32.mrb[0].mxu0
      %1491 = vmatprep.mubr.f32.mxu0 0.0
      %1492 = vmatmul.mubr.f32.gmra.mrb[0].mxu0 %v1323
      %v1493 = vpop.f32.mrb[0].mxu0
      %v1494 = vadd.f32 0.0, %v1493
      %v1495 = vpop.f32.mrb[0].mxu0
      %1496 = vmatprep.mubr.f32.mxu0 0.0
      %1497 = vmatmul.mubr.f32.gmra.mrb[0].mxu0 %v1326
      %v1498 = vpop.f32.mrb[0].mxu0
      %v1499 = vadd.f32 0.0, %v1498
      %v1500 = vpop.f32.mrb[0].mxu0
      %1501 = vmatprep.mubr.f32.mxu0 0.0
      %1502 = vmatmul.mubr.f32.gmra.mrb[0].mxu0 %v1329
      %v1503 = vpop.f32.mrb[0].mxu0
      %v1504 = vadd.f32 0.0, %v1503
      %v1505 = vpop.f32.mrb[0].mxu0
      %1506 = vmatprep.mubr.f32.mxu0 0.0
      %1507 = vmatmul.mubr.f32.gmra.mrb[0].mxu0 %v1332
      %v1508 = vpop.f32.mrb[0].mxu0
      %v1509 = vadd.f32 0.0, %v1508
      %v1510 = vpop.f32.mrb[0].mxu0
      %1511 = vmatprep.mubr.f32.mxu0 0.0
      %1512 = vmatmul.mubr.f32.gmra.mrb[0].mxu0 %v1335
      %v1513 = vpop.f32.mrb[0].mxu0
      %v1514 = vadd.f32 0.0, %v1513
      %v1515 = vpop.f32.mrb[0].mxu0
      %1516 = vmatprep.mubr.f32.mxu0 0.0
      %1517 = vmatmul.mubr.f32.gmra.mrb[0].mxu0 %v1338
      %v1518 = vpop.f32.mrb[0].mxu0
      %v1519 = vadd.f32 0.0, %v1518
      %v1520 = vpop.f32.mrb[0].mxu0
      %1521 = vmatprep.mubr.f32.mxu0 0.0
      %1522 = vmatmul.mubr.f32.gmra.mrb[0].mxu0 %v1341
      %v1523 = vpop.f32.mrb[0].mxu0
      %v1524 = vadd.f32 0.0, %v1523
      %v1525 = vpop.f32.mrb[0].mxu0
      %1526 = vmatprep.mubr.f32.mxu0 0.0
      %1527 = vmatmul.mubr.f32.gmra.mrb[0].mxu0 %v1344
      %v1528 = vpop.f32.mrb[0].mxu0
      %v1529 = vadd.f32 0.0, %v1528
      %v1530 = vpop.f32.mrb[0].mxu0
      %1531 = vmatprep.mubr.f32.mxu0 0.0
      %1532 = vmatmul.mubr.f32.gmra.mrb[0].mxu0 %v1347
      %v1533 = vpop.f32.mrb[0].mxu0
      %v1534 = vadd.f32 0.0, %v1533
      %v1535 = vpop.f32.mrb[0].mxu0
      %1536 = vmatprep.mubr.f32.mxu0 0.0
      %1537 = vmatmul.mubr.f32.gmra.mrb[0].mxu0 %v1350
      %v1538 = vpop.f32.mrb[0].mxu0
      %v1539 = vadd.f32 0.0, %v1538
      %v1540 = vpop.f32.mrb[0].mxu0
      %1541 = vmatprep.mubr.f32.mxu0 0.0
      %1542 = vmatmul.mubr.f32.gmra.mrb[0].mxu0 %v1353
      %v1543 = vpop.f32.mrb[0].mxu0
      %v1544 = vadd.f32 0.0, %v1543
      %v1545 = vpop.f32.mrb[0].mxu0
      %1546 = vmatprep.mubr.f32.mxu0 0.0
      %1547 = vmatmul.mubr.f32.gmra.mrb[0].mxu0 %v1356
      %v1548 = vpop.f32.mrb[0].mxu0
      %v1549 = vadd.f32 0.0, %v1548
      %v1550 = vpop.f32.mrb[0].mxu0
      %1551 = vmatprep.mubr.f32.mxu0 0.0
      %1552 = vmatmul.mubr.f32.gmra.mrb[0].mxu0 %v1359
      %v1553 = vpop.f32.mrb[0].mxu0
      %v1554 = vadd.f32 0.0, %v1553
      %v1555 = vpop.f32.mrb[0].mxu0
      %1556 = vmatprep.mubr.f32.mxu0 0.0
      %1557 = vmatmul.mubr.f32.gmra.mrb[0].mxu0 %v1362
      %v1558 = vpop.f32.mrb[0].mxu0
      %v1559 = vadd.f32 0.0, %v1558
      %v1560 = vpop.f32.mrb[0].mxu0
      %1561 = vmatprep.mubr.f32.mxu0 0.0
      %1562 = vmatmul.mubr.f32.gmra.mrb[0].mxu0 %v1365
      %v1563 = vpop.f32.mrb[0].mxu0
      %v1564 = vadd.f32 0.0, %v1563
      %v1565 = vpop.f32.mrb[0].mxu0
      %1566 = vmatprep.mubr.f32.mxu0 0.0
      %1567 = vmatmul.mubr.f32.gmra.mrb[0].mxu0 %v1368
      %v1568 = vpop.f32.mrb[0].mxu0
      %v1569 = vadd.f32 0.0, %v1568
      %v1570 = vpop.f32.mrb[0].mxu0
      %1571 = vmatprep.mubr.f32.mxu0 0.0
      %1572 = vmatmul.mubr.f32.gmra.mrb[0].mxu0 %v1371
      %v1573 = vpop.f32.mrb[0].mxu0
      %v1574 = vadd.f32 0.0, %v1573
      %v1575 = vpop.f32.mrb[0].mxu0
      %1576 = vmatprep.mubr.f32.mxu0 0.0
      %1577 = vmatmul.mubr.f32.gmra.mrb[0].mxu0 %v1374
      %v1578 = vpop.f32.mrb[0].mxu0
      %v1579 = vadd.f32 0.0, %v1578
      %v1580 = vpop.f32.mrb[0].mxu0
      %1581 = vmatprep.mubr.f32.mxu0 0.0
      %1582 = vmatmul.mubr.f32.gmra.mrb[0].mxu0 %v1377
      %v1583 = vpop.f32.mrb[0].mxu0
      %v1584 = vadd.f32 0.0, %v1583
      %v1585 = vpop.f32.mrb[0].mxu0
      %1586 = vmatprep.mubr.f32.mxu0 0.0
      %1587 = vmatmul.mubr.f32.gmra.mrb[0].mxu0 %v1380
      %v1588 = vpop.f32.mrb[0].mxu0
      %v1589 = vadd.f32 0.0, %v1588
      %v1590 = vpop.f32.mrb[0].mxu0
      %1591 = vmatprep.mubr.f32.mxu0 0.0
      %1592 = vmatmul.mubr.f32.gmra.mrb[0].mxu0 %v1383
      %v1593 = vpop.f32.mrb[0].mxu0
      %v1594 = vadd.f32 0.0, %v1593
      %v1595 = vpop.f32.mrb[0].mxu0
      %1596 = vmatprep.mubr.f32.mxu0 0.0
      %1597 = vmatmul.mubr.f32.gmra.mrb[0].mxu0 %v1386
      %v1598 = vpop.f32.mrb[0].mxu0
      %v1599 = vadd.f32 0.0, %v1598
      %v1600 = vpop.f32.mrb[0].mxu0
      %1601 = vmatprep.mubr.f32.mxu0 0.0
      %1602 = vmatmul.mubr.f32.gmra.mrb[0].mxu0 %v1389
      %v1603 = vpop.f32.mrb[0].mxu0
      %v1604 = vadd.f32 0.0, %v1603
      %v1605 = vpop.f32.mrb[0].mxu0
      %1606 = vmatprep.mubr.f32.mxu0 0.0
      %1607 = vmatmul.mubr.f32.gmra.mrb[0].mxu0 %v1392
      %v1608 = vpop.f32.mrb[0].mxu0
      %v1609 = vadd.f32 0.0, %v1608
      %v1610 = vpop.f32.mrb[0].mxu0
      %1611 = vmatprep.mubr.f32.mxu0 0.0
      %1612 = vmatmul.mubr.f32.gmra.mrb[0].mxu0 %v1395
      %v1613 = vpop.f32.mrb[0].mxu0
      %v1614 = vadd.f32 0.0, %v1613
      %v1615 = vpop.f32.mrb[0].mxu0
      %1616 = vmatprep.mubr.f32.mxu0 0.0
      %1617 = vmatmul.mubr.f32.gmra.mrb[0].mxu0 %v1398
      %v1618 = vpop.f32.mrb[0].mxu0
      %v1619 = vadd.f32 0.0, %v1618
      %v1620 = vpop.f32.mrb[0].mxu0
      %1621 = vmatprep.mubr.f32.mxu0 0.0
      %1622 = vmatmul.mubr.f32.gmra.mrb[0].mxu0 %v1401
      %v1623 = vpop.f32.mrb[0].mxu0
      %v1624 = vadd.f32 0.0, %v1623
      %v1625 = vpop.f32.mrb[0].mxu0
      %1626 = vmatprep.mubr.f32.mxu0 0.0
      %1627 = vmatmul.mubr.f32.gmra.mrb[0].mxu0 %v1404
      %v1628 = vpop.f32.mrb[0].mxu0
      %v1629 = vadd.f32 0.0, %v1628
      %v1630 = vpop.f32.mrb[0].mxu0
      %1631 = vmatprep.mubr.f32.mxu0 0.0
      %1632 = vmatmul.mubr.f32.gmra.mrb[0].mxu0 %v1407
      %v1633 = vpop.f32.mrb[0].mxu0
      %v1634 = vadd.f32 0.0, %v1633
      %v1635 = vpop.f32.mrb[0].mxu0
      %1636 = vdwg.mxu0
      %v1637 = vadd.f32 %v1246, %v1479
      %v1638 = vadd.f32 %v1247, %v1484
      %v1639 = vadd.f32 %v1248, %v1489
      %v1640 = vadd.f32 %v1249, %v1494
      %v1641 = vadd.f32 %v1250, %v1499
      %v1642 = vadd.f32 %v1251, %v1504
      %v1643 = vadd.f32 %v1252, %v1509
      %v1644 = vadd.f32 %v1253, %v1514
      %v1645 = vadd.f32 %v1254, %v1519
      %v1646 = vadd.f32 %v1255, %v1524
      %v1647 = vadd.f32 %v1256, %v1529
      %v1648 = vadd.f32 %v1257, %v1534
      %v1649 = vadd.f32 %v1258, %v1539
      %v1650 = vadd.f32 %v1259, %v1544
      %v1651 = vadd.f32 %v1260, %v1549
      %v1652 = vadd.f32 %v1261, %v1554
      %v1653 = vadd.f32 %v1262, %v1559
      %v1654 = vadd.f32 %v1263, %v1564
      %v1655 = vadd.f32 %v1264, %v1569
      %v1656 = vadd.f32 %v1265, %v1574
      %v1657 = vadd.f32 %v1266, %v1579
      %v1658 = vadd.f32 %v1267, %v1584
      %v1659 = vadd.f32 %v1268, %v1589
      %v1660 = vadd.f32 %v1269, %v1594
      %v1661 = vadd.f32 %v1270, %v1599
      %v1662 = vadd.f32 %v1271, %v1604
      %v1663 = vadd.f32 %v1272, %v1609
      %v1664 = vadd.f32 %v1273, %v1614
      %v1665 = vadd.f32 %v1274, %v1619
      %v1666 = vadd.f32 %v1275, %v1624
      %v1667 = vadd.f32 %v1276, %v1629
      %v1668 = vadd.f32 %v1277, %v1634
      %v1669 = vld [vmem:[%s1278 + $0x1] sm:$0xff]
      %v1670 = vld [vmem:[%s1278 + $0x9] sm:$0xff]
      %v1671 = vld [vmem:[%s1278 + $0x19] sm:$0xff]
      %v1672 = vld [vmem:[%s1278 + $0x21] sm:$0xff]
      %v1673 = vld [vmem:[%s1278 + $0x31] sm:$0xff]
      %v1674 = vld [vmem:[%s1278 + $0x39] sm:$0xff]
      %v1675 = vld [vmem:[%s1278 + $0x49] sm:$0xff]
      %v1676 = vld [vmem:[%s1278 + $0x51] sm:$0xff]
      %v1677 = vld [vmem:[%s1278 + $0x61] sm:$0xff]
      %v1678 = vld [vmem:[%s1278 + $0x69] sm:$0xff]
      %v1679 = vld [vmem:[%s1278 + $0x79] sm:$0xff]
      %v1680 = vld [vmem:[%s1278 + $0x81] sm:$0xff]
      %v1681 = vld [vmem:[%s1278 + $0x91] sm:$0xff]
      %v1682 = vld [vmem:[%s1278 + $0x99] sm:$0xff]
      %v1683 = vld [vmem:[%s1278 + $0xa9] sm:$0xff]
      %v1684 = vld [vmem:[%s1278 + $0xb1] sm:$0xff]
      %v1685 = vld [vmem:[%s1278 + $0xc1] sm:$0xff]
      %v1686 = vld [vmem:[%s1278 + $0xc9] sm:$0xff]
      %v1687 = vld [vmem:[%s1278 + $0xd9] sm:$0xff]
      %v1688 = vld [vmem:[%s1278 + $0xe1] sm:$0xff]
      %v1689 = vld [vmem:[%s1278 + $0xf1] sm:$0xff]
      %v1690 = vld [vmem:[%s1278 + $0xf9] sm:$0xff]
      %v1691 = vld [vmem:[%s1278 + $0x109] sm:$0xff]
      %v1692 = vld [vmem:[%s1278 + $0x111] sm:$0xff]
      %v1693 = vld [vmem:[%s1278 + $0x121] sm:$0xff]
      %v1694 = vld [vmem:[%s1278 + $0x129] sm:$0xff]
      %v1695 = vld [vmem:[%s1278 + $0x139] sm:$0xff]
      %v1696 = vld [vmem:[%s1278 + $0x141] sm:$0xff]
      %v1697 = vld [vmem:[%s1278 + $0x151] sm:$0xff]
      %v1698 = vld [vmem:[%s1278 + $0x159] sm:$0xff]
      %v1699 = vld [vmem:[%s1278 + $0x169] sm:$0xff]
      %v1700 = vld [vmem:[%s1278 + $0x171] sm:$0xff]
      %s1701 = scalar_lea.vmem %s1, 16
      %v1702 = vld [vmem:[%s1701] sm:$0xf]
      %v1704 = vsel %vm238, %v1669, 0
      %v1707 = vsel %vm238, %v1670, 0
      %v1710 = vsel %vm238, %v1671, 0
      %v1713 = vsel %vm238, %v1672, 0
      %v1716 = vsel %vm238, %v1673, 0
      %v1719 = vsel %vm238, %v1674, 0
      %v1722 = vsel %vm238, %v1675, 0
      %v1725 = vsel %vm238, %v1676, 0
      %v1728 = vsel %vm238, %v1677, 0
      %v1731 = vsel %vm238, %v1678, 0
      %v1734 = vsel %vm238, %v1679, 0
      %v1737 = vsel %vm238, %v1680, 0
      %v1740 = vsel %vm238, %v1681, 0
      %v1743 = vsel %vm238, %v1682, 0
      %v1746 = vsel %vm238, %v1683, 0
      %v1749 = vsel %vm238, %v1684, 0
      %v1752 = vsel %vm238, %v1685, 0
      %v1755 = vsel %vm238, %v1686, 0
      %v1758 = vsel %vm238, %v1687, 0
      %v1761 = vsel %vm238, %v1688, 0
      %v1764 = vsel %vm238, %v1689, 0
      %v1767 = vsel %vm238, %v1690, 0
      %v1770 = vsel %vm238, %v1691, 0
      %v1773 = vsel %vm238, %v1692, 0
      %v1776 = vsel %vm238, %v1693, 0
      %v1779 = vsel %vm238, %v1694, 0
      %v1782 = vsel %vm238, %v1695, 0
      %v1785 = vsel %vm238, %v1696, 0
      %v1788 = vsel %vm238, %v1697, 0
      %v1791 = vsel %vm238, %v1698, 0
      %v1794 = vsel %vm238, %v1699, 0
      %v1797 = vsel %vm238, %v1700, 0
      %v1800 = vsel %vm335, %v1702, 0
      %1802 = vmatprep.subr.mxu0 0.0
      %1803 = vmatpush1.msra.mxu0 %v1800
      %1804 = vmatprep.subr.mxu0 0.0
      %1805 = vmatpush1.msra.mxu0 0.0
      %1806 = vmatprep.subr.mxu0 0.0
      %1807 = vmatpush1.msra.mxu0 0.0
      %1808 = vmatprep.subr.mxu0 0.0
      %1809 = vmatpush1.msra.mxu0 0.0
      %1810 = vmatprep.subr.mxu0 0.0
      %1811 = vmatpush1.msra.mxu0 0.0
      %1812 = vmatprep.subr.mxu0 0.0
      %1813 = vmatpush1.msra.mxu0 0.0
      %1814 = vmatprep.subr.mxu0 0.0
      %1815 = vmatpush1.msra.mxu0 0.0
      %1816 = vmatprep.subr.mxu0 0.0
      %1817 = vmatpush1.msra.mxu0 0.0
      %1818 = vmatprep.subr.mxu0 0.0
      %1819 = vmatpush1.msra.mxu0 0.0
      %1820 = vmatprep.subr.mxu0 0.0
      %1821 = vmatpush1.msra.mxu0 0.0
      %1822 = vmatprep.subr.mxu0 0.0
      %1823 = vmatpush1.msra.mxu0 0.0
      %1824 = vmatprep.subr.mxu0 0.0
      %1825 = vmatpush1.msra.mxu0 0.0
      %1826 = vmatprep.subr.mxu0 0.0
      %1827 = vmatpush1.msra.mxu0 0.0
      %1828 = vmatprep.subr.mxu0 0.0
      %1829 = vmatpush1.msra.mxu0 0.0
      %1830 = vmatprep.subr.mxu0 0.0
      %1831 = vmatpush1.msra.mxu0 0.0
      %1832 = vmatprep.subr.mxu0 0.0
      %1833 = vmatpush1.msra.mxu0 0.0
      %1834 = vmatprep.subr.mxu0 0.0
      %1835 = vmatpush1.msra.mxu0 0.0
      %1836 = vmatprep.subr.mxu0 0.0
      %1837 = vmatpush1.msra.mxu0 0.0
      %1838 = vmatprep.subr.mxu0 0.0
      %1839 = vmatpush1.msra.mxu0 0.0
      %1840 = vmatprep.subr.mxu0 0.0
      %1841 = vmatpush1.msra.mxu0 0.0
      %1842 = vmatprep.subr.mxu0 0.0
      %1843 = vmatpush1.msra.mxu0 0.0
      %1844 = vmatprep.subr.mxu0 0.0
      %1845 = vmatpush1.msra.mxu0 0.0
      %1846 = vmatprep.subr.mxu0 0.0
      %1847 = vmatpush1.msra.mxu0 0.0
      %1848 = vmatprep.subr.mxu0 0.0
      %1849 = vmatpush1.msra.mxu0 0.0
      %1850 = vmatprep.subr.mxu0 0.0
      %1851 = vmatpush1.msra.mxu0 0.0
      %1852 = vmatprep.subr.mxu0 0.0
      %1853 = vmatpush1.msra.mxu0 0.0
      %1854 = vmatprep.subr.mxu0 0.0
      %1855 = vmatpush1.msra.mxu0 0.0
      %1856 = vmatprep.subr.mxu0 0.0
      %1857 = vmatpush1.msra.mxu0 0.0
      %1858 = vmatprep.subr.mxu0 0.0
      %1859 = vmatpush1.msra.mxu0 0.0
      %1860 = vmatprep.subr.mxu0 0.0
      %1861 = vmatpush1.msra.mxu0 0.0
      %1862 = vmatprep.subr.mxu0 0.0
      %1863 = vmatpush1.msra.mxu0 0.0
      %1864 = vmatprep.subr.mxu0 0.0
      %1865 = vmatpush1.msra.mxu0 0.0
      %1866 = vmatprep.mubr.f32.mxu0 0.0
      %1867 = vmatmul.mubr.f32.gmra.mrb[0].mxu0 %v1704
      %v1868 = vpop.f32.mrb[0].mxu0
      %v1869 = vadd.f32 0.0, %v1868
      %v1870 = vpop.f32.mrb[0].mxu0
      %1871 = vmatprep.mubr.f32.mxu0 0.0
      %1872 = vmatmul.mubr.f32.gmra.mrb[0].mxu0 %v1707
      %v1873 = vpop.f32.mrb[0].mxu0
      %v1874 = vadd.f32 0.0, %v1873
      %v1875 = vpop.f32.mrb[0].mxu0
      %1876 = vmatprep.mubr.f32.mxu0 0.0
      %1877 = vmatmul.mubr.f32.gmra.mrb[0].mxu0 %v1710
      %v1878 = vpop.f32.mrb[0].mxu0
      %v1879 = vadd.f32 0.0, %v1878
      %v1880 = vpop.f32.mrb[0].mxu0
      %1881 = vmatprep.mubr.f32.mxu0 0.0
      %1882 = vmatmul.mubr.f32.gmra.mrb[0].mxu0 %v1713
      %v1883 = vpop.f32.mrb[0].mxu0
      %v1884 = vadd.f32 0.0, %v1883
      %v1885 = vpop.f32.mrb[0].mxu0
      %1886 = vmatprep.mubr.f32.mxu0 0.0
      %1887 = vmatmul.mubr.f32.gmra.mrb[0].mxu0 %v1716
      %v1888 = vpop.f32.mrb[0].mxu0
      %v1889 = vadd.f32 0.0, %v1888
      %v1890 = vpop.f32.mrb[0].mxu0
      %1891 = vmatprep.mubr.f32.mxu0 0.0
      %1892 = vmatmul.mubr.f32.gmra.mrb[0].mxu0 %v1719
      %v1893 = vpop.f32.mrb[0].mxu0
      %v1894 = vadd.f32 0.0, %v1893
      %v1895 = vpop.f32.mrb[0].mxu0
      %1896 = vmatprep.mubr.f32.mxu0 0.0
      %1897 = vmatmul.mubr.f32.gmra.mrb[0].mxu0 %v1722
      %v1898 = vpop.f32.mrb[0].mxu0
      %v1899 = vadd.f32 0.0, %v1898
      %v1900 = vpop.f32.mrb[0].mxu0
      %1901 = vmatprep.mubr.f32.mxu0 0.0
      %1902 = vmatmul.mubr.f32.gmra.mrb[0].mxu0 %v1725
      %v1903 = vpop.f32.mrb[0].mxu0
      %v1904 = vadd.f32 0.0, %v1903
      %v1905 = vpop.f32.mrb[0].mxu0
      %1906 = vmatprep.mubr.f32.mxu0 0.0
      %1907 = vmatmul.mubr.f32.gmra.mrb[0].mxu0 %v1728
      %v1908 = vpop.f32.mrb[0].mxu0
      %v1909 = vadd.f32 0.0, %v1908
      %v1910 = vpop.f32.mrb[0].mxu0
      %1911 = vmatprep.mubr.f32.mxu0 0.0
      %1912 = vmatmul.mubr.f32.gmra.mrb[0].mxu0 %v1731
      %v1913 = vpop.f32.mrb[0].mxu0
      %v1914 = vadd.f32 0.0, %v1913
      %v1915 = vpop.f32.mrb[0].mxu0
      %1916 = vmatprep.mubr.f32.mxu0 0.0
      %1917 = vmatmul.mubr.f32.gmra.mrb[0].mxu0 %v1734
      %v1918 = vpop.f32.mrb[0].mxu0
      %v1919 = vadd.f32 0.0, %v1918
      %v1920 = vpop.f32.mrb[0].mxu0
      %1921 = vmatprep.mubr.f32.mxu0 0.0
      %1922 = vmatmul.mubr.f32.gmra.mrb[0].mxu0 %v1737
      %v1923 = vpop.f32.mrb[0].mxu0
      %v1924 = vadd.f32 0.0, %v1923
      %v1925 = vpop.f32.mrb[0].mxu0
      %1926 = vmatprep.mubr.f32.mxu0 0.0
      %1927 = vmatmul.mubr.f32.gmra.mrb[0].mxu0 %v1740
      %v1928 = vpop.f32.mrb[0].mxu0
      %v1929 = vadd.f32 0.0, %v1928
      %v1930 = vpop.f32.mrb[0].mxu0
      %1931 = vmatprep.mubr.f32.mxu0 0.0
      %1932 = vmatmul.mubr.f32.gmra.mrb[0].mxu0 %v1743
      %v1933 = vpop.f32.mrb[0].mxu0
      %v1934 = vadd.f32 0.0, %v1933
      %v1935 = vpop.f32.mrb[0].mxu0
      %1936 = vmatprep.mubr.f32.mxu0 0.0
      %1937 = vmatmul.mubr.f32.gmra.mrb[0].mxu0 %v1746
      %v1938 = vpop.f32.mrb[0].mxu0
      %v1939 = vadd.f32 0.0, %v1938
      %v1940 = vpop.f32.mrb[0].mxu0
      %1941 = vmatprep.mubr.f32.mxu0 0.0
      %1942 = vmatmul.mubr.f32.gmra.mrb[0].mxu0 %v1749
      %v1943 = vpop.f32.mrb[0].mxu0
      %v1944 = vadd.f32 0.0, %v1943
      %v1945 = vpop.f32.mrb[0].mxu0
      %1946 = vmatprep.mubr.f32.mxu0 0.0
      %1947 = vmatmul.mubr.f32.gmra.mrb[0].mxu0 %v1752
      %v1948 = vpop.f32.mrb[0].mxu0
      %v1949 = vadd.f32 0.0, %v1948
      %v1950 = vpop.f32.mrb[0].mxu0
      %1951 = vmatprep.mubr.f32.mxu0 0.0
      %1952 = vmatmul.mubr.f32.gmra.mrb[0].mxu0 %v1755
      %v1953 = vpop.f32.mrb[0].mxu0
      %v1954 = vadd.f32 0.0, %v1953
      %v1955 = vpop.f32.mrb[0].mxu0
      %1956 = vmatprep.mubr.f32.mxu0 0.0
      %1957 = vmatmul.mubr.f32.gmra.mrb[0].mxu0 %v1758
      %v1958 = vpop.f32.mrb[0].mxu0
      %v1959 = vadd.f32 0.0, %v1958
      %v1960 = vpop.f32.mrb[0].mxu0
      %1961 = vmatprep.mubr.f32.mxu0 0.0
      %1962 = vmatmul.mubr.f32.gmra.mrb[0].mxu0 %v1761
      %v1963 = vpop.f32.mrb[0].mxu0
      %v1964 = vadd.f32 0.0, %v1963
      %v1965 = vpop.f32.mrb[0].mxu0
      %1966 = vmatprep.mubr.f32.mxu0 0.0
      %1967 = vmatmul.mubr.f32.gmra.mrb[0].mxu0 %v1764
      %v1968 = vpop.f32.mrb[0].mxu0
      %v1969 = vadd.f32 0.0, %v1968
      %v1970 = vpop.f32.mrb[0].mxu0
      %1971 = vmatprep.mubr.f32.mxu0 0.0
      %1972 = vmatmul.mubr.f32.gmra.mrb[0].mxu0 %v1767
      %v1973 = vpop.f32.mrb[0].mxu0
      %v1974 = vadd.f32 0.0, %v1973
      %v1975 = vpop.f32.mrb[0].mxu0
      %1976 = vmatprep.mubr.f32.mxu0 0.0
      %1977 = vmatmul.mubr.f32.gmra.mrb[0].mxu0 %v1770
      %v1978 = vpop.f32.mrb[0].mxu0
      %v1979 = vadd.f32 0.0, %v1978
      %v1980 = vpop.f32.mrb[0].mxu0
      %1981 = vmatprep.mubr.f32.mxu0 0.0
      %1982 = vmatmul.mubr.f32.gmra.mrb[0].mxu0 %v1773
      %v1983 = vpop.f32.mrb[0].mxu0
      %v1984 = vadd.f32 0.0, %v1983
      %v1985 = vpop.f32.mrb[0].mxu0
      %1986 = vmatprep.mubr.f32.mxu0 0.0
      %1987 = vmatmul.mubr.f32.gmra.mrb[0].mxu0 %v1776
      %v1988 = vpop.f32.mrb[0].mxu0
      %v1989 = vadd.f32 0.0, %v1988
      %v1990 = vpop.f32.mrb[0].mxu0
      %1991 = vmatprep.mubr.f32.mxu0 0.0
      %1992 = vmatmul.mubr.f32.gmra.mrb[0].mxu0 %v1779
      %v1993 = vpop.f32.mrb[0].mxu0
      %v1994 = vadd.f32 0.0, %v1993
      %v1995 = vpop.f32.mrb[0].mxu0
      %1996 = vmatprep.mubr.f32.mxu0 0.0
      %1997 = vmatmul.mubr.f32.gmra.mrb[0].mxu0 %v1782
      %v1998 = vpop.f32.mrb[0].mxu0
      %v1999 = vadd.f32 0.0, %v1998
      %v2000 = vpop.f32.mrb[0].mxu0
      %2001 = vmatprep.mubr.f32.mxu0 0.0
      %2002 = vmatmul.mubr.f32.gmra.mrb[0].mxu0 %v1785
      %v2003 = vpop.f32.mrb[0].mxu0
      %v2004 = vadd.f32 0.0, %v2003
      %v2005 = vpop.f32.mrb[0].mxu0
      %2006 = vmatprep.mubr.f32.mxu0 0.0
      %2007 = vmatmul.mubr.f32.gmra.mrb[0].mxu0 %v1788
      %v2008 = vpop.f32.mrb[0].mxu0
      %v2009 = vadd.f32 0.0, %v2008
      %v2010 = vpop.f32.mrb[0].mxu0
      %2011 = vmatprep.mubr.f32.mxu0 0.0
      %2012 = vmatmul.mubr.f32.gmra.mrb[0].mxu0 %v1791
      %v2013 = vpop.f32.mrb[0].mxu0
      %v2014 = vadd.f32 0.0, %v2013
      %v2015 = vpop.f32.mrb[0].mxu0
      %2016 = vmatprep.mubr.f32.mxu0 0.0
      %2017 = vmatmul.mubr.f32.gmra.mrb[0].mxu0 %v1794
      %v2018 = vpop.f32.mrb[0].mxu0
      %v2019 = vadd.f32 0.0, %v2018
      %v2020 = vpop.f32.mrb[0].mxu0
      %2021 = vmatprep.mubr.f32.mxu0 0.0
      %2022 = vmatmul.mubr.f32.gmra.mrb[0].mxu0 %v1797
      %v2023 = vpop.f32.mrb[0].mxu0
      %v2024 = vadd.f32 0.0, %v2023
      %v2025 = vpop.f32.mrb[0].mxu0
      %2026 = vdwg.mxu0
      %v2027 = vadd.f32 %v1637, %v1869
      %v2028 = vadd.f32 %v1638, %v1874
      %v2029 = vadd.f32 %v1639, %v1879
      %v2030 = vadd.f32 %v1640, %v1884
      %v2031 = vadd.f32 %v1641, %v1889
      %v2032 = vadd.f32 %v1642, %v1894
      %v2033 = vadd.f32 %v1643, %v1899
      %v2034 = vadd.f32 %v1644, %v1904
      %v2035 = vadd.f32 %v1645, %v1909
      %v2036 = vadd.f32 %v1646, %v1914
      %v2037 = vadd.f32 %v1647, %v1919
      %v2038 = vadd.f32 %v1648, %v1924
      %v2039 = vadd.f32 %v1649, %v1929
      %v2040 = vadd.f32 %v1650, %v1934
      %v2041 = vadd.f32 %v1651, %v1939
      %v2042 = vadd.f32 %v1652, %v1944
      %v2043 = vadd.f32 %v1653, %v1949
      %v2044 = vadd.f32 %v1654, %v1954
      %v2045 = vadd.f32 %v1655, %v1959
      %v2046 = vadd.f32 %v1656, %v1964
      %v2047 = vadd.f32 %v1657, %v1969
      %v2048 = vadd.f32 %v1658, %v1974
      %v2049 = vadd.f32 %v1659, %v1979
      %v2050 = vadd.f32 %v1660, %v1984
      %v2051 = vadd.f32 %v1661, %v1989
      %v2052 = vadd.f32 %v1662, %v1994
      %v2053 = vadd.f32 %v1663, %v1999
      %v2054 = vadd.f32 %v1664, %v2004
      %v2055 = vadd.f32 %v1665, %v2009
      %v2056 = vadd.f32 %v1666, %v2014
      %v2057 = vadd.f32 %v1667, %v2019
      %v2058 = vadd.f32 %v1668, %v2024
      %v2059 = vld [vmem:[%s1278 + $0x2] sm:$0xff]
      %v2060 = vld [vmem:[%s1278 + $0xa] sm:$0xff]
      %v2061 = vld [vmem:[%s1278 + $0x1a] sm:$0xff]
      %v2062 = vld [vmem:[%s1278 + $0x22] sm:$0xff]
      %v2063 = vld [vmem:[%s1278 + $0x32] sm:$0xff]
      %v2064 = vld [vmem:[%s1278 + $0x3a] sm:$0xff]
      %v2065 = vld [vmem:[%s1278 + $0x4a] sm:$0xff]
      %v2066 = vld [vmem:[%s1278 + $0x52] sm:$0xff]
      %v2067 = vld [vmem:[%s1278 + $0x62] sm:$0xff]
      %v2068 = vld [vmem:[%s1278 + $0x6a] sm:$0xff]
      %v2069 = vld [vmem:[%s1278 + $0x7a] sm:$0xff]
      %v2070 = vld [vmem:[%s1278 + $0x82] sm:$0xff]
      %v2071 = vld [vmem:[%s1278 + $0x92] sm:$0xff]
      %v2072 = vld [vmem:[%s1278 + $0x9a] sm:$0xff]
      %v2073 = vld [vmem:[%s1278 + $0xaa] sm:$0xff]
      %v2074 = vld [vmem:[%s1278 + $0xb2] sm:$0xff]
      %v2075 = vld [vmem:[%s1278 + $0xc2] sm:$0xff]
      %v2076 = vld [vmem:[%s1278 + $0xca] sm:$0xff]
      %v2077 = vld [vmem:[%s1278 + $0xda] sm:$0xff]
      %v2078 = vld [vmem:[%s1278 + $0xe2] sm:$0xff]
      %v2079 = vld [vmem:[%s1278 + $0xf2] sm:$0xff]
      %v2080 = vld [vmem:[%s1278 + $0xfa] sm:$0xff]
      %v2081 = vld [vmem:[%s1278 + $0x10a] sm:$0xff]
      %v2082 = vld [vmem:[%s1278 + $0x112] sm:$0xff]
      %v2083 = vld [vmem:[%s1278 + $0x122] sm:$0xff]
      %v2084 = vld [vmem:[%s1278 + $0x12a] sm:$0xff]
      %v2085 = vld [vmem:[%s1278 + $0x13a] sm:$0xff]
      %v2086 = vld [vmem:[%s1278 + $0x142] sm:$0xff]
      %v2087 = vld [vmem:[%s1278 + $0x152] sm:$0xff]
      %v2088 = vld [vmem:[%s1278 + $0x15a] sm:$0xff]
      %v2089 = vld [vmem:[%s1278 + $0x16a] sm:$0xff]
      %v2090 = vld [vmem:[%s1278 + $0x172] sm:$0xff]
      %s2091 = scalar_lea.vmem %s1, 20
      %v2092 = vld [vmem:[%s2091] sm:$0xf]
      %v2094 = vsel %vm238, %v2059, 0
      %v2097 = vsel %vm238, %v2060, 0
      %v2100 = vsel %vm238, %v2061, 0
      %v2103 = vsel %vm238, %v2062, 0
      %v2106 = vsel %vm238, %v2063, 0
      %v2109 = vsel %vm238, %v2064, 0
      %v2112 = vsel %vm238, %v2065, 0
      %v2115 = vsel %vm238, %v2066, 0
      %v2118 = vsel %vm238, %v2067, 0
      %v2121 = vsel %vm238, %v2068, 0
      %v2124 = vsel %vm238, %v2069, 0
      %v2127 = vsel %vm238, %v2070, 0
      %v2130 = vsel %vm238, %v2071, 0
      %v2133 = vsel %vm238, %v2072, 0
      %v2136 = vsel %vm238, %v2073, 0
      %v2139 = vsel %vm238, %v2074, 0
      %v2142 = vsel %vm238, %v2075, 0
      %v2145 = vsel %vm238, %v2076, 0
      %v2148 = vsel %vm238, %v2077, 0
      %v2151 = vsel %vm238, %v2078, 0
      %v2154 = vsel %vm238, %v2079, 0
      %v2157 = vsel %vm238, %v2080, 0
      %v2160 = vsel %vm238, %v2081, 0
      %v2163 = vsel %vm238, %v2082, 0
      %v2166 = vsel %vm238, %v2083, 0
      %v2169 = vsel %vm238, %v2084, 0
      %v2172 = vsel %vm238, %v2085, 0
      %v2175 = vsel %vm238, %v2086, 0
      %v2178 = vsel %vm238, %v2087, 0
      %v2181 = vsel %vm238, %v2088, 0
      %v2184 = vsel %vm238, %v2089, 0
      %v2187 = vsel %vm238, %v2090, 0
      %v2190 = vsel %vm335, %v2092, 0
      %2192 = vmatprep.subr.mxu0 0.0
      %2193 = vmatpush1.msra.mxu0 %v2190
      %2194 = vmatprep.subr.mxu0 0.0
      %2195 = vmatpush1.msra.mxu0 0.0
      %2196 = vmatprep.subr.mxu0 0.0
      %2197 = vmatpush1.msra.mxu0 0.0
      %2198 = vmatprep.subr.mxu0 0.0
      %2199 = vmatpush1.msra.mxu0 0.0
      %2200 = vmatprep.subr.mxu0 0.0
      %2201 = vmatpush1.msra.mxu0 0.0
      %2202 = vmatprep.subr.mxu0 0.0
      %2203 = vmatpush1.msra.mxu0 0.0
      %2204 = vmatprep.subr.mxu0 0.0
      %2205 = vmatpush1.msra.mxu0 0.0
      %2206 = vmatprep.subr.mxu0 0.0
      %2207 = vmatpush1.msra.mxu0 0.0
      %2208 = vmatprep.subr.mxu0 0.0
      %2209 = vmatpush1.msra.mxu0 0.0
      %2210 = vmatprep.subr.mxu0 0.0
      %2211 = vmatpush1.msra.mxu0 0.0
      %2212 = vmatprep.subr.mxu0 0.0
      %2213 = vmatpush1.msra.mxu0 0.0
      %2214 = vmatprep.subr.mxu0 0.0
      %2215 = vmatpush1.msra.mxu0 0.0
      %2216 = vmatprep.subr.mxu0 0.0
      %2217 = vmatpush1.msra.mxu0 0.0
      %2218 = vmatprep.subr.mxu0 0.0
      %2219 = vmatpush1.msra.mxu0 0.0
      %2220 = vmatprep.subr.mxu0 0.0
      %2221 = vmatpush1.msra.mxu0 0.0
      %2222 = vmatprep.subr.mxu0 0.0
      %2223 = vmatpush1.msra.mxu0 0.0
      %2224 = vmatprep.subr.mxu0 0.0
      %2225 = vmatpush1.msra.mxu0 0.0
      %2226 = vmatprep.subr.mxu0 0.0
      %2227 = vmatpush1.msra.mxu0 0.0
      %2228 = vmatprep.subr.mxu0 0.0
      %2229 = vmatpush1.msra.mxu0 0.0
      %2230 = vmatprep.subr.mxu0 0.0
      %2231 = vmatpush1.msra.mxu0 0.0
      %2232 = vmatprep.subr.mxu0 0.0
      %2233 = vmatpush1.msra.mxu0 0.0
      %2234 = vmatprep.subr.mxu0 0.0
      %2235 = vmatpush1.msra.mxu0 0.0
      %2236 = vmatprep.subr.mxu0 0.0
      %2237 = vmatpush1.msra.mxu0 0.0
      %2238 = vmatprep.subr.mxu0 0.0
      %2239 = vmatpush1.msra.mxu0 0.0
      %2240 = vmatprep.subr.mxu0 0.0
      %2241 = vmatpush1.msra.mxu0 0.0
      %2242 = vmatprep.subr.mxu0 0.0
      %2243 = vmatpush1.msra.mxu0 0.0
      %2244 = vmatprep.subr.mxu0 0.0
      %2245 = vmatpush1.msra.mxu0 0.0
      %2246 = vmatprep.subr.mxu0 0.0
      %2247 = vmatpush1.msra.mxu0 0.0
      %2248 = vmatprep.subr.mxu0 0.0
      %2249 = vmatpush1.msra.mxu0 0.0
      %2250 = vmatprep.subr.mxu0 0.0
      %2251 = vmatpush1.msra.mxu0 0.0
      %2252 = vmatprep.subr.mxu0 0.0
      %2253 = vmatpush1.msra.mxu0 0.0
      %2254 = vmatprep.subr.mxu0 0.0
      %2255 = vmatpush1.msra.mxu0 0.0
      %2256 = vmatprep.mubr.f32.mxu0 0.0
      %2257 = vmatmul.mubr.f32.gmra.mrb[0].mxu0 %v2094
      %v2258 = vpop.f32.mrb[0].mxu0
      %v2259 = vadd.f32 0.0, %v2258
      %v2260 = vpop.f32.mrb[0].mxu0
      %2261 = vmatprep.mubr.f32.mxu0 0.0
      %2262 = vmatmul.mubr.f32.gmra.mrb[0].mxu0 %v2097
      %v2263 = vpop.f32.mrb[0].mxu0
      %v2264 = vadd.f32 0.0, %v2263
      %v2265 = vpop.f32.mrb[0].mxu0
      %2266 = vmatprep.mubr.f32.mxu0 0.0
      %2267 = vmatmul.mubr.f32.gmra.mrb[0].mxu0 %v2100
      %v2268 = vpop.f32.mrb[0].mxu0
      %v2269 = vadd.f32 0.0, %v2268
      %v2270 = vpop.f32.mrb[0].mxu0
      %2271 = vmatprep.mubr.f32.mxu0 0.0
      %2272 = vmatmul.mubr.f32.gmra.mrb[0].mxu0 %v2103
      %v2273 = vpop.f32.mrb[0].mxu0
      %v2274 = vadd.f32 0.0, %v2273
      %v2275 = vpop.f32.mrb[0].mxu0
      %2276 = vmatprep.mubr.f32.mxu0 0.0
      %2277 = vmatmul.mubr.f32.gmra.mrb[0].mxu0 %v2106
      %v2278 = vpop.f32.mrb[0].mxu0
      %v2279 = vadd.f32 0.0, %v2278
      %v2280 = vpop.f32.mrb[0].mxu0
      %2281 = vmatprep.mubr.f32.mxu0 0.0
      %2282 = vmatmul.mubr.f32.gmra.mrb[0].mxu0 %v2109
      %v2283 = vpop.f32.mrb[0].mxu0
      %v2284 = vadd.f32 0.0, %v2283
      %v2285 = vpop.f32.mrb[0].mxu0
      %2286 = vmatprep.mubr.f32.mxu0 0.0
      %2287 = vmatmul.mubr.f32.gmra.mrb[0].mxu0 %v2112
      %v2288 = vpop.f32.mrb[0].mxu0
      %v2289 = vadd.f32 0.0, %v2288
      %v2290 = vpop.f32.mrb[0].mxu0
      %2291 = vmatprep.mubr.f32.mxu0 0.0
      %2292 = vmatmul.mubr.f32.gmra.mrb[0].mxu0 %v2115
      %v2293 = vpop.f32.mrb[0].mxu0
      %v2294 = vadd.f32 0.0, %v2293
      %v2295 = vpop.f32.mrb[0].mxu0
      %2296 = vmatprep.mubr.f32.mxu0 0.0
      %2297 = vmatmul.mubr.f32.gmra.mrb[0].mxu0 %v2118
      %v2298 = vpop.f32.mrb[0].mxu0
      %v2299 = vadd.f32 0.0, %v2298
      %v2300 = vpop.f32.mrb[0].mxu0
      %2301 = vmatprep.mubr.f32.mxu0 0.0
      %2302 = vmatmul.mubr.f32.gmra.mrb[0].mxu0 %v2121
      %v2303 = vpop.f32.mrb[0].mxu0
      %v2304 = vadd.f32 0.0, %v2303
      %v2305 = vpop.f32.mrb[0].mxu0
      %2306 = vmatprep.mubr.f32.mxu0 0.0
      %2307 = vmatmul.mubr.f32.gmra.mrb[0].mxu0 %v2124
      %v2308 = vpop.f32.mrb[0].mxu0
      %v2309 = vadd.f32 0.0, %v2308
      %v2310 = vpop.f32.mrb[0].mxu0
      %2311 = vmatprep.mubr.f32.mxu0 0.0
      %2312 = vmatmul.mubr.f32.gmra.mrb[0].mxu0 %v2127
      %v2313 = vpop.f32.mrb[0].mxu0
      %v2314 = vadd.f32 0.0, %v2313
      %v2315 = vpop.f32.mrb[0].mxu0
      %2316 = vmatprep.mubr.f32.mxu0 0.0
      %2317 = vmatmul.mubr.f32.gmra.mrb[0].mxu0 %v2130
      %v2318 = vpop.f32.mrb[0].mxu0
      %v2319 = vadd.f32 0.0, %v2318
      %v2320 = vpop.f32.mrb[0].mxu0
      %2321 = vmatprep.mubr.f32.mxu0 0.0
      %2322 = vmatmul.mubr.f32.gmra.mrb[0].mxu0 %v2133
      %v2323 = vpop.f32.mrb[0].mxu0
      %v2324 = vadd.f32 0.0, %v2323
      %v2325 = vpop.f32.mrb[0].mxu0
      %2326 = vmatprep.mubr.f32.mxu0 0.0
      %2327 = vmatmul.mubr.f32.gmra.mrb[0].mxu0 %v2136
      %v2328 = vpop.f32.mrb[0].mxu0
      %v2329 = vadd.f32 0.0, %v2328
      %v2330 = vpop.f32.mrb[0].mxu0
      %2331 = vmatprep.mubr.f32.mxu0 0.0
      %2332 = vmatmul.mubr.f32.gmra.mrb[0].mxu0 %v2139
      %v2333 = vpop.f32.mrb[0].mxu0
      %v2334 = vadd.f32 0.0, %v2333
      %v2335 = vpop.f32.mrb[0].mxu0
      %2336 = vmatprep.mubr.f32.mxu0 0.0
      %2337 = vmatmul.mubr.f32.gmra.mrb[0].mxu0 %v2142
      %v2338 = vpop.f32.mrb[0].mxu0
      %v2339 = vadd.f32 0.0, %v2338
      %v2340 = vpop.f32.mrb[0].mxu0
      %2341 = vmatprep.mubr.f32.mxu0 0.0
      %2342 = vmatmul.mubr.f32.gmra.mrb[0].mxu0 %v2145
      %v2343 = vpop.f32.mrb[0].mxu0
      %v2344 = vadd.f32 0.0, %v2343
      %v2345 = vpop.f32.mrb[0].mxu0
      %2346 = vmatprep.mubr.f32.mxu0 0.0
      %2347 = vmatmul.mubr.f32.gmra.mrb[0].mxu0 %v2148
      %v2348 = vpop.f32.mrb[0].mxu0
      %v2349 = vadd.f32 0.0, %v2348
      %v2350 = vpop.f32.mrb[0].mxu0
      %2351 = vmatprep.mubr.f32.mxu0 0.0
      %2352 = vmatmul.mubr.f32.gmra.mrb[0].mxu0 %v2151
      %v2353 = vpop.f32.mrb[0].mxu0
      %v2354 = vadd.f32 0.0, %v2353
      %v2355 = vpop.f32.mrb[0].mxu0
      %2356 = vmatprep.mubr.f32.mxu0 0.0
      %2357 = vmatmul.mubr.f32.gmra.mrb[0].mxu0 %v2154
      %v2358 = vpop.f32.mrb[0].mxu0
      %v2359 = vadd.f32 0.0, %v2358
      %v2360 = vpop.f32.mrb[0].mxu0
      %2361 = vmatprep.mubr.f32.mxu0 0.0
      %2362 = vmatmul.mubr.f32.gmra.mrb[0].mxu0 %v2157
      %v2363 = vpop.f32.mrb[0].mxu0
      %v2364 = vadd.f32 0.0, %v2363
      %v2365 = vpop.f32.mrb[0].mxu0
      %2366 = vmatprep.mubr.f32.mxu0 0.0
      %2367 = vmatmul.mubr.f32.gmra.mrb[0].mxu0 %v2160
      %v2368 = vpop.f32.mrb[0].mxu0
      %v2369 = vadd.f32 0.0, %v2368
      %v2370 = vpop.f32.mrb[0].mxu0
      %2371 = vmatprep.mubr.f32.mxu0 0.0
      %2372 = vmatmul.mubr.f32.gmra.mrb[0].mxu0 %v2163
      %v2373 = vpop.f32.mrb[0].mxu0
      %v2374 = vadd.f32 0.0, %v2373
      %v2375 = vpop.f32.mrb[0].mxu0
      %2376 = vmatprep.mubr.f32.mxu0 0.0
      %2377 = vmatmul.mubr.f32.gmra.mrb[0].mxu0 %v2166
      %v2378 = vpop.f32.mrb[0].mxu0
      %v2379 = vadd.f32 0.0, %v2378
      %v2380 = vpop.f32.mrb[0].mxu0
      %2381 = vmatprep.mubr.f32.mxu0 0.0
      %2382 = vmatmul.mubr.f32.gmra.mrb[0].mxu0 %v2169
      %v2383 = vpop.f32.mrb[0].mxu0
      %v2384 = vadd.f32 0.0, %v2383
      %v2385 = vpop.f32.mrb[0].mxu0
      %2386 = vmatprep.mubr.f32.mxu0 0.0
      %2387 = vmatmul.mubr.f32.gmra.mrb[0].mxu0 %v2172
      %v2388 = vpop.f32.mrb[0].mxu0
      %v2389 = vadd.f32 0.0, %v2388
      %v2390 = vpop.f32.mrb[0].mxu0
      %2391 = vmatprep.mubr.f32.mxu0 0.0
      %2392 = vmatmul.mubr.f32.gmra.mrb[0].mxu0 %v2175
      %v2393 = vpop.f32.mrb[0].mxu0
      %v2394 = vadd.f32 0.0, %v2393
      %v2395 = vpop.f32.mrb[0].mxu0
      %2396 = vmatprep.mubr.f32.mxu0 0.0
      %2397 = vmatmul.mubr.f32.gmra.mrb[0].mxu0 %v2178
      %v2398 = vpop.f32.mrb[0].mxu0
      %v2399 = vadd.f32 0.0, %v2398
      %v2400 = vpop.f32.mrb[0].mxu0
      %2401 = vmatprep.mubr.f32.mxu0 0.0
      %2402 = vmatmul.mubr.f32.gmra.mrb[0].mxu0 %v2181
      %v2403 = vpop.f32.mrb[0].mxu0
      %v2404 = vadd.f32 0.0, %v2403
      %v2405 = vpop.f32.mrb[0].mxu0
      %2406 = vmatprep.mubr.f32.mxu0 0.0
      %2407 = vmatmul.mubr.f32.gmra.mrb[0].mxu0 %v2184
      %v2408 = vpop.f32.mrb[0].mxu0
      %v2409 = vadd.f32 0.0, %v2408
      %v2410 = vpop.f32.mrb[0].mxu0
      %2411 = vmatprep.mubr.f32.mxu0 0.0
      %2412 = vmatmul.mubr.f32.gmra.mrb[0].mxu0 %v2187
      %v2413 = vpop.f32.mrb[0].mxu0
      %v2414 = vadd.f32 0.0, %v2413
      %v2415 = vpop.f32.mrb[0].mxu0
      %2416 = vdwg.mxu0
      %v2417 = vadd.f32 %v2027, %v2259
      %v2418 = vadd.f32 %v2028, %v2264
      %v2419 = vadd.f32 %v2029, %v2269
      %v2420 = vadd.f32 %v2030, %v2274
      %v2421 = vadd.f32 %v2031, %v2279
      %v2422 = vadd.f32 %v2032, %v2284
      %v2423 = vadd.f32 %v2033, %v2289
      %v2424 = vadd.f32 %v2034, %v2294
      %v2425 = vadd.f32 %v2035, %v2299
      %v2426 = vadd.f32 %v2036, %v2304
      %v2427 = vadd.f32 %v2037, %v2309
      %v2428 = vadd.f32 %v2038, %v2314
      %v2429 = vadd.f32 %v2039, %v2319
      %v2430 = vadd.f32 %v2040, %v2324
      %v2431 = vadd.f32 %v2041, %v2329
      %v2432 = vadd.f32 %v2042, %v2334
      %v2433 = vadd.f32 %v2043, %v2339
      %v2434 = vadd.f32 %v2044, %v2344
      %v2435 = vadd.f32 %v2045, %v2349
      %v2436 = vadd.f32 %v2046, %v2354
      %v2437 = vadd.f32 %v2047, %v2359
      %v2438 = vadd.f32 %v2048, %v2364
      %v2439 = vadd.f32 %v2049, %v2369
      %v2440 = vadd.f32 %v2050, %v2374
      %v2441 = vadd.f32 %v2051, %v2379
      %v2442 = vadd.f32 %v2052, %v2384
      %v2443 = vadd.f32 %v2053, %v2389
      %v2444 = vadd.f32 %v2054, %v2394
      %v2445 = vadd.f32 %v2055, %v2399
      %v2446 = vadd.f32 %v2056, %v2404
      %v2447 = vadd.f32 %v2057, %v2409
      %v2448 = vadd.f32 %v2058, %v2414
      %s2449 = scalar_lea.vmem %s165, 48
      %v2450 = vld [vmem:[%s2449] sm:$0xff]
      %v2451 = vld [vmem:[%s2449 + $0x8] sm:$0xff]
      %v2452 = vld [vmem:[%s2449 + $0x18] sm:$0xff]
      %v2453 = vld [vmem:[%s2449 + $0x20] sm:$0xff]
      %v2454 = vld [vmem:[%s2449 + $0x30] sm:$0xff]
      %v2455 = vld [vmem:[%s2449 + $0x38] sm:$0xff]
      %v2456 = vld [vmem:[%s2449 + $0x48] sm:$0xff]
      %v2457 = vld [vmem:[%s2449 + $0x50] sm:$0xff]
      %v2458 = vld [vmem:[%s2449 + $0x60] sm:$0xff]
      %v2459 = vld [vmem:[%s2449 + $0x68] sm:$0xff]
      %v2460 = vld [vmem:[%s2449 + $0x78] sm:$0xff]
      %v2461 = vld [vmem:[%s2449 + $0x80] sm:$0xff]
      %v2462 = vld [vmem:[%s2449 + $0x90] sm:$0xff]
      %v2463 = vld [vmem:[%s2449 + $0x98] sm:$0xff]
      %v2464 = vld [vmem:[%s2449 + $0xa8] sm:$0xff]
      %v2465 = vld [vmem:[%s2449 + $0xb0] sm:$0xff]
      %v2466 = vld [vmem:[%s2449 + $0xc0] sm:$0xff]
      %v2467 = vld [vmem:[%s2449 + $0xc8] sm:$0xff]
      %v2468 = vld [vmem:[%s2449 + $0xd8] sm:$0xff]
      %v2469 = vld [vmem:[%s2449 + $0xe0] sm:$0xff]
      %v2470 = vld [vmem:[%s2449 + $0xf0] sm:$0xff]
      %v2471 = vld [vmem:[%s2449 + $0xf8] sm:$0xff]
      %v2472 = vld [vmem:[%s2449 + $0x108] sm:$0xff]
      %v2473 = vld [vmem:[%s2449 + $0x110] sm:$0xff]
      %v2474 = vld [vmem:[%s2449 + $0x120] sm:$0xff]
      %v2475 = vld [vmem:[%s2449 + $0x128] sm:$0xff]
      %v2476 = vld [vmem:[%s2449 + $0x138] sm:$0xff]
      %v2477 = vld [vmem:[%s2449 + $0x140] sm:$0xff]
      %v2478 = vld [vmem:[%s2449 + $0x150] sm:$0xff]
      %v2479 = vld [vmem:[%s2449 + $0x158] sm:$0xff]
      %v2480 = vld [vmem:[%s2449 + $0x168] sm:$0xff]
      %v2481 = vld [vmem:[%s2449 + $0x170] sm:$0xff]
      %s2482 = scalar_lea.vmem %s1, 24
      %v2483 = vld [vmem:[%s2482] sm:$0xf]
      %v2485 = vsel %vm238, %v2450, 0
      %v2488 = vsel %vm238, %v2451, 0
      %v2491 = vsel %vm238, %v2452, 0
      %v2494 = vsel %vm238, %v2453, 0
      %v2497 = vsel %vm238, %v2454, 0
      %v2500 = vsel %vm238, %v2455, 0
      %v2503 = vsel %vm238, %v2456, 0
      %v2506 = vsel %vm238, %v2457, 0
      %v2509 = vsel %vm238, %v2458, 0
      %v2512 = vsel %vm238, %v2459, 0
      %v2515 = vsel %vm238, %v2460, 0
      %v2518 = vsel %vm238, %v2461, 0
      %v2521 = vsel %vm238, %v2462, 0
      %v2524 = vsel %vm238, %v2463, 0
      %v2527 = vsel %vm238, %v2464, 0
      %v2530 = vsel %vm238, %v2465, 0
      %v2533 = vsel %vm238, %v2466, 0
      %v2536 = vsel %vm238, %v2467, 0
      %v2539 = vsel %vm238, %v2468, 0
      %v2542 = vsel %vm238, %v2469, 0
      %v2545 = vsel %vm238, %v2470, 0
      %v2548 = vsel %vm238, %v2471, 0
      %v2551 = vsel %vm238, %v2472, 0
      %v2554 = vsel %vm238, %v2473, 0
      %v2557 = vsel %vm238, %v2474, 0
      %v2560 = vsel %vm238, %v2475, 0
      %v2563 = vsel %vm238, %v2476, 0
      %v2566 = vsel %vm238, %v2477, 0
      %v2569 = vsel %vm238, %v2478, 0
      %v2572 = vsel %vm238, %v2479, 0
      %v2575 = vsel %vm238, %v2480, 0
      %v2578 = vsel %vm238, %v2481, 0
      %v2581 = vsel %vm335, %v2483, 0
      %2583 = vmatprep.subr.mxu0 0.0
      %2584 = vmatpush1.msra.mxu0 %v2581
      %2585 = vmatprep.subr.mxu0 0.0
      %2586 = vmatpush1.msra.mxu0 0.0
      %2587 = vmatprep.subr.mxu0 0.0
      %2588 = vmatpush1.msra.mxu0 0.0
      %2589 = vmatprep.subr.mxu0 0.0
      %2590 = vmatpush1.msra.mxu0 0.0
      %2591 = vmatprep.subr.mxu0 0.0
      %2592 = vmatpush1.msra.mxu0 0.0
      %2593 = vmatprep.subr.mxu0 0.0
      %2594 = vmatpush1.msra.mxu0 0.0
      %2595 = vmatprep.subr.mxu0 0.0
      %2596 = vmatpush1.msra.mxu0 0.0
      %2597 = vmatprep.subr.mxu0 0.0
      %2598 = vmatpush1.msra.mxu0 0.0
      %2599 = vmatprep.subr.mxu0 0.0
      %2600 = vmatpush1.msra.mxu0 0.0
      %2601 = vmatprep.subr.mxu0 0.0
      %2602 = vmatpush1.msra.mxu0 0.0
      %2603 = vmatprep.subr.mxu0 0.0
      %2604 = vmatpush1.msra.mxu0 0.0
      %2605 = vmatprep.subr.mxu0 0.0
      %2606 = vmatpush1.msra.mxu0 0.0
      %2607 = vmatprep.subr.mxu0 0.0
      %2608 = vmatpush1.msra.mxu0 0.0
      %2609 = vmatprep.subr.mxu0 0.0
      %2610 = vmatpush1.msra.mxu0 0.0
      %2611 = vmatprep.subr.mxu0 0.0
      %2612 = vmatpush1.msra.mxu0 0.0
      %2613 = vmatprep.subr.mxu0 0.0
      %2614 = vmatpush1.msra.mxu0 0.0
      %2615 = vmatprep.subr.mxu0 0.0
      %2616 = vmatpush1.msra.mxu0 0.0
      %2617 = vmatprep.subr.mxu0 0.0
      %2618 = vmatpush1.msra.mxu0 0.0
      %2619 = vmatprep.subr.mxu0 0.0
      %2620 = vmatpush1.msra.mxu0 0.0
      %2621 = vmatprep.subr.mxu0 0.0
      %2622 = vmatpush1.msra.mxu0 0.0
      %2623 = vmatprep.subr.mxu0 0.0
      %2624 = vmatpush1.msra.mxu0 0.0
      %2625 = vmatprep.subr.mxu0 0.0
      %2626 = vmatpush1.msra.mxu0 0.0
      %2627 = vmatprep.subr.mxu0 0.0
      %2628 = vmatpush1.msra.mxu0 0.0
      %2629 = vmatprep.subr.mxu0 0.0
      %2630 = vmatpush1.msra.mxu0 0.0
      %2631 = vmatprep.subr.mxu0 0.0
      %2632 = vmatpush1.msra.mxu0 0.0
      %2633 = vmatprep.subr.mxu0 0.0
      %2634 = vmatpush1.msra.mxu0 0.0
      %2635 = vmatprep.subr.mxu0 0.0
      %2636 = vmatpush1.msra.mxu0 0.0
      %2637 = vmatprep.subr.mxu0 0.0
      %2638 = vmatpush1.msra.mxu0 0.0
      %2639 = vmatprep.subr.mxu0 0.0
      %2640 = vmatpush1.msra.mxu0 0.0
      %2641 = vmatprep.subr.mxu0 0.0
      %2642 = vmatpush1.msra.mxu0 0.0
      %2643 = vmatprep.subr.mxu0 0.0
      %2644 = vmatpush1.msra.mxu0 0.0
      %2645 = vmatprep.subr.mxu0 0.0
      %2646 = vmatpush1.msra.mxu0 0.0
      %2647 = vmatprep.mubr.f32.mxu0 0.0
      %2648 = vmatmul.mubr.f32.gmra.mrb[0].mxu0 %v2485
      %v2649 = vpop.f32.mrb[0].mxu0
      %v2650 = vadd.f32 0.0, %v2649
      %v2651 = vpop.f32.mrb[0].mxu0
      %2652 = vmatprep.mubr.f32.mxu0 0.0
      %2653 = vmatmul.mubr.f32.gmra.mrb[0].mxu0 %v2488
      %v2654 = vpop.f32.mrb[0].mxu0
      %v2655 = vadd.f32 0.0, %v2654
      %v2656 = vpop.f32.mrb[0].mxu0
      %2657 = vmatprep.mubr.f32.mxu0 0.0
      %2658 = vmatmul.mubr.f32.gmra.mrb[0].mxu0 %v2491
      %v2659 = vpop.f32.mrb[0].mxu0
      %v2660 = vadd.f32 0.0, %v2659
      %v2661 = vpop.f32.mrb[0].mxu0
      %2662 = vmatprep.mubr.f32.mxu0 0.0
      %2663 = vmatmul.mubr.f32.gmra.mrb[0].mxu0 %v2494
      %v2664 = vpop.f32.mrb[0].mxu0
      %v2665 = vadd.f32 0.0, %v2664
      %v2666 = vpop.f32.mrb[0].mxu0
      %2667 = vmatprep.mubr.f32.mxu0 0.0
      %2668 = vmatmul.mubr.f32.gmra.mrb[0].mxu0 %v2497
      %v2669 = vpop.f32.mrb[0].mxu0
      %v2670 = vadd.f32 0.0, %v2669
      %v2671 = vpop.f32.mrb[0].mxu0
      %2672 = vmatprep.mubr.f32.mxu0 0.0
      %2673 = vmatmul.mubr.f32.gmra.mrb[0].mxu0 %v2500
      %v2674 = vpop.f32.mrb[0].mxu0
      %v2675 = vadd.f32 0.0, %v2674
      %v2676 = vpop.f32.mrb[0].mxu0
      %2677 = vmatprep.mubr.f32.mxu0 0.0
      %2678 = vmatmul.mubr.f32.gmra.mrb[0].mxu0 %v2503
      %v2679 = vpop.f32.mrb[0].mxu0
      %v2680 = vadd.f32 0.0, %v2679
      %v2681 = vpop.f32.mrb[0].mxu0
      %2682 = vmatprep.mubr.f32.mxu0 0.0
      %2683 = vmatmul.mubr.f32.gmra.mrb[0].mxu0 %v2506
      %v2684 = vpop.f32.mrb[0].mxu0
      %v2685 = vadd.f32 0.0, %v2684
      %v2686 = vpop.f32.mrb[0].mxu0
      %2687 = vmatprep.mubr.f32.mxu0 0.0
      %2688 = vmatmul.mubr.f32.gmra.mrb[0].mxu0 %v2509
      %v2689 = vpop.f32.mrb[0].mxu0
      %v2690 = vadd.f32 0.0, %v2689
      %v2691 = vpop.f32.mrb[0].mxu0
      %2692 = vmatprep.mubr.f32.mxu0 0.0
      %2693 = vmatmul.mubr.f32.gmra.mrb[0].mxu0 %v2512
      %v2694 = vpop.f32.mrb[0].mxu0
      %v2695 = vadd.f32 0.0, %v2694
      %v2696 = vpop.f32.mrb[0].mxu0
      %2697 = vmatprep.mubr.f32.mxu0 0.0
      %2698 = vmatmul.mubr.f32.gmra.mrb[0].mxu0 %v2515
      %v2699 = vpop.f32.mrb[0].mxu0
      %v2700 = vadd.f32 0.0, %v2699
      %v2701 = vpop.f32.mrb[0].mxu0
      %2702 = vmatprep.mubr.f32.mxu0 0.0
      %2703 = vmatmul.mubr.f32.gmra.mrb[0].mxu0 %v2518
      %v2704 = vpop.f32.mrb[0].mxu0
      %v2705 = vadd.f32 0.0, %v2704
      %v2706 = vpop.f32.mrb[0].mxu0
      %2707 = vmatprep.mubr.f32.mxu0 0.0
      %2708 = vmatmul.mubr.f32.gmra.mrb[0].mxu0 %v2521
      %v2709 = vpop.f32.mrb[0].mxu0
      %v2710 = vadd.f32 0.0, %v2709
      %v2711 = vpop.f32.mrb[0].mxu0
      %2712 = vmatprep.mubr.f32.mxu0 0.0
      %2713 = vmatmul.mubr.f32.gmra.mrb[0].mxu0 %v2524
      %v2714 = vpop.f32.mrb[0].mxu0
      %v2715 = vadd.f32 0.0, %v2714
      %v2716 = vpop.f32.mrb[0].mxu0
      %2717 = vmatprep.mubr.f32.mxu0 0.0
      %2718 = vmatmul.mubr.f32.gmra.mrb[0].mxu0 %v2527
      %v2719 = vpop.f32.mrb[0].mxu0
      %v2720 = vadd.f32 0.0, %v2719
      %v2721 = vpop.f32.mrb[0].mxu0
      %2722 = vmatprep.mubr.f32.mxu0 0.0
      %2723 = vmatmul.mubr.f32.gmra.mrb[0].mxu0 %v2530
      %v2724 = vpop.f32.mrb[0].mxu0
      %v2725 = vadd.f32 0.0, %v2724
      %v2726 = vpop.f32.mrb[0].mxu0
      %2727 = vmatprep.mubr.f32.mxu0 0.0
      %2728 = vmatmul.mubr.f32.gmra.mrb[0].mxu0 %v2533
      %v2729 = vpop.f32.mrb[0].mxu0
      %v2730 = vadd.f32 0.0, %v2729
      %v2731 = vpop.f32.mrb[0].mxu0
      %2732 = vmatprep.mubr.f32.mxu0 0.0
      %2733 = vmatmul.mubr.f32.gmra.mrb[0].mxu0 %v2536
      %v2734 = vpop.f32.mrb[0].mxu0
      %v2735 = vadd.f32 0.0, %v2734
      %v2736 = vpop.f32.mrb[0].mxu0
      %2737 = vmatprep.mubr.f32.mxu0 0.0
      %2738 = vmatmul.mubr.f32.gmra.mrb[0].mxu0 %v2539
      %v2739 = vpop.f32.mrb[0].mxu0
      %v2740 = vadd.f32 0.0, %v2739
      %v2741 = vpop.f32.mrb[0].mxu0
      %2742 = vmatprep.mubr.f32.mxu0 0.0
      %2743 = vmatmul.mubr.f32.gmra.mrb[0].mxu0 %v2542
      %v2744 = vpop.f32.mrb[0].mxu0
      %v2745 = vadd.f32 0.0, %v2744
      %v2746 = vpop.f32.mrb[0].mxu0
      %2747 = vmatprep.mubr.f32.mxu0 0.0
      %2748 = vmatmul.mubr.f32.gmra.mrb[0].mxu0 %v2545
      %v2749 = vpop.f32.mrb[0].mxu0
      %v2750 = vadd.f32 0.0, %v2749
      %v2751 = vpop.f32.mrb[0].mxu0
      %2752 = vmatprep.mubr.f32.mxu0 0.0
      %2753 = vmatmul.mubr.f32.gmra.mrb[0].mxu0 %v2548
      %v2754 = vpop.f32.mrb[0].mxu0
      %v2755 = vadd.f32 0.0, %v2754
      %v2756 = vpop.f32.mrb[0].mxu0
      %2757 = vmatprep.mubr.f32.mxu0 0.0
      %2758 = vmatmul.mubr.f32.gmra.mrb[0].mxu0 %v2551
      %v2759 = vpop.f32.mrb[0].mxu0
      %v2760 = vadd.f32 0.0, %v2759
      %v2761 = vpop.f32.mrb[0].mxu0
      %2762 = vmatprep.mubr.f32.mxu0 0.0
      %2763 = vmatmul.mubr.f32.gmra.mrb[0].mxu0 %v2554
      %v2764 = vpop.f32.mrb[0].mxu0
      %v2765 = vadd.f32 0.0, %v2764
      %v2766 = vpop.f32.mrb[0].mxu0
      %2767 = vmatprep.mubr.f32.mxu0 0.0
      %2768 = vmatmul.mubr.f32.gmra.mrb[0].mxu0 %v2557
      %v2769 = vpop.f32.mrb[0].mxu0
      %v2770 = vadd.f32 0.0, %v2769
      %v2771 = vpop.f32.mrb[0].mxu0
      %2772 = vmatprep.mubr.f32.mxu0 0.0
      %2773 = vmatmul.mubr.f32.gmra.mrb[0].mxu0 %v2560
      %v2774 = vpop.f32.mrb[0].mxu0
      %v2775 = vadd.f32 0.0, %v2774
      %v2776 = vpop.f32.mrb[0].mxu0
      %2777 = vmatprep.mubr.f32.mxu0 0.0
      %2778 = vmatmul.mubr.f32.gmra.mrb[0].mxu0 %v2563
      %v2779 = vpop.f32.mrb[0].mxu0
      %v2780 = vadd.f32 0.0, %v2779
      %v2781 = vpop.f32.mrb[0].mxu0
      %2782 = vmatprep.mubr.f32.mxu0 0.0
      %2783 = vmatmul.mubr.f32.gmra.mrb[0].mxu0 %v2566
      %v2784 = vpop.f32.mrb[0].mxu0
      %v2785 = vadd.f32 0.0, %v2784
      %v2786 = vpop.f32.mrb[0].mxu0
      %2787 = vmatprep.mubr.f32.mxu0 0.0
      %2788 = vmatmul.mubr.f32.gmra.mrb[0].mxu0 %v2569
      %v2789 = vpop.f32.mrb[0].mxu0
      %v2790 = vadd.f32 0.0, %v2789
      %v2791 = vpop.f32.mrb[0].mxu0
      %2792 = vmatprep.mubr.f32.mxu0 0.0
      %2793 = vmatmul.mubr.f32.gmra.mrb[0].mxu0 %v2572
      %v2794 = vpop.f32.mrb[0].mxu0
      %v2795 = vadd.f32 0.0, %v2794
      %v2796 = vpop.f32.mrb[0].mxu0
      %2797 = vmatprep.mubr.f32.mxu0 0.0
      %2798 = vmatmul.mubr.f32.gmra.mrb[0].mxu0 %v2575
      %v2799 = vpop.f32.mrb[0].mxu0
      %v2800 = vadd.f32 0.0, %v2799
      %v2801 = vpop.f32.mrb[0].mxu0
      %2802 = vmatprep.mubr.f32.mxu0 0.0
      %2803 = vmatmul.mubr.f32.gmra.mrb[0].mxu0 %v2578
      %v2804 = vpop.f32.mrb[0].mxu0
      %v2805 = vadd.f32 0.0, %v2804
      %v2806 = vpop.f32.mrb[0].mxu0
      %2807 = vdwg.mxu0
      %v2808 = vadd.f32 %v2417, %v2650
      %v2809 = vadd.f32 %v2418, %v2655
      %v2810 = vadd.f32 %v2419, %v2660
      %v2811 = vadd.f32 %v2420, %v2665
      %v2812 = vadd.f32 %v2421, %v2670
      %v2813 = vadd.f32 %v2422, %v2675
      %v2814 = vadd.f32 %v2423, %v2680
      %v2815 = vadd.f32 %v2424, %v2685
      %v2816 = vadd.f32 %v2425, %v2690
      %v2817 = vadd.f32 %v2426, %v2695
      %v2818 = vadd.f32 %v2427, %v2700
      %v2819 = vadd.f32 %v2428, %v2705
      %v2820 = vadd.f32 %v2429, %v2710
      %v2821 = vadd.f32 %v2430, %v2715
      %v2822 = vadd.f32 %v2431, %v2720
      %v2823 = vadd.f32 %v2432, %v2725
      %v2824 = vadd.f32 %v2433, %v2730
      %v2825 = vadd.f32 %v2434, %v2735
      %v2826 = vadd.f32 %v2435, %v2740
      %v2827 = vadd.f32 %v2436, %v2745
      %v2828 = vadd.f32 %v2437, %v2750
      %v2829 = vadd.f32 %v2438, %v2755
      %v2830 = vadd.f32 %v2439, %v2760
      %v2831 = vadd.f32 %v2440, %v2765
      %v2832 = vadd.f32 %v2441, %v2770
      %v2833 = vadd.f32 %v2442, %v2775
      %v2834 = vadd.f32 %v2443, %v2780
      %v2835 = vadd.f32 %v2444, %v2785
      %v2836 = vadd.f32 %v2445, %v2790
      %v2837 = vadd.f32 %v2446, %v2795
      %v2838 = vadd.f32 %v2447, %v2800
      %v2839 = vadd.f32 %v2448, %v2805
      %v2840 = vld [vmem:[%s2449 + $0x1] sm:$0xff]
      %v2841 = vld [vmem:[%s2449 + $0x9] sm:$0xff]
      %v2842 = vld [vmem:[%s2449 + $0x19] sm:$0xff]
      %v2843 = vld [vmem:[%s2449 + $0x21] sm:$0xff]
      %v2844 = vld [vmem:[%s2449 + $0x31] sm:$0xff]
      %v2845 = vld [vmem:[%s2449 + $0x39] sm:$0xff]
      %v2846 = vld [vmem:[%s2449 + $0x49] sm:$0xff]
      %v2847 = vld [vmem:[%s2449 + $0x51] sm:$0xff]
      %v2848 = vld [vmem:[%s2449 + $0x61] sm:$0xff]
      %v2849 = vld [vmem:[%s2449 + $0x69] sm:$0xff]
      %v2850 = vld [vmem:[%s2449 + $0x79] sm:$0xff]
      %v2851 = vld [vmem:[%s2449 + $0x81] sm:$0xff]
      %v2852 = vld [vmem:[%s2449 + $0x91] sm:$0xff]
      %v2853 = vld [vmem:[%s2449 + $0x99] sm:$0xff]
      %v2854 = vld [vmem:[%s2449 + $0xa9] sm:$0xff]
      %v2855 = vld [vmem:[%s2449 + $0xb1] sm:$0xff]
      %v2856 = vld [vmem:[%s2449 + $0xc1] sm:$0xff]
      %v2857 = vld [vmem:[%s2449 + $0xc9] sm:$0xff]
      %v2858 = vld [vmem:[%s2449 + $0xd9] sm:$0xff]
      %v2859 = vld [vmem:[%s2449 + $0xe1] sm:$0xff]
      %v2860 = vld [vmem:[%s2449 + $0xf1] sm:$0xff]
      %v2861 = vld [vmem:[%s2449 + $0xf9] sm:$0xff]
      %v2862 = vld [vmem:[%s2449 + $0x109] sm:$0xff]
      %v2863 = vld [vmem:[%s2449 + $0x111] sm:$0xff]
      %v2864 = vld [vmem:[%s2449 + $0x121] sm:$0xff]
      %v2865 = vld [vmem:[%s2449 + $0x129] sm:$0xff]
      %v2866 = vld [vmem:[%s2449 + $0x139] sm:$0xff]
      %v2867 = vld [vmem:[%s2449 + $0x141] sm:$0xff]
      %v2868 = vld [vmem:[%s2449 + $0x151] sm:$0xff]
      %v2869 = vld [vmem:[%s2449 + $0x159] sm:$0xff]
      %v2870 = vld [vmem:[%s2449 + $0x169] sm:$0xff]
      %v2871 = vld [vmem:[%s2449 + $0x171] sm:$0xff]
      %s2872 = scalar_lea.vmem %s1, 28
      %v2873 = vld [vmem:[%s2872] sm:$0xf]
      %v2875 = vsel %vm238, %v2840, 0
      %v2878 = vsel %vm238, %v2841, 0
      %v2881 = vsel %vm238, %v2842, 0
      %v2884 = vsel %vm238, %v2843, 0
      %v2887 = vsel %vm238, %v2844, 0
      %v2890 = vsel %vm238, %v2845, 0
      %v2893 = vsel %vm238, %v2846, 0
      %v2896 = vsel %vm238, %v2847, 0
      %v2899 = vsel %vm238, %v2848, 0
      %v2902 = vsel %vm238, %v2849, 0
      %v2905 = vsel %vm238, %v2850, 0
      %v2908 = vsel %vm238, %v2851, 0
      %v2911 = vsel %vm238, %v2852, 0
      %v2914 = vsel %vm238, %v2853, 0
      %v2917 = vsel %vm238, %v2854, 0
      %v2920 = vsel %vm238, %v2855, 0
      %v2923 = vsel %vm238, %v2856, 0
      %v2926 = vsel %vm238, %v2857, 0
      %v2929 = vsel %vm238, %v2858, 0
      %v2932 = vsel %vm238, %v2859, 0
      %v2935 = vsel %vm238, %v2860, 0
      %v2938 = vsel %vm238, %v2861, 0
      %v2941 = vsel %vm238, %v2862, 0
      %v2944 = vsel %vm238, %v2863, 0
      %v2947 = vsel %vm238, %v2864, 0
      %v2950 = vsel %vm238, %v2865, 0
      %v2953 = vsel %vm238, %v2866, 0
      %v2956 = vsel %vm238, %v2867, 0
      %v2959 = vsel %vm238, %v2868, 0
      %v2962 = vsel %vm238, %v2869, 0
      %v2965 = vsel %vm238, %v2870, 0
      %v2968 = vsel %vm238, %v2871, 0
      %v2971 = vsel %vm335, %v2873, 0
      %2973 = vmatprep.subr.mxu0 0.0
      %2974 = vmatpush1.msra.mxu0 %v2971
      %2975 = vmatprep.subr.mxu0 0.0
      %2976 = vmatpush1.msra.mxu0 0.0
      %2977 = vmatprep.subr.mxu0 0.0
      %2978 = vmatpush1.msra.mxu0 0.0
      %2979 = vmatprep.subr.mxu0 0.0
      %2980 = vmatpush1.msra.mxu0 0.0
      %2981 = vmatprep.subr.mxu0 0.0
      %2982 = vmatpush1.msra.mxu0 0.0
      %2983 = vmatprep.subr.mxu0 0.0
      %2984 = vmatpush1.msra.mxu0 0.0
      %2985 = vmatprep.subr.mxu0 0.0
      %2986 = vmatpush1.msra.mxu0 0.0
      %2987 = vmatprep.subr.mxu0 0.0
      %2988 = vmatpush1.msra.mxu0 0.0
      %2989 = vmatprep.subr.mxu0 0.0
      %2990 = vmatpush1.msra.mxu0 0.0
      %2991 = vmatprep.subr.mxu0 0.0
      %2992 = vmatpush1.msra.mxu0 0.0
      %2993 = vmatprep.subr.mxu0 0.0
      %2994 = vmatpush1.msra.mxu0 0.0
      %2995 = vmatprep.subr.mxu0 0.0
      %2996 = vmatpush1.msra.mxu0 0.0
      %2997 = vmatprep.subr.mxu0 0.0
      %2998 = vmatpush1.msra.mxu0 0.0
      %2999 = vmatprep.subr.mxu0 0.0
      %3000 = vmatpush1.msra.mxu0 0.0
      %3001 = vmatprep.subr.mxu0 0.0
      %3002 = vmatpush1.msra.mxu0 0.0
      %3003 = vmatprep.subr.mxu0 0.0
      %3004 = vmatpush1.msra.mxu0 0.0
      %3005 = vmatprep.subr.mxu0 0.0
      %3006 = vmatpush1.msra.mxu0 0.0
      %3007 = vmatprep.subr.mxu0 0.0
      %3008 = vmatpush1.msra.mxu0 0.0
      %3009 = vmatprep.subr.mxu0 0.0
      %3010 = vmatpush1.msra.mxu0 0.0
      %3011 = vmatprep.subr.mxu0 0.0
      %3012 = vmatpush1.msra.mxu0 0.0
      %3013 = vmatprep.subr.mxu0 0.0
      %3014 = vmatpush1.msra.mxu0 0.0
      %3015 = vmatprep.subr.mxu0 0.0
      %3016 = vmatpush1.msra.mxu0 0.0
      %3017 = vmatprep.subr.mxu0 0.0
      %3018 = vmatpush1.msra.mxu0 0.0
      %3019 = vmatprep.subr.mxu0 0.0
      %3020 = vmatpush1.msra.mxu0 0.0
      %3021 = vmatprep.subr.mxu0 0.0
      %3022 = vmatpush1.msra.mxu0 0.0
      %3023 = vmatprep.subr.mxu0 0.0
      %3024 = vmatpush1.msra.mxu0 0.0
      %3025 = vmatprep.subr.mxu0 0.0
      %3026 = vmatpush1.msra.mxu0 0.0
      %3027 = vmatprep.subr.mxu0 0.0
      %3028 = vmatpush1.msra.mxu0 0.0
      %3029 = vmatprep.subr.mxu0 0.0
      %3030 = vmatpush1.msra.mxu0 0.0
      %3031 = vmatprep.subr.mxu0 0.0
      %3032 = vmatpush1.msra.mxu0 0.0
      %3033 = vmatprep.subr.mxu0 0.0
      %3034 = vmatpush1.msra.mxu0 0.0
      %3035 = vmatprep.subr.mxu0 0.0
      %3036 = vmatpush1.msra.mxu0 0.0
      %3037 = vmatprep.mubr.f32.mxu0 0.0
      %3038 = vmatmul.mubr.f32.gmra.mrb[0].mxu0 %v2875
      %v3039 = vpop.f32.mrb[0].mxu0
      %v3040 = vadd.f32 0.0, %v3039
      %v3041 = vpop.f32.mrb[0].mxu0
      %3042 = vmatprep.mubr.f32.mxu0 0.0
      %3043 = vmatmul.mubr.f32.gmra.mrb[0].mxu0 %v2878
      %v3044 = vpop.f32.mrb[0].mxu0
      %v3045 = vadd.f32 0.0, %v3044
      %v3046 = vpop.f32.mrb[0].mxu0
      %3047 = vmatprep.mubr.f32.mxu0 0.0
      %3048 = vmatmul.mubr.f32.gmra.mrb[0].mxu0 %v2881
      %v3049 = vpop.f32.mrb[0].mxu0
      %v3050 = vadd.f32 0.0, %v3049
      %v3051 = vpop.f32.mrb[0].mxu0
      %3052 = vmatprep.mubr.f32.mxu0 0.0
      %3053 = vmatmul.mubr.f32.gmra.mrb[0].mxu0 %v2884
      %v3054 = vpop.f32.mrb[0].mxu0
      %v3055 = vadd.f32 0.0, %v3054
      %v3056 = vpop.f32.mrb[0].mxu0
      %3057 = vmatprep.mubr.f32.mxu0 0.0
      %3058 = vmatmul.mubr.f32.gmra.mrb[0].mxu0 %v2887
      %v3059 = vpop.f32.mrb[0].mxu0
      %v3060 = vadd.f32 0.0, %v3059
      %v3061 = vpop.f32.mrb[0].mxu0
      %3062 = vmatprep.mubr.f32.mxu0 0.0
      %3063 = vmatmul.mubr.f32.gmra.mrb[0].mxu0 %v2890
      %v3064 = vpop.f32.mrb[0].mxu0
      %v3065 = vadd.f32 0.0, %v3064
      %v3066 = vpop.f32.mrb[0].mxu0
      %3067 = vmatprep.mubr.f32.mxu0 0.0
      %3068 = vmatmul.mubr.f32.gmra.mrb[0].mxu0 %v2893
      %v3069 = vpop.f32.mrb[0].mxu0
      %v3070 = vadd.f32 0.0, %v3069
      %v3071 = vpop.f32.mrb[0].mxu0
      %3072 = vmatprep.mubr.f32.mxu0 0.0
      %3073 = vmatmul.mubr.f32.gmra.mrb[0].mxu0 %v2896
      %v3074 = vpop.f32.mrb[0].mxu0
      %v3075 = vadd.f32 0.0, %v3074
      %v3076 = vpop.f32.mrb[0].mxu0
      %3077 = vmatprep.mubr.f32.mxu0 0.0
      %3078 = vmatmul.mubr.f32.gmra.mrb[0].mxu0 %v2899
      %v3079 = vpop.f32.mrb[0].mxu0
      %v3080 = vadd.f32 0.0, %v3079
      %v3081 = vpop.f32.mrb[0].mxu0
      %3082 = vmatprep.mubr.f32.mxu0 0.0
      %3083 = vmatmul.mubr.f32.gmra.mrb[0].mxu0 %v2902
      %v3084 = vpop.f32.mrb[0].mxu0
      %v3085 = vadd.f32 0.0, %v3084
      %v3086 = vpop.f32.mrb[0].mxu0
      %3087 = vmatprep.mubr.f32.mxu0 0.0
      %3088 = vmatmul.mubr.f32.gmra.mrb[0].mxu0 %v2905
      %v3089 = vpop.f32.mrb[0].mxu0
      %v3090 = vadd.f32 0.0, %v3089
      %v3091 = vpop.f32.mrb[0].mxu0
      %3092 = vmatprep.mubr.f32.mxu0 0.0
      %3093 = vmatmul.mubr.f32.gmra.mrb[0].mxu0 %v2908
      %v3094 = vpop.f32.mrb[0].mxu0
      %v3095 = vadd.f32 0.0, %v3094
      %v3096 = vpop.f32.mrb[0].mxu0
      %3097 = vmatprep.mubr.f32.mxu0 0.0
      %3098 = vmatmul.mubr.f32.gmra.mrb[0].mxu0 %v2911
      %v3099 = vpop.f32.mrb[0].mxu0
      %v3100 = vadd.f32 0.0, %v3099
      %v3101 = vpop.f32.mrb[0].mxu0
      %3102 = vmatprep.mubr.f32.mxu0 0.0
      %3103 = vmatmul.mubr.f32.gmra.mrb[0].mxu0 %v2914
      %v3104 = vpop.f32.mrb[0].mxu0
      %v3105 = vadd.f32 0.0, %v3104
      %v3106 = vpop.f32.mrb[0].mxu0
      %3107 = vmatprep.mubr.f32.mxu0 0.0
      %3108 = vmatmul.mubr.f32.gmra.mrb[0].mxu0 %v2917
      %v3109 = vpop.f32.mrb[0].mxu0
      %v3110 = vadd.f32 0.0, %v3109
      %v3111 = vpop.f32.mrb[0].mxu0
      %3112 = vmatprep.mubr.f32.mxu0 0.0
      %3113 = vmatmul.mubr.f32.gmra.mrb[0].mxu0 %v2920
      %v3114 = vpop.f32.mrb[0].mxu0
      %v3115 = vadd.f32 0.0, %v3114
      %v3116 = vpop.f32.mrb[0].mxu0
      %3117 = vmatprep.mubr.f32.mxu0 0.0
      %3118 = vmatmul.mubr.f32.gmra.mrb[0].mxu0 %v2923
      %v3119 = vpop.f32.mrb[0].mxu0
      %v3120 = vadd.f32 0.0, %v3119
      %v3121 = vpop.f32.mrb[0].mxu0
      %3122 = vmatprep.mubr.f32.mxu0 0.0
      %3123 = vmatmul.mubr.f32.gmra.mrb[0].mxu0 %v2926
      %v3124 = vpop.f32.mrb[0].mxu0
      %v3125 = vadd.f32 0.0, %v3124
      %v3126 = vpop.f32.mrb[0].mxu0
      %3127 = vmatprep.mubr.f32.mxu0 0.0
      %3128 = vmatmul.mubr.f32.gmra.mrb[0].mxu0 %v2929
      %v3129 = vpop.f32.mrb[0].mxu0
      %v3130 = vadd.f32 0.0, %v3129
      %v3131 = vpop.f32.mrb[0].mxu0
      %3132 = vmatprep.mubr.f32.mxu0 0.0
      %3133 = vmatmul.mubr.f32.gmra.mrb[0].mxu0 %v2932
      %v3134 = vpop.f32.mrb[0].mxu0
      %v3135 = vadd.f32 0.0, %v3134
      %v3136 = vpop.f32.mrb[0].mxu0
      %3137 = vmatprep.mubr.f32.mxu0 0.0
      %3138 = vmatmul.mubr.f32.gmra.mrb[0].mxu0 %v2935
      %v3139 = vpop.f32.mrb[0].mxu0
      %v3140 = vadd.f32 0.0, %v3139
      %v3141 = vpop.f32.mrb[0].mxu0
      %3142 = vmatprep.mubr.f32.mxu0 0.0
      %3143 = vmatmul.mubr.f32.gmra.mrb[0].mxu0 %v2938
      %v3144 = vpop.f32.mrb[0].mxu0
      %v3145 = vadd.f32 0.0, %v3144
      %v3146 = vpop.f32.mrb[0].mxu0
      %3147 = vmatprep.mubr.f32.mxu0 0.0
      %3148 = vmatmul.mubr.f32.gmra.mrb[0].mxu0 %v2941
      %v3149 = vpop.f32.mrb[0].mxu0
      %v3150 = vadd.f32 0.0, %v3149
      %v3151 = vpop.f32.mrb[0].mxu0
      %3152 = vmatprep.mubr.f32.mxu0 0.0
      %3153 = vmatmul.mubr.f32.gmra.mrb[0].mxu0 %v2944
      %v3154 = vpop.f32.mrb[0].mxu0
      %v3155 = vadd.f32 0.0, %v3154
      %v3156 = vpop.f32.mrb[0].mxu0
      %3157 = vmatprep.mubr.f32.mxu0 0.0
      %3158 = vmatmul.mubr.f32.gmra.mrb[0].mxu0 %v2947
      %v3159 = vpop.f32.mrb[0].mxu0
      %v3160 = vadd.f32 0.0, %v3159
      %v3161 = vpop.f32.mrb[0].mxu0
      %3162 = vmatprep.mubr.f32.mxu0 0.0
      %3163 = vmatmul.mubr.f32.gmra.mrb[0].mxu0 %v2950
      %v3164 = vpop.f32.mrb[0].mxu0
      %v3165 = vadd.f32 0.0, %v3164
      %v3166 = vpop.f32.mrb[0].mxu0
      %3167 = vmatprep.mubr.f32.mxu0 0.0
      %3168 = vmatmul.mubr.f32.gmra.mrb[0].mxu0 %v2953
      %v3169 = vpop.f32.mrb[0].mxu0
      %v3170 = vadd.f32 0.0, %v3169
      %v3171 = vpop.f32.mrb[0].mxu0
      %3172 = vmatprep.mubr.f32.mxu0 0.0
      %3173 = vmatmul.mubr.f32.gmra.mrb[0].mxu0 %v2956
      %v3174 = vpop.f32.mrb[0].mxu0
      %v3175 = vadd.f32 0.0, %v3174
      %v3176 = vpop.f32.mrb[0].mxu0
      %3177 = vmatprep.mubr.f32.mxu0 0.0
      %3178 = vmatmul.mubr.f32.gmra.mrb[0].mxu0 %v2959
      %v3179 = vpop.f32.mrb[0].mxu0
      %v3180 = vadd.f32 0.0, %v3179
      %v3181 = vpop.f32.mrb[0].mxu0
      %3182 = vmatprep.mubr.f32.mxu0 0.0
      %3183 = vmatmul.mubr.f32.gmra.mrb[0].mxu0 %v2962
      %v3184 = vpop.f32.mrb[0].mxu0
      %v3185 = vadd.f32 0.0, %v3184
      %v3186 = vpop.f32.mrb[0].mxu0
      %3187 = vmatprep.mubr.f32.mxu0 0.0
      %3188 = vmatmul.mubr.f32.gmra.mrb[0].mxu0 %v2965
      %v3189 = vpop.f32.mrb[0].mxu0
      %v3190 = vadd.f32 0.0, %v3189
      %v3191 = vpop.f32.mrb[0].mxu0
      %3192 = vmatprep.mubr.f32.mxu0 0.0
      %3193 = vmatmul.mubr.f32.gmra.mrb[0].mxu0 %v2968
      %v3194 = vpop.f32.mrb[0].mxu0
      %v3195 = vadd.f32 0.0, %v3194
      %v3196 = vpop.f32.mrb[0].mxu0
      %3197 = vdwg.mxu0
      %v3198 = vadd.f32 %v2808, %v3040
      %v3199 = vadd.f32 %v2809, %v3045
      %v3200 = vadd.f32 %v2810, %v3050
      %v3201 = vadd.f32 %v2811, %v3055
      %v3202 = vadd.f32 %v2812, %v3060
      %v3203 = vadd.f32 %v2813, %v3065
      %v3204 = vadd.f32 %v2814, %v3070
      %v3205 = vadd.f32 %v2815, %v3075
      %v3206 = vadd.f32 %v2816, %v3080
      %v3207 = vadd.f32 %v2817, %v3085
      %v3208 = vadd.f32 %v2818, %v3090
      %v3209 = vadd.f32 %v2819, %v3095
      %v3210 = vadd.f32 %v2820, %v3100
      %v3211 = vadd.f32 %v2821, %v3105
      %v3212 = vadd.f32 %v2822, %v3110
      %v3213 = vadd.f32 %v2823, %v3115
      %v3214 = vadd.f32 %v2824, %v3120
      %v3215 = vadd.f32 %v2825, %v3125
      %v3216 = vadd.f32 %v2826, %v3130
      %v3217 = vadd.f32 %v2827, %v3135
      %v3218 = vadd.f32 %v2828, %v3140
      %v3219 = vadd.f32 %v2829, %v3145
      %v3220 = vadd.f32 %v2830, %v3150
      %v3221 = vadd.f32 %v2831, %v3155
      %v3222 = vadd.f32 %v2832, %v3160
      %v3223 = vadd.f32 %v2833, %v3165
      %v3224 = vadd.f32 %v2834, %v3170
      %v3225 = vadd.f32 %v2835, %v3175
      %v3226 = vadd.f32 %v2836, %v3180
      %v3227 = vadd.f32 %v2837, %v3185
      %v3228 = vadd.f32 %v2838, %v3190
      %v3229 = vadd.f32 %v2839, %v3195
      %v3230 = vld [vmem:[%s2449 + $0x2] sm:$0xff]
      %v3231 = vld [vmem:[%s2449 + $0xa] sm:$0xff]
      %v3232 = vld [vmem:[%s2449 + $0x1a] sm:$0xff]
      %v3233 = vld [vmem:[%s2449 + $0x22] sm:$0xff]
      %v3234 = vld [vmem:[%s2449 + $0x32] sm:$0xff]
      %v3235 = vld [vmem:[%s2449 + $0x3a] sm:$0xff]
      %v3236 = vld [vmem:[%s2449 + $0x4a] sm:$0xff]
      %v3237 = vld [vmem:[%s2449 + $0x52] sm:$0xff]
      %v3238 = vld [vmem:[%s2449 + $0x62] sm:$0xff]
      %v3239 = vld [vmem:[%s2449 + $0x6a] sm:$0xff]
      %v3240 = vld [vmem:[%s2449 + $0x7a] sm:$0xff]
      %v3241 = vld [vmem:[%s2449 + $0x82] sm:$0xff]
      %v3242 = vld [vmem:[%s2449 + $0x92] sm:$0xff]
      %v3243 = vld [vmem:[%s2449 + $0x9a] sm:$0xff]
      %v3244 = vld [vmem:[%s2449 + $0xaa] sm:$0xff]
      %v3245 = vld [vmem:[%s2449 + $0xb2] sm:$0xff]
      %v3246 = vld [vmem:[%s2449 + $0xc2] sm:$0xff]
      %v3247 = vld [vmem:[%s2449 + $0xca] sm:$0xff]
      %v3248 = vld [vmem:[%s2449 + $0xda] sm:$0xff]
      %v3249 = vld [vmem:[%s2449 + $0xe2] sm:$0xff]
      %v3250 = vld [vmem:[%s2449 + $0xf2] sm:$0xff]
      %v3251 = vld [vmem:[%s2449 + $0xfa] sm:$0xff]
      %v3252 = vld [vmem:[%s2449 + $0x10a] sm:$0xff]
      %v3253 = vld [vmem:[%s2449 + $0x112] sm:$0xff]
      %v3254 = vld [vmem:[%s2449 + $0x122] sm:$0xff]
      %v3255 = vld [vmem:[%s2449 + $0x12a] sm:$0xff]
      %v3256 = vld [vmem:[%s2449 + $0x13a] sm:$0xff]
      %v3257 = vld [vmem:[%s2449 + $0x142] sm:$0xff]
      %v3258 = vld [vmem:[%s2449 + $0x152] sm:$0xff]
      %v3259 = vld [vmem:[%s2449 + $0x15a] sm:$0xff]
      %v3260 = vld [vmem:[%s2449 + $0x16a] sm:$0xff]
      %v3261 = vld [vmem:[%s2449 + $0x172] sm:$0xff]
      %s3262 = scalar_lea.vmem %s1, 32
      %v3263 = vld [vmem:[%s3262] sm:$0xf]
      %v3265 = vsel %vm238, %v3230, 0
      %v3268 = vsel %vm238, %v3231, 0
      %v3271 = vsel %vm238, %v3232, 0
      %v3274 = vsel %vm238, %v3233, 0
      %v3277 = vsel %vm238, %v3234, 0
      %v3280 = vsel %vm238, %v3235, 0
      %v3283 = vsel %vm238, %v3236, 0
      %v3286 = vsel %vm238, %v3237, 0
      %v3289 = vsel %vm238, %v3238, 0
      %v3292 = vsel %vm238, %v3239, 0
      %v3295 = vsel %vm238, %v3240, 0
      %v3298 = vsel %vm238, %v3241, 0
      %v3301 = vsel %vm238, %v3242, 0
      %v3304 = vsel %vm238, %v3243, 0
      %v3307 = vsel %vm238, %v3244, 0
      %v3310 = vsel %vm238, %v3245, 0
      %v3313 = vsel %vm238, %v3246, 0
      %v3316 = vsel %vm238, %v3247, 0
      %v3319 = vsel %vm238, %v3248, 0
      %v3322 = vsel %vm238, %v3249, 0
      %v3325 = vsel %vm238, %v3250, 0
      %v3328 = vsel %vm238, %v3251, 0
      %v3331 = vsel %vm238, %v3252, 0
      %v3334 = vsel %vm238, %v3253, 0
      %v3337 = vsel %vm238, %v3254, 0
      %v3340 = vsel %vm238, %v3255, 0
      %v3343 = vsel %vm238, %v3256, 0
      %v3346 = vsel %vm238, %v3257, 0
      %v3349 = vsel %vm238, %v3258, 0
      %v3352 = vsel %vm238, %v3259, 0
      %v3355 = vsel %vm238, %v3260, 0
      %v3358 = vsel %vm238, %v3261, 0
      %v3361 = vsel %vm335, %v3263, 0
      %3363 = vmatprep.subr.mxu0 0.0
      %3364 = vmatpush1.msra.mxu0 %v3361
      %3365 = vmatprep.subr.mxu0 0.0
      %3366 = vmatpush1.msra.mxu0 0.0
      %3367 = vmatprep.subr.mxu0 0.0
      %3368 = vmatpush1.msra.mxu0 0.0
      %3369 = vmatprep.subr.mxu0 0.0
      %3370 = vmatpush1.msra.mxu0 0.0
      %3371 = vmatprep.subr.mxu0 0.0
      %3372 = vmatpush1.msra.mxu0 0.0
      %3373 = vmatprep.subr.mxu0 0.0
      %3374 = vmatpush1.msra.mxu0 0.0
      %3375 = vmatprep.subr.mxu0 0.0
      %3376 = vmatpush1.msra.mxu0 0.0
      %3377 = vmatprep.subr.mxu0 0.0
      %3378 = vmatpush1.msra.mxu0 0.0
      %3379 = vmatprep.subr.mxu0 0.0
      %3380 = vmatpush1.msra.mxu0 0.0
      %3381 = vmatprep.subr.mxu0 0.0
      %3382 = vmatpush1.msra.mxu0 0.0
      %3383 = vmatprep.subr.mxu0 0.0
      %3384 = vmatpush1.msra.mxu0 0.0
      %3385 = vmatprep.subr.mxu0 0.0
      %3386 = vmatpush1.msra.mxu0 0.0
      %3387 = vmatprep.subr.mxu0 0.0
      %3388 = vmatpush1.msra.mxu0 0.0
      %3389 = vmatprep.subr.mxu0 0.0
      %3390 = vmatpush1.msra.mxu0 0.0
      %3391 = vmatprep.subr.mxu0 0.0
      %3392 = vmatpush1.msra.mxu0 0.0
      %3393 = vmatprep.subr.mxu0 0.0
      %3394 = vmatpush1.msra.mxu0 0.0
      %3395 = vmatprep.subr.mxu0 0.0
      %3396 = vmatpush1.msra.mxu0 0.0
      %3397 = vmatprep.subr.mxu0 0.0
      %3398 = vmatpush1.msra.mxu0 0.0
      %3399 = vmatprep.subr.mxu0 0.0
      %3400 = vmatpush1.msra.mxu0 0.0
      %3401 = vmatprep.subr.mxu0 0.0
      %3402 = vmatpush1.msra.mxu0 0.0
      %3403 = vmatprep.subr.mxu0 0.0
      %3404 = vmatpush1.msra.mxu0 0.0
      %3405 = vmatprep.subr.mxu0 0.0
      %3406 = vmatpush1.msra.mxu0 0.0
      %3407 = vmatprep.subr.mxu0 0.0
      %3408 = vmatpush1.msra.mxu0 0.0
      %3409 = vmatprep.subr.mxu0 0.0
      %3410 = vmatpush1.msra.mxu0 0.0
      %3411 = vmatprep.subr.mxu0 0.0
      %3412 = vmatpush1.msra.mxu0 0.0
      %3413 = vmatprep.subr.mxu0 0.0
      %3414 = vmatpush1.msra.mxu0 0.0
      %3415 = vmatprep.subr.mxu0 0.0
      %3416 = vmatpush1.msra.mxu0 0.0
      %3417 = vmatprep.subr.mxu0 0.0
      %3418 = vmatpush1.msra.mxu0 0.0
      %3419 = vmatprep.subr.mxu0 0.0
      %3420 = vmatpush1.msra.mxu0 0.0
      %3421 = vmatprep.subr.mxu0 0.0
      %3422 = vmatpush1.msra.mxu0 0.0
      %3423 = vmatprep.subr.mxu0 0.0
      %3424 = vmatpush1.msra.mxu0 0.0
      %3425 = vmatprep.subr.mxu0 0.0
      %3426 = vmatpush1.msra.mxu0 0.0
      %3427 = vmatprep.mubr.f32.mxu0 0.0
      %3428 = vmatmul.mubr.f32.gmra.mrb[0].mxu0 %v3265
      %v3429 = vpop.f32.mrb[0].mxu0
      %v3430 = vadd.f32 0.0, %v3429
      %v3431 = vpop.f32.mrb[0].mxu0
      %3432 = vmatprep.mubr.f32.mxu0 0.0
      %3433 = vmatmul.mubr.f32.gmra.mrb[0].mxu0 %v3268
      %v3434 = vpop.f32.mrb[0].mxu0
      %v3435 = vadd.f32 0.0, %v3434
      %v3436 = vpop.f32.mrb[0].mxu0
      %3437 = vmatprep.mubr.f32.mxu0 0.0
      %3438 = vmatmul.mubr.f32.gmra.mrb[0].mxu0 %v3271
      %v3439 = vpop.f32.mrb[0].mxu0
      %v3440 = vadd.f32 0.0, %v3439
      %v3441 = vpop.f32.mrb[0].mxu0
      %3442 = vmatprep.mubr.f32.mxu0 0.0
      %3443 = vmatmul.mubr.f32.gmra.mrb[0].mxu0 %v3274
      %v3444 = vpop.f32.mrb[0].mxu0
      %v3445 = vadd.f32 0.0, %v3444
      %v3446 = vpop.f32.mrb[0].mxu0
      %3447 = vmatprep.mubr.f32.mxu0 0.0
      %3448 = vmatmul.mubr.f32.gmra.mrb[0].mxu0 %v3277
      %v3449 = vpop.f32.mrb[0].mxu0
      %v3450 = vadd.f32 0.0, %v3449
      %v3451 = vpop.f32.mrb[0].mxu0
      %3452 = vmatprep.mubr.f32.mxu0 0.0
      %3453 = vmatmul.mubr.f32.gmra.mrb[0].mxu0 %v3280
      %v3454 = vpop.f32.mrb[0].mxu0
      %v3455 = vadd.f32 0.0, %v3454
      %v3456 = vpop.f32.mrb[0].mxu0
      %3457 = vmatprep.mubr.f32.mxu0 0.0
      %3458 = vmatmul.mubr.f32.gmra.mrb[0].mxu0 %v3283
      %v3459 = vpop.f32.mrb[0].mxu0
      %v3460 = vadd.f32 0.0, %v3459
      %v3461 = vpop.f32.mrb[0].mxu0
      %3462 = vmatprep.mubr.f32.mxu0 0.0
      %3463 = vmatmul.mubr.f32.gmra.mrb[0].mxu0 %v3286
      %v3464 = vpop.f32.mrb[0].mxu0
      %v3465 = vadd.f32 0.0, %v3464
      %v3466 = vpop.f32.mrb[0].mxu0
      %3467 = vmatprep.mubr.f32.mxu0 0.0
      %3468 = vmatmul.mubr.f32.gmra.mrb[0].mxu0 %v3289
      %v3469 = vpop.f32.mrb[0].mxu0
      %v3470 = vadd.f32 0.0, %v3469
      %v3471 = vpop.f32.mrb[0].mxu0
      %3472 = vmatprep.mubr.f32.mxu0 0.0
      %3473 = vmatmul.mubr.f32.gmra.mrb[0].mxu0 %v3292
      %v3474 = vpop.f32.mrb[0].mxu0
      %v3475 = vadd.f32 0.0, %v3474
      %v3476 = vpop.f32.mrb[0].mxu0
      %3477 = vmatprep.mubr.f32.mxu0 0.0
      %3478 = vmatmul.mubr.f32.gmra.mrb[0].mxu0 %v3295
      %v3479 = vpop.f32.mrb[0].mxu0
      %v3480 = vadd.f32 0.0, %v3479
      %v3481 = vpop.f32.mrb[0].mxu0
      %3482 = vmatprep.mubr.f32.mxu0 0.0
      %3483 = vmatmul.mubr.f32.gmra.mrb[0].mxu0 %v3298
      %v3484 = vpop.f32.mrb[0].mxu0
      %v3485 = vadd.f32 0.0, %v3484
      %v3486 = vpop.f32.mrb[0].mxu0
      %3487 = vmatprep.mubr.f32.mxu0 0.0
      %3488 = vmatmul.mubr.f32.gmra.mrb[0].mxu0 %v3301
      %v3489 = vpop.f32.mrb[0].mxu0
      %v3490 = vadd.f32 0.0, %v3489
      %v3491 = vpop.f32.mrb[0].mxu0
      %3492 = vmatprep.mubr.f32.mxu0 0.0
      %3493 = vmatmul.mubr.f32.gmra.mrb[0].mxu0 %v3304
      %v3494 = vpop.f32.mrb[0].mxu0
      %v3495 = vadd.f32 0.0, %v3494
      %v3496 = vpop.f32.mrb[0].mxu0
      %3497 = vmatprep.mubr.f32.mxu0 0.0
      %3498 = vmatmul.mubr.f32.gmra.mrb[0].mxu0 %v3307
      %v3499 = vpop.f32.mrb[0].mxu0
      %v3500 = vadd.f32 0.0, %v3499
      %v3501 = vpop.f32.mrb[0].mxu0
      %3502 = vmatprep.mubr.f32.mxu0 0.0
      %3503 = vmatmul.mubr.f32.gmra.mrb[0].mxu0 %v3310
      %v3504 = vpop.f32.mrb[0].mxu0
      %v3505 = vadd.f32 0.0, %v3504
      %v3506 = vpop.f32.mrb[0].mxu0
      %3507 = vmatprep.mubr.f32.mxu0 0.0
      %3508 = vmatmul.mubr.f32.gmra.mrb[0].mxu0 %v3313
      %v3509 = vpop.f32.mrb[0].mxu0
      %v3510 = vadd.f32 0.0, %v3509
      %v3511 = vpop.f32.mrb[0].mxu0
      %3512 = vmatprep.mubr.f32.mxu0 0.0
      %3513 = vmatmul.mubr.f32.gmra.mrb[0].mxu0 %v3316
      %v3514 = vpop.f32.mrb[0].mxu0
      %v3515 = vadd.f32 0.0, %v3514
      %v3516 = vpop.f32.mrb[0].mxu0
      %3517 = vmatprep.mubr.f32.mxu0 0.0
      %3518 = vmatmul.mubr.f32.gmra.mrb[0].mxu0 %v3319
      %v3519 = vpop.f32.mrb[0].mxu0
      %v3520 = vadd.f32 0.0, %v3519
      %v3521 = vpop.f32.mrb[0].mxu0
      %3522 = vmatprep.mubr.f32.mxu0 0.0
      %3523 = vmatmul.mubr.f32.gmra.mrb[0].mxu0 %v3322
      %v3524 = vpop.f32.mrb[0].mxu0
      %v3525 = vadd.f32 0.0, %v3524
      %v3526 = vpop.f32.mrb[0].mxu0
      %3527 = vmatprep.mubr.f32.mxu0 0.0
      %3528 = vmatmul.mubr.f32.gmra.mrb[0].mxu0 %v3325
      %v3529 = vpop.f32.mrb[0].mxu0
      %v3530 = vadd.f32 0.0, %v3529
      %v3531 = vpop.f32.mrb[0].mxu0
      %3532 = vmatprep.mubr.f32.mxu0 0.0
      %3533 = vmatmul.mubr.f32.gmra.mrb[0].mxu0 %v3328
      %v3534 = vpop.f32.mrb[0].mxu0
      %v3535 = vadd.f32 0.0, %v3534
      %v3536 = vpop.f32.mrb[0].mxu0
      %3537 = vmatprep.mubr.f32.mxu0 0.0
      %3538 = vmatmul.mubr.f32.gmra.mrb[0].mxu0 %v3331
      %v3539 = vpop.f32.mrb[0].mxu0
      %v3540 = vadd.f32 0.0, %v3539
      %v3541 = vpop.f32.mrb[0].mxu0
      %3542 = vmatprep.mubr.f32.mxu0 0.0
      %3543 = vmatmul.mubr.f32.gmra.mrb[0].mxu0 %v3334
      %v3544 = vpop.f32.mrb[0].mxu0
      %v3545 = vadd.f32 0.0, %v3544
      %v3546 = vpop.f32.mrb[0].mxu0
      %3547 = vmatprep.mubr.f32.mxu0 0.0
      %3548 = vmatmul.mubr.f32.gmra.mrb[0].mxu0 %v3337
      %v3549 = vpop.f32.mrb[0].mxu0
      %v3550 = vadd.f32 0.0, %v3549
      %v3551 = vpop.f32.mrb[0].mxu0
      %3552 = vmatprep.mubr.f32.mxu0 0.0
      %3553 = vmatmul.mubr.f32.gmra.mrb[0].mxu0 %v3340
      %v3554 = vpop.f32.mrb[0].mxu0
      %v3555 = vadd.f32 0.0, %v3554
      %v3556 = vpop.f32.mrb[0].mxu0
      %3557 = vmatprep.mubr.f32.mxu0 0.0
      %3558 = vmatmul.mubr.f32.gmra.mrb[0].mxu0 %v3343
      %v3559 = vpop.f32.mrb[0].mxu0
      %v3560 = vadd.f32 0.0, %v3559
      %v3561 = vpop.f32.mrb[0].mxu0
      %3562 = vmatprep.mubr.f32.mxu0 0.0
      %3563 = vmatmul.mubr.f32.gmra.mrb[0].mxu0 %v3346
      %v3564 = vpop.f32.mrb[0].mxu0
      %v3565 = vadd.f32 0.0, %v3564
      %v3566 = vpop.f32.mrb[0].mxu0
      %3567 = vmatprep.mubr.f32.mxu0 0.0
      %3568 = vmatmul.mubr.f32.gmra.mrb[0].mxu0 %v3349
      %v3569 = vpop.f32.mrb[0].mxu0
      %v3570 = vadd.f32 0.0, %v3569
      %v3571 = vpop.f32.mrb[0].mxu0
      %3572 = vmatprep.mubr.f32.mxu0 0.0
      %3573 = vmatmul.mubr.f32.gmra.mrb[0].mxu0 %v3352
      %v3574 = vpop.f32.mrb[0].mxu0
      %v3575 = vadd.f32 0.0, %v3574
      %v3576 = vpop.f32.mrb[0].mxu0
      %3577 = vmatprep.mubr.f32.mxu0 0.0
      %3578 = vmatmul.mubr.f32.gmra.mrb[0].mxu0 %v3355
      %v3579 = vpop.f32.mrb[0].mxu0
      %v3580 = vadd.f32 0.0, %v3579
      %v3581 = vpop.f32.mrb[0].mxu0
      %3582 = vmatprep.mubr.f32.mxu0 0.0
      %3583 = vmatmul.mubr.f32.gmra.mrb[0].mxu0 %v3358
      %v3584 = vpop.f32.mrb[0].mxu0
      %v3585 = vadd.f32 0.0, %v3584
      %v3586 = vpop.f32.mrb[0].mxu0
      %3587 = vdwg.mxu0
      %v3588 = vadd.f32 %v3198, %v3430
      %v3589 = vadd.f32 %v3199, %v3435
      %v3590 = vadd.f32 %v3200, %v3440
      %v3591 = vadd.f32 %v3201, %v3445
      %v3592 = vadd.f32 %v3202, %v3450
      %v3593 = vadd.f32 %v3203, %v3455
      %v3594 = vadd.f32 %v3204, %v3460
      %v3595 = vadd.f32 %v3205, %v3465
      %v3596 = vadd.f32 %v3206, %v3470
      %v3597 = vadd.f32 %v3207, %v3475
      %v3598 = vadd.f32 %v3208, %v3480
      %v3599 = vadd.f32 %v3209, %v3485
      %v3600 = vadd.f32 %v3210, %v3490
      %v3601 = vadd.f32 %v3211, %v3495
      %v3602 = vadd.f32 %v3212, %v3500
      %v3603 = vadd.f32 %v3213, %v3505
      %v3604 = vadd.f32 %v3214, %v3510
      %v3605 = vadd.f32 %v3215, %v3515
      %v3606 = vadd.f32 %v3216, %v3520
      %v3607 = vadd.f32 %v3217, %v3525
      %v3608 = vadd.f32 %v3218, %v3530
      %v3609 = vadd.f32 %v3219, %v3535
      %v3610 = vadd.f32 %v3220, %v3540
      %v3611 = vadd.f32 %v3221, %v3545
      %v3612 = vadd.f32 %v3222, %v3550
      %v3613 = vadd.f32 %v3223, %v3555
      %v3614 = vadd.f32 %v3224, %v3560
      %v3615 = vadd.f32 %v3225, %v3565
      %v3616 = vadd.f32 %v3226, %v3570
      %v3617 = vadd.f32 %v3227, %v3575
      %v3618 = vadd.f32 %v3228, %v3580
      %v3619 = vadd.f32 %v3229, %v3585
      %v3620 = vld [vmem:[%s2] sm:$0x1]
      %v3622 = vlaneseq
      %v3623 = vshrl.u32 %v3622, 7
      %v3624 = vsub.s32 0, %v3623
      %v3625 = vrot.slane %v3620, %v3624
      %v3627 = vadd.f32 %v3588, %v3625
      %v3628 = vadd.f32 %v3589, %v3625
      %v3629 = vadd.f32 %v3590, %v3625
      %v3630 = vadd.f32 %v3591, %v3625
      %v3631 = vadd.f32 %v3592, %v3625
      %v3632 = vadd.f32 %v3593, %v3625
      %v3633 = vadd.f32 %v3594, %v3625
      %v3634 = vadd.f32 %v3595, %v3625
      %v3635 = vadd.f32 %v3596, %v3625
      %v3636 = vadd.f32 %v3597, %v3625
      %v3637 = vadd.f32 %v3598, %v3625
      %v3638 = vadd.f32 %v3599, %v3625
      %v3639 = vadd.f32 %v3600, %v3625
      %v3640 = vadd.f32 %v3601, %v3625
      %v3641 = vadd.f32 %v3602, %v3625
      %v3642 = vadd.f32 %v3603, %v3625
      %v3643 = vadd.f32 %v3604, %v3625
      %v3644 = vadd.f32 %v3605, %v3625
      %v3645 = vadd.f32 %v3606, %v3625
      %v3646 = vadd.f32 %v3607, %v3625
      %v3647 = vadd.f32 %v3608, %v3625
      %v3648 = vadd.f32 %v3609, %v3625
      %v3649 = vadd.f32 %v3610, %v3625
      %v3650 = vadd.f32 %v3611, %v3625
      %v3651 = vadd.f32 %v3612, %v3625
      %v3652 = vadd.f32 %v3613, %v3625
      %v3653 = vadd.f32 %v3614, %v3625
      %v3654 = vadd.f32 %v3615, %v3625
      %v3655 = vadd.f32 %v3616, %v3625
      %v3656 = vadd.f32 %v3617, %v3625
      %v3657 = vadd.f32 %v3618, %v3625
      %v3658 = vadd.f32 %v3619, %v3625
      %v3659 = vmul.f32 %v3627, %v3627
      %v3660 = vmul.f32 %v3628, %v3628
      %v3661 = vmul.f32 %v3629, %v3629
      %v3662 = vmul.f32 %v3630, %v3630
      %v3663 = vmul.f32 %v3631, %v3631
      %v3664 = vmul.f32 %v3632, %v3632
      %v3665 = vmul.f32 %v3633, %v3633
      %v3666 = vmul.f32 %v3634, %v3634
      %v3667 = vmul.f32 %v3635, %v3635
      %v3668 = vmul.f32 %v3636, %v3636
      %v3669 = vmul.f32 %v3637, %v3637
      %v3670 = vmul.f32 %v3638, %v3638
      %v3671 = vmul.f32 %v3639, %v3639
      %v3672 = vmul.f32 %v3640, %v3640
      %v3673 = vmul.f32 %v3641, %v3641
      %v3674 = vmul.f32 %v3642, %v3642
      %v3675 = vmul.f32 %v3643, %v3643
      %v3676 = vmul.f32 %v3644, %v3644
      %v3677 = vmul.f32 %v3645, %v3645
      %v3678 = vmul.f32 %v3646, %v3646
      %v3679 = vmul.f32 %v3647, %v3647
      %v3680 = vmul.f32 %v3648, %v3648
      %v3681 = vmul.f32 %v3649, %v3649
      %v3682 = vmul.f32 %v3650, %v3650
      %v3683 = vmul.f32 %v3651, %v3651
      %v3684 = vmul.f32 %v3652, %v3652
      %v3685 = vmul.f32 %v3653, %v3653
      %v3686 = vmul.f32 %v3654, %v3654
      %v3687 = vmul.f32 %v3655, %v3655
      %v3688 = vmul.f32 %v3656, %v3656
      %v3689 = vmul.f32 %v3657, %v3657
      %v3690 = vmul.f32 %v3658, %v3658
      %vm3691 = vcmask 64512
      %v3692 = vsel %vm3691, %v3659, 0.0
      %3693 = vadd.xlane.f32.xlu0 %v3692
      %v3694 = vpop.xlane.xlu0 %3693
      %v3695 = vsel %vm3691, %v3660, 0.0
      %3696 = vadd.xlane.f32.xlu0 %v3695
      %v3697 = vpop.xlane.xlu0 %3696
      %v3698 = vsel %vm3691, %v3661, 0.0
      %3699 = vadd.xlane.f32.xlu0 %v3698
      %v3700 = vpop.xlane.xlu0 %3699
      %v3701 = vsel %vm3691, %v3662, 0.0
      %3702 = vadd.xlane.f32.xlu0 %v3701
      %v3703 = vpop.xlane.xlu0 %3702
      %v3704 = vsel %vm3691, %v3663, 0.0
      %3705 = vadd.xlane.f32.xlu0 %v3704
      %v3706 = vpop.xlane.xlu0 %3705
      %v3707 = vsel %vm3691, %v3664, 0.0
      %3708 = vadd.xlane.f32.xlu0 %v3707
      %v3709 = vpop.xlane.xlu0 %3708
      %v3710 = vsel %vm3691, %v3665, 0.0
      %3711 = vadd.xlane.f32.xlu0 %v3710
      %v3712 = vpop.xlane.xlu0 %3711
      %v3713 = vsel %vm3691, %v3666, 0.0
      %3714 = vadd.xlane.f32.xlu0 %v3713
      %v3715 = vpop.xlane.xlu0 %3714
      %v3716 = vsel %vm3691, %v3667, 0.0
      %3717 = vadd.xlane.f32.xlu0 %v3716
      %v3718 = vpop.xlane.xlu0 %3717
      %v3719 = vsel %vm3691, %v3668, 0.0
      %3720 = vadd.xlane.f32.xlu0 %v3719
      %v3721 = vpop.xlane.xlu0 %3720
      %v3722 = vsel %vm3691, %v3669, 0.0
      %3723 = vadd.xlane.f32.xlu0 %v3722
      %v3724 = vpop.xlane.xlu0 %3723
      %v3725 = vsel %vm3691, %v3670, 0.0
      %3726 = vadd.xlane.f32.xlu0 %v3725
      %v3727 = vpop.xlane.xlu0 %3726
      %v3728 = vsel %vm3691, %v3671, 0.0
      %3729 = vadd.xlane.f32.xlu0 %v3728
      %v3730 = vpop.xlane.xlu0 %3729
      %v3731 = vsel %vm3691, %v3672, 0.0
      %3732 = vadd.xlane.f32.xlu0 %v3731
      %v3733 = vpop.xlane.xlu0 %3732
      %v3734 = vsel %vm3691, %v3673, 0.0
      %3735 = vadd.xlane.f32.xlu0 %v3734
      %v3736 = vpop.xlane.xlu0 %3735
      %v3737 = vsel %vm3691, %v3674, 0.0
      %3738 = vadd.xlane.f32.xlu0 %v3737
      %v3739 = vpop.xlane.xlu0 %3738
      %v3740 = vsel %vm3691, %v3675, 0.0
      %3741 = vadd.xlane.f32.xlu0 %v3740
      %v3742 = vpop.xlane.xlu0 %3741
      %v3743 = vsel %vm3691, %v3676, 0.0
      %3744 = vadd.xlane.f32.xlu0 %v3743
      %v3745 = vpop.xlane.xlu0 %3744
      %v3746 = vsel %vm3691, %v3677, 0.0
      %3747 = vadd.xlane.f32.xlu0 %v3746
      %v3748 = vpop.xlane.xlu0 %3747
      %v3749 = vsel %vm3691, %v3678, 0.0
      %3750 = vadd.xlane.f32.xlu0 %v3749
      %v3751 = vpop.xlane.xlu0 %3750
      %v3752 = vsel %vm3691, %v3679, 0.0
      %3753 = vadd.xlane.f32.xlu0 %v3752
      %v3754 = vpop.xlane.xlu0 %3753
      %v3755 = vsel %vm3691, %v3680, 0.0
      %3756 = vadd.xlane.f32.xlu0 %v3755
      %v3757 = vpop.xlane.xlu0 %3756
      %v3758 = vsel %vm3691, %v3681, 0.0
      %3759 = vadd.xlane.f32.xlu0 %v3758
      %v3760 = vpop.xlane.xlu0 %3759
      %v3761 = vsel %vm3691, %v3682, 0.0
      %3762 = vadd.xlane.f32.xlu0 %v3761
      %v3763 = vpop.xlane.xlu0 %3762
      %v3764 = vsel %vm3691, %v3683, 0.0
      %3765 = vadd.xlane.f32.xlu0 %v3764
      %v3766 = vpop.xlane.xlu0 %3765
      %v3767 = vsel %vm3691, %v3684, 0.0
      %3768 = vadd.xlane.f32.xlu0 %v3767
      %v3769 = vpop.xlane.xlu0 %3768
      %v3770 = vsel %vm3691, %v3685, 0.0
      %3771 = vadd.xlane.f32.xlu0 %v3770
      %v3772 = vpop.xlane.xlu0 %3771
      %v3773 = vsel %vm3691, %v3686, 0.0
      %3774 = vadd.xlane.f32.xlu0 %v3773
      %v3775 = vpop.xlane.xlu0 %3774
      %v3776 = vsel %vm3691, %v3687, 0.0
      %3777 = vadd.xlane.f32.xlu0 %v3776
      %v3778 = vpop.xlane.xlu0 %3777
      %v3779 = vsel %vm3691, %v3688, 0.0
      %3780 = vadd.xlane.f32.xlu0 %v3779
      %v3781 = vpop.xlane.xlu0 %3780
      %v3782 = vsel %vm3691, %v3689, 0.0
      %3783 = vadd.xlane.f32.xlu0 %v3782
      %v3784 = vpop.xlane.xlu0 %3783
      %v3785 = vsel %vm3691, %v3690, 0.0
      %3786 = vadd.xlane.f32.xlu0 %v3785
      %v3787 = vpop.xlane.xlu0 %3786
      %v3788 = vrcp.pop 8.0
      %v3789 = vmul.f32 %v3694, %v3788
      %v3790 = vmul.f32 %v3697, %v3788
      %v3791 = vmul.f32 %v3700, %v3788
      %v3792 = vmul.f32 %v3703, %v3788
      %v3793 = vmul.f32 %v3706, %v3788
      %v3794 = vmul.f32 %v3709, %v3788
      %v3795 = vmul.f32 %v3712, %v3788
      %v3796 = vmul.f32 %v3715, %v3788
      %v3797 = vmul.f32 %v3718, %v3788
      %v3798 = vmul.f32 %v3721, %v3788
      %v3799 = vmul.f32 %v3724, %v3788
      %v3800 = vmul.f32 %v3727, %v3788
      %v3801 = vmul.f32 %v3730, %v3788
      %v3802 = vmul.f32 %v3733, %v3788
      %v3803 = vmul.f32 %v3736, %v3788
      %v3804 = vmul.f32 %v3739, %v3788
      %v3805 = vmul.f32 %v3742, %v3788
      %v3806 = vmul.f32 %v3745, %v3788
      %v3807 = vmul.f32 %v3748, %v3788
      %v3808 = vmul.f32 %v3751, %v3788
      %v3809 = vmul.f32 %v3754, %v3788
      %v3810 = vmul.f32 %v3757, %v3788
      %v3811 = vmul.f32 %v3760, %v3788
      %v3812 = vmul.f32 %v3763, %v3788
      %v3813 = vmul.f32 %v3766, %v3788
      %v3814 = vmul.f32 %v3769, %v3788
      %v3815 = vmul.f32 %v3772, %v3788
      %v3816 = vmul.f32 %v3775, %v3788
      %v3817 = vmul.f32 %v3778, %v3788
      %v3818 = vmul.f32 %v3781, %v3788
      %v3819 = vmul.f32 %v3784, %v3788
      %v3820 = vmul.f32 %v3787, %v3788
      %v3821 = vadd.f32 %v3789, 1e-08
      %v3822 = vadd.f32 %v3790, 1e-08
      %v3823 = vadd.f32 %v3791, 1e-08
      %v3824 = vadd.f32 %v3792, 1e-08
      %v3825 = vadd.f32 %v3793, 1e-08
      %v3826 = vadd.f32 %v3794, 1e-08
      %v3827 = vadd.f32 %v3795, 1e-08
      %v3828 = vadd.f32 %v3796, 1e-08
      %v3829 = vadd.f32 %v3797, 1e-08
      %v3830 = vadd.f32 %v3798, 1e-08
      %v3831 = vadd.f32 %v3799, 1e-08
      %v3832 = vadd.f32 %v3800, 1e-08
      %v3833 = vadd.f32 %v3801, 1e-08
      %v3834 = vadd.f32 %v3802, 1e-08
      %v3835 = vadd.f32 %v3803, 1e-08
      %v3836 = vadd.f32 %v3804, 1e-08
      %v3837 = vadd.f32 %v3805, 1e-08
      %v3838 = vadd.f32 %v3806, 1e-08
      %v3839 = vadd.f32 %v3807, 1e-08
      %v3840 = vadd.f32 %v3808, 1e-08
      %v3841 = vadd.f32 %v3809, 1e-08
      %v3842 = vadd.f32 %v3810, 1e-08
      %v3843 = vadd.f32 %v3811, 1e-08
      %v3844 = vadd.f32 %v3812, 1e-08
      %v3845 = vadd.f32 %v3813, 1e-08
      %v3846 = vadd.f32 %v3814, 1e-08
      %v3847 = vadd.f32 %v3815, 1e-08
      %v3848 = vadd.f32 %v3816, 1e-08
      %v3849 = vadd.f32 %v3817, 1e-08
      %v3850 = vadd.f32 %v3818, 1e-08
      %v3851 = vadd.f32 %v3819, 1e-08
      %v3852 = vadd.f32 %v3820, 1e-08
      %v3853 = vrsqrt.pop %v3821
      %v3854 = vrsqrt.pop %v3822
      %v3855 = vrsqrt.pop %v3823
      %v3856 = vrsqrt.pop %v3824
      %v3857 = vrsqrt.pop %v3825
      %v3858 = vrsqrt.pop %v3826
      %v3859 = vrsqrt.pop %v3827
      %v3860 = vrsqrt.pop %v3828
      %v3861 = vrsqrt.pop %v3829
      %v3862 = vrsqrt.pop %v3830
      %v3863 = vrsqrt.pop %v3831
      %v3864 = vrsqrt.pop %v3832
      %v3865 = vrsqrt.pop %v3833
      %v3866 = vrsqrt.pop %v3834
      %v3867 = vrsqrt.pop %v3835
      %v3868 = vrsqrt.pop %v3836
      %v3869 = vrsqrt.pop %v3837
      %v3870 = vrsqrt.pop %v3838
      %v3871 = vrsqrt.pop %v3839
      %v3872 = vrsqrt.pop %v3840
      %v3873 = vrsqrt.pop %v3841
      %v3874 = vrsqrt.pop %v3842
      %v3875 = vrsqrt.pop %v3843
      %v3876 = vrsqrt.pop %v3844
      %v3877 = vrsqrt.pop %v3845
      %v3878 = vrsqrt.pop %v3846
      %v3879 = vrsqrt.pop %v3847
      %v3880 = vrsqrt.pop %v3848
      %v3881 = vrsqrt.pop %v3849
      %v3882 = vrsqrt.pop %v3850
      %v3883 = vrsqrt.pop %v3851
      %v3884 = vrsqrt.pop %v3852
      %v3885 = vmul.f32 %v3627, %v3853
      %v3886 = vmul.f32 %v3628, %v3854
      %v3887 = vmul.f32 %v3629, %v3855
      %v3888 = vmul.f32 %v3630, %v3856
      %v3889 = vmul.f32 %v3631, %v3857
      %v3890 = vmul.f32 %v3632, %v3858
      %v3891 = vmul.f32 %v3633, %v3859
      %v3892 = vmul.f32 %v3634, %v3860
      %v3893 = vmul.f32 %v3635, %v3861
      %v3894 = vmul.f32 %v3636, %v3862
      %v3895 = vmul.f32 %v3637, %v3863
      %v3896 = vmul.f32 %v3638, %v3864
      %v3897 = vmul.f32 %v3639, %v3865
      %v3898 = vmul.f32 %v3640, %v3866
      %v3899 = vmul.f32 %v3641, %v3867
      %v3900 = vmul.f32 %v3642, %v3868
      %v3901 = vmul.f32 %v3643, %v3869
      %v3902 = vmul.f32 %v3644, %v3870
      %v3903 = vmul.f32 %v3645, %v3871
      %v3904 = vmul.f32 %v3646, %v3872
      %v3905 = vmul.f32 %v3647, %v3873
      %v3906 = vmul.f32 %v3648, %v3874
      %v3907 = vmul.f32 %v3649, %v3875
      %v3908 = vmul.f32 %v3650, %v3876
      %v3909 = vmul.f32 %v3651, %v3877
      %v3910 = vmul.f32 %v3652, %v3878
      %v3911 = vmul.f32 %v3653, %v3879
      %v3912 = vmul.f32 %v3654, %v3880
      %v3913 = vmul.f32 %v3655, %v3881
      %v3914 = vmul.f32 %v3656, %v3882
      %v3915 = vmul.f32 %v3657, %v3883
      %v3916 = vmul.f32 %v3658, %v3884
      %v3917 = vmul.f32 %v3885, 0.2
      %v3918 = vmul.f32 %v3886, 0.2
      %v3919 = vmul.f32 %v3887, 0.2
      %v3920 = vmul.f32 %v3888, 0.2
      %v3921 = vmul.f32 %v3889, 0.2
      %v3922 = vmul.f32 %v3890, 0.2
      %v3923 = vmul.f32 %v3891, 0.2
      %v3924 = vmul.f32 %v3892, 0.2
      %v3925 = vmul.f32 %v3893, 0.2
      %v3926 = vmul.f32 %v3894, 0.2
      %v3927 = vmul.f32 %v3895, 0.2
      %v3928 = vmul.f32 %v3896, 0.2
      %v3929 = vmul.f32 %v3897, 0.2
      %v3930 = vmul.f32 %v3898, 0.2
      %v3931 = vmul.f32 %v3899, 0.2
      %v3932 = vmul.f32 %v3900, 0.2
      %v3933 = vmul.f32 %v3901, 0.2
      %v3934 = vmul.f32 %v3902, 0.2
      %v3935 = vmul.f32 %v3903, 0.2
      %v3936 = vmul.f32 %v3904, 0.2
      %v3937 = vmul.f32 %v3905, 0.2
      %v3938 = vmul.f32 %v3906, 0.2
      %v3939 = vmul.f32 %v3907, 0.2
      %v3940 = vmul.f32 %v3908, 0.2
      %v3941 = vmul.f32 %v3909, 0.2
      %v3942 = vmul.f32 %v3910, 0.2
      %v3943 = vmul.f32 %v3911, 0.2
      %v3944 = vmul.f32 %v3912, 0.2
      %v3945 = vmul.f32 %v3913, 0.2
      %v3946 = vmul.f32 %v3914, 0.2
      %v3947 = vmul.f32 %v3915, 0.2
      %v3948 = vmul.f32 %v3916, 0.2
      %v3949 = vmax.f32 %v3885, %v3917
      %v3950 = vmax.f32 %v3886, %v3918
      %v3951 = vmax.f32 %v3887, %v3919
      %v3952 = vmax.f32 %v3888, %v3920
      %v3953 = vmax.f32 %v3889, %v3921
      %v3954 = vmax.f32 %v3890, %v3922
      %v3955 = vmax.f32 %v3891, %v3923
      %v3956 = vmax.f32 %v3892, %v3924
      %v3957 = vmax.f32 %v3893, %v3925
      %v3958 = vmax.f32 %v3894, %v3926
      %v3959 = vmax.f32 %v3895, %v3927
      %v3960 = vmax.f32 %v3896, %v3928
      %v3961 = vmax.f32 %v3897, %v3929
      %v3962 = vmax.f32 %v3898, %v3930
      %v3963 = vmax.f32 %v3899, %v3931
      %v3964 = vmax.f32 %v3900, %v3932
      %v3965 = vmax.f32 %v3901, %v3933
      %v3966 = vmax.f32 %v3902, %v3934
      %v3967 = vmax.f32 %v3903, %v3935
      %v3968 = vmax.f32 %v3904, %v3936
      %v3969 = vmax.f32 %v3905, %v3937
      %v3970 = vmax.f32 %v3906, %v3938
      %v3971 = vmax.f32 %v3907, %v3939
      %v3972 = vmax.f32 %v3908, %v3940
      %v3973 = vmax.f32 %v3909, %v3941
      %v3974 = vmax.f32 %v3910, %v3942
      %v3975 = vmax.f32 %v3911, %v3943
      %v3976 = vmax.f32 %v3912, %v3944
      %v3977 = vmax.f32 %v3913, %v3945
      %v3978 = vmax.f32 %v3914, %v3946
      %v3979 = vmax.f32 %v3915, %v3947
      %v3980 = vmax.f32 %v3916, %v3948
      %3981 = vst.msk [vmem:[%s170] sm:$0xff] %vm3691, %v3949
      %3982 = vst.msk [vmem:[%s170 + $0x8] sm:$0xff] %vm3691, %v3950
      %3983 = vst.msk [vmem:[%s170 + $0x10] sm:$0xff] %vm3691, %v3951
      %3984 = vst.msk [vmem:[%s170 + $0x18] sm:$0xff] %vm3691, %v3952
      %3985 = vst.msk [vmem:[%s170 + $0x20] sm:$0xff] %vm3691, %v3953
      %3986 = vst.msk [vmem:[%s170 + $0x28] sm:$0xff] %vm3691, %v3954
      %3987 = vst.msk [vmem:[%s170 + $0x30] sm:$0xff] %vm3691, %v3955
      %3988 = vst.msk [vmem:[%s170 + $0x38] sm:$0xff] %vm3691, %v3956
      %3989 = vst.msk [vmem:[%s170 + $0x40] sm:$0xff] %vm3691, %v3957
      %3990 = vst.msk [vmem:[%s170 + $0x48] sm:$0xff] %vm3691, %v3958
      %3991 = vst.msk [vmem:[%s170 + $0x50] sm:$0xff] %vm3691, %v3959
      %3992 = vst.msk [vmem:[%s170 + $0x58] sm:$0xff] %vm3691, %v3960
      %3993 = vst.msk [vmem:[%s170 + $0x60] sm:$0xff] %vm3691, %v3961
      %3994 = vst.msk [vmem:[%s170 + $0x68] sm:$0xff] %vm3691, %v3962
      %3995 = vst.msk [vmem:[%s170 + $0x70] sm:$0xff] %vm3691, %v3963
      %3996 = vst.msk [vmem:[%s170 + $0x78] sm:$0xff] %vm3691, %v3964
      %3997 = vst.msk [vmem:[%s170 + $0x80] sm:$0xff] %vm3691, %v3965
      %3998 = vst.msk [vmem:[%s170 + $0x88] sm:$0xff] %vm3691, %v3966
      %3999 = vst.msk [vmem:[%s170 + $0x90] sm:$0xff] %vm3691, %v3967
      %4000 = vst.msk [vmem:[%s170 + $0x98] sm:$0xff] %vm3691, %v3968
      %4001 = vst.msk [vmem:[%s170 + $0xa0] sm:$0xff] %vm3691, %v3969
      %4002 = vst.msk [vmem:[%s170 + $0xa8] sm:$0xff] %vm3691, %v3970
      %4003 = vst.msk [vmem:[%s170 + $0xb0] sm:$0xff] %vm3691, %v3971
      %4004 = vst.msk [vmem:[%s170 + $0xb8] sm:$0xff] %vm3691, %v3972
      %4005 = vst.msk [vmem:[%s170 + $0xc0] sm:$0xff] %vm3691, %v3973
      %4006 = vst.msk [vmem:[%s170 + $0xc8] sm:$0xff] %vm3691, %v3974
      %4007 = vst.msk [vmem:[%s170 + $0xd0] sm:$0xff] %vm3691, %v3975
      %4008 = vst.msk [vmem:[%s170 + $0xd8] sm:$0xff] %vm3691, %v3976
      %4009 = vst.msk [vmem:[%s170 + $0xe0] sm:$0xff] %vm3691, %v3977
      %4010 = vst.msk [vmem:[%s170 + $0xe8] sm:$0xff] %vm3691, %v3978
      %4011 = vst.msk [vmem:[%s170 + $0xf0] sm:$0xff] %vm3691, %v3979
      %4012 = vst.msk [vmem:[%s170 + $0xf8] sm:$0xff] %vm3691, %v3980
      %p4013 = scmp.lt.s32.totalorder %s14, 1
      %s4014 = scalar_select %p4013, %s14, 1
      %s4015 = smul.addr %s4014, 32
      %s4016 = smul.addr %s4015, 8
      %s4017 = scalar_lea.vmem %s3, %s4016
      // Predicated region
      $region33: #{tpu_custom_call.1} parent=31 // pred_check
        %p4018 = pneg %p100
      $region34: #{tpu_custom_call.1} parent=31 // pred_check_branch
        %4020 = sbr.rel (%p4018) target = $region36
      $region35: #{tpu_custom_call.1} parent=31 // pred_region
        _
      $region36: #{tpu_custom_call.1} parent=31 // pred_fallthru
        _
    $region32: #{tpu_custom_call.1} parent=5 // pred_fallthru
      _
    %p4021 = scmp.le.s32.totalorder 2, %s9
    // Predicated region
    $region37: #{tpu_custom_call.1} parent=5 // pred_check
      %p4022 = pneg %p4021
    $region38: #{tpu_custom_call.1} parent=5 // pred_check_branch
      %4024 = sbr.rel (%p4022) target = $region40
    $region39: #{tpu_custom_call.1} parent=5 // pred_region
      %s4025 = ssub.s32 %s9, 2
      // Predicated region
      $region41: #{tpu_custom_call.1} parent=39 // pred_check
        %p4026 = pneg %p106
      $region42: #{tpu_custom_call.1} parent=39 // pred_check_branch
        %4028 = sbr.rel (%p4026) target = $region44
      $region43: #{tpu_custom_call.1} parent=39 // pred_region
        %p4029 = scmp.lt.s32.totalorder %s15, 1
        %s4030 = scalar_select %p4029, %s15, 1
        %s4031 = smul.addr %s4030, 32
        %s4032 = smul.addr %s4031, 8
        %s4033 = scalar_lea.vmem %s3, %s4032
      $region44: #{tpu_custom_call.1} parent=39 // pred_fallthru
        _
    $region40: #{tpu_custom_call.1} parent=5 // pred_fallthru
      _
  $region6: #{tpu_custom_call.1} parent=0 // loop_footer
    %s13 = sadd.s32 1, %s9
  $region7: #{tpu_custom_call.1} parent=0 // loop_footer_branch
    %8 = sbr.rel target = $region3
  $region8: #{tpu_custom_call.1} parent=0 // loop_exit
    _

</llo_original>
